<compile_context>
chip_gen: v7x
topology: tpu7x:2x2x1
jax: 0.10.0
libtpu: 0.0.40
codegen_flags: <defaults>
</compile_context>

<pallas_src>
import functools
import math

import jax
import jax.numpy as jnp
from jax import lax
from jax.experimental import pallas as pl
from jax.experimental.pallas import tpu as pltpu


def _round_up(a: int, b: int) -> int:
    return -(-a // b) * b


def _attn_kernel(xq_ref, xkv_ref, wqT_ref, wk_ref, wv_ref, wo_ref, bias_ref,
                 o_ref, q_scr, m_scr, l_scr, acc_scr,
                 *, scale, heads, dim_head, n_valid, need_mask):
    """One grid step = (batch b, q-tile i, kv-tile j); all heads in-kernel.

    xq_ref   : (1, tq, C)        x q-tile (N-major view, read once per (b,i))
    xkv_ref  : (1, C, tk)        lane-dense x kv-tile (dominant stream)
    wqT_ref  : (C, hidden)       W_q^T
    wk_ref   : (hidden, C)       W_k
    wv_ref   : (hidden, C)       W_v
    wo_ref   : (heads, C, Dh)    W_out split per head
    bias_ref : (C, 1)            output-conv bias
    o_ref    : (1, C, tq)        lane-dense output tile (resident across j)
    """
    j = pl.program_id(2)
    n_kv = pl.num_programs(2)
    tk = xkv_ref.shape[2]

    # ---- init online-softmax state + project q for all heads, once per (b,i)
    @pl.when(j == 0)
    def _():
        m_scr[...] = jnp.full_like(m_scr, -jnp.inf)
        l_scr[...] = jnp.zeros_like(l_scr)
        acc_scr[...] = jnp.zeros_like(acc_scr)
        # (tq, C) @ (C, hidden) -> (tq, hidden); K = C is tiny.
        q_all = jnp.dot(xq_ref[0], wqT_ref[...],
                        preferred_element_type=jnp.float32) * scale
        for h in range(heads):                       # static unroll: lane slices
            q_scr[h] = q_all[:, h * dim_head:(h + 1) * dim_head].astype(q_scr.dtype)

    # ---- k / v projections from ONE lane-dense (C, tk) x tile --------------
    xkv = xkv_ref[0]
    k3 = jnp.dot(wk_ref[...], xkv, preferred_element_type=jnp.float32
                 ).reshape(heads, dim_head, tk).astype(jnp.bfloat16)   # (h, Dh, tk)
    v3 = jnp.dot(wv_ref[...], xkv, preferred_element_type=jnp.float32
                 ).reshape(heads, dim_head, tk).astype(jnp.bfloat16)   # (h, Dh, tk)

    # ---- scores for all heads: bf16 MXU, f32 accumulate --------------------
    s = jnp.einsum('hqd,hdk->hqk', q_scr[...], k3,
                   preferred_element_type=jnp.float32)                  # (h, tq, tk)
    if need_mask:
        col = j * tk + lax.broadcasted_iota(jnp.int32, s.shape, 2)
        s = jnp.where(col < n_valid, s, -jnp.inf)    # mask padded kv columns

    # ---- flash online-softmax step (f32 VPU/EUP math) -----------------------
    m_prev = m_scr[...]
    m_new = jnp.maximum(m_prev, jnp.max(s, axis=-1, keepdims=True))
    alpha = jnp.exp(m_prev - m_new)                                     # (h, tq, 1)
    p = jnp.exp(s - m_new)                                              # (h, tq, tk)
    l_scr[...] = alpha * l_scr[...] + jnp.sum(p, axis=-1, keepdims=True)
    acc_scr[...] = alpha * acc_scr[...] + jnp.einsum(
        'hqk,hdk->hqd', p.astype(jnp.bfloat16), v3,
        preferred_element_type=jnp.float32)                             # (h, tq, Dh)
    m_scr[...] = m_new

    # ---- finalize: 1/l, fused output projection over all heads, bias, store -
    @pl.when(j == n_kv - 1)
    def _():
        inv_l = pl.reciprocal(l_scr[...], approx=True)                  # EUP vrcp
        out_h = (acc_scr[...] * inv_l).astype(jnp.bfloat16)             # (h, tq, Dh)
        yh = jnp.einsum('hcd,hqd->hcq', wo_ref[...], out_h,
                        preferred_element_type=jnp.float32)             # (h, C, tq)
        o_ref[0] = (jnp.sum(yh, axis=0) + bias_ref[...]).astype(o_ref.dtype)


def attention_pallas(x_nchw, w_qkv, w_out, b_out, *, heads, dim_head,
                     tq=256, tk=256):
    """x_nchw: (B, C, H, W) float32. Returns (B, C, H, W)."""
    B, C, H, W = x_nchw.shape
    N = H * W
    hidden = heads * dim_head
    scale = dim_head ** (-0.5)

    # Tile selection: multiples of 128, capped by the (128-rounded) sequence.
    n128 = _round_up(N, 128)
    tq = _round_up(max(128, min(tq, n128)), 128)
    tk = _round_up(max(128, min(tk, n128)), 128)
    N_pad = _round_up(N, math.lcm(tq, tk))
    n_q = N_pad // tq
    n_kv = N_pad // tk
    need_mask = N_pad != N

    # Layout plumbing (one-off XLA ops outside the kernel); bf16 streaming.
    x_bcn = x_nchw.reshape(B, C, N)
    if need_mask:
        x_bcn = jnp.pad(x_bcn, ((0, 0), (0, 0), (0, N_pad - N)))
    x_bcn = x_bcn.astype(jnp.bfloat16)                 # lane-dense kv stream
    x_bnc = jnp.transpose(x_bcn, (0, 2, 1))            # small q-tile stream

    wqkv2d = w_qkv.reshape(3 * hidden, C)
    wqT = jnp.transpose(wqkv2d[:hidden]).astype(jnp.bfloat16)              # (C, hidden)
    wk = wqkv2d[hidden:2 * hidden].astype(jnp.bfloat16)                    # (hidden, C)
    wv = wqkv2d[2 * hidden:].astype(jnp.bfloat16)                          # (hidden, C)
    wo3 = jnp.transpose(w_out.reshape(C, heads, dim_head),
                        (1, 0, 2)).astype(jnp.bfloat16)                    # (heads, C, Dh)
    bias2d = b_out.reshape(C, 1).astype(jnp.float32)

    kernel = functools.partial(_attn_kernel, scale=scale, heads=heads,
                               dim_head=dim_head, n_valid=N,
                               need_mask=need_mask)

    flops = int(4 * B * heads * N_pad * N_pad * dim_head        # scores + PV
                + 2 * B * N_pad * C * hidden                    # q projection
                + 2 * B * n_q * N_pad * C * 2 * hidden          # k/v proj (per q tile)
                + 2 * B * N_pad * hidden * C)                   # out projection
    bytes_accessed = int(2 * B * C * N_pad                      # q-tile stream (bf16)
                         + 2 * B * n_q * C * N_pad              # kv stream, re-read per i
                         + 2 * (3 * hidden * C + heads * C * dim_head)
                         + 4 * C
                         + 4 * B * C * N_pad)                   # output (f32)
    cost = pl.CostEstimate(flops=flops,
                           transcendentals=int(B * heads * N_pad * N_pad),
                           bytes_accessed=bytes_accessed)

    out_bcn = pl.pallas_call(
        kernel,
        out_shape=jax.ShapeDtypeStruct((B, C, N_pad), x_nchw.dtype),
        grid_spec=pltpu.PrefetchScalarGridSpec(
            num_scalar_prefetch=0,
            grid=(B, n_q, n_kv),
            in_specs=[
                pl.BlockSpec((1, tq, C), lambda b, i, j: (b, i, 0)),        # x q-tile
                pl.BlockSpec((1, C, tk), lambda b, i, j: (b, 0, j)),        # x kv-tile
                pl.BlockSpec((C, hidden), lambda b, i, j: (0, 0)),          # Wq^T
                pl.BlockSpec((hidden, C), lambda b, i, j: (0, 0)),          # Wk
                pl.BlockSpec((hidden, C), lambda b, i, j: (0, 0)),          # Wv
                pl.BlockSpec((heads, C, dim_head), lambda b, i, j: (0, 0, 0)),  # Wout
                pl.BlockSpec((C, 1), lambda b, i, j: (0, 0)),               # bias
            ],
            out_specs=pl.BlockSpec((1, C, tq), lambda b, i, j: (b, 0, i)),
            scratch_shapes=[
                pltpu.VMEM((heads, tq, dim_head), jnp.bfloat16),   # q (MXU operand)
                pltpu.VMEM((heads, tq, 1), jnp.float32),           # running max m
                pltpu.VMEM((heads, tq, 1), jnp.float32),           # running sum l
                pltpu.VMEM((heads, tq, dim_head), jnp.float32),    # PV accumulator
            ],
        ),
        compiler_params=pltpu.CompilerParams(
            dimension_semantics=("parallel", "parallel", "arbitrary"),
            vmem_limit_bytes=32 * 1024 * 1024,
        ),
        cost_estimate=cost,
    )(x_bnc, x_bcn, wqT, wk, wv, wo3, bias2d)

    out = out_bcn[:, :, :N] if need_mask else out_bcn
    return out.reshape(B, C, H, W)


def attention_reference(x_nchw, w_qkv, w_out, b_out, *, heads, dim_head):
    """Pure-JAX f32 reference mirroring the PyTorch forward."""
    B, C, H, W = x_nchw.shape
    N = H * W
    hidden = heads * dim_head
    scale = dim_head ** (-0.5)

    x = x_nchw.reshape(B, C, N)
    qkv = jnp.einsum('oc,bcn->bon', w_qkv.reshape(3 * hidden, C), x)
    q, k, v = jnp.split(qkv, 3, axis=1)
    rs = lambda t: t.reshape(B, heads, dim_head, N)
    q, k, v = rs(q) * scale, rs(k), rs(v)
    sim = jnp.einsum('bhdi,bhdj->bhij', q, k)
    sim = sim - jnp.max(sim, axis=-1, keepdims=True)
    attn = jax.nn.softmax(sim, axis=-1)
    out = jnp.einsum('bhij,bhdj->bhid', attn, v)           # (B, h, N, Dh)
    out = jnp.transpose(out, (0, 1, 3, 2)).reshape(B, hidden, N)
    y = jnp.einsum('ch,bhn->bcn', w_out.reshape(C, hidden), out) + b_out[None, :, None]
    return y.reshape(B, C, H, W)


if __name__ == "__main__":
    # Module hyperparameters (dim = input channels).
    dim, heads, dim_head = 4, 4, 32
    hidden = heads * dim_head

    key = jax.random.PRNGKey(0)
    kx, kq, kw, kb = jax.random.split(key, 4)

    # Deterministic synthetic parameters (shapes follow nn.Conv2d(.., 1)).
    w_qkv = jax.random.normal(kq, (hidden * 3, dim, 1, 1), dtype=jnp.float32) * 0.1
    w_out = jax.random.normal(kw, (dim, hidden, 1, 1), dtype=jnp.float32) * 0.1
    b_out = jax.random.normal(kb, (dim,), dtype=jnp.float32) * 0.1

    def check(x, **tile_kw):
        out = jax.block_until_ready(
            attention_pallas(x, w_qkv, w_out, b_out,
                             heads=heads, dim_head=dim_head, **tile_kw))
        ref = attention_reference(x, w_qkv, w_out, b_out,
                                  heads=heads, dim_head=dim_head)
        assert out.shape == x.shape
        max_err = float(jnp.max(jnp.abs(out - ref)))
        # bf16 streamed operands + approx reciprocal -> loosened tolerance.
        assert jnp.allclose(out, ref, atol=2e-2, rtol=2e-2), (
            f"mismatch vs reference (max abs err {max_err})")
        return max_err

    x = jax.random.normal(kx, (2, dim, 16, 16), dtype=jnp.float32)   # N = 256
    check(x)                       # default 256 tiles: single kv tile per q tile
    check(x, tq=128, tk=128)       # multi-tile path: exercises online softmax
    x_odd = jax.random.normal(kx, (1, dim, 10, 10), dtype=jnp.float32)  # N = 100
    check(x_odd)                   # non-128-multiple N: pad + kv-column masking

    print("KERNEL_OK")
</pallas_src>

<mosaic_0001>
module attributes {stable_mosaic.version = 11 : i64} {
  func.func @_attn_kernel(%arg0: i32, %arg1: i32, %arg2: i32, %arg3: memref<1x256x4xbf16, #tpu.memory_space<vmem>>, %arg4: memref<1x4x256xbf16, #tpu.memory_space<vmem>>, %arg5: memref<4x128xbf16, #tpu.memory_space<vmem>>, %arg6: memref<128x4xbf16, #tpu.memory_space<vmem>>, %arg7: memref<128x4xbf16, #tpu.memory_space<vmem>>, %arg8: memref<4x4x32xbf16, #tpu.memory_space<vmem>>, %arg9: memref<4x1xf32, #tpu.memory_space<vmem>>, %arg10: memref<1x4x256xf32, #tpu.memory_space<vmem>>, %arg11: memref<4x256x32xbf16, #tpu.memory_space<vmem>>, %arg12: memref<4x256x1xf32, #tpu.memory_space<vmem>>, %arg13: memref<4x256x1xf32, #tpu.memory_space<vmem>>, %arg14: memref<4x256x32xf32, #tpu.memory_space<vmem>>) attributes {dimension_semantics = [#tpu.dimension_semantics<parallel>, #tpu.dimension_semantics<parallel>, #tpu.dimension_semantics<arbitrary>], iteration_bounds = array<i64: 2, 1, 1>, scalar_prefetch = 0 : i64, scratch_operands = 4 : i64, tpu.core_type = #tpu.core_type<tc>, window_params = [{transform_indices = @transform_0, window_bounds = array<i64: 1, 256, 4>}, {transform_indices = @transform_1, window_bounds = array<i64: 1, 4, 256>}, {pipeline_mode = #tpu.pipeline_mode<synchronous>, transform_indices = @transform_2, window_bounds = array<i64: 4, 128>}, {pipeline_mode = #tpu.pipeline_mode<synchronous>, transform_indices = @transform_3, window_bounds = array<i64: 128, 4>}, {pipeline_mode = #tpu.pipeline_mode<synchronous>, transform_indices = @transform_4, window_bounds = array<i64: 128, 4>}, {pipeline_mode = #tpu.pipeline_mode<synchronous>, transform_indices = @transform_5, window_bounds = array<i64: 4, 4, 32>}, {pipeline_mode = #tpu.pipeline_mode<synchronous>, transform_indices = @transform_6, window_bounds = array<i64: 4, 1>}, {transform_indices = @transform_7, window_bounds = array<i64: 1, 4, 256>}]} {
    %c0_i32 = arith.constant 0 : i32
    %0 = arith.cmpi eq, %arg2, %c0_i32 : i32
    %1 = arith.extui %0 : i1 to i32
    %c0_i32_0 = arith.constant 0 : i32
    %2 = arith.cmpi ne, %1, %c0_i32_0 : i32
    scf.if %2 {
      %cst_35 = arith.constant 0xFF800000 : f32
      %41 = vector.broadcast %cst_35 : f32 to vector<4x256x1xf32>
      %c0_36 = arith.constant 0 : index
      %c0_37 = arith.constant 0 : index
      %c0_38 = arith.constant 0 : index
      %42 = vector.load %arg12[%c0_36, %c0_37, %c0_38] : memref<4x256x1xf32, #tpu.memory_space<vmem>>, vector<4x256x1xf32>
      tpu.vector_store %arg12[%c0_36, %c0_37, %c0_38], %41 {strides = array<i32>} : memref<4x256x1xf32, #tpu.memory_space<vmem>>, vector<4x256x1xf32>,
      %cst_39 = arith.constant 0.000000e+00 : f32
      %43 = vector.broadcast %cst_39 : f32 to vector<4x256x1xf32>
      %c0_40 = arith.constant 0 : index
      %c0_41 = arith.constant 0 : index
      %c0_42 = arith.constant 0 : index
      %44 = vector.load %arg13[%c0_40, %c0_41, %c0_42] : memref<4x256x1xf32, #tpu.memory_space<vmem>>, vector<4x256x1xf32>
      tpu.vector_store %arg13[%c0_40, %c0_41, %c0_42], %43 {strides = array<i32>} : memref<4x256x1xf32, #tpu.memory_space<vmem>>, vector<4x256x1xf32>,
      %cst_43 = arith.constant 0.000000e+00 : f32
      %45 = vector.broadcast %cst_43 : f32 to vector<4x256x32xf32>
      %c0_44 = arith.constant 0 : index
      %c0_45 = arith.constant 0 : index
      %c0_46 = arith.constant 0 : index
      %46 = vector.load %arg14[%c0_44, %c0_45, %c0_46] : memref<4x256x32xf32, #tpu.memory_space<vmem>>, vector<4x256x32xf32>
      tpu.vector_store %arg14[%c0_44, %c0_45, %c0_46], %45 {strides = array<i32>} : memref<4x256x32xf32, #tpu.memory_space<vmem>>, vector<4x256x32xf32>,
      %c0_47 = arith.constant 0 : index
      %c0_48 = arith.constant 0 : index
      %c0_49 = arith.constant 0 : index
      %47 = vector.load %arg3[%c0_47, %c0_48, %c0_49] : memref<1x256x4xbf16, #tpu.memory_space<vmem>>, vector<1x256x4xbf16>
      %48 = vector.shape_cast %47 : vector<1x256x4xbf16> to vector<256x4xbf16>
      %c0_50 = arith.constant 0 : index
      %c0_51 = arith.constant 0 : index
      %49 = vector.load %arg5[%c0_50, %c0_51] : memref<4x128xbf16, #tpu.memory_space<vmem>>, vector<4x128xbf16>
      %cst_52 = arith.constant dense<0.000000e+00> : vector<256x128xf32>
      %50 = tpu.matmul %48, %49, %cst_52 {dimension_numbers = #tpu.dot_dimension_numbers<[1], [0], [0], [1], [0, 0, 1, 1], [], []>} : vector<256x4xbf16>, vector<4x128xbf16>, vector<256x128xf32> -> vector<256x128xf32>
      %cst_53 = arith.constant 0.176776692 : f32
      %51 = vector.broadcast %cst_53 : f32 to vector<256x128xf32>
      %52 = arith.mulf %50, %51 : vector<256x128xf32>
      %53 = vector.extract_strided_slice %52 {offsets = [0, 0], sizes = [256, 32], strides = [1, 1]} : vector<256x128xf32> to vector<256x32xf32>
      %54 = arith.truncf %53 : vector<256x32xf32> to vector<256x32xbf16>
      %c0_54 = arith.constant 0 : index
      %c0_55 = arith.constant 0 : index
      %c0_56 = arith.constant 0 : index
      %55 = vector.load %arg11[%c0_54, %c0_55, %c0_56] : memref<4x256x32xbf16, #tpu.memory_space<vmem>>, vector<1x256x32xbf16>
      %56 = vector.shape_cast %55 : vector<1x256x32xbf16> to vector<256x32xbf16>
      %57 = vector.shape_cast %54 : vector<256x32xbf16> to vector<1x256x32xbf16>
      tpu.vector_store %arg11[%c0_54, %c0_55, %c0_56], %57 {strides = array<i32>} : memref<4x256x32xbf16, #tpu.memory_space<vmem>>, vector<1x256x32xbf16>,
      %58 = vector.extract_strided_slice %52 {offsets = [0, 32], sizes = [256, 32], strides = [1, 1]} : vector<256x128xf32> to vector<256x32xf32>
      %59 = arith.truncf %58 : vector<256x32xf32> to vector<256x32xbf16>
      %c1 = arith.constant 1 : index
      %c0_57 = arith.constant 0 : index
      %c0_58 = arith.constant 0 : index
      %60 = vector.load %arg11[%c1, %c0_57, %c0_58] : memref<4x256x32xbf16, #tpu.memory_space<vmem>>, vector<1x256x32xbf16>
      %61 = vector.shape_cast %60 : vector<1x256x32xbf16> to vector<256x32xbf16>
      %62 = vector.shape_cast %59 : vector<256x32xbf16> to vector<1x256x32xbf16>
      tpu.vector_store %arg11[%c1, %c0_57, %c0_58], %62 {strides = array<i32>} : memref<4x256x32xbf16, #tpu.memory_space<vmem>>, vector<1x256x32xbf16>,
      %63 = vector.extract_strided_slice %52 {offsets = [0, 64], sizes = [256, 32], strides = [1, 1]} : vector<256x128xf32> to vector<256x32xf32>
      %64 = arith.truncf %63 : vector<256x32xf32> to vector<256x32xbf16>
      %c2 = arith.constant 2 : index
      %c0_59 = arith.constant 0 : index
      %c0_60 = arith.constant 0 : index
      %65 = vector.load %arg11[%c2, %c0_59, %c0_60] : memref<4x256x32xbf16, #tpu.memory_space<vmem>>, vector<1x256x32xbf16>
      %66 = vector.shape_cast %65 : vector<1x256x32xbf16> to vector<256x32xbf16>
      %67 = vector.shape_cast %64 : vector<256x32xbf16> to vector<1x256x32xbf16>
      tpu.vector_store %arg11[%c2, %c0_59, %c0_60], %67 {strides = array<i32>} : memref<4x256x32xbf16, #tpu.memory_space<vmem>>, vector<1x256x32xbf16>,
      %68 = vector.extract_strided_slice %52 {offsets = [0, 96], sizes = [256, 32], strides = [1, 1]} : vector<256x128xf32> to vector<256x32xf32>
      %69 = arith.truncf %68 : vector<256x32xf32> to vector<256x32xbf16>
      %c3 = arith.constant 3 : index
      %c0_61 = arith.constant 0 : index
      %c0_62 = arith.constant 0 : index
      %70 = vector.load %arg11[%c3, %c0_61, %c0_62] : memref<4x256x32xbf16, #tpu.memory_space<vmem>>, vector<1x256x32xbf16>
      %71 = vector.shape_cast %70 : vector<1x256x32xbf16> to vector<256x32xbf16>
      %72 = vector.shape_cast %69 : vector<256x32xbf16> to vector<1x256x32xbf16>
      tpu.vector_store %arg11[%c3, %c0_61, %c0_62], %72 {strides = array<i32>} : memref<4x256x32xbf16, #tpu.memory_space<vmem>>, vector<1x256x32xbf16>,
    } else {
    }
    %c0 = arith.constant 0 : index
    %c0_1 = arith.constant 0 : index
    %c0_2 = arith.constant 0 : index
    %3 = vector.load %arg4[%c0, %c0_1, %c0_2] : memref<1x4x256xbf16, #tpu.memory_space<vmem>>, vector<1x4x256xbf16>
    %4 = vector.shape_cast %3 : vector<1x4x256xbf16> to vector<4x256xbf16>
    %c0_3 = arith.constant 0 : index
    %c0_4 = arith.constant 0 : index
    %5 = vector.load %arg6[%c0_3, %c0_4] : memref<128x4xbf16, #tpu.memory_space<vmem>>, vector<128x4xbf16>
    %cst = arith.constant dense<0.000000e+00> : vector<128x256xf32>
    %6 = tpu.matmul %5, %4, %cst {dimension_numbers = #tpu.dot_dimension_numbers<[1], [0], [0], [1], [0, 0, 1, 1], [], []>} : vector<128x4xbf16>, vector<4x256xbf16>, vector<128x256xf32> -> vector<128x256xf32>
    %7 = vector.shape_cast %6 : vector<128x256xf32> to vector<4x32x256xf32>
    %8 = arith.truncf %7 : vector<4x32x256xf32> to vector<4x32x256xbf16>
    %c0_5 = arith.constant 0 : index
    %c0_6 = arith.constant 0 : index
    %9 = vector.load %arg7[%c0_5, %c0_6] : memref<128x4xbf16, #tpu.memory_space<vmem>>, vector<128x4xbf16>
    %cst_7 = arith.constant dense<0.000000e+00> : vector<128x256xf32>
    %10 = tpu.matmul %9, %4, %cst_7 {dimension_numbers = #tpu.dot_dimension_numbers<[1], [0], [0], [1], [0, 0, 1, 1], [], []>} : vector<128x4xbf16>, vector<4x256xbf16>, vector<128x256xf32> -> vector<128x256xf32>
    %11 = vector.shape_cast %10 : vector<128x256xf32> to vector<4x32x256xf32>
    %12 = arith.truncf %11 : vector<4x32x256xf32> to vector<4x32x256xbf16>
    %c0_8 = arith.constant 0 : index
    %c0_9 = arith.constant 0 : index
    %c0_10 = arith.constant 0 : index
    %13 = vector.load %arg11[%c0_8, %c0_9, %c0_10] : memref<4x256x32xbf16, #tpu.memory_space<vmem>>, vector<4x256x32xbf16>
    "tpu.trace_start"() <{level = 10 : i32, message = "hqd,hdk->hqk"}> : () -> ()
    %cst_11 = arith.constant dense<0.000000e+00> : vector<4x256x256xf32>
    %14 = tpu.matmul %13, %8, %cst_11 {dimension_numbers = #tpu.dot_dimension_numbers<[2], [1], [1], [2], [0, 0, 0, 1, 1, 2], [0], [0]>} : vector<4x256x32xbf16>, vector<4x32x256xbf16>, vector<4x256x256xf32> -> vector<4x256x256xf32>
    "tpu.trace_stop"() : () -> ()
    %c0_12 = arith.constant 0 : index
    %c0_13 = arith.constant 0 : index
    %c0_14 = arith.constant 0 : index
    %15 = vector.load %arg12[%c0_12, %c0_13, %c0_14] : memref<4x256x1xf32, #tpu.memory_space<vmem>>, vector<4x256x1xf32>
    %cst_15 = arith.constant dense<0xFF800000> : vector<4x256xf32>
    %16 = vector.multi_reduction <maximumf>, %14, %cst_15 [2] : vector<4x256x256xf32> to vector<4x256xf32>
    %17 = vector.shape_cast %16 : vector<4x256xf32> to vector<4x256x1xf32>
    %18 = arith.maximumf %15, %17 : vector<4x256x1xf32>
    %19 = arith.subf %15, %18 : vector<4x256x1xf32>
    %20 = math.exp %19 : vector<4x256x1xf32>
    %21 = vector.broadcast %18 : vector<4x256x1xf32> to vector<4x256x256xf32>
    %22 = arith.subf %14, %21 : vector<4x256x256xf32>
    %23 = math.exp %22 : vector<4x256x256xf32>
    %c0_16 = arith.constant 0 : index
    %c0_17 = arith.constant 0 : index
    %c0_18 = arith.constant 0 : index
    %24 = vector.load %arg13[%c0_16, %c0_17, %c0_18] : memref<4x256x1xf32, #tpu.memory_space<vmem>>, vector<4x256x1xf32>
    %25 = arith.mulf %20, %24 : vector<4x256x1xf32>
    %cst_19 = arith.constant dense<0.000000e+00> : vector<4x256xf32>
    %26 = vector.multi_reduction <add>, %23, %cst_19 [2] : vector<4x256x256xf32> to vector<4x256xf32>
    %27 = vector.shape_cast %26 : vector<4x256xf32> to vector<4x256x1xf32>
    %28 = arith.addf %25, %27 : vector<4x256x1xf32>
    %c0_20 = arith.constant 0 : index
    %c0_21 = arith.constant 0 : index
    %c0_22 = arith.constant 0 : index
    %29 = vector.load %arg13[%c0_20, %c0_21, %c0_22] : memref<4x256x1xf32, #tpu.memory_space<vmem>>, vector<4x256x1xf32>
    tpu.vector_store %arg13[%c0_20, %c0_21, %c0_22], %28 {strides = array<i32>} : memref<4x256x1xf32, #tpu.memory_space<vmem>>, vector<4x256x1xf32>,
    %c0_23 = arith.constant 0 : index
    %c0_24 = arith.constant 0 : index
    %c0_25 = arith.constant 0 : index
    %30 = vector.load %arg14[%c0_23, %c0_24, %c0_25] : memref<4x256x32xf32, #tpu.memory_space<vmem>>, vector<4x256x32xf32>
    %31 = vector.broadcast %20 : vector<4x256x1xf32> to vector<4x256x32xf32>
    %32 = arith.mulf %31, %30 : vector<4x256x32xf32>
    %33 = arith.truncf %23 : vector<4x256x256xf32> to vector<4x256x256xbf16>
    "tpu.trace_start"() <{level = 10 : i32, message = "hqk,hdk->hqd"}> : () -> ()
    %cst_26 = arith.constant dense<0.000000e+00> : vector<4x256x32xf32>
    %34 = tpu.matmul %33, %12, %cst_26 {dimension_numbers = #tpu.dot_dimension_numbers<[2], [2], [1], [1], [0, 0, 0, 1, 1, 1], [0], [0]>} : vector<4x256x256xbf16>, vector<4x32x256xbf16>, vector<4x256x32xf32> -> vector<4x256x32xf32>
    "tpu.trace_stop"() : () -> ()
    %35 = arith.addf %32, %34 : vector<4x256x32xf32>
    %c0_27 = arith.constant 0 : index
    %c0_28 = arith.constant 0 : index
    %c0_29 = arith.constant 0 : index
    %36 = vector.load %arg14[%c0_27, %c0_28, %c0_29] : memref<4x256x32xf32, #tpu.memory_space<vmem>>, vector<4x256x32xf32>
    tpu.vector_store %arg14[%c0_27, %c0_28, %c0_29], %35 {strides = array<i32>} : memref<4x256x32xf32, #tpu.memory_space<vmem>>, vector<4x256x32xf32>,
    %c0_30 = arith.constant 0 : index
    %c0_31 = arith.constant 0 : index
    %c0_32 = arith.constant 0 : index
    %37 = vector.load %arg12[%c0_30, %c0_31, %c0_32] : memref<4x256x1xf32, #tpu.memory_space<vmem>>, vector<4x256x1xf32>
    tpu.vector_store %arg12[%c0_30, %c0_31, %c0_32], %18 {strides = array<i32>} : memref<4x256x1xf32, #tpu.memory_space<vmem>>, vector<4x256x1xf32>,
    %c0_i32_33 = arith.constant 0 : i32
    %38 = arith.cmpi eq, %arg2, %c0_i32_33 : i32
    %39 = arith.extui %38 : i1 to i32
    %c0_i32_34 = arith.constant 0 : i32
    %40 = arith.cmpi ne, %39, %c0_i32_34 : i32
    scf.if %40 {
      %c0_35 = arith.constant 0 : index
      %c0_36 = arith.constant 0 : index
      %c0_37 = arith.constant 0 : index
      %41 = vector.load %arg13[%c0_35, %c0_36, %c0_37] : memref<4x256x1xf32, #tpu.memory_space<vmem>>, vector<4x256x1xf32>
      %42 = tpu.reciprocal %41 {approx = true} : vector<4x256x1xf32> -> vector<4x256x1xf32>
      %c0_38 = arith.constant 0 : index
      %c0_39 = arith.constant 0 : index
      %c0_40 = arith.constant 0 : index
      %43 = vector.load %arg14[%c0_38, %c0_39, %c0_40] : memref<4x256x32xf32, #tpu.memory_space<vmem>>, vector<4x256x32xf32>
      %44 = vector.broadcast %42 : vector<4x256x1xf32> to vector<4x256x32xf32>
      %45 = arith.mulf %43, %44 : vector<4x256x32xf32>
      %46 = arith.truncf %45 : vector<4x256x32xf32> to vector<4x256x32xbf16>
      %c0_41 = arith.constant 0 : index
      %c0_42 = arith.constant 0 : index
      %c0_43 = arith.constant 0 : index
      %47 = vector.load %arg8[%c0_41, %c0_42, %c0_43] : memref<4x4x32xbf16, #tpu.memory_space<vmem>>, vector<4x4x32xbf16>
      "tpu.trace_start"() <{level = 10 : i32, message = "hcd,hqd->hcq"}> : () -> ()
      %cst_44 = arith.constant dense<0.000000e+00> : vector<4x4x256xf32>
      %48 = tpu.matmul %47, %46, %cst_44 {dimension_numbers = #tpu.dot_dimension_numbers<[2], [2], [1], [1], [0, 0, 0, 1, 1, 1], [0], [0]>} : vector<4x4x32xbf16>, vector<4x256x32xbf16>, vector<4x4x256xf32> -> vector<4x4x256xf32>
      "tpu.trace_stop"() : () -> ()
      %cst_45 = arith.constant dense<0.000000e+00> : vector<4x256xf32>
      %49 = vector.multi_reduction <add>, %48, %cst_45 [0] : vector<4x4x256xf32> to vector<4x256xf32>
      %c0_46 = arith.constant 0 : index
      %c0_47 = arith.constant 0 : index
      %50 = vector.load %arg9[%c0_46, %c0_47] : memref<4x1xf32, #tpu.memory_space<vmem>>, vector<4x1xf32>
      %51 = vector.broadcast %50 : vector<4x1xf32> to vector<4x256xf32>
      %52 = arith.addf %49, %51 : vector<4x256xf32>
      %c0_48 = arith.constant 0 : index
      %c0_49 = arith.constant 0 : index
      %c0_50 = arith.constant 0 : index
      %53 = vector.load %arg10[%c0_48, %c0_49, %c0_50] : memref<1x4x256xf32, #tpu.memory_space<vmem>>, vector<1x4x256xf32>
      %54 = vector.shape_cast %53 : vector<1x4x256xf32> to vector<4x256xf32>
      %55 = vector.shape_cast %52 : vector<4x256xf32> to vector<1x4x256xf32>
      tpu.vector_store %arg10[%c0_48, %c0_49, %c0_50], %55 {strides = array<i32>} : memref<1x4x256xf32, #tpu.memory_space<vmem>>, vector<1x4x256xf32>,
    } else {
    }
    return
  }
  func.func @transform_0(%arg0: i32, %arg1: i32, %arg2: i32) -> (i32, i32, i32) {
    %c0_i32 = arith.constant 0 : i32
    %c0_i32_0 = arith.constant 0 : i32
    return %arg0, %arg1, %c0_i32 : i32, i32, i32
  }
  func.func @transform_1(%arg0: i32, %arg1: i32, %arg2: i32) -> (i32, i32, i32) {
    %c0_i32 = arith.constant 0 : i32
    %c0_i32_0 = arith.constant 0 : i32
    return %arg0, %c0_i32, %arg2 : i32, i32, i32
  }
  func.func @transform_2(%arg0: i32, %arg1: i32, %arg2: i32) -> (i32, i32) {
    %c0_i32 = arith.constant 0 : i32
    %c0_i32_0 = arith.constant 0 : i32
    %c0_i32_1 = arith.constant 0 : i32
    return %c0_i32, %c0_i32_0 : i32, i32
  }
  func.func @transform_3(%arg0: i32, %arg1: i32, %arg2: i32) -> (i32, i32) {
    %c0_i32 = arith.constant 0 : i32
    %c0_i32_0 = arith.constant 0 : i32
    %c0_i32_1 = arith.constant 0 : i32
    return %c0_i32, %c0_i32_0 : i32, i32
  }
  func.func @transform_4(%arg0: i32, %arg1: i32, %arg2: i32) -> (i32, i32) {
    %c0_i32 = arith.constant 0 : i32
    %c0_i32_0 = arith.constant 0 : i32
    %c0_i32_1 = arith.constant 0 : i32
    return %c0_i32, %c0_i32_0 : i32, i32
  }
  func.func @transform_5(%arg0: i32, %arg1: i32, %arg2: i32) -> (i32, i32, i32) {
    %c0_i32 = arith.constant 0 : i32
    %c0_i32_0 = arith.constant 0 : i32
    %c0_i32_1 = arith.constant 0 : i32
    %c0_i32_2 = arith.constant 0 : i32
    return %c0_i32, %c0_i32_0, %c0_i32_1 : i32, i32, i32
  }
  func.func @transform_6(%arg0: i32, %arg1: i32, %arg2: i32) -> (i32, i32) {
    %c0_i32 = arith.constant 0 : i32
    %c0_i32_0 = arith.constant 0 : i32
    %c0_i32_1 = arith.constant 0 : i32
    return %c0_i32, %c0_i32_0 : i32, i32
  }
  func.func @transform_7(%arg0: i32, %arg1: i32, %arg2: i32) -> (i32, i32, i32) {
    %c0_i32 = arith.constant 0 : i32
    %c0_i32_0 = arith.constant 0 : i32
    return %arg0, %c0_i32, %arg1 : i32, i32, i32
  }
}

</mosaic_0001>

<llo_original>
// kernel: tpu_custom_call.1
$region0: #{tpu_custom_call.1}
  #allocation0 [shape = 'u32[]', space=smem, size = 0x4, offset = 0x4, fixed_abs, tag = 'smem constant byte address 0x4 - core index']
  #allocation1 [shape = 'u32[144,128]{1,0:T(1,128)}', space=vmem, size = 0x12000, scoped, tag = 'internal scratch']
  #allocation2 [shape = 'bf16[4,256,32]{2,1,0:T(16,128)(2,1)}', space=vmem, size = 0x40000, scoped, tag = 'scratch operand']
  #allocation3 [shape = 'f32[4,256,1]{2,1,0:T(8,128)}', space=vmem, size = 0x80000, scoped, tag = 'scratch operand']
  #allocation4 [shape = 'f32[4,256,1]{2,1,0:T(8,128)}', space=vmem, size = 0x80000, scoped, tag = 'scratch operand']
  #allocation5 [shape = 'f32[4,256,32]{2,1,0:T(8,128)}', space=vmem, size = 0x80000, scoped, tag = 'scratch operand']
  %s0 = inlined_call_operand.vmem [shape: bf16[2,256,4], index: 0, kind: input, shape index: {}]
  %s1 = inlined_call_operand.vmem [shape: bf16[2,4,256], index: 1, kind: input, shape index: {}]
  %s2 = inlined_call_operand.vmem [shape: bf16[4,128], index: 2, kind: input, shape index: {}]
  %s3 = inlined_call_operand.vmem [shape: bf16[128,4], index: 3, kind: input, shape index: {}]
  %s4 = inlined_call_operand.vmem [shape: bf16[128,4], index: 4, kind: input, shape index: {}]
  %s5 = inlined_call_operand.vmem [shape: bf16[4,4,32], index: 5, kind: input, shape index: {}]
  %s6 = inlined_call_operand.vmem [shape: f32[4,1], index: 6, kind: input, shape index: {}]
  %s7 = inlined_call_operand.hbm [shape: f32[2,4,256], index: 7, kind: output, shape index: {}]
  %s8 = sld [smem:[#allocation0]]
  $region69: #{tpu_custom_call.1} parent=0
    _
  %s10 = ssub.s32 1, %s8
  %s11 = scalar_select 0, %s10, %s8
  $region1: #{tpu_custom_call.1} parent=0
    #allocation6 [shape = 'u8[8192]{0}', space=vmem, size = 0x2000, scoped, tag = 'output window, operand 0']
    #allocation7 [shape = 's32[2]{0}', space=sflag, size = 0x8, scoped, tag = 'scoped memory for tpu_custom_call.1']
    %12 = vsyncpa [#allocation7], 0
    %s13 = scalar_lea.sflag [#allocation7], 1
    %14 = vsyncpa %s13, 0
    loop: start=0, step=1, limit=4
    $region2: #{tpu_custom_call.1} parent=1 // loop_pre_header
      _
    $region3: #{tpu_custom_call.1} parent=1 // loop_header
      %s16 = sphi 0, %s20
      %p17 = scmp.ge.s32.totalorder %s16, 4
      %s23 = sphi 0, %s42
      %s24 = sphi 0, %s38
      %s25 = sphi 0, %s34
      %s26 = sphi 0, %s23
      %s27 = sphi 0, %s24
      %s28 = sphi 0, %s25
      %s29 = sphi 0, %s26
      %s30 = sphi 0, %s27
      %s31 = sphi 0, %s28
      %s47 = sphi 0, %s49
      %s50 = sphi 0, %s47
      %s51 = sphi 0, %s50
      %s67 = sphi 0, %s51
      %s75 = sphi 0, %s77
      %s78 = sphi 0, %s75
      %s79 = sphi 0, %s78
      %s95 = sphi 0, %s79
      %s99 = sphi 0, %s99
      %s101 = sphi 0, %s99
      %s102 = sphi 0, %s101
      %s116 = sphi 0, %s102
      %s120 = sphi 0, %s120
      %s122 = sphi 0, %s120
      %s123 = sphi 0, %s122
      %s137 = sphi 0, %s123
      %s141 = sphi 0, %s141
      %s143 = sphi 0, %s141
      %s144 = sphi 0, %s143
      %s158 = sphi 0, %s144
      %s162 = sphi 0, %s162
      %s164 = sphi 0, %s162
      %s165 = sphi 0, %s164
      %s179 = sphi 0, %s165
      %s183 = sphi 0, %s183
      %s185 = sphi 0, %s183
      %s186 = sphi 0, %s185
      %s200 = sphi 0, %s186
      %s208 = sphi 0, %s210
      %s211 = sphi 0, %s208
      %s212 = sphi 0, %s211
      %s228 = sphi 0, %s212
    $region4: #{tpu_custom_call.1} parent=1 // loop_header_branch
      %19 = sbr.rel (%p17) target = $region8
    $region5: #{tpu_custom_call.1} parent=1 // loop_body
      %s21 = ssub.s32 %s16, 1
      %s22 = ssub.s32 %s16, 2
      %s32 = sadd.s32 1, %s25
      %p33 = scmp.ge.s32.totalorder %s32, 1
      %s34 = scalar_select %p33, 0, %s32
      %s35 = sadd.s32 1, %s24
      %s36 = scalar_select %p33, %s35, %s24
      %p37 = scmp.ge.s32.totalorder %s36, 1
      %s38 = scalar_select %p37, 0, %s36
      %s39 = sadd.s32 1, %s23
      %s40 = scalar_select %p37, %s39, %s23
      %p41 = scmp.ge.s32.totalorder %s40, 2
      %s42 = scalar_select %p41, 0, %s40
      %s43 = ssub.s32 %s23, %s42
      %s44 = ssub.s32 %s24, %s38
      %s45 = sor.u32 %s43, %s44
      %p46 = scmp.eq.s32.totalorder %s45, 0
      %s48 = sadd.s32 %s47, 1
      %s49 = scalar_select %p46, %s47, %s48
      %p52 = pneg %p46
      %p53 = scmp.eq.s32.totalorder %s16, 1
      %p54 = por %p52, %p53
      %p55 = scmp.ne.s32.totalorder %s47, %s50
      %p56 = scmp.eq.s32.totalorder %s16, 0
      %p57 = por %p55, %p56
      %p58 = scmp.ne.s32.totalorder %s47, %s50
      %p59 = scmp.eq.s32.totalorder %s21, 1
      %p60 = por %p58, %p59
      %p61 = scmp.ne.s32.totalorder %s50, %s51
      %p62 = scmp.eq.s32.totalorder %s21, 0
      %p63 = por %p61, %p62
      %p64 = scmp.ne.s32.totalorder %s50, %s51
      %p65 = scmp.eq.s32.totalorder %s22, 1
      %p66 = por %p64, %p65
      %p68 = scmp.ne.s32.totalorder %s51, %s67
      %p69 = scmp.eq.s32.totalorder %s22, 0
      %p70 = por %p68, %p69
      %s71 = ssub.s32 %s23, %s42
      %s72 = ssub.s32 %s25, %s34
      %s73 = sor.u32 %s71, %s72
      %p74 = scmp.eq.s32.totalorder %s73, 0
      %s76 = sadd.s32 %s75, 1
      %s77 = scalar_select %p74, %s75, %s76
      %p80 = pneg %p74
      %p81 = scmp.eq.s32.totalorder %s16, 1
      %p82 = por %p80, %p81
      %p83 = scmp.ne.s32.totalorder %s75, %s78
      %p84 = scmp.eq.s32.totalorder %s16, 0
      %p85 = por %p83, %p84
      %p86 = scmp.ne.s32.totalorder %s75, %s78
      %p87 = scmp.eq.s32.totalorder %s21, 1
      %p88 = por %p86, %p87
      %p89 = scmp.ne.s32.totalorder %s78, %s79
      %p90 = scmp.eq.s32.totalorder %s21, 0
      %p91 = por %p89, %p90
      %p92 = scmp.ne.s32.totalorder %s78, %s79
      %p93 = scmp.eq.s32.totalorder %s22, 1
      %p94 = por %p92, %p93
      %p96 = scmp.ne.s32.totalorder %s79, %s95
      %p97 = scmp.eq.s32.totalorder %s22, 0
      %p98 = por %p96, %p97
      %s100 = sadd.s32 %s99, 1
      %p103 = scmp.eq.s32.totalorder %s16, 1
      %p104 = scmp.ne.s32.totalorder %s99, %s101
      %p105 = scmp.eq.s32.totalorder %s16, 0
      %p106 = por %p104, %p105
      %p107 = scmp.ne.s32.totalorder %s99, %s101
      %p108 = scmp.eq.s32.totalorder %s21, 1
      %p109 = por %p107, %p108
      %p110 = scmp.ne.s32.totalorder %s101, %s102
      %p111 = scmp.eq.s32.totalorder %s21, 0
      %p112 = por %p110, %p111
      %p113 = scmp.ne.s32.totalorder %s101, %s102
      %p114 = scmp.eq.s32.totalorder %s22, 1
      %p115 = por %p113, %p114
      %p117 = scmp.ne.s32.totalorder %s102, %s116
      %p118 = scmp.eq.s32.totalorder %s22, 0
      %p119 = por %p117, %p118
      %s121 = sadd.s32 %s120, 1
      %p124 = scmp.eq.s32.totalorder %s16, 1
      %p125 = scmp.ne.s32.totalorder %s120, %s122
      %p126 = scmp.eq.s32.totalorder %s16, 0
      %p127 = por %p125, %p126
      %p128 = scmp.ne.s32.totalorder %s120, %s122
      %p129 = scmp.eq.s32.totalorder %s21, 1
      %p130 = por %p128, %p129
      %p131 = scmp.ne.s32.totalorder %s122, %s123
      %p132 = scmp.eq.s32.totalorder %s21, 0
      %p133 = por %p131, %p132
      %p134 = scmp.ne.s32.totalorder %s122, %s123
      %p135 = scmp.eq.s32.totalorder %s22, 1
      %p136 = por %p134, %p135
      %p138 = scmp.ne.s32.totalorder %s123, %s137
      %p139 = scmp.eq.s32.totalorder %s22, 0
      %p140 = por %p138, %p139
      %s142 = sadd.s32 %s141, 1
      %p145 = scmp.eq.s32.totalorder %s16, 1
      %p146 = scmp.ne.s32.totalorder %s141, %s143
      %p147 = scmp.eq.s32.totalorder %s16, 0
      %p148 = por %p146, %p147
      %p149 = scmp.ne.s32.totalorder %s141, %s143
      %p150 = scmp.eq.s32.totalorder %s21, 1
      %p151 = por %p149, %p150
      %p152 = scmp.ne.s32.totalorder %s143, %s144
      %p153 = scmp.eq.s32.totalorder %s21, 0
      %p154 = por %p152, %p153
      %p155 = scmp.ne.s32.totalorder %s143, %s144
      %p156 = scmp.eq.s32.totalorder %s22, 1
      %p157 = por %p155, %p156
      %p159 = scmp.ne.s32.totalorder %s144, %s158
      %p160 = scmp.eq.s32.totalorder %s22, 0
      %p161 = por %p159, %p160
      %s163 = sadd.s32 %s162, 1
      %p166 = scmp.eq.s32.totalorder %s16, 1
      %p167 = scmp.ne.s32.totalorder %s162, %s164
      %p168 = scmp.eq.s32.totalorder %s16, 0
      %p169 = por %p167, %p168
      %p170 = scmp.ne.s32.totalorder %s162, %s164
      %p171 = scmp.eq.s32.totalorder %s21, 1
      %p172 = por %p170, %p171
      %p173 = scmp.ne.s32.totalorder %s164, %s165
      %p174 = scmp.eq.s32.totalorder %s21, 0
      %p175 = por %p173, %p174
      %p176 = scmp.ne.s32.totalorder %s164, %s165
      %p177 = scmp.eq.s32.totalorder %s22, 1
      %p178 = por %p176, %p177
      %p180 = scmp.ne.s32.totalorder %s165, %s179
      %p181 = scmp.eq.s32.totalorder %s22, 0
      %p182 = por %p180, %p181
      %s184 = sadd.s32 %s183, 1
      %p187 = scmp.eq.s32.totalorder %s16, 1
      %p188 = scmp.ne.s32.totalorder %s183, %s185
      %p189 = scmp.eq.s32.totalorder %s16, 0
      %p190 = por %p188, %p189
      %p191 = scmp.ne.s32.totalorder %s183, %s185
      %p192 = scmp.eq.s32.totalorder %s21, 1
      %p193 = por %p191, %p192
      %p194 = scmp.ne.s32.totalorder %s185, %s186
      %p195 = scmp.eq.s32.totalorder %s21, 0
      %p196 = por %p194, %p195
      %p197 = scmp.ne.s32.totalorder %s185, %s186
      %p198 = scmp.eq.s32.totalorder %s22, 1
      %p199 = por %p197, %p198
      %p201 = scmp.ne.s32.totalorder %s186, %s200
      %p202 = scmp.eq.s32.totalorder %s22, 0
      %p203 = por %p201, %p202
      %s204 = ssub.s32 %s23, %s42
      %s205 = ssub.s32 %s24, %s38
      %s206 = sor.u32 %s204, %s205
      %p207 = scmp.eq.s32.totalorder %s206, 0
      %s209 = sadd.s32 %s208, 1
      %s210 = scalar_select %p207, %s208, %s209
      %p213 = pneg %p207
      %p214 = scmp.eq.s32.totalorder %s16, 1
      %p215 = por %p213, %p214
      %p216 = scmp.ne.s32.totalorder %s208, %s211
      %p217 = scmp.eq.s32.totalorder %s16, 0
      %p218 = por %p216, %p217
      %p219 = scmp.ne.s32.totalorder %s208, %s211
      %p220 = scmp.eq.s32.totalorder %s21, 1
      %p221 = por %p219, %p220
      %p222 = scmp.ne.s32.totalorder %s211, %s212
      %p223 = scmp.eq.s32.totalorder %s21, 0
      %p224 = por %p222, %p223
      %p225 = scmp.ne.s32.totalorder %s211, %s212
      %p226 = scmp.eq.s32.totalorder %s22, 1
      %p227 = por %p225, %p226
      %p229 = scmp.ne.s32.totalorder %s212, %s228
      %p230 = scmp.eq.s32.totalorder %s22, 0
      %p231 = por %p229, %p230
      %p232 = scmp.le.s32.totalorder 1, %s16
      %p233 = scmp.lt.s32.totalorder %s16, 3
      %p234 = pnand %p232, %p233
      %p235 = pneg %p234
      // Predicated region
      $region9: #{tpu_custom_call.1} parent=5 // pred_check
        _
      $region10: #{tpu_custom_call.1} parent=5 // pred_check_branch
        %237 = sbr.rel (%p234) target = $region12
      $region11: #{tpu_custom_call.1} parent=5 // pred_region
        %s238 = ssub.s32 %s16, 1
        // Predicated region
        $region13: #{tpu_custom_call.1} parent=11 // pred_check
          %p239 = pneg %p112
        $region14: #{tpu_custom_call.1} parent=11 // pred_check_branch
          %241 = sbr.rel (%p239) target = $region16
        $region15: #{tpu_custom_call.1} parent=11 // pred_region
          _
        $region16: #{tpu_custom_call.1} parent=11 // pred_fallthru
          _
        // Predicated region
        $region17: #{tpu_custom_call.1} parent=11 // pred_check
          %p242 = pneg %p133
        $region18: #{tpu_custom_call.1} parent=11 // pred_check_branch
          %244 = sbr.rel (%p242) target = $region20
        $region19: #{tpu_custom_call.1} parent=11 // pred_region
          _
        $region20: #{tpu_custom_call.1} parent=11 // pred_fallthru
          _
        // Predicated region
        $region21: #{tpu_custom_call.1} parent=11 // pred_check
          %p245 = pneg %p154
        $region22: #{tpu_custom_call.1} parent=11 // pred_check_branch
          %247 = sbr.rel (%p245) target = $region24
        $region23: #{tpu_custom_call.1} parent=11 // pred_region
          _
        $region24: #{tpu_custom_call.1} parent=11 // pred_fallthru
          _
        // Predicated region
        $region25: #{tpu_custom_call.1} parent=11 // pred_check
          %p248 = pneg %p175
        $region26: #{tpu_custom_call.1} parent=11 // pred_check_branch
          %250 = sbr.rel (%p248) target = $region28
        $region27: #{tpu_custom_call.1} parent=11 // pred_region
          _
        $region28: #{tpu_custom_call.1} parent=11 // pred_fallthru
          _
        // Predicated region
        $region29: #{tpu_custom_call.1} parent=11 // pred_check
          %p251 = pneg %p196
        $region30: #{tpu_custom_call.1} parent=11 // pred_check_branch
          %253 = sbr.rel (%p251) target = $region32
        $region31: #{tpu_custom_call.1} parent=11 // pred_region
          _
        $region32: #{tpu_custom_call.1} parent=11 // pred_fallthru
          _
      $region12: #{tpu_custom_call.1} parent=5 // pred_fallthru
        _
      %p254 = scmp.lt.s32.totalorder %s16, 2
      // Predicated region
      $region33: #{tpu_custom_call.1} parent=5 // pred_check
        %p255 = pneg %p254
      $region34: #{tpu_custom_call.1} parent=5 // pred_check_branch
        %257 = sbr.rel (%p255) target = $region36
      $region35: #{tpu_custom_call.1} parent=5 // pred_region
        // Predicated region
        $region37: #{tpu_custom_call.1} parent=35 // pred_check
          %p258 = pneg %p57
        $region38: #{tpu_custom_call.1} parent=35 // pred_check_branch
          %260 = sbr.rel (%p258) target = $region40
        $region39: #{tpu_custom_call.1} parent=35 // pred_region
          %s261 = smul.u32 32, %s24
          %p262 = scmp.lt.s32.totalorder %s23, 1
          %s263 = scalar_select %p262, %s23, 1
          %p264 = scmp.lt.s32.totalorder %s261, 31
          %s265 = scalar_select %p264, %s261, 31
          %s266 = smul.addr %s263, 32
          %s267 = sadd.s32 %s265, %s266
          %s268 = smul.addr %s267, 4
          %s269 = scalar_lea.vmem %s0, %s268
          %s270 = smul.u32 32, %s24
        $region40: #{tpu_custom_call.1} parent=35 // pred_fallthru
          _
        // Predicated region
        $region41: #{tpu_custom_call.1} parent=35 // pred_check
          %p271 = pneg %p85
        $region42: #{tpu_custom_call.1} parent=35 // pred_check_branch
          %273 = sbr.rel (%p271) target = $region44
        $region43: #{tpu_custom_call.1} parent=35 // pred_region
          %s274 = smul.u32 2, %s25
          %p275 = scmp.lt.s32.totalorder %s23, 1
          %s276 = scalar_select %p275, %s23, 1
          %p277 = scmp.lt.s32.totalorder %s274, 1
          %s278 = scalar_select %p277, %s274, 1
          %s279 = smul.addr %s276, 2
          %s280 = sadd.s32 %s278, %s279
          %s281 = smul.addr %s280, 2
          %s282 = scalar_lea.vmem %s1, %s281
          %s283 = smul.u32 2, %s25
        $region44: #{tpu_custom_call.1} parent=35 // pred_fallthru
          _
      $region36: #{tpu_custom_call.1} parent=5 // pred_fallthru
        _
      %p284 = scmp.le.s32.totalorder 1, %s16
      %p285 = scmp.lt.s32.totalorder %s16, 3
      %p286 = pnand %p284, %p285
      %p287 = pneg %p286
      // Predicated region
      $region45: #{tpu_custom_call.1} parent=5 // pred_check
        _
      $region46: #{tpu_custom_call.1} parent=5 // pred_check_branch
        %289 = sbr.rel (%p286) target = $region48
      $region47: #{tpu_custom_call.1} parent=5 // pred_region
        %s290 = ssub.s32 %s16, 1
        %s291 = smul.u32 32, %s27
        %p292 = scmp.lt.s32.totalorder %s26, 1
        %s293 = scalar_select %p292, %s26, 1
        %p294 = scmp.lt.s32.totalorder %s291, 31
        %s295 = scalar_select %p294, %s291, 31
        %s296 = smul.addr %s293, 32
        %s297 = sadd.s32 %s295, %s296
        %s298 = smul.addr %s297, 4
        %s299 = scalar_lea.vmem %s0, %s298
        %p300 = pneg %p63
        %p301 = pneg %p60
        %s302 = smul.u32 2, %s28
        %p303 = scmp.lt.s32.totalorder %s26, 1
        %s304 = scalar_select %p303, %s26, 1
        %p305 = scmp.lt.s32.totalorder %s302, 1
        %s306 = scalar_select %p305, %s302, 1
        %s307 = smul.addr %s304, 2
        %s308 = sadd.s32 %s306, %s307
        %s309 = smul.addr %s308, 2
        %s310 = scalar_lea.vmem %s1, %s309
        %p311 = pneg %p91
        %p312 = pneg %p88
        %p313 = pneg %p112
        %p314 = pneg %p109
        %p315 = pneg %p133
        %p316 = pneg %p130
        %p317 = pneg %p154
        %p318 = pneg %p151
        %p319 = pneg %p175
        %p320 = pneg %p172
        %p321 = pneg %p196
        %p322 = pneg %p193
        %p323 = pneg %p224
        %p324 = pneg %p221
        %s325 = sand.u32 %s211, 1
        %s326 = scalar_lea.sflag [#allocation7], %s325
        %s327 = sand.u32 %s211, 1
        %s328 = smul.addr %s327, 8
        %s329 = scalar_lea.vmem [#allocation6], %s328
        %s330 = smul.u32 32, %s27
        %p331 = scmp.lt.s32.totalorder %s26, 1
        %s332 = scalar_select %p331, %s26, 1
        %p333 = scmp.lt.s32.totalorder %s330, 31
        %s334 = scalar_select %p333, %s330, 31
        %s335 = smul.addr %s332, 32
        %s336 = sadd.s32 %s334, %s335
        %s337 = smul.addr %s336, 4
        %s338 = scalar_lea.vmem %s0, %s337
        %s339 = smul.u32 32, %s27
        %s340 = smul.u32 2, %s28
        %p341 = scmp.lt.s32.totalorder %s26, 1
        %s342 = scalar_select %p341, %s26, 1
        %p343 = scmp.lt.s32.totalorder %s340, 1
        %s344 = scalar_select %p343, %s340, 1
        %s345 = smul.addr %s342, 2
        %s346 = sadd.s32 %s344, %s345
        %s347 = smul.addr %s346, 2
        %s348 = scalar_lea.vmem %s1, %s347
        %s349 = smul.u32 2, %s28
        %s350 = smul.u32 2, %s27
        %p352 = scmp.eq.s32.totalorder %s28, 0
        // Predicated region
        $region49: #{tpu_custom_call.1} parent=47 // pred_check
          %p353 = pneg %p352
        $region50: #{tpu_custom_call.1} parent=47 // pred_check_branch
          %355 = sbr.rel (%p353) target = $region52
        $region51: #{tpu_custom_call.1} parent=47 // pred_region
          %vm356 = vcmask 7168
          %357 = vst.msk [vmem:[#allocation3] sm:$0xff] %vm356, -inf
          %358 = vst.msk [vmem:[#allocation3 + $0x8] sm:$0xff] %vm356, -inf
          %359 = vst.msk [vmem:[#allocation3 + $0x10] sm:$0xff] %vm356, -inf
          %360 = vst.msk [vmem:[#allocation3 + $0x18] sm:$0xff] %vm356, -inf
          %361 = vst.msk [vmem:[#allocation3 + $0x20] sm:$0xff] %vm356, -inf
          %362 = vst.msk [vmem:[#allocation3 + $0x28] sm:$0xff] %vm356, -inf
          %363 = vst.msk [vmem:[#allocation3 + $0x30] sm:$0xff] %vm356, -inf
          %364 = vst.msk [vmem:[#allocation3 + $0x38] sm:$0xff] %vm356, -inf
          %365 = vst.msk [vmem:[#allocation3 + $0x40] sm:$0xff] %vm356, -inf
          %366 = vst.msk [vmem:[#allocation3 + $0x48] sm:$0xff] %vm356, -inf
          %367 = vst.msk [vmem:[#allocation3 + $0x50] sm:$0xff] %vm356, -inf
          %368 = vst.msk [vmem:[#allocation3 + $0x58] sm:$0xff] %vm356, -inf
          %369 = vst.msk [vmem:[#allocation3 + $0x60] sm:$0xff] %vm356, -inf
          %370 = vst.msk [vmem:[#allocation3 + $0x68] sm:$0xff] %vm356, -inf
          %371 = vst.msk [vmem:[#allocation3 + $0x70] sm:$0xff] %vm356, -inf
          %372 = vst.msk [vmem:[#allocation3 + $0x78] sm:$0xff] %vm356, -inf
          %373 = vst.msk [vmem:[#allocation3 + $0x80] sm:$0xff] %vm356, -inf
          %374 = vst.msk [vmem:[#allocation3 + $0x88] sm:$0xff] %vm356, -inf
          %375 = vst.msk [vmem:[#allocation3 + $0x90] sm:$0xff] %vm356, -inf
          %376 = vst.msk [vmem:[#allocation3 + $0x98] sm:$0xff] %vm356, -inf
          %377 = vst.msk [vmem:[#allocation3 + $0xa0] sm:$0xff] %vm356, -inf
          %378 = vst.msk [vmem:[#allocation3 + $0xa8] sm:$0xff] %vm356, -inf
          %379 = vst.msk [vmem:[#allocation3 + $0xb0] sm:$0xff] %vm356, -inf
          %380 = vst.msk [vmem:[#allocation3 + $0xb8] sm:$0xff] %vm356, -inf
          %381 = vst.msk [vmem:[#allocation3 + $0xc0] sm:$0xff] %vm356, -inf
          %382 = vst.msk [vmem:[#allocation3 + $0xc8] sm:$0xff] %vm356, -inf
          %383 = vst.msk [vmem:[#allocation3 + $0xd0] sm:$0xff] %vm356, -inf
          %384 = vst.msk [vmem:[#allocation3 + $0xd8] sm:$0xff] %vm356, -inf
          %385 = vst.msk [vmem:[#allocation3 + $0xe0] sm:$0xff] %vm356, -inf
          %386 = vst.msk [vmem:[#allocation3 + $0xe8] sm:$0xff] %vm356, -inf
          %387 = vst.msk [vmem:[#allocation3 + $0xf0] sm:$0xff] %vm356, -inf
          %388 = vst.msk [vmem:[#allocation3 + $0xf8] sm:$0xff] %vm356, -inf
          %389 = vst.msk [vmem:[#allocation3 + $0x100] sm:$0xff] %vm356, -inf
          %390 = vst.msk [vmem:[#allocation3 + $0x108] sm:$0xff] %vm356, -inf
          %391 = vst.msk [vmem:[#allocation3 + $0x110] sm:$0xff] %vm356, -inf
          %392 = vst.msk [vmem:[#allocation3 + $0x118] sm:$0xff] %vm356, -inf
          %393 = vst.msk [vmem:[#allocation3 + $0x120] sm:$0xff] %vm356, -inf
          %394 = vst.msk [vmem:[#allocation3 + $0x128] sm:$0xff] %vm356, -inf
          %395 = vst.msk [vmem:[#allocation3 + $0x130] sm:$0xff] %vm356, -inf
          %396 = vst.msk [vmem:[#allocation3 + $0x138] sm:$0xff] %vm356, -inf
          %397 = vst.msk [vmem:[#allocation3 + $0x140] sm:$0xff] %vm356, -inf
          %398 = vst.msk [vmem:[#allocation3 + $0x148] sm:$0xff] %vm356, -inf
          %399 = vst.msk [vmem:[#allocation3 + $0x150] sm:$0xff] %vm356, -inf
          %400 = vst.msk [vmem:[#allocation3 + $0x158] sm:$0xff] %vm356, -inf
          %401 = vst.msk [vmem:[#allocation3 + $0x160] sm:$0xff] %vm356, -inf
          %402 = vst.msk [vmem:[#allocation3 + $0x168] sm:$0xff] %vm356, -inf
          %403 = vst.msk [vmem:[#allocation3 + $0x170] sm:$0xff] %vm356, -inf
          %404 = vst.msk [vmem:[#allocation3 + $0x178] sm:$0xff] %vm356, -inf
          %405 = vst.msk [vmem:[#allocation3 + $0x180] sm:$0xff] %vm356, -inf
          %406 = vst.msk [vmem:[#allocation3 + $0x188] sm:$0xff] %vm356, -inf
          %407 = vst.msk [vmem:[#allocation3 + $0x190] sm:$0xff] %vm356, -inf
          %408 = vst.msk [vmem:[#allocation3 + $0x198] sm:$0xff] %vm356, -inf
          %409 = vst.msk [vmem:[#allocation3 + $0x1a0] sm:$0xff] %vm356, -inf
          %410 = vst.msk [vmem:[#allocation3 + $0x1a8] sm:$0xff] %vm356, -inf
          %411 = vst.msk [vmem:[#allocation3 + $0x1b0] sm:$0xff] %vm356, -inf
          %412 = vst.msk [vmem:[#allocation3 + $0x1b8] sm:$0xff] %vm356, -inf
          %413 = vst.msk [vmem:[#allocation3 + $0x1c0] sm:$0xff] %vm356, -inf
          %414 = vst.msk [vmem:[#allocation3 + $0x1c8] sm:$0xff] %vm356, -inf
          %415 = vst.msk [vmem:[#allocation3 + $0x1d0] sm:$0xff] %vm356, -inf
          %416 = vst.msk [vmem:[#allocation3 + $0x1d8] sm:$0xff] %vm356, -inf
          %417 = vst.msk [vmem:[#allocation3 + $0x1e0] sm:$0xff] %vm356, -inf
          %418 = vst.msk [vmem:[#allocation3 + $0x1e8] sm:$0xff] %vm356, -inf
          %419 = vst.msk [vmem:[#allocation3 + $0x1f0] sm:$0xff] %vm356, -inf
          %420 = vst.msk [vmem:[#allocation3 + $0x1f8] sm:$0xff] %vm356, -inf
          %421 = vst.msk [vmem:[#allocation3 + $0x200] sm:$0xff] %vm356, -inf
          %422 = vst.msk [vmem:[#allocation3 + $0x208] sm:$0xff] %vm356, -inf
          %423 = vst.msk [vmem:[#allocation3 + $0x210] sm:$0xff] %vm356, -inf
          %424 = vst.msk [vmem:[#allocation3 + $0x218] sm:$0xff] %vm356, -inf
          %425 = vst.msk [vmem:[#allocation3 + $0x220] sm:$0xff] %vm356, -inf
          %426 = vst.msk [vmem:[#allocation3 + $0x228] sm:$0xff] %vm356, -inf
          %427 = vst.msk [vmem:[#allocation3 + $0x230] sm:$0xff] %vm356, -inf
          %428 = vst.msk [vmem:[#allocation3 + $0x238] sm:$0xff] %vm356, -inf
          %429 = vst.msk [vmem:[#allocation3 + $0x240] sm:$0xff] %vm356, -inf
          %430 = vst.msk [vmem:[#allocation3 + $0x248] sm:$0xff] %vm356, -inf
          %431 = vst.msk [vmem:[#allocation3 + $0x250] sm:$0xff] %vm356, -inf
          %432 = vst.msk [vmem:[#allocation3 + $0x258] sm:$0xff] %vm356, -inf
          %433 = vst.msk [vmem:[#allocation3 + $0x260] sm:$0xff] %vm356, -inf
          %434 = vst.msk [vmem:[#allocation3 + $0x268] sm:$0xff] %vm356, -inf
          %435 = vst.msk [vmem:[#allocation3 + $0x270] sm:$0xff] %vm356, -inf
          %436 = vst.msk [vmem:[#allocation3 + $0x278] sm:$0xff] %vm356, -inf
          %437 = vst.msk [vmem:[#allocation3 + $0x280] sm:$0xff] %vm356, -inf
          %438 = vst.msk [vmem:[#allocation3 + $0x288] sm:$0xff] %vm356, -inf
          %439 = vst.msk [vmem:[#allocation3 + $0x290] sm:$0xff] %vm356, -inf
          %440 = vst.msk [vmem:[#allocation3 + $0x298] sm:$0xff] %vm356, -inf
          %441 = vst.msk [vmem:[#allocation3 + $0x2a0] sm:$0xff] %vm356, -inf
          %442 = vst.msk [vmem:[#allocation3 + $0x2a8] sm:$0xff] %vm356, -inf
          %443 = vst.msk [vmem:[#allocation3 + $0x2b0] sm:$0xff] %vm356, -inf
          %444 = vst.msk [vmem:[#allocation3 + $0x2b8] sm:$0xff] %vm356, -inf
          %445 = vst.msk [vmem:[#allocation3 + $0x2c0] sm:$0xff] %vm356, -inf
          %446 = vst.msk [vmem:[#allocation3 + $0x2c8] sm:$0xff] %vm356, -inf
          %447 = vst.msk [vmem:[#allocation3 + $0x2d0] sm:$0xff] %vm356, -inf
          %448 = vst.msk [vmem:[#allocation3 + $0x2d8] sm:$0xff] %vm356, -inf
          %449 = vst.msk [vmem:[#allocation3 + $0x2e0] sm:$0xff] %vm356, -inf
          %450 = vst.msk [vmem:[#allocation3 + $0x2e8] sm:$0xff] %vm356, -inf
          %451 = vst.msk [vmem:[#allocation3 + $0x2f0] sm:$0xff] %vm356, -inf
          %452 = vst.msk [vmem:[#allocation3 + $0x2f8] sm:$0xff] %vm356, -inf
          %453 = vst.msk [vmem:[#allocation3 + $0x300] sm:$0xff] %vm356, -inf
          %454 = vst.msk [vmem:[#allocation3 + $0x308] sm:$0xff] %vm356, -inf
          %455 = vst.msk [vmem:[#allocation3 + $0x310] sm:$0xff] %vm356, -inf
          %456 = vst.msk [vmem:[#allocation3 + $0x318] sm:$0xff] %vm356, -inf
          %457 = vst.msk [vmem:[#allocation3 + $0x320] sm:$0xff] %vm356, -inf
          %458 = vst.msk [vmem:[#allocation3 + $0x328] sm:$0xff] %vm356, -inf
          %459 = vst.msk [vmem:[#allocation3 + $0x330] sm:$0xff] %vm356, -inf
          %460 = vst.msk [vmem:[#allocation3 + $0x338] sm:$0xff] %vm356, -inf
          %461 = vst.msk [vmem:[#allocation3 + $0x340] sm:$0xff] %vm356, -inf
          %462 = vst.msk [vmem:[#allocation3 + $0x348] sm:$0xff] %vm356, -inf
          %463 = vst.msk [vmem:[#allocation3 + $0x350] sm:$0xff] %vm356, -inf
          %464 = vst.msk [vmem:[#allocation3 + $0x358] sm:$0xff] %vm356, -inf
          %465 = vst.msk [vmem:[#allocation3 + $0x360] sm:$0xff] %vm356, -inf
          %466 = vst.msk [vmem:[#allocation3 + $0x368] sm:$0xff] %vm356, -inf
          %467 = vst.msk [vmem:[#allocation3 + $0x370] sm:$0xff] %vm356, -inf
          %468 = vst.msk [vmem:[#allocation3 + $0x378] sm:$0xff] %vm356, -inf
          %469 = vst.msk [vmem:[#allocation3 + $0x380] sm:$0xff] %vm356, -inf
          %470 = vst.msk [vmem:[#allocation3 + $0x388] sm:$0xff] %vm356, -inf
          %471 = vst.msk [vmem:[#allocation3 + $0x390] sm:$0xff] %vm356, -inf
          %472 = vst.msk [vmem:[#allocation3 + $0x398] sm:$0xff] %vm356, -inf
          %473 = vst.msk [vmem:[#allocation3 + $0x3a0] sm:$0xff] %vm356, -inf
          %474 = vst.msk [vmem:[#allocation3 + $0x3a8] sm:$0xff] %vm356, -inf
          %475 = vst.msk [vmem:[#allocation3 + $0x3b0] sm:$0xff] %vm356, -inf
          %476 = vst.msk [vmem:[#allocation3 + $0x3b8] sm:$0xff] %vm356, -inf
          %477 = vst.msk [vmem:[#allocation3 + $0x3c0] sm:$0xff] %vm356, -inf
          %478 = vst.msk [vmem:[#allocation3 + $0x3c8] sm:$0xff] %vm356, -inf
          %479 = vst.msk [vmem:[#allocation3 + $0x3d0] sm:$0xff] %vm356, -inf
          %480 = vst.msk [vmem:[#allocation3 + $0x3d8] sm:$0xff] %vm356, -inf
          %481 = vst.msk [vmem:[#allocation3 + $0x3e0] sm:$0xff] %vm356, -inf
          %482 = vst.msk [vmem:[#allocation3 + $0x3e8] sm:$0xff] %vm356, -inf
          %483 = vst.msk [vmem:[#allocation3 + $0x3f0] sm:$0xff] %vm356, -inf
          %484 = vst.msk [vmem:[#allocation3 + $0x3f8] sm:$0xff] %vm356, -inf
          %485 = vst.msk [vmem:[#allocation4] sm:$0xff] %vm356, 0.0
          %486 = vst.msk [vmem:[#allocation4 + $0x8] sm:$0xff] %vm356, 0.0
          %487 = vst.msk [vmem:[#allocation4 + $0x10] sm:$0xff] %vm356, 0.0
          %488 = vst.msk [vmem:[#allocation4 + $0x18] sm:$0xff] %vm356, 0.0
          %489 = vst.msk [vmem:[#allocation4 + $0x20] sm:$0xff] %vm356, 0.0
          %490 = vst.msk [vmem:[#allocation4 + $0x28] sm:$0xff] %vm356, 0.0
          %491 = vst.msk [vmem:[#allocation4 + $0x30] sm:$0xff] %vm356, 0.0
          %492 = vst.msk [vmem:[#allocation4 + $0x38] sm:$0xff] %vm356, 0.0
          %493 = vst.msk [vmem:[#allocation4 + $0x40] sm:$0xff] %vm356, 0.0
          %494 = vst.msk [vmem:[#allocation4 + $0x48] sm:$0xff] %vm356, 0.0
          %495 = vst.msk [vmem:[#allocation4 + $0x50] sm:$0xff] %vm356, 0.0
          %496 = vst.msk [vmem:[#allocation4 + $0x58] sm:$0xff] %vm356, 0.0
          %497 = vst.msk [vmem:[#allocation4 + $0x60] sm:$0xff] %vm356, 0.0
          %498 = vst.msk [vmem:[#allocation4 + $0x68] sm:$0xff] %vm356, 0.0
          %499 = vst.msk [vmem:[#allocation4 + $0x70] sm:$0xff] %vm356, 0.0
          %500 = vst.msk [vmem:[#allocation4 + $0x78] sm:$0xff] %vm356, 0.0
          %501 = vst.msk [vmem:[#allocation4 + $0x80] sm:$0xff] %vm356, 0.0
          %502 = vst.msk [vmem:[#allocation4 + $0x88] sm:$0xff] %vm356, 0.0
          %503 = vst.msk [vmem:[#allocation4 + $0x90] sm:$0xff] %vm356, 0.0
          %504 = vst.msk [vmem:[#allocation4 + $0x98] sm:$0xff] %vm356, 0.0
          %505 = vst.msk [vmem:[#allocation4 + $0xa0] sm:$0xff] %vm356, 0.0
          %506 = vst.msk [vmem:[#allocation4 + $0xa8] sm:$0xff] %vm356, 0.0
          %507 = vst.msk [vmem:[#allocation4 + $0xb0] sm:$0xff] %vm356, 0.0
          %508 = vst.msk [vmem:[#allocation4 + $0xb8] sm:$0xff] %vm356, 0.0
          %509 = vst.msk [vmem:[#allocation4 + $0xc0] sm:$0xff] %vm356, 0.0
          %510 = vst.msk [vmem:[#allocation4 + $0xc8] sm:$0xff] %vm356, 0.0
          %511 = vst.msk [vmem:[#allocation4 + $0xd0] sm:$0xff] %vm356, 0.0
          %512 = vst.msk [vmem:[#allocation4 + $0xd8] sm:$0xff] %vm356, 0.0
          %513 = vst.msk [vmem:[#allocation4 + $0xe0] sm:$0xff] %vm356, 0.0
          %514 = vst.msk [vmem:[#allocation4 + $0xe8] sm:$0xff] %vm356, 0.0
          %515 = vst.msk [vmem:[#allocation4 + $0xf0] sm:$0xff] %vm356, 0.0
          %516 = vst.msk [vmem:[#allocation4 + $0xf8] sm:$0xff] %vm356, 0.0
          %517 = vst.msk [vmem:[#allocation4 + $0x100] sm:$0xff] %vm356, 0.0
          %518 = vst.msk [vmem:[#allocation4 + $0x108] sm:$0xff] %vm356, 0.0
          %519 = vst.msk [vmem:[#allocation4 + $0x110] sm:$0xff] %vm356, 0.0
          %520 = vst.msk [vmem:[#allocation4 + $0x118] sm:$0xff] %vm356, 0.0
          %521 = vst.msk [vmem:[#allocation4 + $0x120] sm:$0xff] %vm356, 0.0
          %522 = vst.msk [vmem:[#allocation4 + $0x128] sm:$0xff] %vm356, 0.0
          %523 = vst.msk [vmem:[#allocation4 + $0x130] sm:$0xff] %vm356, 0.0
          %524 = vst.msk [vmem:[#allocation4 + $0x138] sm:$0xff] %vm356, 0.0
          %525 = vst.msk [vmem:[#allocation4 + $0x140] sm:$0xff] %vm356, 0.0
          %526 = vst.msk [vmem:[#allocation4 + $0x148] sm:$0xff] %vm356, 0.0
          %527 = vst.msk [vmem:[#allocation4 + $0x150] sm:$0xff] %vm356, 0.0
          %528 = vst.msk [vmem:[#allocation4 + $0x158] sm:$0xff] %vm356, 0.0
          %529 = vst.msk [vmem:[#allocation4 + $0x160] sm:$0xff] %vm356, 0.0
          %530 = vst.msk [vmem:[#allocation4 + $0x168] sm:$0xff] %vm356, 0.0
          %531 = vst.msk [vmem:[#allocation4 + $0x170] sm:$0xff] %vm356, 0.0
          %532 = vst.msk [vmem:[#allocation4 + $0x178] sm:$0xff] %vm356, 0.0
          %533 = vst.msk [vmem:[#allocation4 + $0x180] sm:$0xff] %vm356, 0.0
          %534 = vst.msk [vmem:[#allocation4 + $0x188] sm:$0xff] %vm356, 0.0
          %535 = vst.msk [vmem:[#allocation4 + $0x190] sm:$0xff] %vm356, 0.0
          %536 = vst.msk [vmem:[#allocation4 + $0x198] sm:$0xff] %vm356, 0.0
          %537 = vst.msk [vmem:[#allocation4 + $0x1a0] sm:$0xff] %vm356, 0.0
          %538 = vst.msk [vmem:[#allocation4 + $0x1a8] sm:$0xff] %vm356, 0.0
          %539 = vst.msk [vmem:[#allocation4 + $0x1b0] sm:$0xff] %vm356, 0.0
          %540 = vst.msk [vmem:[#allocation4 + $0x1b8] sm:$0xff] %vm356, 0.0
          %541 = vst.msk [vmem:[#allocation4 + $0x1c0] sm:$0xff] %vm356, 0.0
          %542 = vst.msk [vmem:[#allocation4 + $0x1c8] sm:$0xff] %vm356, 0.0
          %543 = vst.msk [vmem:[#allocation4 + $0x1d0] sm:$0xff] %vm356, 0.0
          %544 = vst.msk [vmem:[#allocation4 + $0x1d8] sm:$0xff] %vm356, 0.0
          %545 = vst.msk [vmem:[#allocation4 + $0x1e0] sm:$0xff] %vm356, 0.0
          %546 = vst.msk [vmem:[#allocation4 + $0x1e8] sm:$0xff] %vm356, 0.0
          %547 = vst.msk [vmem:[#allocation4 + $0x1f0] sm:$0xff] %vm356, 0.0
          %548 = vst.msk [vmem:[#allocation4 + $0x1f8] sm:$0xff] %vm356, 0.0
          %549 = vst.msk [vmem:[#allocation4 + $0x200] sm:$0xff] %vm356, 0.0
          %550 = vst.msk [vmem:[#allocation4 + $0x208] sm:$0xff] %vm356, 0.0
          %551 = vst.msk [vmem:[#allocation4 + $0x210] sm:$0xff] %vm356, 0.0
          %552 = vst.msk [vmem:[#allocation4 + $0x218] sm:$0xff] %vm356, 0.0
          %553 = vst.msk [vmem:[#allocation4 + $0x220] sm:$0xff] %vm356, 0.0
          %554 = vst.msk [vmem:[#allocation4 + $0x228] sm:$0xff] %vm356, 0.0
          %555 = vst.msk [vmem:[#allocation4 + $0x230] sm:$0xff] %vm356, 0.0
          %556 = vst.msk [vmem:[#allocation4 + $0x238] sm:$0xff] %vm356, 0.0
          %557 = vst.msk [vmem:[#allocation4 + $0x240] sm:$0xff] %vm356, 0.0
          %558 = vst.msk [vmem:[#allocation4 + $0x248] sm:$0xff] %vm356, 0.0
          %559 = vst.msk [vmem:[#allocation4 + $0x250] sm:$0xff] %vm356, 0.0
          %560 = vst.msk [vmem:[#allocation4 + $0x258] sm:$0xff] %vm356, 0.0
          %561 = vst.msk [vmem:[#allocation4 + $0x260] sm:$0xff] %vm356, 0.0
          %562 = vst.msk [vmem:[#allocation4 + $0x268] sm:$0xff] %vm356, 0.0
          %563 = vst.msk [vmem:[#allocation4 + $0x270] sm:$0xff] %vm356, 0.0
          %564 = vst.msk [vmem:[#allocation4 + $0x278] sm:$0xff] %vm356, 0.0
          %565 = vst.msk [vmem:[#allocation4 + $0x280] sm:$0xff] %vm356, 0.0
          %566 = vst.msk [vmem:[#allocation4 + $0x288] sm:$0xff] %vm356, 0.0
          %567 = vst.msk [vmem:[#allocation4 + $0x290] sm:$0xff] %vm356, 0.0
          %568 = vst.msk [vmem:[#allocation4 + $0x298] sm:$0xff] %vm356, 0.0
          %569 = vst.msk [vmem:[#allocation4 + $0x2a0] sm:$0xff] %vm356, 0.0
          %570 = vst.msk [vmem:[#allocation4 + $0x2a8] sm:$0xff] %vm356, 0.0
          %571 = vst.msk [vmem:[#allocation4 + $0x2b0] sm:$0xff] %vm356, 0.0
          %572 = vst.msk [vmem:[#allocation4 + $0x2b8] sm:$0xff] %vm356, 0.0
          %573 = vst.msk [vmem:[#allocation4 + $0x2c0] sm:$0xff] %vm356, 0.0
          %574 = vst.msk [vmem:[#allocation4 + $0x2c8] sm:$0xff] %vm356, 0.0
          %575 = vst.msk [vmem:[#allocation4 + $0x2d0] sm:$0xff] %vm356, 0.0
          %576 = vst.msk [vmem:[#allocation4 + $0x2d8] sm:$0xff] %vm356, 0.0
          %577 = vst.msk [vmem:[#allocation4 + $0x2e0] sm:$0xff] %vm356, 0.0
          %578 = vst.msk [vmem:[#allocation4 + $0x2e8] sm:$0xff] %vm356, 0.0
          %579 = vst.msk [vmem:[#allocation4 + $0x2f0] sm:$0xff] %vm356, 0.0
          %580 = vst.msk [vmem:[#allocation4 + $0x2f8] sm:$0xff] %vm356, 0.0
          %581 = vst.msk [vmem:[#allocation4 + $0x300] sm:$0xff] %vm356, 0.0
          %582 = vst.msk [vmem:[#allocation4 + $0x308] sm:$0xff] %vm356, 0.0
          %583 = vst.msk [vmem:[#allocation4 + $0x310] sm:$0xff] %vm356, 0.0
          %584 = vst.msk [vmem:[#allocation4 + $0x318] sm:$0xff] %vm356, 0.0
          %585 = vst.msk [vmem:[#allocation4 + $0x320] sm:$0xff] %vm356, 0.0
          %586 = vst.msk [vmem:[#allocation4 + $0x328] sm:$0xff] %vm356, 0.0
          %587 = vst.msk [vmem:[#allocation4 + $0x330] sm:$0xff] %vm356, 0.0
          %588 = vst.msk [vmem:[#allocation4 + $0x338] sm:$0xff] %vm356, 0.0
          %589 = vst.msk [vmem:[#allocation4 + $0x340] sm:$0xff] %vm356, 0.0
          %590 = vst.msk [vmem:[#allocation4 + $0x348] sm:$0xff] %vm356, 0.0
          %591 = vst.msk [vmem:[#allocation4 + $0x350] sm:$0xff] %vm356, 0.0
          %592 = vst.msk [vmem:[#allocation4 + $0x358] sm:$0xff] %vm356, 0.0
          %593 = vst.msk [vmem:[#allocation4 + $0x360] sm:$0xff] %vm356, 0.0
          %594 = vst.msk [vmem:[#allocation4 + $0x368] sm:$0xff] %vm356, 0.0
          %595 = vst.msk [vmem:[#allocation4 + $0x370] sm:$0xff] %vm356, 0.0
          %596 = vst.msk [vmem:[#allocation4 + $0x378] sm:$0xff] %vm356, 0.0
          %597 = vst.msk [vmem:[#allocation4 + $0x380] sm:$0xff] %vm356, 0.0
          %598 = vst.msk [vmem:[#allocation4 + $0x388] sm:$0xff] %vm356, 0.0
          %599 = vst.msk [vmem:[#allocation4 + $0x390] sm:$0xff] %vm356, 0.0
          %600 = vst.msk [vmem:[#allocation4 + $0x398] sm:$0xff] %vm356, 0.0
          %601 = vst.msk [vmem:[#allocation4 + $0x3a0] sm:$0xff] %vm356, 0.0
          %602 = vst.msk [vmem:[#allocation4 + $0x3a8] sm:$0xff] %vm356, 0.0
          %603 = vst.msk [vmem:[#allocation4 + $0x3b0] sm:$0xff] %vm356, 0.0
          %604 = vst.msk [vmem:[#allocation4 + $0x3b8] sm:$0xff] %vm356, 0.0
          %605 = vst.msk [vmem:[#allocation4 + $0x3c0] sm:$0xff] %vm356, 0.0
          %606 = vst.msk [vmem:[#allocation4 + $0x3c8] sm:$0xff] %vm356, 0.0
          %607 = vst.msk [vmem:[#allocation4 + $0x3d0] sm:$0xff] %vm356, 0.0
          %608 = vst.msk [vmem:[#allocation4 + $0x3d8] sm:$0xff] %vm356, 0.0
          %609 = vst.msk [vmem:[#allocation4 + $0x3e0] sm:$0xff] %vm356, 0.0
          %610 = vst.msk [vmem:[#allocation4 + $0x3e8] sm:$0xff] %vm356, 0.0
          %611 = vst.msk [vmem:[#allocation4 + $0x3f0] sm:$0xff] %vm356, 0.0
          %612 = vst.msk [vmem:[#allocation4 + $0x3f8] sm:$0xff] %vm356, 0.0
          %vm613 = vcmask 261120
          %614 = vst.msk [vmem:[#allocation5] sm:$0xff] %vm613, 0.0
          %615 = vst.msk [vmem:[#allocation5 + $0x8] sm:$0xff] %vm613, 0.0
          %616 = vst.msk [vmem:[#allocation5 + $0x10] sm:$0xff] %vm613, 0.0
          %617 = vst.msk [vmem:[#allocation5 + $0x18] sm:$0xff] %vm613, 0.0
          %618 = vst.msk [vmem:[#allocation5 + $0x20] sm:$0xff] %vm613, 0.0
          %619 = vst.msk [vmem:[#allocation5 + $0x28] sm:$0xff] %vm613, 0.0
          %620 = vst.msk [vmem:[#allocation5 + $0x30] sm:$0xff] %vm613, 0.0
          %621 = vst.msk [vmem:[#allocation5 + $0x38] sm:$0xff] %vm613, 0.0
          %622 = vst.msk [vmem:[#allocation5 + $0x40] sm:$0xff] %vm613, 0.0
          %623 = vst.msk [vmem:[#allocation5 + $0x48] sm:$0xff] %vm613, 0.0
          %624 = vst.msk [vmem:[#allocation5 + $0x50] sm:$0xff] %vm613, 0.0
          %625 = vst.msk [vmem:[#allocation5 + $0x58] sm:$0xff] %vm613, 0.0
          %626 = vst.msk [vmem:[#allocation5 + $0x60] sm:$0xff] %vm613, 0.0
          %627 = vst.msk [vmem:[#allocation5 + $0x68] sm:$0xff] %vm613, 0.0
          %628 = vst.msk [vmem:[#allocation5 + $0x70] sm:$0xff] %vm613, 0.0
          %629 = vst.msk [vmem:[#allocation5 + $0x78] sm:$0xff] %vm613, 0.0
          %630 = vst.msk [vmem:[#allocation5 + $0x80] sm:$0xff] %vm613, 0.0
          %631 = vst.msk [vmem:[#allocation5 + $0x88] sm:$0xff] %vm613, 0.0
          %632 = vst.msk [vmem:[#allocation5 + $0x90] sm:$0xff] %vm613, 0.0
          %633 = vst.msk [vmem:[#allocation5 + $0x98] sm:$0xff] %vm613, 0.0
          %634 = vst.msk [vmem:[#allocation5 + $0xa0] sm:$0xff] %vm613, 0.0
          %635 = vst.msk [vmem:[#allocation5 + $0xa8] sm:$0xff] %vm613, 0.0
          %636 = vst.msk [vmem:[#allocation5 + $0xb0] sm:$0xff] %vm613, 0.0
          %637 = vst.msk [vmem:[#allocation5 + $0xb8] sm:$0xff] %vm613, 0.0
          %638 = vst.msk [vmem:[#allocation5 + $0xc0] sm:$0xff] %vm613, 0.0
          %639 = vst.msk [vmem:[#allocation5 + $0xc8] sm:$0xff] %vm613, 0.0
          %640 = vst.msk [vmem:[#allocation5 + $0xd0] sm:$0xff] %vm613, 0.0
          %641 = vst.msk [vmem:[#allocation5 + $0xd8] sm:$0xff] %vm613, 0.0
          %642 = vst.msk [vmem:[#allocation5 + $0xe0] sm:$0xff] %vm613, 0.0
          %643 = vst.msk [vmem:[#allocation5 + $0xe8] sm:$0xff] %vm613, 0.0
          %644 = vst.msk [vmem:[#allocation5 + $0xf0] sm:$0xff] %vm613, 0.0
          %645 = vst.msk [vmem:[#allocation5 + $0xf8] sm:$0xff] %vm613, 0.0
          %646 = vst.msk [vmem:[#allocation5 + $0x100] sm:$0xff] %vm613, 0.0
          %647 = vst.msk [vmem:[#allocation5 + $0x108] sm:$0xff] %vm613, 0.0
          %648 = vst.msk [vmem:[#allocation5 + $0x110] sm:$0xff] %vm613, 0.0
          %649 = vst.msk [vmem:[#allocation5 + $0x118] sm:$0xff] %vm613, 0.0
          %650 = vst.msk [vmem:[#allocation5 + $0x120] sm:$0xff] %vm613, 0.0
          %651 = vst.msk [vmem:[#allocation5 + $0x128] sm:$0xff] %vm613, 0.0
          %652 = vst.msk [vmem:[#allocation5 + $0x130] sm:$0xff] %vm613, 0.0
          %653 = vst.msk [vmem:[#allocation5 + $0x138] sm:$0xff] %vm613, 0.0
          %654 = vst.msk [vmem:[#allocation5 + $0x140] sm:$0xff] %vm613, 0.0
          %655 = vst.msk [vmem:[#allocation5 + $0x148] sm:$0xff] %vm613, 0.0
          %656 = vst.msk [vmem:[#allocation5 + $0x150] sm:$0xff] %vm613, 0.0
          %657 = vst.msk [vmem:[#allocation5 + $0x158] sm:$0xff] %vm613, 0.0
          %658 = vst.msk [vmem:[#allocation5 + $0x160] sm:$0xff] %vm613, 0.0
          %659 = vst.msk [vmem:[#allocation5 + $0x168] sm:$0xff] %vm613, 0.0
          %660 = vst.msk [vmem:[#allocation5 + $0x170] sm:$0xff] %vm613, 0.0
          %661 = vst.msk [vmem:[#allocation5 + $0x178] sm:$0xff] %vm613, 0.0
          %662 = vst.msk [vmem:[#allocation5 + $0x180] sm:$0xff] %vm613, 0.0
          %663 = vst.msk [vmem:[#allocation5 + $0x188] sm:$0xff] %vm613, 0.0
          %664 = vst.msk [vmem:[#allocation5 + $0x190] sm:$0xff] %vm613, 0.0
          %665 = vst.msk [vmem:[#allocation5 + $0x198] sm:$0xff] %vm613, 0.0
          %666 = vst.msk [vmem:[#allocation5 + $0x1a0] sm:$0xff] %vm613, 0.0
          %667 = vst.msk [vmem:[#allocation5 + $0x1a8] sm:$0xff] %vm613, 0.0
          %668 = vst.msk [vmem:[#allocation5 + $0x1b0] sm:$0xff] %vm613, 0.0
          %669 = vst.msk [vmem:[#allocation5 + $0x1b8] sm:$0xff] %vm613, 0.0
          %670 = vst.msk [vmem:[#allocation5 + $0x1c0] sm:$0xff] %vm613, 0.0
          %671 = vst.msk [vmem:[#allocation5 + $0x1c8] sm:$0xff] %vm613, 0.0
          %672 = vst.msk [vmem:[#allocation5 + $0x1d0] sm:$0xff] %vm613, 0.0
          %673 = vst.msk [vmem:[#allocation5 + $0x1d8] sm:$0xff] %vm613, 0.0
          %674 = vst.msk [vmem:[#allocation5 + $0x1e0] sm:$0xff] %vm613, 0.0
          %675 = vst.msk [vmem:[#allocation5 + $0x1e8] sm:$0xff] %vm613, 0.0
          %676 = vst.msk [vmem:[#allocation5 + $0x1f0] sm:$0xff] %vm613, 0.0
          %677 = vst.msk [vmem:[#allocation5 + $0x1f8] sm:$0xff] %vm613, 0.0
          %678 = vst.msk [vmem:[#allocation5 + $0x200] sm:$0xff] %vm613, 0.0
          %679 = vst.msk [vmem:[#allocation5 + $0x208] sm:$0xff] %vm613, 0.0
          %680 = vst.msk [vmem:[#allocation5 + $0x210] sm:$0xff] %vm613, 0.0
          %681 = vst.msk [vmem:[#allocation5 + $0x218] sm:$0xff] %vm613, 0.0
          %682 = vst.msk [vmem:[#allocation5 + $0x220] sm:$0xff] %vm613, 0.0
          %683 = vst.msk [vmem:[#allocation5 + $0x228] sm:$0xff] %vm613, 0.0
          %684 = vst.msk [vmem:[#allocation5 + $0x230] sm:$0xff] %vm613, 0.0
          %685 = vst.msk [vmem:[#allocation5 + $0x238] sm:$0xff] %vm613, 0.0
          %686 = vst.msk [vmem:[#allocation5 + $0x240] sm:$0xff] %vm613, 0.0
          %687 = vst.msk [vmem:[#allocation5 + $0x248] sm:$0xff] %vm613, 0.0
          %688 = vst.msk [vmem:[#allocation5 + $0x250] sm:$0xff] %vm613, 0.0
          %689 = vst.msk [vmem:[#allocation5 + $0x258] sm:$0xff] %vm613, 0.0
          %690 = vst.msk [vmem:[#allocation5 + $0x260] sm:$0xff] %vm613, 0.0
          %691 = vst.msk [vmem:[#allocation5 + $0x268] sm:$0xff] %vm613, 0.0
          %692 = vst.msk [vmem:[#allocation5 + $0x270] sm:$0xff] %vm613, 0.0
          %693 = vst.msk [vmem:[#allocation5 + $0x278] sm:$0xff] %vm613, 0.0
          %694 = vst.msk [vmem:[#allocation5 + $0x280] sm:$0xff] %vm613, 0.0
          %695 = vst.msk [vmem:[#allocation5 + $0x288] sm:$0xff] %vm613, 0.0
          %696 = vst.msk [vmem:[#allocation5 + $0x290] sm:$0xff] %vm613, 0.0
          %697 = vst.msk [vmem:[#allocation5 + $0x298] sm:$0xff] %vm613, 0.0
          %698 = vst.msk [vmem:[#allocation5 + $0x2a0] sm:$0xff] %vm613, 0.0
          %699 = vst.msk [vmem:[#allocation5 + $0x2a8] sm:$0xff] %vm613, 0.0
          %700 = vst.msk [vmem:[#allocation5 + $0x2b0] sm:$0xff] %vm613, 0.0
          %701 = vst.msk [vmem:[#allocation5 + $0x2b8] sm:$0xff] %vm613, 0.0
          %702 = vst.msk [vmem:[#allocation5 + $0x2c0] sm:$0xff] %vm613, 0.0
          %703 = vst.msk [vmem:[#allocation5 + $0x2c8] sm:$0xff] %vm613, 0.0
          %704 = vst.msk [vmem:[#allocation5 + $0x2d0] sm:$0xff] %vm613, 0.0
          %705 = vst.msk [vmem:[#allocation5 + $0x2d8] sm:$0xff] %vm613, 0.0
          %706 = vst.msk [vmem:[#allocation5 + $0x2e0] sm:$0xff] %vm613, 0.0
          %707 = vst.msk [vmem:[#allocation5 + $0x2e8] sm:$0xff] %vm613, 0.0
          %708 = vst.msk [vmem:[#allocation5 + $0x2f0] sm:$0xff] %vm613, 0.0
          %709 = vst.msk [vmem:[#allocation5 + $0x2f8] sm:$0xff] %vm613, 0.0
          %710 = vst.msk [vmem:[#allocation5 + $0x300] sm:$0xff] %vm613, 0.0
          %711 = vst.msk [vmem:[#allocation5 + $0x308] sm:$0xff] %vm613, 0.0
          %712 = vst.msk [vmem:[#allocation5 + $0x310] sm:$0xff] %vm613, 0.0
          %713 = vst.msk [vmem:[#allocation5 + $0x318] sm:$0xff] %vm613, 0.0
          %714 = vst.msk [vmem:[#allocation5 + $0x320] sm:$0xff] %vm613, 0.0
          %715 = vst.msk [vmem:[#allocation5 + $0x328] sm:$0xff] %vm613, 0.0
          %716 = vst.msk [vmem:[#allocation5 + $0x330] sm:$0xff] %vm613, 0.0
          %717 = vst.msk [vmem:[#allocation5 + $0x338] sm:$0xff] %vm613, 0.0
          %718 = vst.msk [vmem:[#allocation5 + $0x340] sm:$0xff] %vm613, 0.0
          %719 = vst.msk [vmem:[#allocation5 + $0x348] sm:$0xff] %vm613, 0.0
          %720 = vst.msk [vmem:[#allocation5 + $0x350] sm:$0xff] %vm613, 0.0
          %721 = vst.msk [vmem:[#allocation5 + $0x358] sm:$0xff] %vm613, 0.0
          %722 = vst.msk [vmem:[#allocation5 + $0x360] sm:$0xff] %vm613, 0.0
          %723 = vst.msk [vmem:[#allocation5 + $0x368] sm:$0xff] %vm613, 0.0
          %724 = vst.msk [vmem:[#allocation5 + $0x370] sm:$0xff] %vm613, 0.0
          %725 = vst.msk [vmem:[#allocation5 + $0x378] sm:$0xff] %vm613, 0.0
          %726 = vst.msk [vmem:[#allocation5 + $0x380] sm:$0xff] %vm613, 0.0
          %727 = vst.msk [vmem:[#allocation5 + $0x388] sm:$0xff] %vm613, 0.0
          %728 = vst.msk [vmem:[#allocation5 + $0x390] sm:$0xff] %vm613, 0.0
          %729 = vst.msk [vmem:[#allocation5 + $0x398] sm:$0xff] %vm613, 0.0
          %730 = vst.msk [vmem:[#allocation5 + $0x3a0] sm:$0xff] %vm613, 0.0
          %731 = vst.msk [vmem:[#allocation5 + $0x3a8] sm:$0xff] %vm613, 0.0
          %732 = vst.msk [vmem:[#allocation5 + $0x3b0] sm:$0xff] %vm613, 0.0
          %733 = vst.msk [vmem:[#allocation5 + $0x3b8] sm:$0xff] %vm613, 0.0
          %734 = vst.msk [vmem:[#allocation5 + $0x3c0] sm:$0xff] %vm613, 0.0
          %735 = vst.msk [vmem:[#allocation5 + $0x3c8] sm:$0xff] %vm613, 0.0
          %736 = vst.msk [vmem:[#allocation5 + $0x3d0] sm:$0xff] %vm613, 0.0
          %737 = vst.msk [vmem:[#allocation5 + $0x3d8] sm:$0xff] %vm613, 0.0
          %738 = vst.msk [vmem:[#allocation5 + $0x3e0] sm:$0xff] %vm613, 0.0
          %739 = vst.msk [vmem:[#allocation5 + $0x3e8] sm:$0xff] %vm613, 0.0
          %740 = vst.msk [vmem:[#allocation5 + $0x3f0] sm:$0xff] %vm613, 0.0
          %741 = vst.msk [vmem:[#allocation5 + $0x3f8] sm:$0xff] %vm613, 0.0
          %v742 = vld [vmem:[%s338] sm:$0xf]
          %v743 = vld [vmem:[%s338 + $0x4] sm:$0xf]
          %v744 = vld [vmem:[%s338 + $0x8] sm:$0xf]
          %v745 = vld [vmem:[%s338 + $0xc] sm:$0xf]
          %v746 = vld [vmem:[%s338 + $0x10] sm:$0xf]
          %v747 = vld [vmem:[%s338 + $0x14] sm:$0xf]
          %v748 = vld [vmem:[%s338 + $0x18] sm:$0xf]
          %v749 = vld [vmem:[%s338 + $0x1c] sm:$0xf]
          %v750 = vld [vmem:[%s338 + $0x20] sm:$0xf]
          %v751 = vld [vmem:[%s338 + $0x24] sm:$0xf]
          %v752 = vld [vmem:[%s338 + $0x28] sm:$0xf]
          %v753 = vld [vmem:[%s338 + $0x2c] sm:$0xf]
          %v754 = vld [vmem:[%s338 + $0x30] sm:$0xf]
          %v755 = vld [vmem:[%s338 + $0x34] sm:$0xf]
          %v756 = vld [vmem:[%s338 + $0x38] sm:$0xf]
          %v757 = vld [vmem:[%s338 + $0x3c] sm:$0xf]
          %v758 = vld [vmem:[%s338 + $0x40] sm:$0xf]
          %v759 = vld [vmem:[%s338 + $0x44] sm:$0xf]
          %v760 = vld [vmem:[%s338 + $0x48] sm:$0xf]
          %v761 = vld [vmem:[%s338 + $0x4c] sm:$0xf]
          %v762 = vld [vmem:[%s338 + $0x50] sm:$0xf]
          %v763 = vld [vmem:[%s338 + $0x54] sm:$0xf]
          %v764 = vld [vmem:[%s338 + $0x58] sm:$0xf]
          %v765 = vld [vmem:[%s338 + $0x5c] sm:$0xf]
          %v766 = vld [vmem:[%s338 + $0x60] sm:$0xf]
          %v767 = vld [vmem:[%s338 + $0x64] sm:$0xf]
          %v768 = vld [vmem:[%s338 + $0x68] sm:$0xf]
          %v769 = vld [vmem:[%s338 + $0x6c] sm:$0xf]
          %v770 = vld [vmem:[%s338 + $0x70] sm:$0xf]
          %v771 = vld [vmem:[%s338 + $0x74] sm:$0xf]
          %v772 = vld [vmem:[%s338 + $0x78] sm:$0xf]
          %v773 = vld [vmem:[%s338 + $0x7c] sm:$0xf]
          %v774 = vld [vmem:[%s2] sm:$0x3]
          %v807 = vunpack.c.l.b16 %v742
          %v808 = vunpack.c.l.b16 %v743
          %v809 = vunpack.c.l.b16 %v744
          %v810 = vunpack.c.l.b16 %v745
          %v811 = vunpack.c.l.b16 %v746
          %v812 = vunpack.c.l.b16 %v747
          %v813 = vunpack.c.l.b16 %v748
          %v814 = vunpack.c.l.b16 %v749
          %v815 = vunpack.c.l.b16 %v750
          %v816 = vunpack.c.l.b16 %v751
          %v817 = vunpack.c.l.b16 %v752
          %v818 = vunpack.c.l.b16 %v753
          %v819 = vunpack.c.l.b16 %v754
          %v820 = vunpack.c.l.b16 %v755
          %v821 = vunpack.c.l.b16 %v756
          %v822 = vunpack.c.l.b16 %v757
          %v823 = vunpack.c.l.b16 %v758
          %v824 = vunpack.c.l.b16 %v759
          %v825 = vunpack.c.l.b16 %v760
          %v826 = vunpack.c.l.b16 %v761
          %v827 = vunpack.c.l.b16 %v762
          %v828 = vunpack.c.l.b16 %v763
          %v829 = vunpack.c.l.b16 %v764
          %v830 = vunpack.c.l.b16 %v765
          %v831 = vunpack.c.l.b16 %v766
          %v832 = vunpack.c.l.b16 %v767
          %v833 = vunpack.c.l.b16 %v768
          %v834 = vunpack.c.l.b16 %v769
          %v835 = vunpack.c.l.b16 %v770
          %v836 = vunpack.c.l.b16 %v771
          %v837 = vunpack.c.l.b16 %v772
          %v838 = vunpack.c.l.b16 %v773
          %v839 = vpack.c.b16 %v808, %v807
          %v840 = vpack.c.b16 %v810, %v809
          %v841 = vpack.c.b16 %v812, %v811
          %v842 = vpack.c.b16 %v814, %v813
          %v843 = vpack.c.b16 %v816, %v815
          %v844 = vpack.c.b16 %v818, %v817
          %v845 = vpack.c.b16 %v820, %v819
          %v846 = vpack.c.b16 %v822, %v821
          %v847 = vpack.c.b16 %v824, %v823
          %v848 = vpack.c.b16 %v826, %v825
          %v849 = vpack.c.b16 %v828, %v827
          %v850 = vpack.c.b16 %v830, %v829
          %v851 = vpack.c.b16 %v832, %v831
          %v852 = vpack.c.b16 %v834, %v833
          %v853 = vpack.c.b16 %v836, %v835
          %v854 = vpack.c.b16 %v838, %v837
          %vm855 = vcmask 31744
          %v857 = vsel %vm855, %v839, 0
          %v860 = vsel %vm855, %v840, 0
          %v863 = vsel %vm855, %v841, 0
          %v866 = vsel %vm855, %v842, 0
          %v869 = vsel %vm855, %v843, 0
          %v872 = vsel %vm855, %v844, 0
          %v875 = vsel %vm855, %v845, 0
          %v878 = vsel %vm855, %v846, 0
          %v881 = vsel %vm855, %v847, 0
          %v884 = vsel %vm855, %v848, 0
          %v887 = vsel %vm855, %v849, 0
          %v890 = vsel %vm855, %v850, 0
          %v893 = vsel %vm855, %v851, 0
          %v896 = vsel %vm855, %v852, 0
          %v899 = vsel %vm855, %v853, 0
          %v902 = vsel %vm855, %v854, 0
          %vm904 = vcmask 1041408
          %v906 = vsel %vm904, %v774, 0
          %908 = vmatprep.subr.bf16.mxu0 0
          %909 = vmatpush1.bf16.msra.mxu0 %v906
          %910 = vmatprep.subr.bf16.mxu0 0
          %911 = vmatpush1.bf16.msra.mxu0 0
          %912 = vmatprep.subr.bf16.mxu0 0
          %913 = vmatpush1.bf16.msra.mxu0 0
          %914 = vmatprep.subr.bf16.mxu0 0
          %915 = vmatpush1.bf16.msra.mxu0 0
          %916 = vmatprep.subr.bf16.mxu0 0
          %917 = vmatpush1.bf16.msra.mxu0 0
          %918 = vmatprep.subr.bf16.mxu0 0
          %919 = vmatpush1.bf16.msra.mxu0 0
          %920 = vmatprep.subr.bf16.mxu0 0
          %921 = vmatpush1.bf16.msra.mxu0 0
          %922 = vmatprep.subr.bf16.mxu0 0
          %923 = vmatpush1.bf16.msra.mxu0 0
          %924 = vmatprep.subr.bf16.mxu0 0
          %925 = vmatpush1.bf16.msra.mxu0 0
          %926 = vmatprep.subr.bf16.mxu0 0
          %927 = vmatpush1.bf16.msra.mxu0 0
          %928 = vmatprep.subr.bf16.mxu0 0
          %929 = vmatpush1.bf16.msra.mxu0 0
          %930 = vmatprep.subr.bf16.mxu0 0
          %931 = vmatpush1.bf16.msra.mxu0 0
          %932 = vmatprep.subr.bf16.mxu0 0
          %933 = vmatpush1.bf16.msra.mxu0 0
          %934 = vmatprep.subr.bf16.mxu0 0
          %935 = vmatpush1.bf16.msra.mxu0 0
          %936 = vmatprep.subr.bf16.mxu0 0
          %937 = vmatpush1.bf16.msra.mxu0 0
          %938 = vmatprep.subr.bf16.mxu0 0
          %939 = vmatpush1.bf16.msra.mxu0 0
          %940 = vmatprep.mubr.bf16.mxu0 0
          %941 = vmatmul.mubr.bf16.gmra.mrb[0].mxu0 %v857
          %v942 = vpop.f32.mrb[0].mxu0
          %v943 = vadd.f32 0.0, %v942
          %v944 = vpop.f32.mrb[0].mxu0
          %v945 = vpop.f32.mrb[0].mxu0
          %v946 = vadd.f32 0.0, %v945
          %v947 = vpop.f32.mrb[0].mxu0
          %948 = vmatprep.mubr.bf16.mxu0 0
          %949 = vmatmul.mubr.bf16.gmra.mrb[0].mxu0 %v860
          %v950 = vpop.f32.mrb[0].mxu0
          %v951 = vadd.f32 0.0, %v950
          %v952 = vpop.f32.mrb[0].mxu0
          %v953 = vpop.f32.mrb[0].mxu0
          %v954 = vadd.f32 0.0, %v953
          %v955 = vpop.f32.mrb[0].mxu0
          %956 = vmatprep.mubr.bf16.mxu0 0
          %957 = vmatmul.mubr.bf16.gmra.mrb[0].mxu0 %v863
          %v958 = vpop.f32.mrb[0].mxu0
          %v959 = vadd.f32 0.0, %v958
          %v960 = vpop.f32.mrb[0].mxu0
          %v961 = vpop.f32.mrb[0].mxu0
          %v962 = vadd.f32 0.0, %v961
          %v963 = vpop.f32.mrb[0].mxu0
          %964 = vmatprep.mubr.bf16.mxu0 0
          %965 = vmatmul.mubr.bf16.gmra.mrb[0].mxu0 %v866
          %v966 = vpop.f32.mrb[0].mxu0
          %v967 = vadd.f32 0.0, %v966
          %v968 = vpop.f32.mrb[0].mxu0
          %v969 = vpop.f32.mrb[0].mxu0
          %v970 = vadd.f32 0.0, %v969
          %v971 = vpop.f32.mrb[0].mxu0
          %972 = vmatprep.mubr.bf16.mxu0 0
          %973 = vmatmul.mubr.bf16.gmra.mrb[0].mxu0 %v869
          %v974 = vpop.f32.mrb[0].mxu0
          %v975 = vadd.f32 0.0, %v974
          %v976 = vpop.f32.mrb[0].mxu0
          %v977 = vpop.f32.mrb[0].mxu0
          %v978 = vadd.f32 0.0, %v977
          %v979 = vpop.f32.mrb[0].mxu0
          %980 = vmatprep.mubr.bf16.mxu0 0
          %981 = vmatmul.mubr.bf16.gmra.mrb[0].mxu0 %v872
          %v982 = vpop.f32.mrb[0].mxu0
          %v983 = vadd.f32 0.0, %v982
          %v984 = vpop.f32.mrb[0].mxu0
          %v985 = vpop.f32.mrb[0].mxu0
          %v986 = vadd.f32 0.0, %v985
          %v987 = vpop.f32.mrb[0].mxu0
          %988 = vmatprep.mubr.bf16.mxu0 0
          %989 = vmatmul.mubr.bf16.gmra.mrb[0].mxu0 %v875
          %v990 = vpop.f32.mrb[0].mxu0
          %v991 = vadd.f32 0.0, %v990
          %v992 = vpop.f32.mrb[0].mxu0
          %v993 = vpop.f32.mrb[0].mxu0
          %v994 = vadd.f32 0.0, %v993
          %v995 = vpop.f32.mrb[0].mxu0
          %996 = vmatprep.mubr.bf16.mxu0 0
          %997 = vmatmul.mubr.bf16.gmra.mrb[0].mxu0 %v878
          %v998 = vpop.f32.mrb[0].mxu0
          %v999 = vadd.f32 0.0, %v998
          %v1000 = vpop.f32.mrb[0].mxu0
          %v1001 = vpop.f32.mrb[0].mxu0
          %v1002 = vadd.f32 0.0, %v1001
          %v1003 = vpop.f32.mrb[0].mxu0
          %1004 = vmatprep.mubr.bf16.mxu0 0
          %1005 = vmatmul.mubr.bf16.gmra.mrb[0].mxu0 %v881
          %v1006 = vpop.f32.mrb[0].mxu0
          %v1007 = vadd.f32 0.0, %v1006
          %v1008 = vpop.f32.mrb[0].mxu0
          %v1009 = vpop.f32.mrb[0].mxu0
          %v1010 = vadd.f32 0.0, %v1009
          %v1011 = vpop.f32.mrb[0].mxu0
          %1012 = vmatprep.mubr.bf16.mxu0 0
          %1013 = vmatmul.mubr.bf16.gmra.mrb[0].mxu0 %v884
          %v1014 = vpop.f32.mrb[0].mxu0
          %v1015 = vadd.f32 0.0, %v1014
          %v1016 = vpop.f32.mrb[0].mxu0
          %v1017 = vpop.f32.mrb[0].mxu0
          %v1018 = vadd.f32 0.0, %v1017
          %v1019 = vpop.f32.mrb[0].mxu0
          %1020 = vmatprep.mubr.bf16.mxu0 0
          %1021 = vmatmul.mubr.bf16.gmra.mrb[0].mxu0 %v887
          %v1022 = vpop.f32.mrb[0].mxu0
          %v1023 = vadd.f32 0.0, %v1022
          %v1024 = vpop.f32.mrb[0].mxu0
          %v1025 = vpop.f32.mrb[0].mxu0
          %v1026 = vadd.f32 0.0, %v1025
          %v1027 = vpop.f32.mrb[0].mxu0
          %1028 = vmatprep.mubr.bf16.mxu0 0
          %1029 = vmatmul.mubr.bf16.gmra.mrb[0].mxu0 %v890
          %v1030 = vpop.f32.mrb[0].mxu0
          %v1031 = vadd.f32 0.0, %v1030
          %v1032 = vpop.f32.mrb[0].mxu0
          %v1033 = vpop.f32.mrb[0].mxu0
          %v1034 = vadd.f32 0.0, %v1033
          %v1035 = vpop.f32.mrb[0].mxu0
          %1036 = vmatprep.mubr.bf16.mxu0 0
          %1037 = vmatmul.mubr.bf16.gmra.mrb[0].mxu0 %v893
          %v1038 = vpop.f32.mrb[0].mxu0
          %v1039 = vadd.f32 0.0, %v1038
          %v1040 = vpop.f32.mrb[0].mxu0
          %v1041 = vpop.f32.mrb[0].mxu0
          %v1042 = vadd.f32 0.0, %v1041
          %v1043 = vpop.f32.mrb[0].mxu0
          %1044 = vmatprep.mubr.bf16.mxu0 0
          %1045 = vmatmul.mubr.bf16.gmra.mrb[0].mxu0 %v896
          %v1046 = vpop.f32.mrb[0].mxu0
          %v1047 = vadd.f32 0.0, %v1046
          %v1048 = vpop.f32.mrb[0].mxu0
          %v1049 = vpop.f32.mrb[0].mxu0
          %v1050 = vadd.f32 0.0, %v1049
          %v1051 = vpop.f32.mrb[0].mxu0
          %1052 = vmatprep.mubr.bf16.mxu0 0
          %1053 = vmatmul.mubr.bf16.gmra.mrb[0].mxu0 %v899
          %v1054 = vpop.f32.mrb[0].mxu0
          %v1055 = vadd.f32 0.0, %v1054
          %v1056 = vpop.f32.mrb[0].mxu0
          %v1057 = vpop.f32.mrb[0].mxu0
          %v1058 = vadd.f32 0.0, %v1057
          %v1059 = vpop.f32.mrb[0].mxu0
          %1060 = vmatprep.mubr.bf16.mxu0 0
          %1061 = vmatmul.mubr.bf16.gmra.mrb[0].mxu0 %v902
          %v1062 = vpop.f32.mrb[0].mxu0
          %v1063 = vadd.f32 0.0, %v1062
          %v1064 = vpop.f32.mrb[0].mxu0
          %v1065 = vpop.f32.mrb[0].mxu0
          %v1066 = vadd.f32 0.0, %v1065
          %v1067 = vpop.f32.mrb[0].mxu0
          %1068 = vdwg.mxu0
          %v1069 = vmul.f32 %v943, 0.17677669
          %v1070 = vmul.f32 %v946, 0.17677669
          %v1071 = vmul.f32 %v951, 0.17677669
          %v1072 = vmul.f32 %v954, 0.17677669
          %v1073 = vmul.f32 %v959, 0.17677669
          %v1074 = vmul.f32 %v962, 0.17677669
          %v1075 = vmul.f32 %v967, 0.17677669
          %v1076 = vmul.f32 %v970, 0.17677669
          %v1077 = vmul.f32 %v975, 0.17677669
          %v1078 = vmul.f32 %v978, 0.17677669
          %v1079 = vmul.f32 %v983, 0.17677669
          %v1080 = vmul.f32 %v986, 0.17677669
          %v1081 = vmul.f32 %v991, 0.17677669
          %v1082 = vmul.f32 %v994, 0.17677669
          %v1083 = vmul.f32 %v999, 0.17677669
          %v1084 = vmul.f32 %v1002, 0.17677669
          %v1085 = vmul.f32 %v1007, 0.17677669
          %v1086 = vmul.f32 %v1010, 0.17677669
          %v1087 = vmul.f32 %v1015, 0.17677669
          %v1088 = vmul.f32 %v1018, 0.17677669
          %v1089 = vmul.f32 %v1023, 0.17677669
          %v1090 = vmul.f32 %v1026, 0.17677669
          %v1091 = vmul.f32 %v1031, 0.17677669
          %v1092 = vmul.f32 %v1034, 0.17677669
          %v1093 = vmul.f32 %v1039, 0.17677669
          %v1094 = vmul.f32 %v1042, 0.17677669
          %v1095 = vmul.f32 %v1047, 0.17677669
          %v1096 = vmul.f32 %v1050, 0.17677669
          %v1097 = vmul.f32 %v1055, 0.17677669
          %v1098 = vmul.f32 %v1058, 0.17677669
          %v1099 = vmul.f32 %v1063, 0.17677669
          %v1100 = vmul.f32 %v1066, 0.17677669
          %v1101 = vpack.c.bf16 %v1070, %v1069
          %v1102 = vpack.c.bf16 %v1072, %v1071
          %v1103 = vpack.c.bf16 %v1074, %v1073
          %v1104 = vpack.c.bf16 %v1076, %v1075
          %v1105 = vpack.c.bf16 %v1078, %v1077
          %v1106 = vpack.c.bf16 %v1080, %v1079
          %v1107 = vpack.c.bf16 %v1082, %v1081
          %v1108 = vpack.c.bf16 %v1084, %v1083
          %v1109 = vpack.c.bf16 %v1086, %v1085
          %v1110 = vpack.c.bf16 %v1088, %v1087
          %v1111 = vpack.c.bf16 %v1090, %v1089
          %v1112 = vpack.c.bf16 %v1092, %v1091
          %v1113 = vpack.c.bf16 %v1094, %v1093
          %v1114 = vpack.c.bf16 %v1096, %v1095
          %v1115 = vpack.c.bf16 %v1098, %v1097
          %v1116 = vpack.c.bf16 %v1100, %v1099
          %1117 = vst.msk [vmem:[#allocation2] sm:$0xff] %vm613, %v1101
          %1118 = vst.msk [vmem:[#allocation2 + $0x8] sm:$0xff] %vm613, %v1102
          %1119 = vst.msk [vmem:[#allocation2 + $0x10] sm:$0xff] %vm613, %v1103
          %1120 = vst.msk [vmem:[#allocation2 + $0x18] sm:$0xff] %vm613, %v1104
          %1121 = vst.msk [vmem:[#allocation2 + $0x20] sm:$0xff] %vm613, %v1105
          %1122 = vst.msk [vmem:[#allocation2 + $0x28] sm:$0xff] %vm613, %v1106
          %1123 = vst.msk [vmem:[#allocation2 + $0x30] sm:$0xff] %vm613, %v1107
          %1124 = vst.msk [vmem:[#allocation2 + $0x38] sm:$0xff] %vm613, %v1108
          %1125 = vst.msk [vmem:[#allocation2 + $0x40] sm:$0xff] %vm613, %v1109
          %1126 = vst.msk [vmem:[#allocation2 + $0x48] sm:$0xff] %vm613, %v1110
          %1127 = vst.msk [vmem:[#allocation2 + $0x50] sm:$0xff] %vm613, %v1111
          %1128 = vst.msk [vmem:[#allocation2 + $0x58] sm:$0xff] %vm613, %v1112
          %1129 = vst.msk [vmem:[#allocation2 + $0x60] sm:$0xff] %vm613, %v1113
          %1130 = vst.msk [vmem:[#allocation2 + $0x68] sm:$0xff] %vm613, %v1114
          %1131 = vst.msk [vmem:[#allocation2 + $0x70] sm:$0xff] %vm613, %v1115
          %1132 = vst.msk [vmem:[#allocation2 + $0x78] sm:$0xff] %vm613, %v1116
          %1149 = vrot.lane.b32.xlu0 %v1101, 96
          %v1150 = vpop.permute.xlu0 %1149
          %1151 = vrot.lane.b32.xlu0 %v1102, 96
          %v1152 = vpop.permute.xlu0 %1151
          %1153 = vrot.lane.b32.xlu0 %v1103, 96
          %v1154 = vpop.permute.xlu0 %1153
          %1155 = vrot.lane.b32.xlu0 %v1104, 96
          %v1156 = vpop.permute.xlu0 %1155
          %1157 = vrot.lane.b32.xlu0 %v1105, 96
          %v1158 = vpop.permute.xlu0 %1157
          %1159 = vrot.lane.b32.xlu0 %v1106, 96
          %v1160 = vpop.permute.xlu0 %1159
          %1161 = vrot.lane.b32.xlu0 %v1107, 96
          %v1162 = vpop.permute.xlu0 %1161
          %1163 = vrot.lane.b32.xlu0 %v1108, 96
          %v1164 = vpop.permute.xlu0 %1163
          %1165 = vrot.lane.b32.xlu0 %v1109, 96
          %v1166 = vpop.permute.xlu0 %1165
          %1167 = vrot.lane.b32.xlu0 %v1110, 96
          %v1168 = vpop.permute.xlu0 %1167
          %1169 = vrot.lane.b32.xlu0 %v1111, 96
          %v1170 = vpop.permute.xlu0 %1169
          %1171 = vrot.lane.b32.xlu0 %v1112, 96
          %v1172 = vpop.permute.xlu0 %1171
          %1173 = vrot.lane.b32.xlu0 %v1113, 96
          %v1174 = vpop.permute.xlu0 %1173
          %1175 = vrot.lane.b32.xlu0 %v1114, 96
          %v1176 = vpop.permute.xlu0 %1175
          %1177 = vrot.lane.b32.xlu0 %v1115, 96
          %v1178 = vpop.permute.xlu0 %1177
          %1179 = vrot.lane.b32.xlu0 %v1116, 96
          %v1180 = vpop.permute.xlu0 %1179
          %s1197 = scalar_lea.vmem [#allocation2], 128
          %1198 = vst.msk [vmem:[%s1197] sm:$0xff] %vm613, %v1150
          %1199 = vst.msk [vmem:[%s1197 + $0x8] sm:$0xff] %vm613, %v1152
          %1200 = vst.msk [vmem:[%s1197 + $0x10] sm:$0xff] %vm613, %v1154
          %1201 = vst.msk [vmem:[%s1197 + $0x18] sm:$0xff] %vm613, %v1156
          %1202 = vst.msk [vmem:[%s1197 + $0x20] sm:$0xff] %vm613, %v1158
          %1203 = vst.msk [vmem:[%s1197 + $0x28] sm:$0xff] %vm613, %v1160
          %1204 = vst.msk [vmem:[%s1197 + $0x30] sm:$0xff] %vm613, %v1162
          %1205 = vst.msk [vmem:[%s1197 + $0x38] sm:$0xff] %vm613, %v1164
          %1206 = vst.msk [vmem:[%s1197 + $0x40] sm:$0xff] %vm613, %v1166
          %1207 = vst.msk [vmem:[%s1197 + $0x48] sm:$0xff] %vm613, %v1168
          %1208 = vst.msk [vmem:[%s1197 + $0x50] sm:$0xff] %vm613, %v1170
          %1209 = vst.msk [vmem:[%s1197 + $0x58] sm:$0xff] %vm613, %v1172
          %1210 = vst.msk [vmem:[%s1197 + $0x60] sm:$0xff] %vm613, %v1174
          %1211 = vst.msk [vmem:[%s1197 + $0x68] sm:$0xff] %vm613, %v1176
          %1212 = vst.msk [vmem:[%s1197 + $0x70] sm:$0xff] %vm613, %v1178
          %1213 = vst.msk [vmem:[%s1197 + $0x78] sm:$0xff] %vm613, %v1180
          %1214 = vrot.lane.b32.xlu0 %v1101, 64
          %v1215 = vpop.permute.xlu0 %1214
          %1216 = vrot.lane.b32.xlu0 %v1102, 64
          %v1217 = vpop.permute.xlu0 %1216
          %1218 = vrot.lane.b32.xlu0 %v1103, 64
          %v1219 = vpop.permute.xlu0 %1218
          %1220 = vrot.lane.b32.xlu0 %v1104, 64
          %v1221 = vpop.permute.xlu0 %1220
          %1222 = vrot.lane.b32.xlu0 %v1105, 64
          %v1223 = vpop.permute.xlu0 %1222
          %1224 = vrot.lane.b32.xlu0 %v1106, 64
          %v1225 = vpop.permute.xlu0 %1224
          %1226 = vrot.lane.b32.xlu0 %v1107, 64
          %v1227 = vpop.permute.xlu0 %1226
          %1228 = vrot.lane.b32.xlu0 %v1108, 64
          %v1229 = vpop.permute.xlu0 %1228
          %1230 = vrot.lane.b32.xlu0 %v1109, 64
          %v1231 = vpop.permute.xlu0 %1230
          %1232 = vrot.lane.b32.xlu0 %v1110, 64
          %v1233 = vpop.permute.xlu0 %1232
          %1234 = vrot.lane.b32.xlu0 %v1111, 64
          %v1235 = vpop.permute.xlu0 %1234
          %1236 = vrot.lane.b32.xlu0 %v1112, 64
          %v1237 = vpop.permute.xlu0 %1236
          %1238 = vrot.lane.b32.xlu0 %v1113, 64
          %v1239 = vpop.permute.xlu0 %1238
          %1240 = vrot.lane.b32.xlu0 %v1114, 64
          %v1241 = vpop.permute.xlu0 %1240
          %1242 = vrot.lane.b32.xlu0 %v1115, 64
          %v1243 = vpop.permute.xlu0 %1242
          %1244 = vrot.lane.b32.xlu0 %v1116, 64
          %v1245 = vpop.permute.xlu0 %1244
          %s1262 = scalar_lea.vmem [#allocation2], 256
          %1263 = vst.msk [vmem:[%s1262] sm:$0xff] %vm613, %v1215
          %1264 = vst.msk [vmem:[%s1262 + $0x8] sm:$0xff] %vm613, %v1217
          %1265 = vst.msk [vmem:[%s1262 + $0x10] sm:$0xff] %vm613, %v1219
          %1266 = vst.msk [vmem:[%s1262 + $0x18] sm:$0xff] %vm613, %v1221
          %1267 = vst.msk [vmem:[%s1262 + $0x20] sm:$0xff] %vm613, %v1223
          %1268 = vst.msk [vmem:[%s1262 + $0x28] sm:$0xff] %vm613, %v1225
          %1269 = vst.msk [vmem:[%s1262 + $0x30] sm:$0xff] %vm613, %v1227
          %1270 = vst.msk [vmem:[%s1262 + $0x38] sm:$0xff] %vm613, %v1229
          %1271 = vst.msk [vmem:[%s1262 + $0x40] sm:$0xff] %vm613, %v1231
          %1272 = vst.msk [vmem:[%s1262 + $0x48] sm:$0xff] %vm613, %v1233
          %1273 = vst.msk [vmem:[%s1262 + $0x50] sm:$0xff] %vm613, %v1235
          %1274 = vst.msk [vmem:[%s1262 + $0x58] sm:$0xff] %vm613, %v1237
          %1275 = vst.msk [vmem:[%s1262 + $0x60] sm:$0xff] %vm613, %v1239
          %1276 = vst.msk [vmem:[%s1262 + $0x68] sm:$0xff] %vm613, %v1241
          %1277 = vst.msk [vmem:[%s1262 + $0x70] sm:$0xff] %vm613, %v1243
          %1278 = vst.msk [vmem:[%s1262 + $0x78] sm:$0xff] %vm613, %v1245
          %1279 = vrot.lane.b32.xlu0 %v1101, 32
          %v1280 = vpop.permute.xlu0 %1279
          %1281 = vrot.lane.b32.xlu0 %v1102, 32
          %v1282 = vpop.permute.xlu0 %1281
          %1283 = vrot.lane.b32.xlu0 %v1103, 32
          %v1284 = vpop.permute.xlu0 %1283
          %1285 = vrot.lane.b32.xlu0 %v1104, 32
          %v1286 = vpop.permute.xlu0 %1285
          %1287 = vrot.lane.b32.xlu0 %v1105, 32
          %v1288 = vpop.permute.xlu0 %1287
          %1289 = vrot.lane.b32.xlu0 %v1106, 32
          %v1290 = vpop.permute.xlu0 %1289
          %1291 = vrot.lane.b32.xlu0 %v1107, 32
          %v1292 = vpop.permute.xlu0 %1291
          %1293 = vrot.lane.b32.xlu0 %v1108, 32
          %v1294 = vpop.permute.xlu0 %1293
          %1295 = vrot.lane.b32.xlu0 %v1109, 32
          %v1296 = vpop.permute.xlu0 %1295
          %1297 = vrot.lane.b32.xlu0 %v1110, 32
          %v1298 = vpop.permute.xlu0 %1297
          %1299 = vrot.lane.b32.xlu0 %v1111, 32
          %v1300 = vpop.permute.xlu0 %1299
          %1301 = vrot.lane.b32.xlu0 %v1112, 32
          %v1302 = vpop.permute.xlu0 %1301
          %1303 = vrot.lane.b32.xlu0 %v1113, 32
          %v1304 = vpop.permute.xlu0 %1303
          %1305 = vrot.lane.b32.xlu0 %v1114, 32
          %v1306 = vpop.permute.xlu0 %1305
          %1307 = vrot.lane.b32.xlu0 %v1115, 32
          %v1308 = vpop.permute.xlu0 %1307
          %1309 = vrot.lane.b32.xlu0 %v1116, 32
          %v1310 = vpop.permute.xlu0 %1309
          %s1327 = scalar_lea.vmem [#allocation2], 384
          %1328 = vst.msk [vmem:[%s1327] sm:$0xff] %vm613, %v1280
          %1329 = vst.msk [vmem:[%s1327 + $0x8] sm:$0xff] %vm613, %v1282
          %1330 = vst.msk [vmem:[%s1327 + $0x10] sm:$0xff] %vm613, %v1284
          %1331 = vst.msk [vmem:[%s1327 + $0x18] sm:$0xff] %vm613, %v1286
          %1332 = vst.msk [vmem:[%s1327 + $0x20] sm:$0xff] %vm613, %v1288
          %1333 = vst.msk [vmem:[%s1327 + $0x28] sm:$0xff] %vm613, %v1290
          %1334 = vst.msk [vmem:[%s1327 + $0x30] sm:$0xff] %vm613, %v1292
          %1335 = vst.msk [vmem:[%s1327 + $0x38] sm:$0xff] %vm613, %v1294
          %1336 = vst.msk [vmem:[%s1327 + $0x40] sm:$0xff] %vm613, %v1296
          %1337 = vst.msk [vmem:[%s1327 + $0x48] sm:$0xff] %vm613, %v1298
          %1338 = vst.msk [vmem:[%s1327 + $0x50] sm:$0xff] %vm613, %v1300
          %1339 = vst.msk [vmem:[%s1327 + $0x58] sm:$0xff] %vm613, %v1302
          %1340 = vst.msk [vmem:[%s1327 + $0x60] sm:$0xff] %vm613, %v1304
          %1341 = vst.msk [vmem:[%s1327 + $0x68] sm:$0xff] %vm613, %v1306
          %1342 = vst.msk [vmem:[%s1327 + $0x70] sm:$0xff] %vm613, %v1308
          %1343 = vst.msk [vmem:[%s1327 + $0x78] sm:$0xff] %vm613, %v1310
        $region52: #{tpu_custom_call.1} parent=47 // pred_fallthru
          _
        %v1344 = vld [vmem:[%s348] sm:$0xf]
        %v1345 = vld [vmem:[%s3] sm:$0xf]
        %v1346 = vld [vmem:[%s3 + $0x4] sm:$0xf]
        %v1347 = vld [vmem:[%s3 + $0x8] sm:$0xf]
        %v1348 = vld [vmem:[%s3 + $0xc] sm:$0xf]
        %v1349 = vld [vmem:[%s3 + $0x10] sm:$0xf]
        %v1350 = vld [vmem:[%s3 + $0x14] sm:$0xf]
        %v1351 = vld [vmem:[%s3 + $0x18] sm:$0xf]
        %v1352 = vld [vmem:[%s3 + $0x1c] sm:$0xf]
        %v1353 = vld [vmem:[%s3 + $0x20] sm:$0xf]
        %v1354 = vld [vmem:[%s3 + $0x24] sm:$0xf]
        %v1355 = vld [vmem:[%s3 + $0x28] sm:$0xf]
        %v1356 = vld [vmem:[%s3 + $0x2c] sm:$0xf]
        %v1357 = vld [vmem:[%s3 + $0x30] sm:$0xf]
        %v1358 = vld [vmem:[%s3 + $0x34] sm:$0xf]
        %v1359 = vld [vmem:[%s3 + $0x38] sm:$0xf]
        %v1360 = vld [vmem:[%s3 + $0x3c] sm:$0xf]
        %v1377 = vunpack.c.l.b16 %v1345
        %v1378 = vunpack.c.l.b16 %v1346
        %v1379 = vunpack.c.l.b16 %v1347
        %v1380 = vunpack.c.l.b16 %v1348
        %v1381 = vunpack.c.l.b16 %v1349
        %v1382 = vunpack.c.l.b16 %v1350
        %v1383 = vunpack.c.l.b16 %v1351
        %v1384 = vunpack.c.l.b16 %v1352
        %v1385 = vunpack.c.l.b16 %v1353
        %v1386 = vunpack.c.l.b16 %v1354
        %v1387 = vunpack.c.l.b16 %v1355
        %v1388 = vunpack.c.l.b16 %v1356
        %v1389 = vunpack.c.l.b16 %v1357
        %v1390 = vunpack.c.l.b16 %v1358
        %v1391 = vunpack.c.l.b16 %v1359
        %v1392 = vunpack.c.l.b16 %v1360
        %v1393 = vpack.c.b16 %v1378, %v1377
        %v1394 = vpack.c.b16 %v1380, %v1379
        %v1395 = vpack.c.b16 %v1382, %v1381
        %v1396 = vpack.c.b16 %v1384, %v1383
        %v1397 = vpack.c.b16 %v1386, %v1385
        %v1398 = vpack.c.b16 %v1388, %v1387
        %v1399 = vpack.c.b16 %v1390, %v1389
        %v1400 = vpack.c.b16 %v1392, %v1391
        %v1403 = vunpack.c.l.s4 1983009808
        %v1404 = vunpack.c.0.s8 %v1403
        %v1405 = vlaneseq
        %v1406 = vshrl.u32 %v1405, 7
        %v1407 = vsub.s32 %v1404, %v1406
        %v1408 = vrot.slane %v1344, %v1407
        %v1409 = vcombine.high %v1408, %v1408
        %vm1410 = vcmask 31744
        %v1412 = vsel %vm1410, %v1393, 0
        %v1415 = vsel %vm1410, %v1394, 0
        %v1418 = vsel %vm1410, %v1395, 0
        %v1421 = vsel %vm1410, %v1396, 0
        %v1424 = vsel %vm1410, %v1397, 0
        %v1427 = vsel %vm1410, %v1398, 0
        %v1430 = vsel %vm1410, %v1399, 0
        %v1433 = vsel %vm1410, %v1400, 0
        %vm1435 = vcmask 1041408
        %v1437 = vsel %vm1435, %v1408, 0
        %v1440 = vsel %vm1435, %v1409, 0
        %1442 = vmatprep.subr.bf16.mxu0 %v1440
        %1443 = vmatpush1.bf16.msra.mxu0 %v1437
        %1444 = vmatprep.subr.bf16.mxu0 0
        %1445 = vmatpush1.bf16.msra.mxu0 0
        %1446 = vmatprep.subr.bf16.mxu0 0
        %1447 = vmatpush1.bf16.msra.mxu0 0
        %1448 = vmatprep.subr.bf16.mxu0 0
        %1449 = vmatpush1.bf16.msra.mxu0 0
        %1450 = vmatprep.subr.bf16.mxu0 0
        %1451 = vmatpush1.bf16.msra.mxu0 0
        %1452 = vmatprep.subr.bf16.mxu0 0
        %1453 = vmatpush1.bf16.msra.mxu0 0
        %1454 = vmatprep.subr.bf16.mxu0 0
        %1455 = vmatpush1.bf16.msra.mxu0 0
        %1456 = vmatprep.subr.bf16.mxu0 0
        %1457 = vmatpush1.bf16.msra.mxu0 0
        %1458 = vmatprep.subr.bf16.mxu0 0
        %1459 = vmatpush1.bf16.msra.mxu0 0
        %1460 = vmatprep.subr.bf16.mxu0 0
        %1461 = vmatpush1.bf16.msra.mxu0 0
        %1462 = vmatprep.subr.bf16.mxu0 0
        %1463 = vmatpush1.bf16.msra.mxu0 0
        %1464 = vmatprep.subr.bf16.mxu0 0
        %1465 = vmatpush1.bf16.msra.mxu0 0
        %1466 = vmatprep.subr.bf16.mxu0 0
        %1467 = vmatpush1.bf16.msra.mxu0 0
        %1468 = vmatprep.subr.bf16.mxu0 0
        %1469 = vmatpush1.bf16.msra.mxu0 0
        %1470 = vmatprep.subr.bf16.mxu0 0
        %1471 = vmatpush1.bf16.msra.mxu0 0
        %1472 = vmatprep.subr.bf16.mxu0 0
        %1473 = vmatpush1.bf16.msra.mxu0 0
        %1474 = vmatprep.mubr.bf16.mxu0 0
        %1475 = vmatmul.mubr.bf16.gmra.mrb[0].mxu0 %v1412
        %v1476 = vpop.f32.mrb[0].mxu0
        %v1477 = vadd.f32 0.0, %v1476
        %v1478 = vpop.f32.mrb[0].mxu0
        %v1479 = vadd.f32 0.0, %v1478
        %v1480 = vpop.f32.mrb[0].mxu0
        %v1481 = vadd.f32 0.0, %v1480
        %v1482 = vpop.f32.mrb[0].mxu0
        %v1483 = vadd.f32 0.0, %v1482
        %1484 = vmatprep.mubr.bf16.mxu0 0
        %1485 = vmatmul.mubr.bf16.gmra.mrb[0].mxu0 %v1415
        %v1486 = vpop.f32.mrb[0].mxu0
        %v1487 = vadd.f32 0.0, %v1486
        %v1488 = vpop.f32.mrb[0].mxu0
        %v1489 = vadd.f32 0.0, %v1488
        %v1490 = vpop.f32.mrb[0].mxu0
        %v1491 = vadd.f32 0.0, %v1490
        %v1492 = vpop.f32.mrb[0].mxu0
        %v1493 = vadd.f32 0.0, %v1492
        %1494 = vmatprep.mubr.bf16.mxu0 0
        %1495 = vmatmul.mubr.bf16.gmra.mrb[0].mxu0 %v1418
        %v1496 = vpop.f32.mrb[0].mxu0
        %v1497 = vadd.f32 0.0, %v1496
        %v1498 = vpop.f32.mrb[0].mxu0
        %v1499 = vadd.f32 0.0, %v1498
        %v1500 = vpop.f32.mrb[0].mxu0
        %v1501 = vadd.f32 0.0, %v1500
        %v1502 = vpop.f32.mrb[0].mxu0
        %v1503 = vadd.f32 0.0, %v1502
        %1504 = vmatprep.mubr.bf16.mxu0 0
        %1505 = vmatmul.mubr.bf16.gmra.mrb[0].mxu0 %v1421
        %v1506 = vpop.f32.mrb[0].mxu0
        %v1507 = vadd.f32 0.0, %v1506
        %v1508 = vpop.f32.mrb[0].mxu0
        %v1509 = vadd.f32 0.0, %v1508
        %v1510 = vpop.f32.mrb[0].mxu0
        %v1511 = vadd.f32 0.0, %v1510
        %v1512 = vpop.f32.mrb[0].mxu0
        %v1513 = vadd.f32 0.0, %v1512
        %1514 = vmatprep.mubr.bf16.mxu0 0
        %1515 = vmatmul.mubr.bf16.gmra.mrb[0].mxu0 %v1424
        %v1516 = vpop.f32.mrb[0].mxu0
        %v1517 = vadd.f32 0.0, %v1516
        %v1518 = vpop.f32.mrb[0].mxu0
        %v1519 = vadd.f32 0.0, %v1518
        %v1520 = vpop.f32.mrb[0].mxu0
        %v1521 = vadd.f32 0.0, %v1520
        %v1522 = vpop.f32.mrb[0].mxu0
        %v1523 = vadd.f32 0.0, %v1522
        %1524 = vmatprep.mubr.bf16.mxu0 0
        %1525 = vmatmul.mubr.bf16.gmra.mrb[0].mxu0 %v1427
        %v1526 = vpop.f32.mrb[0].mxu0
        %v1527 = vadd.f32 0.0, %v1526
        %v1528 = vpop.f32.mrb[0].mxu0
        %v1529 = vadd.f32 0.0, %v1528
        %v1530 = vpop.f32.mrb[0].mxu0
        %v1531 = vadd.f32 0.0, %v1530
        %v1532 = vpop.f32.mrb[0].mxu0
        %v1533 = vadd.f32 0.0, %v1532
        %1534 = vmatprep.mubr.bf16.mxu0 0
        %1535 = vmatmul.mubr.bf16.gmra.mrb[0].mxu0 %v1430
        %v1536 = vpop.f32.mrb[0].mxu0
        %v1537 = vadd.f32 0.0, %v1536
        %v1538 = vpop.f32.mrb[0].mxu0
        %v1539 = vadd.f32 0.0, %v1538
        %v1540 = vpop.f32.mrb[0].mxu0
        %v1541 = vadd.f32 0.0, %v1540
        %v1542 = vpop.f32.mrb[0].mxu0
        %v1543 = vadd.f32 0.0, %v1542
        %1544 = vmatprep.mubr.bf16.mxu0 0
        %1545 = vmatmul.mubr.bf16.gmra.mrb[0].mxu0 %v1433
        %v1546 = vpop.f32.mrb[0].mxu0
        %v1547 = vadd.f32 0.0, %v1546
        %v1548 = vpop.f32.mrb[0].mxu0
        %v1549 = vadd.f32 0.0, %v1548
        %v1550 = vpop.f32.mrb[0].mxu0
        %v1551 = vadd.f32 0.0, %v1550
        %v1552 = vpop.f32.mrb[0].mxu0
        %v1553 = vadd.f32 0.0, %v1552
        %1554 = vdwg.mxu0
        %v1555 = vpack.c.bf16 %v1481, %v1477
        %v1556 = vpack.c.bf16 %v1483, %v1479
        %v1557 = vpack.c.bf16 %v1491, %v1487
        %v1558 = vpack.c.bf16 %v1493, %v1489
        %v1559 = vpack.c.bf16 %v1501, %v1497
        %v1560 = vpack.c.bf16 %v1503, %v1499
        %v1561 = vpack.c.bf16 %v1511, %v1507
        %v1562 = vpack.c.bf16 %v1513, %v1509
        %v1563 = vpack.c.bf16 %v1521, %v1517
        %v1564 = vpack.c.bf16 %v1523, %v1519
        %v1565 = vpack.c.bf16 %v1531, %v1527
        %v1566 = vpack.c.bf16 %v1533, %v1529
        %v1567 = vpack.c.bf16 %v1541, %v1537
        %v1568 = vpack.c.bf16 %v1543, %v1539
        %v1569 = vpack.c.bf16 %v1551, %v1547
        %v1570 = vpack.c.bf16 %v1553, %v1549
        %v1571 = vld [vmem:[%s4] sm:$0xf]
        %v1572 = vld [vmem:[%s4 + $0x4] sm:$0xf]
        %v1573 = vld [vmem:[%s4 + $0x8] sm:$0xf]
        %v1574 = vld [vmem:[%s4 + $0xc] sm:$0xf]
        %v1575 = vld [vmem:[%s4 + $0x10] sm:$0xf]
        %v1576 = vld [vmem:[%s4 + $0x14] sm:$0xf]
        %v1577 = vld [vmem:[%s4 + $0x18] sm:$0xf]
        %v1578 = vld [vmem:[%s4 + $0x1c] sm:$0xf]
        %v1579 = vld [vmem:[%s4 + $0x20] sm:$0xf]
        %v1580 = vld [vmem:[%s4 + $0x24] sm:$0xf]
        %v1581 = vld [vmem:[%s4 + $0x28] sm:$0xf]
        %v1582 = vld [vmem:[%s4 + $0x2c] sm:$0xf]
        %v1583 = vld [vmem:[%s4 + $0x30] sm:$0xf]
        %v1584 = vld [vmem:[%s4 + $0x34] sm:$0xf]
        %v1585 = vld [vmem:[%s4 + $0x38] sm:$0xf]
        %v1586 = vld [vmem:[%s4 + $0x3c] sm:$0xf]
        %v1603 = vunpack.c.l.b16 %v1571
        %v1604 = vunpack.c.l.b16 %v1572
        %v1605 = vunpack.c.l.b16 %v1573
        %v1606 = vunpack.c.l.b16 %v1574
        %v1607 = vunpack.c.l.b16 %v1575
        %v1608 = vunpack.c.l.b16 %v1576
        %v1609 = vunpack.c.l.b16 %v1577
        %v1610 = vunpack.c.l.b16 %v1578
        %v1611 = vunpack.c.l.b16 %v1579
        %v1612 = vunpack.c.l.b16 %v1580
        %v1613 = vunpack.c.l.b16 %v1581
        %v1614 = vunpack.c.l.b16 %v1582
        %v1615 = vunpack.c.l.b16 %v1583
        %v1616 = vunpack.c.l.b16 %v1584
        %v1617 = vunpack.c.l.b16 %v1585
        %v1618 = vunpack.c.l.b16 %v1586
        %v1619 = vpack.c.b16 %v1604, %v1603
        %v1620 = vpack.c.b16 %v1606, %v1605
        %v1621 = vpack.c.b16 %v1608, %v1607
        %v1622 = vpack.c.b16 %v1610, %v1609
        %v1623 = vpack.c.b16 %v1612, %v1611
        %v1624 = vpack.c.b16 %v1614, %v1613
        %v1625 = vpack.c.b16 %v1616, %v1615
        %v1626 = vpack.c.b16 %v1618, %v1617
        %v1628 = vsel %vm1410, %v1619, 0
        %v1631 = vsel %vm1410, %v1620, 0
        %v1634 = vsel %vm1410, %v1621, 0
        %v1637 = vsel %vm1410, %v1622, 0
        %v1640 = vsel %vm1410, %v1623, 0
        %v1643 = vsel %vm1410, %v1624, 0
        %v1646 = vsel %vm1410, %v1625, 0
        %v1649 = vsel %vm1410, %v1626, 0
        %1651 = vmatprep.subr.bf16.mxu0 %v1440
        %1652 = vmatpush1.bf16.msra.mxu0 %v1437
        %1653 = vmatprep.subr.bf16.mxu0 0
        %1654 = vmatpush1.bf16.msra.mxu0 0
        %1655 = vmatprep.subr.bf16.mxu0 0
        %1656 = vmatpush1.bf16.msra.mxu0 0
        %1657 = vmatprep.subr.bf16.mxu0 0
        %1658 = vmatpush1.bf16.msra.mxu0 0
        %1659 = vmatprep.subr.bf16.mxu0 0
        %1660 = vmatpush1.bf16.msra.mxu0 0
        %1661 = vmatprep.subr.bf16.mxu0 0
        %1662 = vmatpush1.bf16.msra.mxu0 0
        %1663 = vmatprep.subr.bf16.mxu0 0
        %1664 = vmatpush1.bf16.msra.mxu0 0
        %1665 = vmatprep.subr.bf16.mxu0 0
        %1666 = vmatpush1.bf16.msra.mxu0 0
        %1667 = vmatprep.subr.bf16.mxu0 0
        %1668 = vmatpush1.bf16.msra.mxu0 0
        %1669 = vmatprep.subr.bf16.mxu0 0
        %1670 = vmatpush1.bf16.msra.mxu0 0
        %1671 = vmatprep.subr.bf16.mxu0 0
        %1672 = vmatpush1.bf16.msra.mxu0 0
        %1673 = vmatprep.subr.bf16.mxu0 0
        %1674 = vmatpush1.bf16.msra.mxu0 0
        %1675 = vmatprep.subr.bf16.mxu0 0
        %1676 = vmatpush1.bf16.msra.mxu0 0
        %1677 = vmatprep.subr.bf16.mxu0 0
        %1678 = vmatpush1.bf16.msra.mxu0 0
        %1679 = vmatprep.subr.bf16.mxu0 0
        %1680 = vmatpush1.bf16.msra.mxu0 0
        %1681 = vmatprep.subr.bf16.mxu0 0
        %1682 = vmatpush1.bf16.msra.mxu0 0
        %1683 = vmatprep.mubr.bf16.mxu0 0
        %1684 = vmatmul.mubr.bf16.gmra.mrb[0].mxu0 %v1628
        %v1685 = vpop.f32.mrb[0].mxu0
        %v1686 = vadd.f32 0.0, %v1685
        %v1687 = vpop.f32.mrb[0].mxu0
        %v1688 = vadd.f32 0.0, %v1687
        %v1689 = vpop.f32.mrb[0].mxu0
        %v1690 = vadd.f32 0.0, %v1689
        %v1691 = vpop.f32.mrb[0].mxu0
        %v1692 = vadd.f32 0.0, %v1691
        %1693 = vmatprep.mubr.bf16.mxu0 0
        %1694 = vmatmul.mubr.bf16.gmra.mrb[0].mxu0 %v1631
        %v1695 = vpop.f32.mrb[0].mxu0
        %v1696 = vadd.f32 0.0, %v1695
        %v1697 = vpop.f32.mrb[0].mxu0
        %v1698 = vadd.f32 0.0, %v1697
        %v1699 = vpop.f32.mrb[0].mxu0
        %v1700 = vadd.f32 0.0, %v1699
        %v1701 = vpop.f32.mrb[0].mxu0
        %v1702 = vadd.f32 0.0, %v1701
        %1703 = vmatprep.mubr.bf16.mxu0 0
        %1704 = vmatmul.mubr.bf16.gmra.mrb[0].mxu0 %v1634
        %v1705 = vpop.f32.mrb[0].mxu0
        %v1706 = vadd.f32 0.0, %v1705
        %v1707 = vpop.f32.mrb[0].mxu0
        %v1708 = vadd.f32 0.0, %v1707
        %v1709 = vpop.f32.mrb[0].mxu0
        %v1710 = vadd.f32 0.0, %v1709
        %v1711 = vpop.f32.mrb[0].mxu0
        %v1712 = vadd.f32 0.0, %v1711
        %1713 = vmatprep.mubr.bf16.mxu0 0
        %1714 = vmatmul.mubr.bf16.gmra.mrb[0].mxu0 %v1637
        %v1715 = vpop.f32.mrb[0].mxu0
        %v1716 = vadd.f32 0.0, %v1715
        %v1717 = vpop.f32.mrb[0].mxu0
        %v1718 = vadd.f32 0.0, %v1717
        %v1719 = vpop.f32.mrb[0].mxu0
        %v1720 = vadd.f32 0.0, %v1719
        %v1721 = vpop.f32.mrb[0].mxu0
        %v1722 = vadd.f32 0.0, %v1721
        %1723 = vmatprep.mubr.bf16.mxu0 0
        %1724 = vmatmul.mubr.bf16.gmra.mrb[0].mxu0 %v1640
        %v1725 = vpop.f32.mrb[0].mxu0
        %v1726 = vadd.f32 0.0, %v1725
        %v1727 = vpop.f32.mrb[0].mxu0
        %v1728 = vadd.f32 0.0, %v1727
        %v1729 = vpop.f32.mrb[0].mxu0
        %v1730 = vadd.f32 0.0, %v1729
        %v1731 = vpop.f32.mrb[0].mxu0
        %v1732 = vadd.f32 0.0, %v1731
        %1733 = vmatprep.mubr.bf16.mxu0 0
        %1734 = vmatmul.mubr.bf16.gmra.mrb[0].mxu0 %v1643
        %v1735 = vpop.f32.mrb[0].mxu0
        %v1736 = vadd.f32 0.0, %v1735
        %v1737 = vpop.f32.mrb[0].mxu0
        %v1738 = vadd.f32 0.0, %v1737
        %v1739 = vpop.f32.mrb[0].mxu0
        %v1740 = vadd.f32 0.0, %v1739
        %v1741 = vpop.f32.mrb[0].mxu0
        %v1742 = vadd.f32 0.0, %v1741
        %1743 = vmatprep.mubr.bf16.mxu0 0
        %1744 = vmatmul.mubr.bf16.gmra.mrb[0].mxu0 %v1646
        %v1745 = vpop.f32.mrb[0].mxu0
        %v1746 = vadd.f32 0.0, %v1745
        %v1747 = vpop.f32.mrb[0].mxu0
        %v1748 = vadd.f32 0.0, %v1747
        %v1749 = vpop.f32.mrb[0].mxu0
        %v1750 = vadd.f32 0.0, %v1749
        %v1751 = vpop.f32.mrb[0].mxu0
        %v1752 = vadd.f32 0.0, %v1751
        %1753 = vmatprep.mubr.bf16.mxu0 0
        %1754 = vmatmul.mubr.bf16.gmra.mrb[0].mxu0 %v1649
        %v1755 = vpop.f32.mrb[0].mxu0
        %v1756 = vadd.f32 0.0, %v1755
        %v1757 = vpop.f32.mrb[0].mxu0
        %v1758 = vadd.f32 0.0, %v1757
        %v1759 = vpop.f32.mrb[0].mxu0
        %v1760 = vadd.f32 0.0, %v1759
        %v1761 = vpop.f32.mrb[0].mxu0
        %v1762 = vadd.f32 0.0, %v1761
        %1763 = vdwg.mxu0
        %v1764 = vpack.c.bf16 %v1690, %v1686
        %v1765 = vpack.c.bf16 %v1692, %v1688
        %v1766 = vpack.c.bf16 %v1700, %v1696
        %v1767 = vpack.c.bf16 %v1702, %v1698
        %v1768 = vpack.c.bf16 %v1710, %v1706
        %v1769 = vpack.c.bf16 %v1712, %v1708
        %v1770 = vpack.c.bf16 %v1720, %v1716
        %v1771 = vpack.c.bf16 %v1722, %v1718
        %v1772 = vpack.c.bf16 %v1730, %v1726
        %v1773 = vpack.c.bf16 %v1732, %v1728
        %v1774 = vpack.c.bf16 %v1740, %v1736
        %v1775 = vpack.c.bf16 %v1742, %v1738
        %v1776 = vpack.c.bf16 %v1750, %v1746
        %v1777 = vpack.c.bf16 %v1752, %v1748
        %v1778 = vpack.c.bf16 %v1760, %v1756
        %v1779 = vpack.c.bf16 %v1762, %v1758
        %v1780 = vld [vmem:[#allocation2] sm:$0xff]
        %v1781 = vld [vmem:[#allocation2 + $0x8] sm:$0xff]
        %v1782 = vld [vmem:[#allocation2 + $0x10] sm:$0xff]
        %v1783 = vld [vmem:[#allocation2 + $0x18] sm:$0xff]
        %v1784 = vld [vmem:[#allocation2 + $0x20] sm:$0xff]
        %v1785 = vld [vmem:[#allocation2 + $0x28] sm:$0xff]
        %v1786 = vld [vmem:[#allocation2 + $0x30] sm:$0xff]
        %v1787 = vld [vmem:[#allocation2 + $0x38] sm:$0xff]
        %v1788 = vld [vmem:[#allocation2 + $0x40] sm:$0xff]
        %v1789 = vld [vmem:[#allocation2 + $0x48] sm:$0xff]
        %v1790 = vld [vmem:[#allocation2 + $0x50] sm:$0xff]
        %v1791 = vld [vmem:[#allocation2 + $0x58] sm:$0xff]
        %v1792 = vld [vmem:[#allocation2 + $0x60] sm:$0xff]
        %v1793 = vld [vmem:[#allocation2 + $0x68] sm:$0xff]
        %v1794 = vld [vmem:[#allocation2 + $0x70] sm:$0xff]
        %v1795 = vld [vmem:[#allocation2 + $0x78] sm:$0xff]
        %v1796 = vld [vmem:[#allocation2 + $0x80] sm:$0xff]
        %v1797 = vld [vmem:[#allocation2 + $0x88] sm:$0xff]
        %v1798 = vld [vmem:[#allocation2 + $0x90] sm:$0xff]
        %v1799 = vld [vmem:[#allocation2 + $0x98] sm:$0xff]
        %v1800 = vld [vmem:[#allocation2 + $0xa0] sm:$0xff]
        %v1801 = vld [vmem:[#allocation2 + $0xa8] sm:$0xff]
        %v1802 = vld [vmem:[#allocation2 + $0xb0] sm:$0xff]
        %v1803 = vld [vmem:[#allocation2 + $0xb8] sm:$0xff]
        %v1804 = vld [vmem:[#allocation2 + $0xc0] sm:$0xff]
        %v1805 = vld [vmem:[#allocation2 + $0xc8] sm:$0xff]
        %v1806 = vld [vmem:[#allocation2 + $0xd0] sm:$0xff]
        %v1807 = vld [vmem:[#allocation2 + $0xd8] sm:$0xff]
        %v1808 = vld [vmem:[#allocation2 + $0xe0] sm:$0xff]
        %v1809 = vld [vmem:[#allocation2 + $0xe8] sm:$0xff]
        %v1810 = vld [vmem:[#allocation2 + $0xf0] sm:$0xff]
        %v1811 = vld [vmem:[#allocation2 + $0xf8] sm:$0xff]
        %v1812 = vld [vmem:[#allocation2 + $0x100] sm:$0xff]
        %v1813 = vld [vmem:[#allocation2 + $0x108] sm:$0xff]
        %v1814 = vld [vmem:[#allocation2 + $0x110] sm:$0xff]
        %v1815 = vld [vmem:[#allocation2 + $0x118] sm:$0xff]
        %v1816 = vld [vmem:[#allocation2 + $0x120] sm:$0xff]
        %v1817 = vld [vmem:[#allocation2 + $0x128] sm:$0xff]
        %v1818 = vld [vmem:[#allocation2 + $0x130] sm:$0xff]
        %v1819 = vld [vmem:[#allocation2 + $0x138] sm:$0xff]
        %v1820 = vld [vmem:[#allocation2 + $0x140] sm:$0xff]
        %v1821 = vld [vmem:[#allocation2 + $0x148] sm:$0xff]
        %v1822 = vld [vmem:[#allocation2 + $0x150] sm:$0xff]
        %v1823 = vld [vmem:[#allocation2 + $0x158] sm:$0xff]
        %v1824 = vld [vmem:[#allocation2 + $0x160] sm:$0xff]
        %v1825 = vld [vmem:[#allocation2 + $0x168] sm:$0xff]
        %v1826 = vld [vmem:[#allocation2 + $0x170] sm:$0xff]
        %v1827 = vld [vmem:[#allocation2 + $0x178] sm:$0xff]
        %v1828 = vld [vmem:[#allocation2 + $0x180] sm:$0xff]
        %v1829 = vld [vmem:[#allocation2 + $0x188] sm:$0xff]
        %v1830 = vld [vmem:[#allocation2 + $0x190] sm:$0xff]
        %v1831 = vld [vmem:[#allocation2 + $0x198] sm:$0xff]
        %v1832 = vld [vmem:[#allocation2 + $0x1a0] sm:$0xff]
        %v1833 = vld [vmem:[#allocation2 + $0x1a8] sm:$0xff]
        %v1834 = vld [vmem:[#allocation2 + $0x1b0] sm:$0xff]
        %v1835 = vld [vmem:[#allocation2 + $0x1b8] sm:$0xff]
        %v1836 = vld [vmem:[#allocation2 + $0x1c0] sm:$0xff]
        %v1837 = vld [vmem:[#allocation2 + $0x1c8] sm:$0xff]
        %v1838 = vld [vmem:[#allocation2 + $0x1d0] sm:$0xff]
        %v1839 = vld [vmem:[#allocation2 + $0x1d8] sm:$0xff]
        %v1840 = vld [vmem:[#allocation2 + $0x1e0] sm:$0xff]
        %v1841 = vld [vmem:[#allocation2 + $0x1e8] sm:$0xff]
        %v1842 = vld [vmem:[#allocation2 + $0x1f0] sm:$0xff]
        %v1843 = vld [vmem:[#allocation2 + $0x1f8] sm:$0xff]
        %vm1844 = vcmask 261120
        %v1846 = vsel %vm1844, %v1780, 0
        %v1849 = vsel %vm1844, %v1781, 0
        %v1852 = vsel %vm1844, %v1782, 0
        %v1855 = vsel %vm1844, %v1783, 0
        %v1858 = vsel %vm1844, %v1784, 0
        %v1861 = vsel %vm1844, %v1785, 0
        %v1864 = vsel %vm1844, %v1786, 0
        %v1867 = vsel %vm1844, %v1787, 0
        %v1870 = vsel %vm1844, %v1788, 0
        %v1873 = vsel %vm1844, %v1789, 0
        %v1876 = vsel %vm1844, %v1790, 0
        %v1879 = vsel %vm1844, %v1791, 0
        %v1882 = vsel %vm1844, %v1792, 0
        %v1885 = vsel %vm1844, %v1793, 0
        %v1888 = vsel %vm1844, %v1794, 0
        %v1891 = vsel %vm1844, %v1795, 0
        %1893 = vmatprep.subr.bf16.mxu0 %v1556
        %1894 = vmatpush1.bf16.msra.mxu0 %v1555
        %1895 = vmatprep.subr.bf16.mxu0 %v1558
        %1896 = vmatpush1.bf16.msra.mxu0 %v1557
        %1897 = vmatprep.subr.bf16.mxu0 0
        %1898 = vmatpush1.bf16.msra.mxu0 0
        %1899 = vmatprep.subr.bf16.mxu0 0
        %1900 = vmatpush1.bf16.msra.mxu0 0
        %1901 = vmatprep.subr.bf16.mxu0 0
        %1902 = vmatpush1.bf16.msra.mxu0 0
        %1903 = vmatprep.subr.bf16.mxu0 0
        %1904 = vmatpush1.bf16.msra.mxu0 0
        %1905 = vmatprep.subr.bf16.mxu0 0
        %1906 = vmatpush1.bf16.msra.mxu0 0
        %1907 = vmatprep.subr.bf16.mxu0 0
        %1908 = vmatpush1.bf16.msra.mxu0 0
        %1909 = vmatprep.subr.bf16.mxu0 0
        %1910 = vmatpush1.bf16.msra.mxu0 0
        %1911 = vmatprep.subr.bf16.mxu0 0
        %1912 = vmatpush1.bf16.msra.mxu0 0
        %1913 = vmatprep.subr.bf16.mxu0 0
        %1914 = vmatpush1.bf16.msra.mxu0 0
        %1915 = vmatprep.subr.bf16.mxu0 0
        %1916 = vmatpush1.bf16.msra.mxu0 0
        %1917 = vmatprep.subr.bf16.mxu0 0
        %1918 = vmatpush1.bf16.msra.mxu0 0
        %1919 = vmatprep.subr.bf16.mxu0 0
        %1920 = vmatpush1.bf16.msra.mxu0 0
        %1921 = vmatprep.subr.bf16.mxu0 0
        %1922 = vmatpush1.bf16.msra.mxu0 0
        %1923 = vmatprep.subr.bf16.mxu0 0
        %1924 = vmatpush1.bf16.msra.mxu0 0
        %1925 = vmatprep.mubr.bf16.mxu0 0
        %1926 = vmatmul.mubr.bf16.gmra.mrb[0].mxu0 %v1846
        %v1927 = vpop.f32.mrb[0].mxu0
        %v1928 = vadd.f32 0.0, %v1927
        %v1929 = vpop.f32.mrb[0].mxu0
        %v1930 = vadd.f32 0.0, %v1929
        %v1931 = vpop.f32.mrb[0].mxu0
        %v1932 = vadd.f32 0.0, %v1931
        %v1933 = vpop.f32.mrb[0].mxu0
        %v1934 = vadd.f32 0.0, %v1933
        %1935 = vmatprep.mubr.bf16.mxu0 0
        %1936 = vmatmul.mubr.bf16.gmra.mrb[0].mxu0 %v1849
        %v1937 = vpop.f32.mrb[0].mxu0
        %v1938 = vadd.f32 0.0, %v1937
        %v1939 = vpop.f32.mrb[0].mxu0
        %v1940 = vadd.f32 0.0, %v1939
        %v1941 = vpop.f32.mrb[0].mxu0
        %v1942 = vadd.f32 0.0, %v1941
        %v1943 = vpop.f32.mrb[0].mxu0
        %v1944 = vadd.f32 0.0, %v1943
        %1945 = vmatprep.mubr.bf16.mxu0 0
        %1946 = vmatmul.mubr.bf16.gmra.mrb[0].mxu0 %v1852
        %v1947 = vpop.f32.mrb[0].mxu0
        %v1948 = vadd.f32 0.0, %v1947
        %v1949 = vpop.f32.mrb[0].mxu0
        %v1950 = vadd.f32 0.0, %v1949
        %v1951 = vpop.f32.mrb[0].mxu0
        %v1952 = vadd.f32 0.0, %v1951
        %v1953 = vpop.f32.mrb[0].mxu0
        %v1954 = vadd.f32 0.0, %v1953
        %1955 = vmatprep.mubr.bf16.mxu0 0
        %1956 = vmatmul.mubr.bf16.gmra.mrb[0].mxu0 %v1855
        %v1957 = vpop.f32.mrb[0].mxu0
        %v1958 = vadd.f32 0.0, %v1957
        %v1959 = vpop.f32.mrb[0].mxu0
        %v1960 = vadd.f32 0.0, %v1959
        %v1961 = vpop.f32.mrb[0].mxu0
        %v1962 = vadd.f32 0.0, %v1961
        %v1963 = vpop.f32.mrb[0].mxu0
        %v1964 = vadd.f32 0.0, %v1963
        %1965 = vmatprep.mubr.bf16.mxu0 0
        %1966 = vmatmul.mubr.bf16.gmra.mrb[0].mxu0 %v1858
        %v1967 = vpop.f32.mrb[0].mxu0
        %v1968 = vadd.f32 0.0, %v1967
        %v1969 = vpop.f32.mrb[0].mxu0
        %v1970 = vadd.f32 0.0, %v1969
        %v1971 = vpop.f32.mrb[0].mxu0
        %v1972 = vadd.f32 0.0, %v1971
        %v1973 = vpop.f32.mrb[0].mxu0
        %v1974 = vadd.f32 0.0, %v1973
        %1975 = vmatprep.mubr.bf16.mxu0 0
        %1976 = vmatmul.mubr.bf16.gmra.mrb[0].mxu0 %v1861
        %v1977 = vpop.f32.mrb[0].mxu0
        %v1978 = vadd.f32 0.0, %v1977
        %v1979 = vpop.f32.mrb[0].mxu0
        %v1980 = vadd.f32 0.0, %v1979
        %v1981 = vpop.f32.mrb[0].mxu0
        %v1982 = vadd.f32 0.0, %v1981
        %v1983 = vpop.f32.mrb[0].mxu0
        %v1984 = vadd.f32 0.0, %v1983
        %1985 = vmatprep.mubr.bf16.mxu0 0
        %1986 = vmatmul.mubr.bf16.gmra.mrb[0].mxu0 %v1864
        %v1987 = vpop.f32.mrb[0].mxu0
        %v1988 = vadd.f32 0.0, %v1987
        %v1989 = vpop.f32.mrb[0].mxu0
        %v1990 = vadd.f32 0.0, %v1989
        %v1991 = vpop.f32.mrb[0].mxu0
        %v1992 = vadd.f32 0.0, %v1991
        %v1993 = vpop.f32.mrb[0].mxu0
        %v1994 = vadd.f32 0.0, %v1993
        %1995 = vmatprep.mubr.bf16.mxu0 0
        %1996 = vmatmul.mubr.bf16.gmra.mrb[0].mxu0 %v1867
        %v1997 = vpop.f32.mrb[0].mxu0
        %v1998 = vadd.f32 0.0, %v1997
        %v1999 = vpop.f32.mrb[0].mxu0
        %v2000 = vadd.f32 0.0, %v1999
        %v2001 = vpop.f32.mrb[0].mxu0
        %v2002 = vadd.f32 0.0, %v2001
        %v2003 = vpop.f32.mrb[0].mxu0
        %v2004 = vadd.f32 0.0, %v2003
        %2005 = vmatprep.mubr.bf16.mxu0 0
        %2006 = vmatmul.mubr.bf16.gmra.mrb[0].mxu0 %v1870
        %v2007 = vpop.f32.mrb[0].mxu0
        %v2008 = vadd.f32 0.0, %v2007
        %v2009 = vpop.f32.mrb[0].mxu0
        %v2010 = vadd.f32 0.0, %v2009
        %v2011 = vpop.f32.mrb[0].mxu0
        %v2012 = vadd.f32 0.0, %v2011
        %v2013 = vpop.f32.mrb[0].mxu0
        %v2014 = vadd.f32 0.0, %v2013
        %2015 = vmatprep.mubr.bf16.mxu0 0
        %2016 = vmatmul.mubr.bf16.gmra.mrb[0].mxu0 %v1873
        %v2017 = vpop.f32.mrb[0].mxu0
        %v2018 = vadd.f32 0.0, %v2017
        %v2019 = vpop.f32.mrb[0].mxu0
        %v2020 = vadd.f32 0.0, %v2019
        %v2021 = vpop.f32.mrb[0].mxu0
        %v2022 = vadd.f32 0.0, %v2021
        %v2023 = vpop.f32.mrb[0].mxu0
        %v2024 = vadd.f32 0.0, %v2023
        %2025 = vmatprep.mubr.bf16.mxu0 0
        %2026 = vmatmul.mubr.bf16.gmra.mrb[0].mxu0 %v1876
        %v2027 = vpop.f32.mrb[0].mxu0
        %v2028 = vadd.f32 0.0, %v2027
        %v2029 = vpop.f32.mrb[0].mxu0
        %v2030 = vadd.f32 0.0, %v2029
        %v2031 = vpop.f32.mrb[0].mxu0
        %v2032 = vadd.f32 0.0, %v2031
        %v2033 = vpop.f32.mrb[0].mxu0
        %v2034 = vadd.f32 0.0, %v2033
        %2035 = vmatprep.mubr.bf16.mxu0 0
        %2036 = vmatmul.mubr.bf16.gmra.mrb[0].mxu0 %v1879
        %v2037 = vpop.f32.mrb[0].mxu0
        %v2038 = vadd.f32 0.0, %v2037
        %v2039 = vpop.f32.mrb[0].mxu0
        %v2040 = vadd.f32 0.0, %v2039
        %v2041 = vpop.f32.mrb[0].mxu0
        %v2042 = vadd.f32 0.0, %v2041
        %v2043 = vpop.f32.mrb[0].mxu0
        %v2044 = vadd.f32 0.0, %v2043
        %2045 = vmatprep.mubr.bf16.mxu0 0
        %2046 = vmatmul.mubr.bf16.gmra.mrb[0].mxu0 %v1882
        %v2047 = vpop.f32.mrb[0].mxu0
        %v2048 = vadd.f32 0.0, %v2047
        %v2049 = vpop.f32.mrb[0].mxu0
        %v2050 = vadd.f32 0.0, %v2049
        %v2051 = vpop.f32.mrb[0].mxu0
        %v2052 = vadd.f32 0.0, %v2051
        %v2053 = vpop.f32.mrb[0].mxu0
        %v2054 = vadd.f32 0.0, %v2053
        %2055 = vmatprep.mubr.bf16.mxu0 0
        %2056 = vmatmul.mubr.bf16.gmra.mrb[0].mxu0 %v1885
        %v2057 = vpop.f32.mrb[0].mxu0
        %v2058 = vadd.f32 0.0, %v2057
        %v2059 = vpop.f32.mrb[0].mxu0
        %v2060 = vadd.f32 0.0, %v2059
        %v2061 = vpop.f32.mrb[0].mxu0
        %v2062 = vadd.f32 0.0, %v2061
        %v2063 = vpop.f32.mrb[0].mxu0
        %v2064 = vadd.f32 0.0, %v2063
        %2065 = vmatprep.mubr.bf16.mxu0 0
        %2066 = vmatmul.mubr.bf16.gmra.mrb[0].mxu0 %v1888
        %v2067 = vpop.f32.mrb[0].mxu0
        %v2068 = vadd.f32 0.0, %v2067
        %v2069 = vpop.f32.mrb[0].mxu0
        %v2070 = vadd.f32 0.0, %v2069
        %v2071 = vpop.f32.mrb[0].mxu0
        %v2072 = vadd.f32 0.0, %v2071
        %v2073 = vpop.f32.mrb[0].mxu0
        %v2074 = vadd.f32 0.0, %v2073
        %2075 = vmatprep.mubr.bf16.mxu0 0
        %2076 = vmatmul.mubr.bf16.gmra.mrb[0].mxu0 %v1891
        %v2077 = vpop.f32.mrb[0].mxu0
        %v2078 = vadd.f32 0.0, %v2077
        %v2079 = vpop.f32.mrb[0].mxu0
        %v2080 = vadd.f32 0.0, %v2079
        %v2081 = vpop.f32.mrb[0].mxu0
        %v2082 = vadd.f32 0.0, %v2081
        %v2083 = vpop.f32.mrb[0].mxu0
        %v2084 = vadd.f32 0.0, %v2083
        %2085 = vdwg.mxu0
        %v2087 = vsel %vm1844, %v1796, 0
        %v2090 = vsel %vm1844, %v1797, 0
        %v2093 = vsel %vm1844, %v1798, 0
        %v2096 = vsel %vm1844, %v1799, 0
        %v2099 = vsel %vm1844, %v1800, 0
        %v2102 = vsel %vm1844, %v1801, 0
        %v2105 = vsel %vm1844, %v1802, 0
        %v2108 = vsel %vm1844, %v1803, 0
        %v2111 = vsel %vm1844, %v1804, 0
        %v2114 = vsel %vm1844, %v1805, 0
        %v2117 = vsel %vm1844, %v1806, 0
        %v2120 = vsel %vm1844, %v1807, 0
        %v2123 = vsel %vm1844, %v1808, 0
        %v2126 = vsel %vm1844, %v1809, 0
        %v2129 = vsel %vm1844, %v1810, 0
        %v2132 = vsel %vm1844, %v1811, 0
        %2134 = vmatprep.subr.bf16.mxu0 %v1560
        %2135 = vmatpush1.bf16.msra.mxu0 %v1559
        %2136 = vmatprep.subr.bf16.mxu0 %v1562
        %2137 = vmatpush1.bf16.msra.mxu0 %v1561
        %2138 = vmatprep.subr.bf16.mxu0 0
        %2139 = vmatpush1.bf16.msra.mxu0 0
        %2140 = vmatprep.subr.bf16.mxu0 0
        %2141 = vmatpush1.bf16.msra.mxu0 0
        %2142 = vmatprep.subr.bf16.mxu0 0
        %2143 = vmatpush1.bf16.msra.mxu0 0
        %2144 = vmatprep.subr.bf16.mxu0 0
        %2145 = vmatpush1.bf16.msra.mxu0 0
        %2146 = vmatprep.subr.bf16.mxu0 0
        %2147 = vmatpush1.bf16.msra.mxu0 0
        %2148 = vmatprep.subr.bf16.mxu0 0
        %2149 = vmatpush1.bf16.msra.mxu0 0
        %2150 = vmatprep.subr.bf16.mxu0 0
        %2151 = vmatpush1.bf16.msra.mxu0 0
        %2152 = vmatprep.subr.bf16.mxu0 0
        %2153 = vmatpush1.bf16.msra.mxu0 0
        %2154 = vmatprep.subr.bf16.mxu0 0
        %2155 = vmatpush1.bf16.msra.mxu0 0
        %2156 = vmatprep.subr.bf16.mxu0 0
        %2157 = vmatpush1.bf16.msra.mxu0 0
        %2158 = vmatprep.subr.bf16.mxu0 0
        %2159 = vmatpush1.bf16.msra.mxu0 0
        %2160 = vmatprep.subr.bf16.mxu0 0
        %2161 = vmatpush1.bf16.msra.mxu0 0
        %2162 = vmatprep.subr.bf16.mxu0 0
        %2163 = vmatpush1.bf16.msra.mxu0 0
        %2164 = vmatprep.subr.bf16.mxu0 0
        %2165 = vmatpush1.bf16.msra.mxu0 0
        %2166 = vmatprep.mubr.bf16.mxu0 0
        %2167 = vmatmul.mubr.bf16.gmra.mrb[0].mxu0 %v2087
        %v2168 = vpop.f32.mrb[0].mxu0
        %v2169 = vadd.f32 0.0, %v2168
        %v2170 = vpop.f32.mrb[0].mxu0
        %v2171 = vadd.f32 0.0, %v2170
        %v2172 = vpop.f32.mrb[0].mxu0
        %v2173 = vadd.f32 0.0, %v2172
        %v2174 = vpop.f32.mrb[0].mxu0
        %v2175 = vadd.f32 0.0, %v2174
        %2176 = vmatprep.mubr.bf16.mxu0 0
        %2177 = vmatmul.mubr.bf16.gmra.mrb[0].mxu0 %v2090
        %v2178 = vpop.f32.mrb[0].mxu0
        %v2179 = vadd.f32 0.0, %v2178
        %v2180 = vpop.f32.mrb[0].mxu0
        %v2181 = vadd.f32 0.0, %v2180
        %v2182 = vpop.f32.mrb[0].mxu0
        %v2183 = vadd.f32 0.0, %v2182
        %v2184 = vpop.f32.mrb[0].mxu0
        %v2185 = vadd.f32 0.0, %v2184
        %2186 = vmatprep.mubr.bf16.mxu0 0
        %2187 = vmatmul.mubr.bf16.gmra.mrb[0].mxu0 %v2093
        %v2188 = vpop.f32.mrb[0].mxu0
        %v2189 = vadd.f32 0.0, %v2188
        %v2190 = vpop.f32.mrb[0].mxu0
        %v2191 = vadd.f32 0.0, %v2190
        %v2192 = vpop.f32.mrb[0].mxu0
        %v2193 = vadd.f32 0.0, %v2192
        %v2194 = vpop.f32.mrb[0].mxu0
        %v2195 = vadd.f32 0.0, %v2194
        %2196 = vmatprep.mubr.bf16.mxu0 0
        %2197 = vmatmul.mubr.bf16.gmra.mrb[0].mxu0 %v2096
        %v2198 = vpop.f32.mrb[0].mxu0
        %v2199 = vadd.f32 0.0, %v2198
        %v2200 = vpop.f32.mrb[0].mxu0
        %v2201 = vadd.f32 0.0, %v2200
        %v2202 = vpop.f32.mrb[0].mxu0
        %v2203 = vadd.f32 0.0, %v2202
        %v2204 = vpop.f32.mrb[0].mxu0
        %v2205 = vadd.f32 0.0, %v2204
        %2206 = vmatprep.mubr.bf16.mxu0 0
        %2207 = vmatmul.mubr.bf16.gmra.mrb[0].mxu0 %v2099
        %v2208 = vpop.f32.mrb[0].mxu0
        %v2209 = vadd.f32 0.0, %v2208
        %v2210 = vpop.f32.mrb[0].mxu0
        %v2211 = vadd.f32 0.0, %v2210
        %v2212 = vpop.f32.mrb[0].mxu0
        %v2213 = vadd.f32 0.0, %v2212
        %v2214 = vpop.f32.mrb[0].mxu0
        %v2215 = vadd.f32 0.0, %v2214
        %2216 = vmatprep.mubr.bf16.mxu0 0
        %2217 = vmatmul.mubr.bf16.gmra.mrb[0].mxu0 %v2102
        %v2218 = vpop.f32.mrb[0].mxu0
        %v2219 = vadd.f32 0.0, %v2218
        %v2220 = vpop.f32.mrb[0].mxu0
        %v2221 = vadd.f32 0.0, %v2220
        %v2222 = vpop.f32.mrb[0].mxu0
        %v2223 = vadd.f32 0.0, %v2222
        %v2224 = vpop.f32.mrb[0].mxu0
        %v2225 = vadd.f32 0.0, %v2224
        %2226 = vmatprep.mubr.bf16.mxu0 0
        %2227 = vmatmul.mubr.bf16.gmra.mrb[0].mxu0 %v2105
        %v2228 = vpop.f32.mrb[0].mxu0
        %v2229 = vadd.f32 0.0, %v2228
        %v2230 = vpop.f32.mrb[0].mxu0
        %v2231 = vadd.f32 0.0, %v2230
        %v2232 = vpop.f32.mrb[0].mxu0
        %v2233 = vadd.f32 0.0, %v2232
        %v2234 = vpop.f32.mrb[0].mxu0
        %v2235 = vadd.f32 0.0, %v2234
        %2236 = vmatprep.mubr.bf16.mxu0 0
        %2237 = vmatmul.mubr.bf16.gmra.mrb[0].mxu0 %v2108
        %v2238 = vpop.f32.mrb[0].mxu0
        %v2239 = vadd.f32 0.0, %v2238
        %v2240 = vpop.f32.mrb[0].mxu0
        %v2241 = vadd.f32 0.0, %v2240
        %v2242 = vpop.f32.mrb[0].mxu0
        %v2243 = vadd.f32 0.0, %v2242
        %v2244 = vpop.f32.mrb[0].mxu0
        %v2245 = vadd.f32 0.0, %v2244
        %2246 = vmatprep.mubr.bf16.mxu0 0
        %2247 = vmatmul.mubr.bf16.gmra.mrb[0].mxu0 %v2111
        %v2248 = vpop.f32.mrb[0].mxu0
        %v2249 = vadd.f32 0.0, %v2248
        %v2250 = vpop.f32.mrb[0].mxu0
        %v2251 = vadd.f32 0.0, %v2250
        %v2252 = vpop.f32.mrb[0].mxu0
        %v2253 = vadd.f32 0.0, %v2252
        %v2254 = vpop.f32.mrb[0].mxu0
        %v2255 = vadd.f32 0.0, %v2254
        %2256 = vmatprep.mubr.bf16.mxu0 0
        %2257 = vmatmul.mubr.bf16.gmra.mrb[0].mxu0 %v2114
        %v2258 = vpop.f32.mrb[0].mxu0
        %v2259 = vadd.f32 0.0, %v2258
        %v2260 = vpop.f32.mrb[0].mxu0
        %v2261 = vadd.f32 0.0, %v2260
        %v2262 = vpop.f32.mrb[0].mxu0
        %v2263 = vadd.f32 0.0, %v2262
        %v2264 = vpop.f32.mrb[0].mxu0
        %v2265 = vadd.f32 0.0, %v2264
        %2266 = vmatprep.mubr.bf16.mxu0 0
        %2267 = vmatmul.mubr.bf16.gmra.mrb[0].mxu0 %v2117
        %v2268 = vpop.f32.mrb[0].mxu0
        %v2269 = vadd.f32 0.0, %v2268
        %v2270 = vpop.f32.mrb[0].mxu0
        %v2271 = vadd.f32 0.0, %v2270
        %v2272 = vpop.f32.mrb[0].mxu0
        %v2273 = vadd.f32 0.0, %v2272
        %v2274 = vpop.f32.mrb[0].mxu0
        %v2275 = vadd.f32 0.0, %v2274
        %2276 = vmatprep.mubr.bf16.mxu0 0
        %2277 = vmatmul.mubr.bf16.gmra.mrb[0].mxu0 %v2120
        %v2278 = vpop.f32.mrb[0].mxu0
        %v2279 = vadd.f32 0.0, %v2278
        %v2280 = vpop.f32.mrb[0].mxu0
        %v2281 = vadd.f32 0.0, %v2280
        %v2282 = vpop.f32.mrb[0].mxu0
        %v2283 = vadd.f32 0.0, %v2282
        %v2284 = vpop.f32.mrb[0].mxu0
        %v2285 = vadd.f32 0.0, %v2284
        %2286 = vmatprep.mubr.bf16.mxu0 0
        %2287 = vmatmul.mubr.bf16.gmra.mrb[0].mxu0 %v2123
        %v2288 = vpop.f32.mrb[0].mxu0
        %v2289 = vadd.f32 0.0, %v2288
        %v2290 = vpop.f32.mrb[0].mxu0
        %v2291 = vadd.f32 0.0, %v2290
        %v2292 = vpop.f32.mrb[0].mxu0
        %v2293 = vadd.f32 0.0, %v2292
        %v2294 = vpop.f32.mrb[0].mxu0
        %v2295 = vadd.f32 0.0, %v2294
        %2296 = vmatprep.mubr.bf16.mxu0 0
        %2297 = vmatmul.mubr.bf16.gmra.mrb[0].mxu0 %v2126
        %v2298 = vpop.f32.mrb[0].mxu0
        %v2299 = vadd.f32 0.0, %v2298
        %v2300 = vpop.f32.mrb[0].mxu0
        %v2301 = vadd.f32 0.0, %v2300
        %v2302 = vpop.f32.mrb[0].mxu0
        %v2303 = vadd.f32 0.0, %v2302
        %v2304 = vpop.f32.mrb[0].mxu0
        %v2305 = vadd.f32 0.0, %v2304
        %2306 = vmatprep.mubr.bf16.mxu0 0
        %2307 = vmatmul.mubr.bf16.gmra.mrb[0].mxu0 %v2129
        %v2308 = vpop.f32.mrb[0].mxu0
        %v2309 = vadd.f32 0.0, %v2308
        %v2310 = vpop.f32.mrb[0].mxu0
        %v2311 = vadd.f32 0.0, %v2310
        %v2312 = vpop.f32.mrb[0].mxu0
        %v2313 = vadd.f32 0.0, %v2312
        %v2314 = vpop.f32.mrb[0].mxu0
        %v2315 = vadd.f32 0.0, %v2314
        %2316 = vmatprep.mubr.bf16.mxu0 0
        %2317 = vmatmul.mubr.bf16.gmra.mrb[0].mxu0 %v2132
        %v2318 = vpop.f32.mrb[0].mxu0
        %v2319 = vadd.f32 0.0, %v2318
        %v2320 = vpop.f32.mrb[0].mxu0
        %v2321 = vadd.f32 0.0, %v2320
        %v2322 = vpop.f32.mrb[0].mxu0
        %v2323 = vadd.f32 0.0, %v2322
        %v2324 = vpop.f32.mrb[0].mxu0
        %v2325 = vadd.f32 0.0, %v2324
        %2326 = vdwg.mxu0
        %v2328 = vsel %vm1844, %v1812, 0
        %v2331 = vsel %vm1844, %v1813, 0
        %v2334 = vsel %vm1844, %v1814, 0
        %v2337 = vsel %vm1844, %v1815, 0
        %v2340 = vsel %vm1844, %v1816, 0
        %v2343 = vsel %vm1844, %v1817, 0
        %v2346 = vsel %vm1844, %v1818, 0
        %v2349 = vsel %vm1844, %v1819, 0
        %v2352 = vsel %vm1844, %v1820, 0
        %v2355 = vsel %vm1844, %v1821, 0
        %v2358 = vsel %vm1844, %v1822, 0
        %v2361 = vsel %vm1844, %v1823, 0
        %v2364 = vsel %vm1844, %v1824, 0
        %v2367 = vsel %vm1844, %v1825, 0
        %v2370 = vsel %vm1844, %v1826, 0
        %v2373 = vsel %vm1844, %v1827, 0
        %2375 = vmatprep.subr.bf16.mxu0 %v1564
        %2376 = vmatpush1.bf16.msra.mxu0 %v1563
        %2377 = vmatprep.subr.bf16.mxu0 %v1566
        %2378 = vmatpush1.bf16.msra.mxu0 %v1565
        %2379 = vmatprep.subr.bf16.mxu0 0
        %2380 = vmatpush1.bf16.msra.mxu0 0
        %2381 = vmatprep.subr.bf16.mxu0 0
        %2382 = vmatpush1.bf16.msra.mxu0 0
        %2383 = vmatprep.subr.bf16.mxu0 0
        %2384 = vmatpush1.bf16.msra.mxu0 0
        %2385 = vmatprep.subr.bf16.mxu0 0
        %2386 = vmatpush1.bf16.msra.mxu0 0
        %2387 = vmatprep.subr.bf16.mxu0 0
        %2388 = vmatpush1.bf16.msra.mxu0 0
        %2389 = vmatprep.subr.bf16.mxu0 0
        %2390 = vmatpush1.bf16.msra.mxu0 0
        %2391 = vmatprep.subr.bf16.mxu0 0
        %2392 = vmatpush1.bf16.msra.mxu0 0
        %2393 = vmatprep.subr.bf16.mxu0 0
        %2394 = vmatpush1.bf16.msra.mxu0 0
        %2395 = vmatprep.subr.bf16.mxu0 0
        %2396 = vmatpush1.bf16.msra.mxu0 0
        %2397 = vmatprep.subr.bf16.mxu0 0
        %2398 = vmatpush1.bf16.msra.mxu0 0
        %2399 = vmatprep.subr.bf16.mxu0 0
        %2400 = vmatpush1.bf16.msra.mxu0 0
        %2401 = vmatprep.subr.bf16.mxu0 0
        %2402 = vmatpush1.bf16.msra.mxu0 0
        %2403 = vmatprep.subr.bf16.mxu0 0
        %2404 = vmatpush1.bf16.msra.mxu0 0
        %2405 = vmatprep.subr.bf16.mxu0 0
        %2406 = vmatpush1.bf16.msra.mxu0 0
        %2407 = vmatprep.mubr.bf16.mxu0 0
        %2408 = vmatmul.mubr.bf16.gmra.mrb[0].mxu0 %v2328
        %v2409 = vpop.f32.mrb[0].mxu0
        %v2410 = vadd.f32 0.0, %v2409
        %v2411 = vpop.f32.mrb[0].mxu0
        %v2412 = vadd.f32 0.0, %v2411
        %v2413 = vpop.f32.mrb[0].mxu0
        %v2414 = vadd.f32 0.0, %v2413
        %v2415 = vpop.f32.mrb[0].mxu0
        %v2416 = vadd.f32 0.0, %v2415
        %2417 = vmatprep.mubr.bf16.mxu0 0
        %2418 = vmatmul.mubr.bf16.gmra.mrb[0].mxu0 %v2331
        %v2419 = vpop.f32.mrb[0].mxu0
        %v2420 = vadd.f32 0.0, %v2419
        %v2421 = vpop.f32.mrb[0].mxu0
        %v2422 = vadd.f32 0.0, %v2421
        %v2423 = vpop.f32.mrb[0].mxu0
        %v2424 = vadd.f32 0.0, %v2423
        %v2425 = vpop.f32.mrb[0].mxu0
        %v2426 = vadd.f32 0.0, %v2425
        %2427 = vmatprep.mubr.bf16.mxu0 0
        %2428 = vmatmul.mubr.bf16.gmra.mrb[0].mxu0 %v2334
        %v2429 = vpop.f32.mrb[0].mxu0
        %v2430 = vadd.f32 0.0, %v2429
        %v2431 = vpop.f32.mrb[0].mxu0
        %v2432 = vadd.f32 0.0, %v2431
        %v2433 = vpop.f32.mrb[0].mxu0
        %v2434 = vadd.f32 0.0, %v2433
        %v2435 = vpop.f32.mrb[0].mxu0
        %v2436 = vadd.f32 0.0, %v2435
        %2437 = vmatprep.mubr.bf16.mxu0 0
        %2438 = vmatmul.mubr.bf16.gmra.mrb[0].mxu0 %v2337
        %v2439 = vpop.f32.mrb[0].mxu0
        %v2440 = vadd.f32 0.0, %v2439
        %v2441 = vpop.f32.mrb[0].mxu0
        %v2442 = vadd.f32 0.0, %v2441
        %v2443 = vpop.f32.mrb[0].mxu0
        %v2444 = vadd.f32 0.0, %v2443
        %v2445 = vpop.f32.mrb[0].mxu0
        %v2446 = vadd.f32 0.0, %v2445
        %2447 = vmatprep.mubr.bf16.mxu0 0
        %2448 = vmatmul.mubr.bf16.gmra.mrb[0].mxu0 %v2340
        %v2449 = vpop.f32.mrb[0].mxu0
        %v2450 = vadd.f32 0.0, %v2449
        %v2451 = vpop.f32.mrb[0].mxu0
        %v2452 = vadd.f32 0.0, %v2451
        %v2453 = vpop.f32.mrb[0].mxu0
        %v2454 = vadd.f32 0.0, %v2453
        %v2455 = vpop.f32.mrb[0].mxu0
        %v2456 = vadd.f32 0.0, %v2455
        %2457 = vmatprep.mubr.bf16.mxu0 0
        %2458 = vmatmul.mubr.bf16.gmra.mrb[0].mxu0 %v2343
        %v2459 = vpop.f32.mrb[0].mxu0
        %v2460 = vadd.f32 0.0, %v2459
        %v2461 = vpop.f32.mrb[0].mxu0
        %v2462 = vadd.f32 0.0, %v2461
        %v2463 = vpop.f32.mrb[0].mxu0
        %v2464 = vadd.f32 0.0, %v2463
        %v2465 = vpop.f32.mrb[0].mxu0
        %v2466 = vadd.f32 0.0, %v2465
        %2467 = vmatprep.mubr.bf16.mxu0 0
        %2468 = vmatmul.mubr.bf16.gmra.mrb[0].mxu0 %v2346
        %v2469 = vpop.f32.mrb[0].mxu0
        %v2470 = vadd.f32 0.0, %v2469
        %v2471 = vpop.f32.mrb[0].mxu0
        %v2472 = vadd.f32 0.0, %v2471
        %v2473 = vpop.f32.mrb[0].mxu0
        %v2474 = vadd.f32 0.0, %v2473
        %v2475 = vpop.f32.mrb[0].mxu0
        %v2476 = vadd.f32 0.0, %v2475
        %2477 = vmatprep.mubr.bf16.mxu0 0
        %2478 = vmatmul.mubr.bf16.gmra.mrb[0].mxu0 %v2349
        %v2479 = vpop.f32.mrb[0].mxu0
        %v2480 = vadd.f32 0.0, %v2479
        %v2481 = vpop.f32.mrb[0].mxu0
        %v2482 = vadd.f32 0.0, %v2481
        %v2483 = vpop.f32.mrb[0].mxu0
        %v2484 = vadd.f32 0.0, %v2483
        %v2485 = vpop.f32.mrb[0].mxu0
        %v2486 = vadd.f32 0.0, %v2485
        %2487 = vmatprep.mubr.bf16.mxu0 0
        %2488 = vmatmul.mubr.bf16.gmra.mrb[0].mxu0 %v2352
        %v2489 = vpop.f32.mrb[0].mxu0
        %v2490 = vadd.f32 0.0, %v2489
        %v2491 = vpop.f32.mrb[0].mxu0
        %v2492 = vadd.f32 0.0, %v2491
        %v2493 = vpop.f32.mrb[0].mxu0
        %v2494 = vadd.f32 0.0, %v2493
        %v2495 = vpop.f32.mrb[0].mxu0
        %v2496 = vadd.f32 0.0, %v2495
        %2497 = vmatprep.mubr.bf16.mxu0 0
        %2498 = vmatmul.mubr.bf16.gmra.mrb[0].mxu0 %v2355
        %v2499 = vpop.f32.mrb[0].mxu0
        %v2500 = vadd.f32 0.0, %v2499
        %v2501 = vpop.f32.mrb[0].mxu0
        %v2502 = vadd.f32 0.0, %v2501
        %v2503 = vpop.f32.mrb[0].mxu0
        %v2504 = vadd.f32 0.0, %v2503
        %v2505 = vpop.f32.mrb[0].mxu0
        %v2506 = vadd.f32 0.0, %v2505
        %2507 = vmatprep.mubr.bf16.mxu0 0
        %2508 = vmatmul.mubr.bf16.gmra.mrb[0].mxu0 %v2358
        %v2509 = vpop.f32.mrb[0].mxu0
        %v2510 = vadd.f32 0.0, %v2509
        %v2511 = vpop.f32.mrb[0].mxu0
        %v2512 = vadd.f32 0.0, %v2511
        %v2513 = vpop.f32.mrb[0].mxu0
        %v2514 = vadd.f32 0.0, %v2513
        %v2515 = vpop.f32.mrb[0].mxu0
        %v2516 = vadd.f32 0.0, %v2515
        %2517 = vmatprep.mubr.bf16.mxu0 0
        %2518 = vmatmul.mubr.bf16.gmra.mrb[0].mxu0 %v2361
        %v2519 = vpop.f32.mrb[0].mxu0
        %v2520 = vadd.f32 0.0, %v2519
        %v2521 = vpop.f32.mrb[0].mxu0
        %v2522 = vadd.f32 0.0, %v2521
        %v2523 = vpop.f32.mrb[0].mxu0
        %v2524 = vadd.f32 0.0, %v2523
        %v2525 = vpop.f32.mrb[0].mxu0
        %v2526 = vadd.f32 0.0, %v2525
        %2527 = vmatprep.mubr.bf16.mxu0 0
        %2528 = vmatmul.mubr.bf16.gmra.mrb[0].mxu0 %v2364
        %v2529 = vpop.f32.mrb[0].mxu0
        %v2530 = vadd.f32 0.0, %v2529
        %v2531 = vpop.f32.mrb[0].mxu0
        %v2532 = vadd.f32 0.0, %v2531
        %v2533 = vpop.f32.mrb[0].mxu0
        %v2534 = vadd.f32 0.0, %v2533
        %v2535 = vpop.f32.mrb[0].mxu0
        %v2536 = vadd.f32 0.0, %v2535
        %2537 = vmatprep.mubr.bf16.mxu0 0
        %2538 = vmatmul.mubr.bf16.gmra.mrb[0].mxu0 %v2367
        %v2539 = vpop.f32.mrb[0].mxu0
        %v2540 = vadd.f32 0.0, %v2539
        %v2541 = vpop.f32.mrb[0].mxu0
        %v2542 = vadd.f32 0.0, %v2541
        %v2543 = vpop.f32.mrb[0].mxu0
        %v2544 = vadd.f32 0.0, %v2543
        %v2545 = vpop.f32.mrb[0].mxu0
        %v2546 = vadd.f32 0.0, %v2545
        %2547 = vmatprep.mubr.bf16.mxu0 0
        %2548 = vmatmul.mubr.bf16.gmra.mrb[0].mxu0 %v2370
        %v2549 = vpop.f32.mrb[0].mxu0
        %v2550 = vadd.f32 0.0, %v2549
        %v2551 = vpop.f32.mrb[0].mxu0
        %v2552 = vadd.f32 0.0, %v2551
        %v2553 = vpop.f32.mrb[0].mxu0
        %v2554 = vadd.f32 0.0, %v2553
        %v2555 = vpop.f32.mrb[0].mxu0
        %v2556 = vadd.f32 0.0, %v2555
        %2557 = vmatprep.mubr.bf16.mxu0 0
        %2558 = vmatmul.mubr.bf16.gmra.mrb[0].mxu0 %v2373
        %v2559 = vpop.f32.mrb[0].mxu0
        %v2560 = vadd.f32 0.0, %v2559
        %v2561 = vpop.f32.mrb[0].mxu0
        %v2562 = vadd.f32 0.0, %v2561
        %v2563 = vpop.f32.mrb[0].mxu0
        %v2564 = vadd.f32 0.0, %v2563
        %v2565 = vpop.f32.mrb[0].mxu0
        %v2566 = vadd.f32 0.0, %v2565
        %2567 = vdwg.mxu0
        %v2569 = vsel %vm1844, %v1828, 0
        %v2572 = vsel %vm1844, %v1829, 0
        %v2575 = vsel %vm1844, %v1830, 0
        %v2578 = vsel %vm1844, %v1831, 0
        %v2581 = vsel %vm1844, %v1832, 0
        %v2584 = vsel %vm1844, %v1833, 0
        %v2587 = vsel %vm1844, %v1834, 0
        %v2590 = vsel %vm1844, %v1835, 0
        %v2593 = vsel %vm1844, %v1836, 0
        %v2596 = vsel %vm1844, %v1837, 0
        %v2599 = vsel %vm1844, %v1838, 0
        %v2602 = vsel %vm1844, %v1839, 0
        %v2605 = vsel %vm1844, %v1840, 0
        %v2608 = vsel %vm1844, %v1841, 0
        %v2611 = vsel %vm1844, %v1842, 0
        %v2614 = vsel %vm1844, %v1843, 0
        %2616 = vmatprep.subr.bf16.mxu0 %v1568
        %2617 = vmatpush1.bf16.msra.mxu0 %v1567
        %2618 = vmatprep.subr.bf16.mxu0 %v1570
        %2619 = vmatpush1.bf16.msra.mxu0 %v1569
        %2620 = vmatprep.subr.bf16.mxu0 0
        %2621 = vmatpush1.bf16.msra.mxu0 0
        %2622 = vmatprep.subr.bf16.mxu0 0
        %2623 = vmatpush1.bf16.msra.mxu0 0
        %2624 = vmatprep.subr.bf16.mxu0 0
        %2625 = vmatpush1.bf16.msra.mxu0 0
        %2626 = vmatprep.subr.bf16.mxu0 0
        %2627 = vmatpush1.bf16.msra.mxu0 0
        %2628 = vmatprep.subr.bf16.mxu0 0
        %2629 = vmatpush1.bf16.msra.mxu0 0
        %2630 = vmatprep.subr.bf16.mxu0 0
        %2631 = vmatpush1.bf16.msra.mxu0 0
        %2632 = vmatprep.subr.bf16.mxu0 0
        %2633 = vmatpush1.bf16.msra.mxu0 0
        %2634 = vmatprep.subr.bf16.mxu0 0
        %2635 = vmatpush1.bf16.msra.mxu0 0
        %2636 = vmatprep.subr.bf16.mxu0 0
        %2637 = vmatpush1.bf16.msra.mxu0 0
        %2638 = vmatprep.subr.bf16.mxu0 0
        %2639 = vmatpush1.bf16.msra.mxu0 0
        %2640 = vmatprep.subr.bf16.mxu0 0
        %2641 = vmatpush1.bf16.msra.mxu0 0
        %2642 = vmatprep.subr.bf16.mxu0 0
        %2643 = vmatpush1.bf16.msra.mxu0 0
        %2644 = vmatprep.subr.bf16.mxu0 0
        %2645 = vmatpush1.bf16.msra.mxu0 0
        %2646 = vmatprep.subr.bf16.mxu0 0
        %2647 = vmatpush1.bf16.msra.mxu0 0
        %2648 = vmatprep.mubr.bf16.mxu0 0
        %2649 = vmatmul.mubr.bf16.gmra.mrb[0].mxu0 %v2569
        %v2650 = vpop.f32.mrb[0].mxu0
        %v2651 = vadd.f32 0.0, %v2650
        %v2652 = vpop.f32.mrb[0].mxu0
        %v2653 = vadd.f32 0.0, %v2652
        %v2654 = vpop.f32.mrb[0].mxu0
        %v2655 = vadd.f32 0.0, %v2654
        %v2656 = vpop.f32.mrb[0].mxu0
        %v2657 = vadd.f32 0.0, %v2656
        %2658 = vmatprep.mubr.bf16.mxu0 0
        %2659 = vmatmul.mubr.bf16.gmra.mrb[0].mxu0 %v2572
        %v2660 = vpop.f32.mrb[0].mxu0
        %v2661 = vadd.f32 0.0, %v2660
        %v2662 = vpop.f32.mrb[0].mxu0
        %v2663 = vadd.f32 0.0, %v2662
        %v2664 = vpop.f32.mrb[0].mxu0
        %v2665 = vadd.f32 0.0, %v2664
        %v2666 = vpop.f32.mrb[0].mxu0
        %v2667 = vadd.f32 0.0, %v2666
        %2668 = vmatprep.mubr.bf16.mxu0 0
        %2669 = vmatmul.mubr.bf16.gmra.mrb[0].mxu0 %v2575
        %v2670 = vpop.f32.mrb[0].mxu0
        %v2671 = vadd.f32 0.0, %v2670
        %v2672 = vpop.f32.mrb[0].mxu0
        %v2673 = vadd.f32 0.0, %v2672
        %v2674 = vpop.f32.mrb[0].mxu0
        %v2675 = vadd.f32 0.0, %v2674
        %v2676 = vpop.f32.mrb[0].mxu0
        %v2677 = vadd.f32 0.0, %v2676
        %2678 = vmatprep.mubr.bf16.mxu0 0
        %2679 = vmatmul.mubr.bf16.gmra.mrb[0].mxu0 %v2578
        %v2680 = vpop.f32.mrb[0].mxu0
        %v2681 = vadd.f32 0.0, %v2680
        %v2682 = vpop.f32.mrb[0].mxu0
        %v2683 = vadd.f32 0.0, %v2682
        %v2684 = vpop.f32.mrb[0].mxu0
        %v2685 = vadd.f32 0.0, %v2684
        %v2686 = vpop.f32.mrb[0].mxu0
        %v2687 = vadd.f32 0.0, %v2686
        %2688 = vmatprep.mubr.bf16.mxu0 0
        %2689 = vmatmul.mubr.bf16.gmra.mrb[0].mxu0 %v2581
        %v2690 = vpop.f32.mrb[0].mxu0
        %v2691 = vadd.f32 0.0, %v2690
        %v2692 = vpop.f32.mrb[0].mxu0
        %v2693 = vadd.f32 0.0, %v2692
        %v2694 = vpop.f32.mrb[0].mxu0
        %v2695 = vadd.f32 0.0, %v2694
        %v2696 = vpop.f32.mrb[0].mxu0
        %v2697 = vadd.f32 0.0, %v2696
        %2698 = vmatprep.mubr.bf16.mxu0 0
        %2699 = vmatmul.mubr.bf16.gmra.mrb[0].mxu0 %v2584
        %v2700 = vpop.f32.mrb[0].mxu0
        %v2701 = vadd.f32 0.0, %v2700
        %v2702 = vpop.f32.mrb[0].mxu0
        %v2703 = vadd.f32 0.0, %v2702
        %v2704 = vpop.f32.mrb[0].mxu0
        %v2705 = vadd.f32 0.0, %v2704
        %v2706 = vpop.f32.mrb[0].mxu0
        %v2707 = vadd.f32 0.0, %v2706
        %2708 = vmatprep.mubr.bf16.mxu0 0
        %2709 = vmatmul.mubr.bf16.gmra.mrb[0].mxu0 %v2587
        %v2710 = vpop.f32.mrb[0].mxu0
        %v2711 = vadd.f32 0.0, %v2710
        %v2712 = vpop.f32.mrb[0].mxu0
        %v2713 = vadd.f32 0.0, %v2712
        %v2714 = vpop.f32.mrb[0].mxu0
        %v2715 = vadd.f32 0.0, %v2714
        %v2716 = vpop.f32.mrb[0].mxu0
        %v2717 = vadd.f32 0.0, %v2716
        %2718 = vmatprep.mubr.bf16.mxu0 0
        %2719 = vmatmul.mubr.bf16.gmra.mrb[0].mxu0 %v2590
        %v2720 = vpop.f32.mrb[0].mxu0
        %v2721 = vadd.f32 0.0, %v2720
        %v2722 = vpop.f32.mrb[0].mxu0
        %v2723 = vadd.f32 0.0, %v2722
        %v2724 = vpop.f32.mrb[0].mxu0
        %v2725 = vadd.f32 0.0, %v2724
        %v2726 = vpop.f32.mrb[0].mxu0
        %v2727 = vadd.f32 0.0, %v2726
        %2728 = vmatprep.mubr.bf16.mxu0 0
        %2729 = vmatmul.mubr.bf16.gmra.mrb[0].mxu0 %v2593
        %v2730 = vpop.f32.mrb[0].mxu0
        %v2731 = vadd.f32 0.0, %v2730
        %v2732 = vpop.f32.mrb[0].mxu0
        %v2733 = vadd.f32 0.0, %v2732
        %v2734 = vpop.f32.mrb[0].mxu0
        %v2735 = vadd.f32 0.0, %v2734
        %v2736 = vpop.f32.mrb[0].mxu0
        %v2737 = vadd.f32 0.0, %v2736
        %2738 = vmatprep.mubr.bf16.mxu0 0
        %2739 = vmatmul.mubr.bf16.gmra.mrb[0].mxu0 %v2596
        %v2740 = vpop.f32.mrb[0].mxu0
        %v2741 = vadd.f32 0.0, %v2740
        %v2742 = vpop.f32.mrb[0].mxu0
        %v2743 = vadd.f32 0.0, %v2742
        %v2744 = vpop.f32.mrb[0].mxu0
        %v2745 = vadd.f32 0.0, %v2744
        %v2746 = vpop.f32.mrb[0].mxu0
        %v2747 = vadd.f32 0.0, %v2746
        %2748 = vmatprep.mubr.bf16.mxu0 0
        %2749 = vmatmul.mubr.bf16.gmra.mrb[0].mxu0 %v2599
        %v2750 = vpop.f32.mrb[0].mxu0
        %v2751 = vadd.f32 0.0, %v2750
        %v2752 = vpop.f32.mrb[0].mxu0
        %v2753 = vadd.f32 0.0, %v2752
        %v2754 = vpop.f32.mrb[0].mxu0
        %v2755 = vadd.f32 0.0, %v2754
        %v2756 = vpop.f32.mrb[0].mxu0
        %v2757 = vadd.f32 0.0, %v2756
        %2758 = vmatprep.mubr.bf16.mxu0 0
        %2759 = vmatmul.mubr.bf16.gmra.mrb[0].mxu0 %v2602
        %v2760 = vpop.f32.mrb[0].mxu0
        %v2761 = vadd.f32 0.0, %v2760
        %v2762 = vpop.f32.mrb[0].mxu0
        %v2763 = vadd.f32 0.0, %v2762
        %v2764 = vpop.f32.mrb[0].mxu0
        %v2765 = vadd.f32 0.0, %v2764
        %v2766 = vpop.f32.mrb[0].mxu0
        %v2767 = vadd.f32 0.0, %v2766
        %2768 = vmatprep.mubr.bf16.mxu0 0
        %2769 = vmatmul.mubr.bf16.gmra.mrb[0].mxu0 %v2605
        %v2770 = vpop.f32.mrb[0].mxu0
        %v2771 = vadd.f32 0.0, %v2770
        %v2772 = vpop.f32.mrb[0].mxu0
        %v2773 = vadd.f32 0.0, %v2772
        %v2774 = vpop.f32.mrb[0].mxu0
        %v2775 = vadd.f32 0.0, %v2774
        %v2776 = vpop.f32.mrb[0].mxu0
        %v2777 = vadd.f32 0.0, %v2776
        %2778 = vmatprep.mubr.bf16.mxu0 0
        %2779 = vmatmul.mubr.bf16.gmra.mrb[0].mxu0 %v2608
        %v2780 = vpop.f32.mrb[0].mxu0
        %v2781 = vadd.f32 0.0, %v2780
        %v2782 = vpop.f32.mrb[0].mxu0
        %v2783 = vadd.f32 0.0, %v2782
        %v2784 = vpop.f32.mrb[0].mxu0
        %v2785 = vadd.f32 0.0, %v2784
        %v2786 = vpop.f32.mrb[0].mxu0
        %v2787 = vadd.f32 0.0, %v2786
        %2788 = vmatprep.mubr.bf16.mxu0 0
        %2789 = vmatmul.mubr.bf16.gmra.mrb[0].mxu0 %v2611
        %v2790 = vpop.f32.mrb[0].mxu0
        %v2791 = vadd.f32 0.0, %v2790
        %v2792 = vpop.f32.mrb[0].mxu0
        %v2793 = vadd.f32 0.0, %v2792
        %v2794 = vpop.f32.mrb[0].mxu0
        %v2795 = vadd.f32 0.0, %v2794
        %v2796 = vpop.f32.mrb[0].mxu0
        %v2797 = vadd.f32 0.0, %v2796
        %2798 = vmatprep.mubr.bf16.mxu0 0
        %2799 = vmatmul.mubr.bf16.gmra.mrb[0].mxu0 %v2614
        %v2800 = vpop.f32.mrb[0].mxu0
        %v2801 = vadd.f32 0.0, %v2800
        %v2802 = vpop.f32.mrb[0].mxu0
        %v2803 = vadd.f32 0.0, %v2802
        %v2804 = vpop.f32.mrb[0].mxu0
        %v2805 = vadd.f32 0.0, %v2804
        %v2806 = vpop.f32.mrb[0].mxu0
        %v2807 = vadd.f32 0.0, %v2806
        %2808 = vdwg.mxu0
        %v2809 = vld [vmem:[#allocation3] sm:$0xff]
        %v2810 = vld [vmem:[#allocation3 + $0x8] sm:$0xff]
        %v2811 = vld [vmem:[#allocation3 + $0x10] sm:$0xff]
        %v2812 = vld [vmem:[#allocation3 + $0x18] sm:$0xff]
        %v2813 = vld [vmem:[#allocation3 + $0x20] sm:$0xff]
        %v2814 = vld [vmem:[#allocation3 + $0x28] sm:$0xff]
        %v2815 = vld [vmem:[#allocation3 + $0x30] sm:$0xff]
        %v2816 = vld [vmem:[#allocation3 + $0x38] sm:$0xff]
        %v2817 = vld [vmem:[#allocation3 + $0x40] sm:$0xff]
        %v2818 = vld [vmem:[#allocation3 + $0x48] sm:$0xff]
        %v2819 = vld [vmem:[#allocation3 + $0x50] sm:$0xff]
        %v2820 = vld [vmem:[#allocation3 + $0x58] sm:$0xff]
        %v2821 = vld [vmem:[#allocation3 + $0x60] sm:$0xff]
        %v2822 = vld [vmem:[#allocation3 + $0x68] sm:$0xff]
        %v2823 = vld [vmem:[#allocation3 + $0x70] sm:$0xff]
        %v2824 = vld [vmem:[#allocation3 + $0x78] sm:$0xff]
        %v2825 = vld [vmem:[#allocation3 + $0x80] sm:$0xff]
        %v2826 = vld [vmem:[#allocation3 + $0x88] sm:$0xff]
        %v2827 = vld [vmem:[#allocation3 + $0x90] sm:$0xff]
        %v2828 = vld [vmem:[#allocation3 + $0x98] sm:$0xff]
        %v2829 = vld [vmem:[#allocation3 + $0xa0] sm:$0xff]
        %v2830 = vld [vmem:[#allocation3 + $0xa8] sm:$0xff]
        %v2831 = vld [vmem:[#allocation3 + $0xb0] sm:$0xff]
        %v2832 = vld [vmem:[#allocation3 + $0xb8] sm:$0xff]
        %v2833 = vld [vmem:[#allocation3 + $0xc0] sm:$0xff]
        %v2834 = vld [vmem:[#allocation3 + $0xc8] sm:$0xff]
        %v2835 = vld [vmem:[#allocation3 + $0xd0] sm:$0xff]
        %v2836 = vld [vmem:[#allocation3 + $0xd8] sm:$0xff]
        %v2837 = vld [vmem:[#allocation3 + $0xe0] sm:$0xff]
        %v2838 = vld [vmem:[#allocation3 + $0xe8] sm:$0xff]
        %v2839 = vld [vmem:[#allocation3 + $0xf0] sm:$0xff]
        %v2840 = vld [vmem:[#allocation3 + $0xf8] sm:$0xff]
        %v2841 = vld [vmem:[#allocation3 + $0x100] sm:$0xff]
        %v2842 = vld [vmem:[#allocation3 + $0x108] sm:$0xff]
        %v2843 = vld [vmem:[#allocation3 + $0x110] sm:$0xff]
        %v2844 = vld [vmem:[#allocation3 + $0x118] sm:$0xff]
        %v2845 = vld [vmem:[#allocation3 + $0x120] sm:$0xff]
        %v2846 = vld [vmem:[#allocation3 + $0x128] sm:$0xff]
        %v2847 = vld [vmem:[#allocation3 + $0x130] sm:$0xff]
        %v2848 = vld [vmem:[#allocation3 + $0x138] sm:$0xff]
        %v2849 = vld [vmem:[#allocation3 + $0x140] sm:$0xff]
        %v2850 = vld [vmem:[#allocation3 + $0x148] sm:$0xff]
        %v2851 = vld [vmem:[#allocation3 + $0x150] sm:$0xff]
        %v2852 = vld [vmem:[#allocation3 + $0x158] sm:$0xff]
        %v2853 = vld [vmem:[#allocation3 + $0x160] sm:$0xff]
        %v2854 = vld [vmem:[#allocation3 + $0x168] sm:$0xff]
        %v2855 = vld [vmem:[#allocation3 + $0x170] sm:$0xff]
        %v2856 = vld [vmem:[#allocation3 + $0x178] sm:$0xff]
        %v2857 = vld [vmem:[#allocation3 + $0x180] sm:$0xff]
        %v2858 = vld [vmem:[#allocation3 + $0x188] sm:$0xff]
        %v2859 = vld [vmem:[#allocation3 + $0x190] sm:$0xff]
        %v2860 = vld [vmem:[#allocation3 + $0x198] sm:$0xff]
        %v2861 = vld [vmem:[#allocation3 + $0x1a0] sm:$0xff]
        %v2862 = vld [vmem:[#allocation3 + $0x1a8] sm:$0xff]
        %v2863 = vld [vmem:[#allocation3 + $0x1b0] sm:$0xff]
        %v2864 = vld [vmem:[#allocation3 + $0x1b8] sm:$0xff]
        %v2865 = vld [vmem:[#allocation3 + $0x1c0] sm:$0xff]
        %v2866 = vld [vmem:[#allocation3 + $0x1c8] sm:$0xff]
        %v2867 = vld [vmem:[#allocation3 + $0x1d0] sm:$0xff]
        %v2868 = vld [vmem:[#allocation3 + $0x1d8] sm:$0xff]
        %v2869 = vld [vmem:[#allocation3 + $0x1e0] sm:$0xff]
        %v2870 = vld [vmem:[#allocation3 + $0x1e8] sm:$0xff]
        %v2871 = vld [vmem:[#allocation3 + $0x1f0] sm:$0xff]
        %v2872 = vld [vmem:[#allocation3 + $0x1f8] sm:$0xff]
        %v2873 = vld [vmem:[#allocation3 + $0x200] sm:$0xff]
        %v2874 = vld [vmem:[#allocation3 + $0x208] sm:$0xff]
        %v2875 = vld [vmem:[#allocation3 + $0x210] sm:$0xff]
        %v2876 = vld [vmem:[#allocation3 + $0x218] sm:$0xff]
        %v2877 = vld [vmem:[#allocation3 + $0x220] sm:$0xff]
        %v2878 = vld [vmem:[#allocation3 + $0x228] sm:$0xff]
        %v2879 = vld [vmem:[#allocation3 + $0x230] sm:$0xff]
        %v2880 = vld [vmem:[#allocation3 + $0x238] sm:$0xff]
        %v2881 = vld [vmem:[#allocation3 + $0x240] sm:$0xff]
        %v2882 = vld [vmem:[#allocation3 + $0x248] sm:$0xff]
        %v2883 = vld [vmem:[#allocation3 + $0x250] sm:$0xff]
        %v2884 = vld [vmem:[#allocation3 + $0x258] sm:$0xff]
        %v2885 = vld [vmem:[#allocation3 + $0x260] sm:$0xff]
        %v2886 = vld [vmem:[#allocation3 + $0x268] sm:$0xff]
        %v2887 = vld [vmem:[#allocation3 + $0x270] sm:$0xff]
        %v2888 = vld [vmem:[#allocation3 + $0x278] sm:$0xff]
        %v2889 = vld [vmem:[#allocation3 + $0x280] sm:$0xff]
        %v2890 = vld [vmem:[#allocation3 + $0x288] sm:$0xff]
        %v2891 = vld [vmem:[#allocation3 + $0x290] sm:$0xff]
        %v2892 = vld [vmem:[#allocation3 + $0x298] sm:$0xff]
        %v2893 = vld [vmem:[#allocation3 + $0x2a0] sm:$0xff]
        %v2894 = vld [vmem:[#allocation3 + $0x2a8] sm:$0xff]
        %v2895 = vld [vmem:[#allocation3 + $0x2b0] sm:$0xff]
        %v2896 = vld [vmem:[#allocation3 + $0x2b8] sm:$0xff]
        %v2897 = vld [vmem:[#allocation3 + $0x2c0] sm:$0xff]
        %v2898 = vld [vmem:[#allocation3 + $0x2c8] sm:$0xff]
        %v2899 = vld [vmem:[#allocation3 + $0x2d0] sm:$0xff]
        %v2900 = vld [vmem:[#allocation3 + $0x2d8] sm:$0xff]
        %v2901 = vld [vmem:[#allocation3 + $0x2e0] sm:$0xff]
        %v2902 = vld [vmem:[#allocation3 + $0x2e8] sm:$0xff]
        %v2903 = vld [vmem:[#allocation3 + $0x2f0] sm:$0xff]
        %v2904 = vld [vmem:[#allocation3 + $0x2f8] sm:$0xff]
        %v2905 = vld [vmem:[#allocation3 + $0x300] sm:$0xff]
        %v2906 = vld [vmem:[#allocation3 + $0x308] sm:$0xff]
        %v2907 = vld [vmem:[#allocation3 + $0x310] sm:$0xff]
        %v2908 = vld [vmem:[#allocation3 + $0x318] sm:$0xff]
        %v2909 = vld [vmem:[#allocation3 + $0x320] sm:$0xff]
        %v2910 = vld [vmem:[#allocation3 + $0x328] sm:$0xff]
        %v2911 = vld [vmem:[#allocation3 + $0x330] sm:$0xff]
        %v2912 = vld [vmem:[#allocation3 + $0x338] sm:$0xff]
        %v2913 = vld [vmem:[#allocation3 + $0x340] sm:$0xff]
        %v2914 = vld [vmem:[#allocation3 + $0x348] sm:$0xff]
        %v2915 = vld [vmem:[#allocation3 + $0x350] sm:$0xff]
        %v2916 = vld [vmem:[#allocation3 + $0x358] sm:$0xff]
        %v2917 = vld [vmem:[#allocation3 + $0x360] sm:$0xff]
        %v2918 = vld [vmem:[#allocation3 + $0x368] sm:$0xff]
        %v2919 = vld [vmem:[#allocation3 + $0x370] sm:$0xff]
        %v2920 = vld [vmem:[#allocation3 + $0x378] sm:$0xff]
        %v2921 = vld [vmem:[#allocation3 + $0x380] sm:$0xff]
        %v2922 = vld [vmem:[#allocation3 + $0x388] sm:$0xff]
        %v2923 = vld [vmem:[#allocation3 + $0x390] sm:$0xff]
        %v2924 = vld [vmem:[#allocation3 + $0x398] sm:$0xff]
        %v2925 = vld [vmem:[#allocation3 + $0x3a0] sm:$0xff]
        %v2926 = vld [vmem:[#allocation3 + $0x3a8] sm:$0xff]
        %v2927 = vld [vmem:[#allocation3 + $0x3b0] sm:$0xff]
        %v2928 = vld [vmem:[#allocation3 + $0x3b8] sm:$0xff]
        %v2929 = vld [vmem:[#allocation3 + $0x3c0] sm:$0xff]
        %v2930 = vld [vmem:[#allocation3 + $0x3c8] sm:$0xff]
        %v2931 = vld [vmem:[#allocation3 + $0x3d0] sm:$0xff]
        %v2932 = vld [vmem:[#allocation3 + $0x3d8] sm:$0xff]
        %v2933 = vld [vmem:[#allocation3 + $0x3e0] sm:$0xff]
        %v2934 = vld [vmem:[#allocation3 + $0x3e8] sm:$0xff]
        %v2935 = vld [vmem:[#allocation3 + $0x3f0] sm:$0xff]
        %v2936 = vld [vmem:[#allocation3 + $0x3f8] sm:$0xff]
        %v2937 = vmax.f32 %v1928, %v1930
        %2938 = vmax.xlane.f32.xlu0 %v2937
        %v2939 = vpop.xlane.xlu0 %2938
        %v2940 = vmax.f32 %v1932, %v1934
        %2941 = vmax.xlane.f32.xlu0 %v2940
        %v2942 = vpop.xlane.xlu0 %2941
        %v2943 = vmax.f32 %v1938, %v1940
        %2944 = vmax.xlane.f32.xlu0 %v2943
        %v2945 = vpop.xlane.xlu0 %2944
        %v2946 = vmax.f32 %v1942, %v1944
        %2947 = vmax.xlane.f32.xlu0 %v2946
        %v2948 = vpop.xlane.xlu0 %2947
        %v2949 = vmax.f32 %v1948, %v1950
        %2950 = vmax.xlane.f32.xlu0 %v2949
        %v2951 = vpop.xlane.xlu0 %2950
        %v2952 = vmax.f32 %v1952, %v1954
        %2953 = vmax.xlane.f32.xlu0 %v2952
        %v2954 = vpop.xlane.xlu0 %2953
        %v2955 = vmax.f32 %v1958, %v1960
        %2956 = vmax.xlane.f32.xlu0 %v2955
        %v2957 = vpop.xlane.xlu0 %2956
        %v2958 = vmax.f32 %v1962, %v1964
        %2959 = vmax.xlane.f32.xlu0 %v2958
        %v2960 = vpop.xlane.xlu0 %2959
        %v2961 = vmax.f32 %v1968, %v1970
        %2962 = vmax.xlane.f32.xlu0 %v2961
        %v2963 = vpop.xlane.xlu0 %2962
        %v2964 = vmax.f32 %v1972, %v1974
        %2965 = vmax.xlane.f32.xlu0 %v2964
        %v2966 = vpop.xlane.xlu0 %2965
        %v2967 = vmax.f32 %v1978, %v1980
        %2968 = vmax.xlane.f32.xlu0 %v2967
        %v2969 = vpop.xlane.xlu0 %2968
        %v2970 = vmax.f32 %v1982, %v1984
        %2971 = vmax.xlane.f32.xlu0 %v2970
        %v2972 = vpop.xlane.xlu0 %2971
        %v2973 = vmax.f32 %v1988, %v1990
        %2974 = vmax.xlane.f32.xlu0 %v2973
        %v2975 = vpop.xlane.xlu0 %2974
        %v2976 = vmax.f32 %v1992, %v1994
        %2977 = vmax.xlane.f32.xlu0 %v2976
        %v2978 = vpop.xlane.xlu0 %2977
        %v2979 = vmax.f32 %v1998, %v2000
        %2980 = vmax.xlane.f32.xlu0 %v2979
        %v2981 = vpop.xlane.xlu0 %2980
        %v2982 = vmax.f32 %v2002, %v2004
        %2983 = vmax.xlane.f32.xlu0 %v2982
        %v2984 = vpop.xlane.xlu0 %2983
        %v2985 = vmax.f32 %v2008, %v2010
        %2986 = vmax.xlane.f32.xlu0 %v2985
        %v2987 = vpop.xlane.xlu0 %2986
        %v2988 = vmax.f32 %v2012, %v2014
        %2989 = vmax.xlane.f32.xlu0 %v2988
        %v2990 = vpop.xlane.xlu0 %2989
        %v2991 = vmax.f32 %v2018, %v2020
        %2992 = vmax.xlane.f32.xlu0 %v2991
        %v2993 = vpop.xlane.xlu0 %2992
        %v2994 = vmax.f32 %v2022, %v2024
        %2995 = vmax.xlane.f32.xlu0 %v2994
        %v2996 = vpop.xlane.xlu0 %2995
        %v2997 = vmax.f32 %v2028, %v2030
        %2998 = vmax.xlane.f32.xlu0 %v2997
        %v2999 = vpop.xlane.xlu0 %2998
        %v3000 = vmax.f32 %v2032, %v2034
        %3001 = vmax.xlane.f32.xlu0 %v3000
        %v3002 = vpop.xlane.xlu0 %3001
        %v3003 = vmax.f32 %v2038, %v2040
        %3004 = vmax.xlane.f32.xlu0 %v3003
        %v3005 = vpop.xlane.xlu0 %3004
        %v3006 = vmax.f32 %v2042, %v2044
        %3007 = vmax.xlane.f32.xlu0 %v3006
        %v3008 = vpop.xlane.xlu0 %3007
        %v3009 = vmax.f32 %v2048, %v2050
        %3010 = vmax.xlane.f32.xlu0 %v3009
        %v3011 = vpop.xlane.xlu0 %3010
        %v3012 = vmax.f32 %v2052, %v2054
        %3013 = vmax.xlane.f32.xlu0 %v3012
        %v3014 = vpop.xlane.xlu0 %3013
        %v3015 = vmax.f32 %v2058, %v2060
        %3016 = vmax.xlane.f32.xlu0 %v3015
        %v3017 = vpop.xlane.xlu0 %3016
        %v3018 = vmax.f32 %v2062, %v2064
        %3019 = vmax.xlane.f32.xlu0 %v3018
        %v3020 = vpop.xlane.xlu0 %3019
        %v3021 = vmax.f32 %v2068, %v2070
        %3022 = vmax.xlane.f32.xlu0 %v3021
        %v3023 = vpop.xlane.xlu0 %3022
        %v3024 = vmax.f32 %v2072, %v2074
        %3025 = vmax.xlane.f32.xlu0 %v3024
        %v3026 = vpop.xlane.xlu0 %3025
        %v3027 = vmax.f32 %v2078, %v2080
        %3028 = vmax.xlane.f32.xlu0 %v3027
        %v3029 = vpop.xlane.xlu0 %3028
        %v3030 = vmax.f32 %v2082, %v2084
        %3031 = vmax.xlane.f32.xlu0 %v3030
        %v3032 = vpop.xlane.xlu0 %3031
        %v3033 = vmax.f32 %v2169, %v2171
        %3034 = vmax.xlane.f32.xlu0 %v3033
        %v3035 = vpop.xlane.xlu0 %3034
        %v3036 = vmax.f32 %v2173, %v2175
        %3037 = vmax.xlane.f32.xlu0 %v3036
        %v3038 = vpop.xlane.xlu0 %3037
        %v3039 = vmax.f32 %v2179, %v2181
        %3040 = vmax.xlane.f32.xlu0 %v3039
        %v3041 = vpop.xlane.xlu0 %3040
        %v3042 = vmax.f32 %v2183, %v2185
        %3043 = vmax.xlane.f32.xlu0 %v3042
        %v3044 = vpop.xlane.xlu0 %3043
        %v3045 = vmax.f32 %v2189, %v2191
        %3046 = vmax.xlane.f32.xlu0 %v3045
        %v3047 = vpop.xlane.xlu0 %3046
        %v3048 = vmax.f32 %v2193, %v2195
        %3049 = vmax.xlane.f32.xlu0 %v3048
        %v3050 = vpop.xlane.xlu0 %3049
        %v3051 = vmax.f32 %v2199, %v2201
        %3052 = vmax.xlane.f32.xlu0 %v3051
        %v3053 = vpop.xlane.xlu0 %3052
        %v3054 = vmax.f32 %v2203, %v2205
        %3055 = vmax.xlane.f32.xlu0 %v3054
        %v3056 = vpop.xlane.xlu0 %3055
        %v3057 = vmax.f32 %v2209, %v2211
        %3058 = vmax.xlane.f32.xlu0 %v3057
        %v3059 = vpop.xlane.xlu0 %3058
        %v3060 = vmax.f32 %v2213, %v2215
        %3061 = vmax.xlane.f32.xlu0 %v3060
        %v3062 = vpop.xlane.xlu0 %3061
        %v3063 = vmax.f32 %v2219, %v2221
        %3064 = vmax.xlane.f32.xlu0 %v3063
        %v3065 = vpop.xlane.xlu0 %3064
        %v3066 = vmax.f32 %v2223, %v2225
        %3067 = vmax.xlane.f32.xlu0 %v3066
        %v3068 = vpop.xlane.xlu0 %3067
        %v3069 = vmax.f32 %v2229, %v2231
        %3070 = vmax.xlane.f32.xlu0 %v3069
        %v3071 = vpop.xlane.xlu0 %3070
        %v3072 = vmax.f32 %v2233, %v2235
        %3073 = vmax.xlane.f32.xlu0 %v3072
        %v3074 = vpop.xlane.xlu0 %3073
        %v3075 = vmax.f32 %v2239, %v2241
        %3076 = vmax.xlane.f32.xlu0 %v3075
        %v3077 = vpop.xlane.xlu0 %3076
        %v3078 = vmax.f32 %v2243, %v2245
        %3079 = vmax.xlane.f32.xlu0 %v3078
        %v3080 = vpop.xlane.xlu0 %3079
        %v3081 = vmax.f32 %v2249, %v2251
        %3082 = vmax.xlane.f32.xlu0 %v3081
        %v3083 = vpop.xlane.xlu0 %3082
        %v3084 = vmax.f32 %v2253, %v2255
        %3085 = vmax.xlane.f32.xlu0 %v3084
        %v3086 = vpop.xlane.xlu0 %3085
        %v3087 = vmax.f32 %v2259, %v2261
        %3088 = vmax.xlane.f32.xlu0 %v3087
        %v3089 = vpop.xlane.xlu0 %3088
        %v3090 = vmax.f32 %v2263, %v2265
        %3091 = vmax.xlane.f32.xlu0 %v3090
        %v3092 = vpop.xlane.xlu0 %3091
        %v3093 = vmax.f32 %v2269, %v2271
        %3094 = vmax.xlane.f32.xlu0 %v3093
        %v3095 = vpop.xlane.xlu0 %3094
        %v3096 = vmax.f32 %v2273, %v2275
        %3097 = vmax.xlane.f32.xlu0 %v3096
        %v3098 = vpop.xlane.xlu0 %3097
        %v3099 = vmax.f32 %v2279, %v2281
        %3100 = vmax.xlane.f32.xlu0 %v3099
        %v3101 = vpop.xlane.xlu0 %3100
        %v3102 = vmax.f32 %v2283, %v2285
        %3103 = vmax.xlane.f32.xlu0 %v3102
        %v3104 = vpop.xlane.xlu0 %3103
        %v3105 = vmax.f32 %v2289, %v2291
        %3106 = vmax.xlane.f32.xlu0 %v3105
        %v3107 = vpop.xlane.xlu0 %3106
        %v3108 = vmax.f32 %v2293, %v2295
        %3109 = vmax.xlane.f32.xlu0 %v3108
        %v3110 = vpop.xlane.xlu0 %3109
        %v3111 = vmax.f32 %v2299, %v2301
        %3112 = vmax.xlane.f32.xlu0 %v3111
        %v3113 = vpop.xlane.xlu0 %3112
        %v3114 = vmax.f32 %v2303, %v2305
        %3115 = vmax.xlane.f32.xlu0 %v3114
        %v3116 = vpop.xlane.xlu0 %3115
        %v3117 = vmax.f32 %v2309, %v2311
        %3118 = vmax.xlane.f32.xlu0 %v3117
        %v3119 = vpop.xlane.xlu0 %3118
        %v3120 = vmax.f32 %v2313, %v2315
        %3121 = vmax.xlane.f32.xlu0 %v3120
        %v3122 = vpop.xlane.xlu0 %3121
        %v3123 = vmax.f32 %v2319, %v2321
        %3124 = vmax.xlane.f32.xlu0 %v3123
        %v3125 = vpop.xlane.xlu0 %3124
        %v3126 = vmax.f32 %v2323, %v2325
        %3127 = vmax.xlane.f32.xlu0 %v3126
        %v3128 = vpop.xlane.xlu0 %3127
        %v3129 = vmax.f32 %v2410, %v2412
        %3130 = vmax.xlane.f32.xlu0 %v3129
        %v3131 = vpop.xlane.xlu0 %3130
        %v3132 = vmax.f32 %v2414, %v2416
        %3133 = vmax.xlane.f32.xlu0 %v3132
        %v3134 = vpop.xlane.xlu0 %3133
        %v3135 = vmax.f32 %v2420, %v2422
        %3136 = vmax.xlane.f32.xlu0 %v3135
        %v3137 = vpop.xlane.xlu0 %3136
        %v3138 = vmax.f32 %v2424, %v2426
        %3139 = vmax.xlane.f32.xlu0 %v3138
        %v3140 = vpop.xlane.xlu0 %3139
        %v3141 = vmax.f32 %v2430, %v2432
        %3142 = vmax.xlane.f32.xlu0 %v3141
        %v3143 = vpop.xlane.xlu0 %3142
        %v3144 = vmax.f32 %v2434, %v2436
        %3145 = vmax.xlane.f32.xlu0 %v3144
        %v3146 = vpop.xlane.xlu0 %3145
        %v3147 = vmax.f32 %v2440, %v2442
        %3148 = vmax.xlane.f32.xlu0 %v3147
        %v3149 = vpop.xlane.xlu0 %3148
        %v3150 = vmax.f32 %v2444, %v2446
        %3151 = vmax.xlane.f32.xlu0 %v3150
        %v3152 = vpop.xlane.xlu0 %3151
        %v3153 = vmax.f32 %v2450, %v2452
        %3154 = vmax.xlane.f32.xlu0 %v3153
        %v3155 = vpop.xlane.xlu0 %3154
        %v3156 = vmax.f32 %v2454, %v2456
        %3157 = vmax.xlane.f32.xlu0 %v3156
        %v3158 = vpop.xlane.xlu0 %3157
        %v3159 = vmax.f32 %v2460, %v2462
        %3160 = vmax.xlane.f32.xlu0 %v3159
        %v3161 = vpop.xlane.xlu0 %3160
        %v3162 = vmax.f32 %v2464, %v2466
        %3163 = vmax.xlane.f32.xlu0 %v3162
        %v3164 = vpop.xlane.xlu0 %3163
        %v3165 = vmax.f32 %v2470, %v2472
        %3166 = vmax.xlane.f32.xlu0 %v3165
        %v3167 = vpop.xlane.xlu0 %3166
        %v3168 = vmax.f32 %v2474, %v2476
        %3169 = vmax.xlane.f32.xlu0 %v3168
        %v3170 = vpop.xlane.xlu0 %3169
        %v3171 = vmax.f32 %v2480, %v2482
        %3172 = vmax.xlane.f32.xlu0 %v3171
        %v3173 = vpop.xlane.xlu0 %3172
        %v3174 = vmax.f32 %v2484, %v2486
        %3175 = vmax.xlane.f32.xlu0 %v3174
        %v3176 = vpop.xlane.xlu0 %3175
        %v3177 = vmax.f32 %v2490, %v2492
        %3178 = vmax.xlane.f32.xlu0 %v3177
        %v3179 = vpop.xlane.xlu0 %3178
        %v3180 = vmax.f32 %v2494, %v2496
        %3181 = vmax.xlane.f32.xlu0 %v3180
        %v3182 = vpop.xlane.xlu0 %3181
        %v3183 = vmax.f32 %v2500, %v2502
        %3184 = vmax.xlane.f32.xlu0 %v3183
        %v3185 = vpop.xlane.xlu0 %3184
        %v3186 = vmax.f32 %v2504, %v2506
        %3187 = vmax.xlane.f32.xlu0 %v3186
        %v3188 = vpop.xlane.xlu0 %3187
        %v3189 = vmax.f32 %v2510, %v2512
        %3190 = vmax.xlane.f32.xlu0 %v3189
        %v3191 = vpop.xlane.xlu0 %3190
        %v3192 = vmax.f32 %v2514, %v2516
        %3193 = vmax.xlane.f32.xlu0 %v3192
        %v3194 = vpop.xlane.xlu0 %3193
        %v3195 = vmax.f32 %v2520, %v2522
        %3196 = vmax.xlane.f32.xlu0 %v3195
        %v3197 = vpop.xlane.xlu0 %3196
        %v3198 = vmax.f32 %v2524, %v2526
        %3199 = vmax.xlane.f32.xlu0 %v3198
        %v3200 = vpop.xlane.xlu0 %3199
        %v3201 = vmax.f32 %v2530, %v2532
        %3202 = vmax.xlane.f32.xlu0 %v3201
        %v3203 = vpop.xlane.xlu0 %3202
        %v3204 = vmax.f32 %v2534, %v2536
        %3205 = vmax.xlane.f32.xlu0 %v3204
        %v3206 = vpop.xlane.xlu0 %3205
        %v3207 = vmax.f32 %v2540, %v2542
        %3208 = vmax.xlane.f32.xlu0 %v3207
        %v3209 = vpop.xlane.xlu0 %3208
        %v3210 = vmax.f32 %v2544, %v2546
        %3211 = vmax.xlane.f32.xlu0 %v3210
        %v3212 = vpop.xlane.xlu0 %3211
        %v3213 = vmax.f32 %v2550, %v2552
        %3214 = vmax.xlane.f32.xlu0 %v3213
        %v3215 = vpop.xlane.xlu0 %3214
        %v3216 = vmax.f32 %v2554, %v2556
        %3217 = vmax.xlane.f32.xlu0 %v3216
        %v3218 = vpop.xlane.xlu0 %3217
        %v3219 = vmax.f32 %v2560, %v2562
        %3220 = vmax.xlane.f32.xlu0 %v3219
        %v3221 = vpop.xlane.xlu0 %3220
        %v3222 = vmax.f32 %v2564, %v2566
        %3223 = vmax.xlane.f32.xlu0 %v3222
        %v3224 = vpop.xlane.xlu0 %3223
        %v3225 = vmax.f32 %v2651, %v2653
        %3226 = vmax.xlane.f32.xlu0 %v3225
        %v3227 = vpop.xlane.xlu0 %3226
        %v3228 = vmax.f32 %v2655, %v2657
        %3229 = vmax.xlane.f32.xlu0 %v3228
        %v3230 = vpop.xlane.xlu0 %3229
        %v3231 = vmax.f32 %v2661, %v2663
        %3232 = vmax.xlane.f32.xlu0 %v3231
        %v3233 = vpop.xlane.xlu0 %3232
        %v3234 = vmax.f32 %v2665, %v2667
        %3235 = vmax.xlane.f32.xlu0 %v3234
        %v3236 = vpop.xlane.xlu0 %3235
        %v3237 = vmax.f32 %v2671, %v2673
        %3238 = vmax.xlane.f32.xlu0 %v3237
        %v3239 = vpop.xlane.xlu0 %3238
        %v3240 = vmax.f32 %v2675, %v2677
        %3241 = vmax.xlane.f32.xlu0 %v3240
        %v3242 = vpop.xlane.xlu0 %3241
        %v3243 = vmax.f32 %v2681, %v2683
        %3244 = vmax.xlane.f32.xlu0 %v3243
        %v3245 = vpop.xlane.xlu0 %3244
        %v3246 = vmax.f32 %v2685, %v2687
        %3247 = vmax.xlane.f32.xlu0 %v3246
        %v3248 = vpop.xlane.xlu0 %3247
        %v3249 = vmax.f32 %v2691, %v2693
        %3250 = vmax.xlane.f32.xlu0 %v3249
        %v3251 = vpop.xlane.xlu0 %3250
        %v3252 = vmax.f32 %v2695, %v2697
        %3253 = vmax.xlane.f32.xlu0 %v3252
        %v3254 = vpop.xlane.xlu0 %3253
        %v3255 = vmax.f32 %v2701, %v2703
        %3256 = vmax.xlane.f32.xlu0 %v3255
        %v3257 = vpop.xlane.xlu0 %3256
        %v3258 = vmax.f32 %v2705, %v2707
        %3259 = vmax.xlane.f32.xlu0 %v3258
        %v3260 = vpop.xlane.xlu0 %3259
        %v3261 = vmax.f32 %v2711, %v2713
        %3262 = vmax.xlane.f32.xlu0 %v3261
        %v3263 = vpop.xlane.xlu0 %3262
        %v3264 = vmax.f32 %v2715, %v2717
        %3265 = vmax.xlane.f32.xlu0 %v3264
        %v3266 = vpop.xlane.xlu0 %3265
        %v3267 = vmax.f32 %v2721, %v2723
        %3268 = vmax.xlane.f32.xlu0 %v3267
        %v3269 = vpop.xlane.xlu0 %3268
        %v3270 = vmax.f32 %v2725, %v2727
        %3271 = vmax.xlane.f32.xlu0 %v3270
        %v3272 = vpop.xlane.xlu0 %3271
        %v3273 = vmax.f32 %v2731, %v2733
        %3274 = vmax.xlane.f32.xlu0 %v3273
        %v3275 = vpop.xlane.xlu0 %3274
        %v3276 = vmax.f32 %v2735, %v2737
        %3277 = vmax.xlane.f32.xlu0 %v3276
        %v3278 = vpop.xlane.xlu0 %3277
        %v3279 = vmax.f32 %v2741, %v2743
        %3280 = vmax.xlane.f32.xlu0 %v3279
        %v3281 = vpop.xlane.xlu0 %3280
        %v3282 = vmax.f32 %v2745, %v2747
        %3283 = vmax.xlane.f32.xlu0 %v3282
        %v3284 = vpop.xlane.xlu0 %3283
        %v3285 = vmax.f32 %v2751, %v2753
        %3286 = vmax.xlane.f32.xlu0 %v3285
        %v3287 = vpop.xlane.xlu0 %3286
        %v3288 = vmax.f32 %v2755, %v2757
        %3289 = vmax.xlane.f32.xlu0 %v3288
        %v3290 = vpop.xlane.xlu0 %3289
        %v3291 = vmax.f32 %v2761, %v2763
        %3292 = vmax.xlane.f32.xlu0 %v3291
        %v3293 = vpop.xlane.xlu0 %3292
        %v3294 = vmax.f32 %v2765, %v2767
        %3295 = vmax.xlane.f32.xlu0 %v3294
        %v3296 = vpop.xlane.xlu0 %3295
        %v3297 = vmax.f32 %v2771, %v2773
        %3298 = vmax.xlane.f32.xlu0 %v3297
        %v3299 = vpop.xlane.xlu0 %3298
        %v3300 = vmax.f32 %v2775, %v2777
        %3301 = vmax.xlane.f32.xlu0 %v3300
        %v3302 = vpop.xlane.xlu0 %3301
        %v3303 = vmax.f32 %v2781, %v2783
        %3304 = vmax.xlane.f32.xlu0 %v3303
        %v3305 = vpop.xlane.xlu0 %3304
        %v3306 = vmax.f32 %v2785, %v2787
        %3307 = vmax.xlane.f32.xlu0 %v3306
        %v3308 = vpop.xlane.xlu0 %3307
        %v3309 = vmax.f32 %v2791, %v2793
        %3310 = vmax.xlane.f32.xlu0 %v3309
        %v3311 = vpop.xlane.xlu0 %3310
        %v3312 = vmax.f32 %v2795, %v2797
        %3313 = vmax.xlane.f32.xlu0 %v3312
        %v3314 = vpop.xlane.xlu0 %3313
        %v3315 = vmax.f32 %v2801, %v2803
        %3316 = vmax.xlane.f32.xlu0 %v3315
        %v3317 = vpop.xlane.xlu0 %3316
        %v3318 = vmax.f32 %v2805, %v2807
        %3319 = vmax.xlane.f32.xlu0 %v3318
        %v3320 = vpop.xlane.xlu0 %3319
        %v3321 = vmax.f32 %v2809, %v2939
        %v3322 = vmax.f32 %v2810, %v2942
        %v3323 = vmax.f32 %v2811, %v2945
        %v3324 = vmax.f32 %v2812, %v2948
        %v3325 = vmax.f32 %v2813, %v2951
        %v3326 = vmax.f32 %v2814, %v2954
        %v3327 = vmax.f32 %v2815, %v2957
        %v3328 = vmax.f32 %v2816, %v2960
        %v3329 = vmax.f32 %v2817, %v2963
        %v3330 = vmax.f32 %v2818, %v2966
        %v3331 = vmax.f32 %v2819, %v2969
        %v3332 = vmax.f32 %v2820, %v2972
        %v3333 = vmax.f32 %v2821, %v2975
        %v3334 = vmax.f32 %v2822, %v2978
        %v3335 = vmax.f32 %v2823, %v2981
        %v3336 = vmax.f32 %v2824, %v2984
        %v3337 = vmax.f32 %v2825, %v2987
        %v3338 = vmax.f32 %v2826, %v2990
        %v3339 = vmax.f32 %v2827, %v2993
        %v3340 = vmax.f32 %v2828, %v2996
        %v3341 = vmax.f32 %v2829, %v2999
        %v3342 = vmax.f32 %v2830, %v3002
        %v3343 = vmax.f32 %v2831, %v3005
        %v3344 = vmax.f32 %v2832, %v3008
        %v3345 = vmax.f32 %v2833, %v3011
        %v3346 = vmax.f32 %v2834, %v3014
        %v3347 = vmax.f32 %v2835, %v3017
        %v3348 = vmax.f32 %v2836, %v3020
        %v3349 = vmax.f32 %v2837, %v3023
        %v3350 = vmax.f32 %v2838, %v3026
        %v3351 = vmax.f32 %v2839, %v3029
        %v3352 = vmax.f32 %v2840, %v3032
        %v3353 = vmax.f32 %v2841, %v3035
        %v3354 = vmax.f32 %v2842, %v3038
        %v3355 = vmax.f32 %v2843, %v3041
        %v3356 = vmax.f32 %v2844, %v3044
        %v3357 = vmax.f32 %v2845, %v3047
        %v3358 = vmax.f32 %v2846, %v3050
        %v3359 = vmax.f32 %v2847, %v3053
        %v3360 = vmax.f32 %v2848, %v3056
        %v3361 = vmax.f32 %v2849, %v3059
        %v3362 = vmax.f32 %v2850, %v3062
        %v3363 = vmax.f32 %v2851, %v3065
        %v3364 = vmax.f32 %v2852, %v3068
        %v3365 = vmax.f32 %v2853, %v3071
        %v3366 = vmax.f32 %v2854, %v3074
        %v3367 = vmax.f32 %v2855, %v3077
        %v3368 = vmax.f32 %v2856, %v3080
        %v3369 = vmax.f32 %v2857, %v3083
        %v3370 = vmax.f32 %v2858, %v3086
        %v3371 = vmax.f32 %v2859, %v3089
        %v3372 = vmax.f32 %v2860, %v3092
        %v3373 = vmax.f32 %v2861, %v3095
        %v3374 = vmax.f32 %v2862, %v3098
        %v3375 = vmax.f32 %v2863, %v3101
        %v3376 = vmax.f32 %v2864, %v3104
        %v3377 = vmax.f32 %v2865, %v3107
        %v3378 = vmax.f32 %v2866, %v3110
        %v3379 = vmax.f32 %v2867, %v3113
        %v3380 = vmax.f32 %v2868, %v3116
        %v3381 = vmax.f32 %v2869, %v3119
        %v3382 = vmax.f32 %v2870, %v3122
        %v3383 = vmax.f32 %v2871, %v3125
        %v3384 = vmax.f32 %v2872, %v3128
        %v3385 = vmax.f32 %v2873, %v3131
        %v3386 = vmax.f32 %v2874, %v3134
        %v3387 = vmax.f32 %v2875, %v3137
        %v3388 = vmax.f32 %v2876, %v3140
        %v3389 = vmax.f32 %v2877, %v3143
        %v3390 = vmax.f32 %v2878, %v3146
        %v3391 = vmax.f32 %v2879, %v3149
        %v3392 = vmax.f32 %v2880, %v3152
        %v3393 = vmax.f32 %v2881, %v3155
        %v3394 = vmax.f32 %v2882, %v3158
        %v3395 = vmax.f32 %v2883, %v3161
        %v3396 = vmax.f32 %v2884, %v3164
        %v3397 = vmax.f32 %v2885, %v3167
        %v3398 = vmax.f32 %v2886, %v3170
        %v3399 = vmax.f32 %v2887, %v3173
        %v3400 = vmax.f32 %v2888, %v3176
        %v3401 = vmax.f32 %v2889, %v3179
        %v3402 = vmax.f32 %v2890, %v3182
        %v3403 = vmax.f32 %v2891, %v3185
        %v3404 = vmax.f32 %v2892, %v3188
        %v3405 = vmax.f32 %v2893, %v3191
        %v3406 = vmax.f32 %v2894, %v3194
        %v3407 = vmax.f32 %v2895, %v3197
        %v3408 = vmax.f32 %v2896, %v3200
        %v3409 = vmax.f32 %v2897, %v3203
        %v3410 = vmax.f32 %v2898, %v3206
        %v3411 = vmax.f32 %v2899, %v3209
        %v3412 = vmax.f32 %v2900, %v3212
        %v3413 = vmax.f32 %v2901, %v3215
        %v3414 = vmax.f32 %v2902, %v3218
        %v3415 = vmax.f32 %v2903, %v3221
        %v3416 = vmax.f32 %v2904, %v3224
        %v3417 = vmax.f32 %v2905, %v3227
        %v3418 = vmax.f32 %v2906, %v3230
        %v3419 = vmax.f32 %v2907, %v3233
        %v3420 = vmax.f32 %v2908, %v3236
        %v3421 = vmax.f32 %v2909, %v3239
        %v3422 = vmax.f32 %v2910, %v3242
        %v3423 = vmax.f32 %v2911, %v3245
        %v3424 = vmax.f32 %v2912, %v3248
        %v3425 = vmax.f32 %v2913, %v3251
        %v3426 = vmax.f32 %v2914, %v3254
        %v3427 = vmax.f32 %v2915, %v3257
        %v3428 = vmax.f32 %v2916, %v3260
        %v3429 = vmax.f32 %v2917, %v3263
        %v3430 = vmax.f32 %v2918, %v3266
        %v3431 = vmax.f32 %v2919, %v3269
        %v3432 = vmax.f32 %v2920, %v3272
        %v3433 = vmax.f32 %v2921, %v3275
        %v3434 = vmax.f32 %v2922, %v3278
        %v3435 = vmax.f32 %v2923, %v3281
        %v3436 = vmax.f32 %v2924, %v3284
        %v3437 = vmax.f32 %v2925, %v3287
        %v3438 = vmax.f32 %v2926, %v3290
        %v3439 = vmax.f32 %v2927, %v3293
        %v3440 = vmax.f32 %v2928, %v3296
        %v3441 = vmax.f32 %v2929, %v3299
        %v3442 = vmax.f32 %v2930, %v3302
        %v3443 = vmax.f32 %v2931, %v3305
        %v3444 = vmax.f32 %v2932, %v3308
        %v3445 = vmax.f32 %v2933, %v3311
        %v3446 = vmax.f32 %v2934, %v3314
        %v3447 = vmax.f32 %v2935, %v3317
        %v3448 = vmax.f32 %v2936, %v3320
        %v3449 = vsub.f32 %v2809, %v3321
        %v3450 = vsub.f32 %v2810, %v3322
        %v3451 = vsub.f32 %v2811, %v3323
        %v3452 = vsub.f32 %v2812, %v3324
        %v3453 = vsub.f32 %v2813, %v3325
        %v3454 = vsub.f32 %v2814, %v3326
        %v3455 = vsub.f32 %v2815, %v3327
        %v3456 = vsub.f32 %v2816, %v3328
        %v3457 = vsub.f32 %v2817, %v3329
        %v3458 = vsub.f32 %v2818, %v3330
        %v3459 = vsub.f32 %v2819, %v3331
        %v3460 = vsub.f32 %v2820, %v3332
        %v3461 = vsub.f32 %v2821, %v3333
        %v3462 = vsub.f32 %v2822, %v3334
        %v3463 = vsub.f32 %v2823, %v3335
        %v3464 = vsub.f32 %v2824, %v3336
        %v3465 = vsub.f32 %v2825, %v3337
        %v3466 = vsub.f32 %v2826, %v3338
        %v3467 = vsub.f32 %v2827, %v3339
        %v3468 = vsub.f32 %v2828, %v3340
        %v3469 = vsub.f32 %v2829, %v3341
        %v3470 = vsub.f32 %v2830, %v3342
        %v3471 = vsub.f32 %v2831, %v3343
        %v3472 = vsub.f32 %v2832, %v3344
        %v3473 = vsub.f32 %v2833, %v3345
        %v3474 = vsub.f32 %v2834, %v3346
        %v3475 = vsub.f32 %v2835, %v3347
        %v3476 = vsub.f32 %v2836, %v3348
        %v3477 = vsub.f32 %v2837, %v3349
        %v3478 = vsub.f32 %v2838, %v3350
        %v3479 = vsub.f32 %v2839, %v3351
        %v3480 = vsub.f32 %v2840, %v3352
        %v3481 = vsub.f32 %v2841, %v3353
        %v3482 = vsub.f32 %v2842, %v3354
        %v3483 = vsub.f32 %v2843, %v3355
        %v3484 = vsub.f32 %v2844, %v3356
        %v3485 = vsub.f32 %v2845, %v3357
        %v3486 = vsub.f32 %v2846, %v3358
        %v3487 = vsub.f32 %v2847, %v3359
        %v3488 = vsub.f32 %v2848, %v3360
        %v3489 = vsub.f32 %v2849, %v3361
        %v3490 = vsub.f32 %v2850, %v3362
        %v3491 = vsub.f32 %v2851, %v3363
        %v3492 = vsub.f32 %v2852, %v3364
        %v3493 = vsub.f32 %v2853, %v3365
        %v3494 = vsub.f32 %v2854, %v3366
        %v3495 = vsub.f32 %v2855, %v3367
        %v3496 = vsub.f32 %v2856, %v3368
        %v3497 = vsub.f32 %v2857, %v3369
        %v3498 = vsub.f32 %v2858, %v3370
        %v3499 = vsub.f32 %v2859, %v3371
        %v3500 = vsub.f32 %v2860, %v3372
        %v3501 = vsub.f32 %v2861, %v3373
        %v3502 = vsub.f32 %v2862, %v3374
        %v3503 = vsub.f32 %v2863, %v3375
        %v3504 = vsub.f32 %v2864, %v3376
        %v3505 = vsub.f32 %v2865, %v3377
        %v3506 = vsub.f32 %v2866, %v3378
        %v3507 = vsub.f32 %v2867, %v3379
        %v3508 = vsub.f32 %v2868, %v3380
        %v3509 = vsub.f32 %v2869, %v3381
        %v3510 = vsub.f32 %v2870, %v3382
        %v3511 = vsub.f32 %v2871, %v3383
        %v3512 = vsub.f32 %v2872, %v3384
        %v3513 = vsub.f32 %v2873, %v3385
        %v3514 = vsub.f32 %v2874, %v3386
        %v3515 = vsub.f32 %v2875, %v3387
        %v3516 = vsub.f32 %v2876, %v3388
        %v3517 = vsub.f32 %v2877, %v3389
        %v3518 = vsub.f32 %v2878, %v3390
        %v3519 = vsub.f32 %v2879, %v3391
        %v3520 = vsub.f32 %v2880, %v3392
        %v3521 = vsub.f32 %v2881, %v3393
        %v3522 = vsub.f32 %v2882, %v3394
        %v3523 = vsub.f32 %v2883, %v3395
        %v3524 = vsub.f32 %v2884, %v3396
        %v3525 = vsub.f32 %v2885, %v3397
        %v3526 = vsub.f32 %v2886, %v3398
        %v3527 = vsub.f32 %v2887, %v3399
        %v3528 = vsub.f32 %v2888, %v3400
        %v3529 = vsub.f32 %v2889, %v3401
        %v3530 = vsub.f32 %v2890, %v3402
        %v3531 = vsub.f32 %v2891, %v3403
        %v3532 = vsub.f32 %v2892, %v3404
        %v3533 = vsub.f32 %v2893, %v3405
        %v3534 = vsub.f32 %v2894, %v3406
        %v3535 = vsub.f32 %v2895, %v3407
        %v3536 = vsub.f32 %v2896, %v3408
        %v3537 = vsub.f32 %v2897, %v3409
        %v3538 = vsub.f32 %v2898, %v3410
        %v3539 = vsub.f32 %v2899, %v3411
        %v3540 = vsub.f32 %v2900, %v3412
        %v3541 = vsub.f32 %v2901, %v3413
        %v3542 = vsub.f32 %v2902, %v3414
        %v3543 = vsub.f32 %v2903, %v3415
        %v3544 = vsub.f32 %v2904, %v3416
        %v3545 = vsub.f32 %v2905, %v3417
        %v3546 = vsub.f32 %v2906, %v3418
        %v3547 = vsub.f32 %v2907, %v3419
        %v3548 = vsub.f32 %v2908, %v3420
        %v3549 = vsub.f32 %v2909, %v3421
        %v3550 = vsub.f32 %v2910, %v3422
        %v3551 = vsub.f32 %v2911, %v3423
        %v3552 = vsub.f32 %v2912, %v3424
        %v3553 = vsub.f32 %v2913, %v3425
        %v3554 = vsub.f32 %v2914, %v3426
        %v3555 = vsub.f32 %v2915, %v3427
        %v3556 = vsub.f32 %v2916, %v3428
        %v3557 = vsub.f32 %v2917, %v3429
        %v3558 = vsub.f32 %v2918, %v3430
        %v3559 = vsub.f32 %v2919, %v3431
        %v3560 = vsub.f32 %v2920, %v3432
        %v3561 = vsub.f32 %v2921, %v3433
        %v3562 = vsub.f32 %v2922, %v3434
        %v3563 = vsub.f32 %v2923, %v3435
        %v3564 = vsub.f32 %v2924, %v3436
        %v3565 = vsub.f32 %v2925, %v3437
        %v3566 = vsub.f32 %v2926, %v3438
        %v3567 = vsub.f32 %v2927, %v3439
        %v3568 = vsub.f32 %v2928, %v3440
        %v3569 = vsub.f32 %v2929, %v3441
        %v3570 = vsub.f32 %v2930, %v3442
        %v3571 = vsub.f32 %v2931, %v3443
        %v3572 = vsub.f32 %v2932, %v3444
        %v3573 = vsub.f32 %v2933, %v3445
        %v3574 = vsub.f32 %v2934, %v3446
        %v3575 = vsub.f32 %v2935, %v3447
        %v3576 = vsub.f32 %v2936, %v3448
        %v3577 = vmul.f32 %v3449, 1.442695
        %v3578 = vpow.pop %v3577
        %v3579 = vmul.f32 %v3450, 1.442695
        %v3580 = vpow.pop %v3579
        %v3581 = vmul.f32 %v3451, 1.442695
        %v3582 = vpow.pop %v3581
        %v3583 = vmul.f32 %v3452, 1.442695
        %v3584 = vpow.pop %v3583
        %v3585 = vmul.f32 %v3453, 1.442695
        %v3586 = vpow.pop %v3585
        %v3587 = vmul.f32 %v3454, 1.442695
        %v3588 = vpow.pop %v3587
        %v3589 = vmul.f32 %v3455, 1.442695
        %v3590 = vpow.pop %v3589
        %v3591 = vmul.f32 %v3456, 1.442695
        %v3592 = vpow.pop %v3591
        %v3593 = vmul.f32 %v3457, 1.442695
        %v3594 = vpow.pop %v3593
        %v3595 = vmul.f32 %v3458, 1.442695
        %v3596 = vpow.pop %v3595
        %v3597 = vmul.f32 %v3459, 1.442695
        %v3598 = vpow.pop %v3597
        %v3599 = vmul.f32 %v3460, 1.442695
        %v3600 = vpow.pop %v3599
        %v3601 = vmul.f32 %v3461, 1.442695
        %v3602 = vpow.pop %v3601
        %v3603 = vmul.f32 %v3462, 1.442695
        %v3604 = vpow.pop %v3603
        %v3605 = vmul.f32 %v3463, 1.442695
        %v3606 = vpow.pop %v3605
        %v3607 = vmul.f32 %v3464, 1.442695
        %v3608 = vpow.pop %v3607
        %v3609 = vmul.f32 %v3465, 1.442695
        %v3610 = vpow.pop %v3609
        %v3611 = vmul.f32 %v3466, 1.442695
        %v3612 = vpow.pop %v3611
        %v3613 = vmul.f32 %v3467, 1.442695
        %v3614 = vpow.pop %v3613
        %v3615 = vmul.f32 %v3468, 1.442695
        %v3616 = vpow.pop %v3615
        %v3617 = vmul.f32 %v3469, 1.442695
        %v3618 = vpow.pop %v3617
        %v3619 = vmul.f32 %v3470, 1.442695
        %v3620 = vpow.pop %v3619
        %v3621 = vmul.f32 %v3471, 1.442695
        %v3622 = vpow.pop %v3621
        %v3623 = vmul.f32 %v3472, 1.442695
        %v3624 = vpow.pop %v3623
        %v3625 = vmul.f32 %v3473, 1.442695
        %v3626 = vpow.pop %v3625
        %v3627 = vmul.f32 %v3474, 1.442695
        %v3628 = vpow.pop %v3627
        %v3629 = vmul.f32 %v3475, 1.442695
        %v3630 = vpow.pop %v3629
        %v3631 = vmul.f32 %v3476, 1.442695
        %v3632 = vpow.pop %v3631
        %v3633 = vmul.f32 %v3477, 1.442695
        %v3634 = vpow.pop %v3633
        %v3635 = vmul.f32 %v3478, 1.442695
        %v3636 = vpow.pop %v3635
        %v3637 = vmul.f32 %v3479, 1.442695
        %v3638 = vpow.pop %v3637
        %v3639 = vmul.f32 %v3480, 1.442695
        %v3640 = vpow.pop %v3639
        %v3641 = vmul.f32 %v3481, 1.442695
        %v3642 = vpow.pop %v3641
        %v3643 = vmul.f32 %v3482, 1.442695
        %v3644 = vpow.pop %v3643
        %v3645 = vmul.f32 %v3483, 1.442695
        %v3646 = vpow.pop %v3645
        %v3647 = vmul.f32 %v3484, 1.442695
        %v3648 = vpow.pop %v3647
        %v3649 = vmul.f32 %v3485, 1.442695
        %v3650 = vpow.pop %v3649
        %v3651 = vmul.f32 %v3486, 1.442695
        %v3652 = vpow.pop %v3651
        %v3653 = vmul.f32 %v3487, 1.442695
        %v3654 = vpow.pop %v3653
        %v3655 = vmul.f32 %v3488, 1.442695
        %v3656 = vpow.pop %v3655
        %v3657 = vmul.f32 %v3489, 1.442695
        %v3658 = vpow.pop %v3657
        %v3659 = vmul.f32 %v3490, 1.442695
        %v3660 = vpow.pop %v3659
        %v3661 = vmul.f32 %v3491, 1.442695
        %v3662 = vpow.pop %v3661
        %v3663 = vmul.f32 %v3492, 1.442695
        %v3664 = vpow.pop %v3663
        %v3665 = vmul.f32 %v3493, 1.442695
        %v3666 = vpow.pop %v3665
        %v3667 = vmul.f32 %v3494, 1.442695
        %v3668 = vpow.pop %v3667
        %v3669 = vmul.f32 %v3495, 1.442695
        %v3670 = vpow.pop %v3669
        %v3671 = vmul.f32 %v3496, 1.442695
        %v3672 = vpow.pop %v3671
        %v3673 = vmul.f32 %v3497, 1.442695
        %v3674 = vpow.pop %v3673
        %v3675 = vmul.f32 %v3498, 1.442695
        %v3676 = vpow.pop %v3675
        %v3677 = vmul.f32 %v3499, 1.442695
        %v3678 = vpow.pop %v3677
        %v3679 = vmul.f32 %v3500, 1.442695
        %v3680 = vpow.pop %v3679
        %v3681 = vmul.f32 %v3501, 1.442695
        %v3682 = vpow.pop %v3681
        %v3683 = vmul.f32 %v3502, 1.442695
        %v3684 = vpow.pop %v3683
        %v3685 = vmul.f32 %v3503, 1.442695
        %v3686 = vpow.pop %v3685
        %v3687 = vmul.f32 %v3504, 1.442695
        %v3688 = vpow.pop %v3687
        %v3689 = vmul.f32 %v3505, 1.442695
        %v3690 = vpow.pop %v3689
        %v3691 = vmul.f32 %v3506, 1.442695
        %v3692 = vpow.pop %v3691
        %v3693 = vmul.f32 %v3507, 1.442695
        %v3694 = vpow.pop %v3693
        %v3695 = vmul.f32 %v3508, 1.442695
        %v3696 = vpow.pop %v3695
        %v3697 = vmul.f32 %v3509, 1.442695
        %v3698 = vpow.pop %v3697
        %v3699 = vmul.f32 %v3510, 1.442695
        %v3700 = vpow.pop %v3699
        %v3701 = vmul.f32 %v3511, 1.442695
        %v3702 = vpow.pop %v3701
        %v3703 = vmul.f32 %v3512, 1.442695
        %v3704 = vpow.pop %v3703
        %v3705 = vmul.f32 %v3513, 1.442695
        %v3706 = vpow.pop %v3705
        %v3707 = vmul.f32 %v3514, 1.442695
        %v3708 = vpow.pop %v3707
        %v3709 = vmul.f32 %v3515, 1.442695
        %v3710 = vpow.pop %v3709
        %v3711 = vmul.f32 %v3516, 1.442695
        %v3712 = vpow.pop %v3711
        %v3713 = vmul.f32 %v3517, 1.442695
        %v3714 = vpow.pop %v3713
        %v3715 = vmul.f32 %v3518, 1.442695
        %v3716 = vpow.pop %v3715
        %v3717 = vmul.f32 %v3519, 1.442695
        %v3718 = vpow.pop %v3717
        %v3719 = vmul.f32 %v3520, 1.442695
        %v3720 = vpow.pop %v3719
        %v3721 = vmul.f32 %v3521, 1.442695
        %v3722 = vpow.pop %v3721
        %v3723 = vmul.f32 %v3522, 1.442695
        %v3724 = vpow.pop %v3723
        %v3725 = vmul.f32 %v3523, 1.442695
        %v3726 = vpow.pop %v3725
        %v3727 = vmul.f32 %v3524, 1.442695
        %v3728 = vpow.pop %v3727
        %v3729 = vmul.f32 %v3525, 1.442695
        %v3730 = vpow.pop %v3729
        %v3731 = vmul.f32 %v3526, 1.442695
        %v3732 = vpow.pop %v3731
        %v3733 = vmul.f32 %v3527, 1.442695
        %v3734 = vpow.pop %v3733
        %v3735 = vmul.f32 %v3528, 1.442695
        %v3736 = vpow.pop %v3735
        %v3737 = vmul.f32 %v3529, 1.442695
        %v3738 = vpow.pop %v3737
        %v3739 = vmul.f32 %v3530, 1.442695
        %v3740 = vpow.pop %v3739
        %v3741 = vmul.f32 %v3531, 1.442695
        %v3742 = vpow.pop %v3741
        %v3743 = vmul.f32 %v3532, 1.442695
        %v3744 = vpow.pop %v3743
        %v3745 = vmul.f32 %v3533, 1.442695
        %v3746 = vpow.pop %v3745
        %v3747 = vmul.f32 %v3534, 1.442695
        %v3748 = vpow.pop %v3747
        %v3749 = vmul.f32 %v3535, 1.442695
        %v3750 = vpow.pop %v3749
        %v3751 = vmul.f32 %v3536, 1.442695
        %v3752 = vpow.pop %v3751
        %v3753 = vmul.f32 %v3537, 1.442695
        %v3754 = vpow.pop %v3753
        %v3755 = vmul.f32 %v3538, 1.442695
        %v3756 = vpow.pop %v3755
        %v3757 = vmul.f32 %v3539, 1.442695
        %v3758 = vpow.pop %v3757
        %v3759 = vmul.f32 %v3540, 1.442695
        %v3760 = vpow.pop %v3759
        %v3761 = vmul.f32 %v3541, 1.442695
        %v3762 = vpow.pop %v3761
        %v3763 = vmul.f32 %v3542, 1.442695
        %v3764 = vpow.pop %v3763
        %v3765 = vmul.f32 %v3543, 1.442695
        %v3766 = vpow.pop %v3765
        %v3767 = vmul.f32 %v3544, 1.442695
        %v3768 = vpow.pop %v3767
        %v3769 = vmul.f32 %v3545, 1.442695
        %v3770 = vpow.pop %v3769
        %v3771 = vmul.f32 %v3546, 1.442695
        %v3772 = vpow.pop %v3771
        %v3773 = vmul.f32 %v3547, 1.442695
        %v3774 = vpow.pop %v3773
        %v3775 = vmul.f32 %v3548, 1.442695
        %v3776 = vpow.pop %v3775
        %v3777 = vmul.f32 %v3549, 1.442695
        %v3778 = vpow.pop %v3777
        %v3779 = vmul.f32 %v3550, 1.442695
        %v3780 = vpow.pop %v3779
        %v3781 = vmul.f32 %v3551, 1.442695
        %v3782 = vpow.pop %v3781
        %v3783 = vmul.f32 %v3552, 1.442695
        %v3784 = vpow.pop %v3783
        %v3785 = vmul.f32 %v3553, 1.442695
        %v3786 = vpow.pop %v3785
        %v3787 = vmul.f32 %v3554, 1.442695
        %v3788 = vpow.pop %v3787
        %v3789 = vmul.f32 %v3555, 1.442695
        %v3790 = vpow.pop %v3789
        %v3791 = vmul.f32 %v3556, 1.442695
        %v3792 = vpow.pop %v3791
        %v3793 = vmul.f32 %v3557, 1.442695
        %v3794 = vpow.pop %v3793
        %v3795 = vmul.f32 %v3558, 1.442695
        %v3796 = vpow.pop %v3795
        %v3797 = vmul.f32 %v3559, 1.442695
        %v3798 = vpow.pop %v3797
        %v3799 = vmul.f32 %v3560, 1.442695
        %v3800 = vpow.pop %v3799
        %v3801 = vmul.f32 %v3561, 1.442695
        %v3802 = vpow.pop %v3801
        %v3803 = vmul.f32 %v3562, 1.442695
        %v3804 = vpow.pop %v3803
        %v3805 = vmul.f32 %v3563, 1.442695
        %v3806 = vpow.pop %v3805
        %v3807 = vmul.f32 %v3564, 1.442695
        %v3808 = vpow.pop %v3807
        %v3809 = vmul.f32 %v3565, 1.442695
        %v3810 = vpow.pop %v3809
        %v3811 = vmul.f32 %v3566, 1.442695
        %v3812 = vpow.pop %v3811
        %v3813 = vmul.f32 %v3567, 1.442695
        %v3814 = vpow.pop %v3813
        %v3815 = vmul.f32 %v3568, 1.442695
        %v3816 = vpow.pop %v3815
        %v3817 = vmul.f32 %v3569, 1.442695
        %v3818 = vpow.pop %v3817
        %v3819 = vmul.f32 %v3570, 1.442695
        %v3820 = vpow.pop %v3819
        %v3821 = vmul.f32 %v3571, 1.442695
        %v3822 = vpow.pop %v3821
        %v3823 = vmul.f32 %v3572, 1.442695
        %v3824 = vpow.pop %v3823
        %v3825 = vmul.f32 %v3573, 1.442695
        %v3826 = vpow.pop %v3825
        %v3827 = vmul.f32 %v3574, 1.442695
        %v3828 = vpow.pop %v3827
        %v3829 = vmul.f32 %v3575, 1.442695
        %v3830 = vpow.pop %v3829
        %v3831 = vmul.f32 %v3576, 1.442695
        %v3832 = vpow.pop %v3831
        %3834 = vset.pattern.permute.xlu0 0
        %3835 = vperm.xlu0 %3834, %v3321
        %v3836 = vpop.permute.xlu0 %3835
        %3839 = vset.pattern.permute.xlu0 0
        %3840 = vperm.xlu0 %3839, %v3322
        %v3841 = vpop.permute.xlu0 %3840
        %3844 = vset.pattern.permute.xlu0 0
        %3845 = vperm.xlu0 %3844, %v3323
        %v3846 = vpop.permute.xlu0 %3845
        %3849 = vset.pattern.permute.xlu0 0
        %3850 = vperm.xlu0 %3849, %v3324
        %v3851 = vpop.permute.xlu0 %3850
        %3854 = vset.pattern.permute.xlu0 0
        %3855 = vperm.xlu0 %3854, %v3325
        %v3856 = vpop.permute.xlu0 %3855
        %3859 = vset.pattern.permute.xlu0 0
        %3860 = vperm.xlu0 %3859, %v3326
        %v3861 = vpop.permute.xlu0 %3860
        %3864 = vset.pattern.permute.xlu0 0
        %3865 = vperm.xlu0 %3864, %v3327
        %v3866 = vpop.permute.xlu0 %3865
        %3869 = vset.pattern.permute.xlu0 0
        %3870 = vperm.xlu0 %3869, %v3328
        %v3871 = vpop.permute.xlu0 %3870
        %3874 = vset.pattern.permute.xlu0 0
        %3875 = vperm.xlu0 %3874, %v3329
        %v3876 = vpop.permute.xlu0 %3875
        %3879 = vset.pattern.permute.xlu0 0
        %3880 = vperm.xlu0 %3879, %v3330
        %v3881 = vpop.permute.xlu0 %3880
        %3884 = vset.pattern.permute.xlu0 0
        %3885 = vperm.xlu0 %3884, %v3331
        %v3886 = vpop.permute.xlu0 %3885
        %3889 = vset.pattern.permute.xlu0 0
        %3890 = vperm.xlu0 %3889, %v3332
        %v3891 = vpop.permute.xlu0 %3890
        %3894 = vset.pattern.permute.xlu0 0
        %3895 = vperm.xlu0 %3894, %v3333
        %v3896 = vpop.permute.xlu0 %3895
        %3899 = vset.pattern.permute.xlu0 0
        %3900 = vperm.xlu0 %3899, %v3334
        %v3901 = vpop.permute.xlu0 %3900
        %3904 = vset.pattern.permute.xlu0 0
        %3905 = vperm.xlu0 %3904, %v3335
        %v3906 = vpop.permute.xlu0 %3905
        %3909 = vset.pattern.permute.xlu0 0
        %3910 = vperm.xlu0 %3909, %v3336
        %v3911 = vpop.permute.xlu0 %3910
        %3914 = vset.pattern.permute.xlu0 0
        %3915 = vperm.xlu0 %3914, %v3337
        %v3916 = vpop.permute.xlu0 %3915
        %3919 = vset.pattern.permute.xlu0 0
        %3920 = vperm.xlu0 %3919, %v3338
        %v3921 = vpop.permute.xlu0 %3920
        %3924 = vset.pattern.permute.xlu0 0
        %3925 = vperm.xlu0 %3924, %v3339
        %v3926 = vpop.permute.xlu0 %3925
        %3929 = vset.pattern.permute.xlu0 0
        %3930 = vperm.xlu0 %3929, %v3340
        %v3931 = vpop.permute.xlu0 %3930
        %3934 = vset.pattern.permute.xlu0 0
        %3935 = vperm.xlu0 %3934, %v3341
        %v3936 = vpop.permute.xlu0 %3935
        %3939 = vset.pattern.permute.xlu0 0
        %3940 = vperm.xlu0 %3939, %v3342
        %v3941 = vpop.permute.xlu0 %3940
        %3944 = vset.pattern.permute.xlu0 0
        %3945 = vperm.xlu0 %3944, %v3343
        %v3946 = vpop.permute.xlu0 %3945
        %3949 = vset.pattern.permute.xlu0 0
        %3950 = vperm.xlu0 %3949, %v3344
        %v3951 = vpop.permute.xlu0 %3950
        %3954 = vset.pattern.permute.xlu0 0
        %3955 = vperm.xlu0 %3954, %v3345
        %v3956 = vpop.permute.xlu0 %3955
        %3959 = vset.pattern.permute.xlu0 0
        %3960 = vperm.xlu0 %3959, %v3346
        %v3961 = vpop.permute.xlu0 %3960
        %3964 = vset.pattern.permute.xlu0 0
        %3965 = vperm.xlu0 %3964, %v3347
        %v3966 = vpop.permute.xlu0 %3965
        %3969 = vset.pattern.permute.xlu0 0
        %3970 = vperm.xlu0 %3969, %v3348
        %v3971 = vpop.permute.xlu0 %3970
        %3974 = vset.pattern.permute.xlu0 0
        %3975 = vperm.xlu0 %3974, %v3349
        %v3976 = vpop.permute.xlu0 %3975
        %3979 = vset.pattern.permute.xlu0 0
        %3980 = vperm.xlu0 %3979, %v3350
        %v3981 = vpop.permute.xlu0 %3980
        %3984 = vset.pattern.permute.xlu0 0
        %3985 = vperm.xlu0 %3984, %v3351
        %v3986 = vpop.permute.xlu0 %3985
        %3989 = vset.pattern.permute.xlu0 0
        %3990 = vperm.xlu0 %3989, %v3352
        %v3991 = vpop.permute.xlu0 %3990
        %3994 = vset.pattern.permute.xlu0 0
        %3995 = vperm.xlu0 %3994, %v3353
        %v3996 = vpop.permute.xlu0 %3995
        %3999 = vset.pattern.permute.xlu0 0
        %4000 = vperm.xlu0 %3999, %v3354
        %v4001 = vpop.permute.xlu0 %4000
        %4004 = vset.pattern.permute.xlu0 0
        %4005 = vperm.xlu0 %4004, %v3355
        %v4006 = vpop.permute.xlu0 %4005
        %4009 = vset.pattern.permute.xlu0 0
        %4010 = vperm.xlu0 %4009, %v3356
        %v4011 = vpop.permute.xlu0 %4010
        %4014 = vset.pattern.permute.xlu0 0
        %4015 = vperm.xlu0 %4014, %v3357
        %v4016 = vpop.permute.xlu0 %4015
        %4019 = vset.pattern.permute.xlu0 0
        %4020 = vperm.xlu0 %4019, %v3358
        %v4021 = vpop.permute.xlu0 %4020
        %4024 = vset.pattern.permute.xlu0 0
        %4025 = vperm.xlu0 %4024, %v3359
        %v4026 = vpop.permute.xlu0 %4025
        %4029 = vset.pattern.permute.xlu0 0
        %4030 = vperm.xlu0 %4029, %v3360
        %v4031 = vpop.permute.xlu0 %4030
        %4034 = vset.pattern.permute.xlu0 0
        %4035 = vperm.xlu0 %4034, %v3361
        %v4036 = vpop.permute.xlu0 %4035
        %4039 = vset.pattern.permute.xlu0 0
        %4040 = vperm.xlu0 %4039, %v3362
        %v4041 = vpop.permute.xlu0 %4040
        %4044 = vset.pattern.permute.xlu0 0
        %4045 = vperm.xlu0 %4044, %v3363
        %v4046 = vpop.permute.xlu0 %4045
        %4049 = vset.pattern.permute.xlu0 0
        %4050 = vperm.xlu0 %4049, %v3364
        %v4051 = vpop.permute.xlu0 %4050
        %4054 = vset.pattern.permute.xlu0 0
        %4055 = vperm.xlu0 %4054, %v3365
        %v4056 = vpop.permute.xlu0 %4055
        %4059 = vset.pattern.permute.xlu0 0
        %4060 = vperm.xlu0 %4059, %v3366
        %v4061 = vpop.permute.xlu0 %4060
        %4064 = vset.pattern.permute.xlu0 0
        %4065 = vperm.xlu0 %4064, %v3367
        %v4066 = vpop.permute.xlu0 %4065
        %4069 = vset.pattern.permute.xlu0 0
        %4070 = vperm.xlu0 %4069, %v3368
        %v4071 = vpop.permute.xlu0 %4070
        %4074 = vset.pattern.permute.xlu0 0
        %4075 = vperm.xlu0 %4074, %v3369
        %v4076 = vpop.permute.xlu0 %4075
        %4079 = vset.pattern.permute.xlu0 0
        %4080 = vperm.xlu0 %4079, %v3370
        %v4081 = vpop.permute.xlu0 %4080
        %4084 = vset.pattern.permute.xlu0 0
        %4085 = vperm.xlu0 %4084, %v3371
        %v4086 = vpop.permute.xlu0 %4085
        %4089 = vset.pattern.permute.xlu0 0
        %4090 = vperm.xlu0 %4089, %v3372
        %v4091 = vpop.permute.xlu0 %4090
        %4094 = vset.pattern.permute.xlu0 0
        %4095 = vperm.xlu0 %4094, %v3373
        %v4096 = vpop.permute.xlu0 %4095
        %4099 = vset.pattern.permute.xlu0 0
        %4100 = vperm.xlu0 %4099, %v3374
        %v4101 = vpop.permute.xlu0 %4100
        %4104 = vset.pattern.permute.xlu0 0
        %4105 = vperm.xlu0 %4104, %v3375
        %v4106 = vpop.permute.xlu0 %4105
        %4109 = vset.pattern.permute.xlu0 0
        %4110 = vperm.xlu0 %4109, %v3376
        %v4111 = vpop.permute.xlu0 %4110
        %4114 = vset.pattern.permute.xlu0 0
        %4115 = vperm.xlu0 %4114, %v3377
        %v4116 = vpop.permute.xlu0 %4115
        %4119 = vset.pattern.permute.xlu0 0
        %4120 = vperm.xlu0 %4119, %v3378
        %v4121 = vpop.permute.xlu0 %4120
        %4124 = vset.pattern.permute.xlu0 0
        %4125 = vperm.xlu0 %4124, %v3379
        %v4126 = vpop.permute.xlu0 %4125
        %4129 = vset.pattern.permute.xlu0 0
        %4130 = vperm.xlu0 %4129, %v3380
        %v4131 = vpop.permute.xlu0 %4130
        %4134 = vset.pattern.permute.xlu0 0
        %4135 = vperm.xlu0 %4134, %v3381
        %v4136 = vpop.permute.xlu0 %4135
        %4139 = vset.pattern.permute.xlu0 0
        %4140 = vperm.xlu0 %4139, %v3382
        %v4141 = vpop.permute.xlu0 %4140
        %4144 = vset.pattern.permute.xlu0 0
        %4145 = vperm.xlu0 %4144, %v3383
        %v4146 = vpop.permute.xlu0 %4145
        %4149 = vset.pattern.permute.xlu0 0
        %4150 = vperm.xlu0 %4149, %v3384
        %v4151 = vpop.permute.xlu0 %4150
        %4154 = vset.pattern.permute.xlu0 0
        %4155 = vperm.xlu0 %4154, %v3385
        %v4156 = vpop.permute.xlu0 %4155
        %4159 = vset.pattern.permute.xlu0 0
        %4160 = vperm.xlu0 %4159, %v3386
        %v4161 = vpop.permute.xlu0 %4160
        %4164 = vset.pattern.permute.xlu0 0
        %4165 = vperm.xlu0 %4164, %v3387
        %v4166 = vpop.permute.xlu0 %4165
        %4169 = vset.pattern.permute.xlu0 0
        %4170 = vperm.xlu0 %4169, %v3388
        %v4171 = vpop.permute.xlu0 %4170
        %4174 = vset.pattern.permute.xlu0 0
        %4175 = vperm.xlu0 %4174, %v3389
        %v4176 = vpop.permute.xlu0 %4175
        %4179 = vset.pattern.permute.xlu0 0
        %4180 = vperm.xlu0 %4179, %v3390
        %v4181 = vpop.permute.xlu0 %4180
        %4184 = vset.pattern.permute.xlu0 0
        %4185 = vperm.xlu0 %4184, %v3391
        %v4186 = vpop.permute.xlu0 %4185
        %4189 = vset.pattern.permute.xlu0 0
        %4190 = vperm.xlu0 %4189, %v3392
        %v4191 = vpop.permute.xlu0 %4190
        %4194 = vset.pattern.permute.xlu0 0
        %4195 = vperm.xlu0 %4194, %v3393
        %v4196 = vpop.permute.xlu0 %4195
        %4199 = vset.pattern.permute.xlu0 0
        %4200 = vperm.xlu0 %4199, %v3394
        %v4201 = vpop.permute.xlu0 %4200
        %4204 = vset.pattern.permute.xlu0 0
        %4205 = vperm.xlu0 %4204, %v3395
        %v4206 = vpop.permute.xlu0 %4205
        %4209 = vset.pattern.permute.xlu0 0
        %4210 = vperm.xlu0 %4209, %v3396
        %v4211 = vpop.permute.xlu0 %4210
        %4214 = vset.pattern.permute.xlu0 0
        %4215 = vperm.xlu0 %4214, %v3397
        %v4216 = vpop.permute.xlu0 %4215
        %4219 = vset.pattern.permute.xlu0 0
        %4220 = vperm.xlu0 %4219, %v3398
        %v4221 = vpop.permute.xlu0 %4220
        %4224 = vset.pattern.permute.xlu0 0
        %4225 = vperm.xlu0 %4224, %v3399
        %v4226 = vpop.permute.xlu0 %4225
        %4229 = vset.pattern.permute.xlu0 0
        %4230 = vperm.xlu0 %4229, %v3400
        %v4231 = vpop.permute.xlu0 %4230
        %4234 = vset.pattern.permute.xlu0 0
        %4235 = vperm.xlu0 %4234, %v3401
        %v4236 = vpop.permute.xlu0 %4235
        %4239 = vset.pattern.permute.xlu0 0
        %4240 = vperm.xlu0 %4239, %v3402
        %v4241 = vpop.permute.xlu0 %4240
        %4244 = vset.pattern.permute.xlu0 0
        %4245 = vperm.xlu0 %4244, %v3403
        %v4246 = vpop.permute.xlu0 %4245
        %4249 = vset.pattern.permute.xlu0 0
        %4250 = vperm.xlu0 %4249, %v3404
        %v4251 = vpop.permute.xlu0 %4250
        %4254 = vset.pattern.permute.xlu0 0
        %4255 = vperm.xlu0 %4254, %v3405
        %v4256 = vpop.permute.xlu0 %4255
        %4259 = vset.pattern.permute.xlu0 0
        %4260 = vperm.xlu0 %4259, %v3406
        %v4261 = vpop.permute.xlu0 %4260
        %4264 = vset.pattern.permute.xlu0 0
        %4265 = vperm.xlu0 %4264, %v3407
        %v4266 = vpop.permute.xlu0 %4265
        %4269 = vset.pattern.permute.xlu0 0
        %4270 = vperm.xlu0 %4269, %v3408
        %v4271 = vpop.permute.xlu0 %4270
        %4274 = vset.pattern.permute.xlu0 0
        %4275 = vperm.xlu0 %4274, %v3409
        %v4276 = vpop.permute.xlu0 %4275
        %4279 = vset.pattern.permute.xlu0 0
        %4280 = vperm.xlu0 %4279, %v3410
        %v4281 = vpop.permute.xlu0 %4280
        %4284 = vset.pattern.permute.xlu0 0
        %4285 = vperm.xlu0 %4284, %v3411
        %v4286 = vpop.permute.xlu0 %4285
        %4289 = vset.pattern.permute.xlu0 0
        %4290 = vperm.xlu0 %4289, %v3412
        %v4291 = vpop.permute.xlu0 %4290
        %4294 = vset.pattern.permute.xlu0 0
        %4295 = vperm.xlu0 %4294, %v3413
        %v4296 = vpop.permute.xlu0 %4295
        %4299 = vset.pattern.permute.xlu0 0
        %4300 = vperm.xlu0 %4299, %v3414
        %v4301 = vpop.permute.xlu0 %4300
        %4304 = vset.pattern.permute.xlu0 0
        %4305 = vperm.xlu0 %4304, %v3415
        %v4306 = vpop.permute.xlu0 %4305
        %4309 = vset.pattern.permute.xlu0 0
        %4310 = vperm.xlu0 %4309, %v3416
        %v4311 = vpop.permute.xlu0 %4310
        %4314 = vset.pattern.permute.xlu0 0
        %4315 = vperm.xlu0 %4314, %v3417
        %v4316 = vpop.permute.xlu0 %4315
        %4319 = vset.pattern.permute.xlu0 0
        %4320 = vperm.xlu0 %4319, %v3418
        %v4321 = vpop.permute.xlu0 %4320
        %4324 = vset.pattern.permute.xlu0 0
        %4325 = vperm.xlu0 %4324, %v3419
        %v4326 = vpop.permute.xlu0 %4325
        %4329 = vset.pattern.permute.xlu0 0
        %4330 = vperm.xlu0 %4329, %v3420
        %v4331 = vpop.permute.xlu0 %4330
        %4334 = vset.pattern.permute.xlu0 0
        %4335 = vperm.xlu0 %4334, %v3421
        %v4336 = vpop.permute.xlu0 %4335
        %4339 = vset.pattern.permute.xlu0 0
        %4340 = vperm.xlu0 %4339, %v3422
        %v4341 = vpop.permute.xlu0 %4340
        %4344 = vset.pattern.permute.xlu0 0
        %4345 = vperm.xlu0 %4344, %v3423
        %v4346 = vpop.permute.xlu0 %4345
        %4349 = vset.pattern.permute.xlu0 0
        %4350 = vperm.xlu0 %4349, %v3424
        %v4351 = vpop.permute.xlu0 %4350
        %4354 = vset.pattern.permute.xlu0 0
        %4355 = vperm.xlu0 %4354, %v3425
        %v4356 = vpop.permute.xlu0 %4355
        %4359 = vset.pattern.permute.xlu0 0
        %4360 = vperm.xlu0 %4359, %v3426
        %v4361 = vpop.permute.xlu0 %4360
        %4364 = vset.pattern.permute.xlu0 0
        %4365 = vperm.xlu0 %4364, %v3427
        %v4366 = vpop.permute.xlu0 %4365
        %4369 = vset.pattern.permute.xlu0 0
        %4370 = vperm.xlu0 %4369, %v3428
        %v4371 = vpop.permute.xlu0 %4370
        %4374 = vset.pattern.permute.xlu0 0
        %4375 = vperm.xlu0 %4374, %v3429
        %v4376 = vpop.permute.xlu0 %4375
        %4379 = vset.pattern.permute.xlu0 0
        %4380 = vperm.xlu0 %4379, %v3430
        %v4381 = vpop.permute.xlu0 %4380
        %4384 = vset.pattern.permute.xlu0 0
        %4385 = vperm.xlu0 %4384, %v3431
        %v4386 = vpop.permute.xlu0 %4385
        %4389 = vset.pattern.permute.xlu0 0
        %4390 = vperm.xlu0 %4389, %v3432
        %v4391 = vpop.permute.xlu0 %4390
        %4394 = vset.pattern.permute.xlu0 0
        %4395 = vperm.xlu0 %4394, %v3433
        %v4396 = vpop.permute.xlu0 %4395
        %4399 = vset.pattern.permute.xlu0 0
        %4400 = vperm.xlu0 %4399, %v3434
        %v4401 = vpop.permute.xlu0 %4400
        %4404 = vset.pattern.permute.xlu0 0
        %4405 = vperm.xlu0 %4404, %v3435
        %v4406 = vpop.permute.xlu0 %4405
        %4409 = vset.pattern.permute.xlu0 0
        %4410 = vperm.xlu0 %4409, %v3436
        %v4411 = vpop.permute.xlu0 %4410
        %4414 = vset.pattern.permute.xlu0 0
        %4415 = vperm.xlu0 %4414, %v3437
        %v4416 = vpop.permute.xlu0 %4415
        %4419 = vset.pattern.permute.xlu0 0
        %4420 = vperm.xlu0 %4419, %v3438
        %v4421 = vpop.permute.xlu0 %4420
        %4424 = vset.pattern.permute.xlu0 0
        %4425 = vperm.xlu0 %4424, %v3439
        %v4426 = vpop.permute.xlu0 %4425
        %4429 = vset.pattern.permute.xlu0 0
        %4430 = vperm.xlu0 %4429, %v3440
        %v4431 = vpop.permute.xlu0 %4430
        %4434 = vset.pattern.permute.xlu0 0
        %4435 = vperm.xlu0 %4434, %v3441
        %v4436 = vpop.permute.xlu0 %4435
        %4439 = vset.pattern.permute.xlu0 0
        %4440 = vperm.xlu0 %4439, %v3442
        %v4441 = vpop.permute.xlu0 %4440
        %4444 = vset.pattern.permute.xlu0 0
        %4445 = vperm.xlu0 %4444, %v3443
        %v4446 = vpop.permute.xlu0 %4445
        %4449 = vset.pattern.permute.xlu0 0
        %4450 = vperm.xlu0 %4449, %v3444
        %v4451 = vpop.permute.xlu0 %4450
        %4454 = vset.pattern.permute.xlu0 0
        %4455 = vperm.xlu0 %4454, %v3445
        %v4456 = vpop.permute.xlu0 %4455
        %4459 = vset.pattern.permute.xlu0 0
        %4460 = vperm.xlu0 %4459, %v3446
        %v4461 = vpop.permute.xlu0 %4460
        %4464 = vset.pattern.permute.xlu0 0
        %4465 = vperm.xlu0 %4464, %v3447
        %v4466 = vpop.permute.xlu0 %4465
        %4469 = vset.pattern.permute.xlu0 0
        %4470 = vperm.xlu0 %4469, %v3448
        %v4471 = vpop.permute.xlu0 %4470
        %v4473 = vsub.f32 %v1928, %v3836
        %v4474 = vsub.f32 %v1930, %v3836
        %v4475 = vsub.f32 %v1932, %v3841
        %v4476 = vsub.f32 %v1934, %v3841
        %v4477 = vsub.f32 %v1938, %v3846
        %v4478 = vsub.f32 %v1940, %v3846
        %v4479 = vsub.f32 %v1942, %v3851
        %v4480 = vsub.f32 %v1944, %v3851
        %v4481 = vsub.f32 %v1948, %v3856
        %v4482 = vsub.f32 %v1950, %v3856
        %v4483 = vsub.f32 %v1952, %v3861
        %v4484 = vsub.f32 %v1954, %v3861
        %v4485 = vsub.f32 %v1958, %v3866
        %v4486 = vsub.f32 %v1960, %v3866
        %v4487 = vsub.f32 %v1962, %v3871
        %v4488 = vsub.f32 %v1964, %v3871
        %v4489 = vsub.f32 %v1968, %v3876
        %v4490 = vsub.f32 %v1970, %v3876
        %v4491 = vsub.f32 %v1972, %v3881
        %v4492 = vsub.f32 %v1974, %v3881
        %v4493 = vsub.f32 %v1978, %v3886
        %v4494 = vsub.f32 %v1980, %v3886
        %v4495 = vsub.f32 %v1982, %v3891
        %v4496 = vsub.f32 %v1984, %v3891
        %v4497 = vsub.f32 %v1988, %v3896
        %v4498 = vsub.f32 %v1990, %v3896
        %v4499 = vsub.f32 %v1992, %v3901
        %v4500 = vsub.f32 %v1994, %v3901
        %v4501 = vsub.f32 %v1998, %v3906
        %v4502 = vsub.f32 %v2000, %v3906
        %v4503 = vsub.f32 %v2002, %v3911
        %v4504 = vsub.f32 %v2004, %v3911
        %v4505 = vsub.f32 %v2008, %v3916
        %v4506 = vsub.f32 %v2010, %v3916
        %v4507 = vsub.f32 %v2012, %v3921
        %v4508 = vsub.f32 %v2014, %v3921
        %v4509 = vsub.f32 %v2018, %v3926
        %v4510 = vsub.f32 %v2020, %v3926
        %v4511 = vsub.f32 %v2022, %v3931
        %v4512 = vsub.f32 %v2024, %v3931
        %v4513 = vsub.f32 %v2028, %v3936
        %v4514 = vsub.f32 %v2030, %v3936
        %v4515 = vsub.f32 %v2032, %v3941
        %v4516 = vsub.f32 %v2034, %v3941
        %v4517 = vsub.f32 %v2038, %v3946
        %v4518 = vsub.f32 %v2040, %v3946
        %v4519 = vsub.f32 %v2042, %v3951
        %v4520 = vsub.f32 %v2044, %v3951
        %v4521 = vsub.f32 %v2048, %v3956
        %v4522 = vsub.f32 %v2050, %v3956
        %v4523 = vsub.f32 %v2052, %v3961
        %v4524 = vsub.f32 %v2054, %v3961
        %v4525 = vsub.f32 %v2058, %v3966
        %v4526 = vsub.f32 %v2060, %v3966
        %v4527 = vsub.f32 %v2062, %v3971
        %v4528 = vsub.f32 %v2064, %v3971
        %v4529 = vsub.f32 %v2068, %v3976
        %v4530 = vsub.f32 %v2070, %v3976
        %v4531 = vsub.f32 %v2072, %v3981
        %v4532 = vsub.f32 %v2074, %v3981
        %v4533 = vsub.f32 %v2078, %v3986
        %v4534 = vsub.f32 %v2080, %v3986
        %v4535 = vsub.f32 %v2082, %v3991
        %v4536 = vsub.f32 %v2084, %v3991
        %v4537 = vsub.f32 %v2169, %v3996
        %v4538 = vsub.f32 %v2171, %v3996
        %v4539 = vsub.f32 %v2173, %v4001
        %v4540 = vsub.f32 %v2175, %v4001
        %v4541 = vsub.f32 %v2179, %v4006
        %v4542 = vsub.f32 %v2181, %v4006
        %v4543 = vsub.f32 %v2183, %v4011
        %v4544 = vsub.f32 %v2185, %v4011
        %v4545 = vsub.f32 %v2189, %v4016
        %v4546 = vsub.f32 %v2191, %v4016
        %v4547 = vsub.f32 %v2193, %v4021
        %v4548 = vsub.f32 %v2195, %v4021
        %v4549 = vsub.f32 %v2199, %v4026
        %v4550 = vsub.f32 %v2201, %v4026
        %v4551 = vsub.f32 %v2203, %v4031
        %v4552 = vsub.f32 %v2205, %v4031
        %v4553 = vsub.f32 %v2209, %v4036
        %v4554 = vsub.f32 %v2211, %v4036
        %v4555 = vsub.f32 %v2213, %v4041
        %v4556 = vsub.f32 %v2215, %v4041
        %v4557 = vsub.f32 %v2219, %v4046
        %v4558 = vsub.f32 %v2221, %v4046
        %v4559 = vsub.f32 %v2223, %v4051
        %v4560 = vsub.f32 %v2225, %v4051
        %v4561 = vsub.f32 %v2229, %v4056
        %v4562 = vsub.f32 %v2231, %v4056
        %v4563 = vsub.f32 %v2233, %v4061
        %v4564 = vsub.f32 %v2235, %v4061
        %v4565 = vsub.f32 %v2239, %v4066
        %v4566 = vsub.f32 %v2241, %v4066
        %v4567 = vsub.f32 %v2243, %v4071
        %v4568 = vsub.f32 %v2245, %v4071
        %v4569 = vsub.f32 %v2249, %v4076
        %v4570 = vsub.f32 %v2251, %v4076
        %v4571 = vsub.f32 %v2253, %v4081
        %v4572 = vsub.f32 %v2255, %v4081
        %v4573 = vsub.f32 %v2259, %v4086
        %v4574 = vsub.f32 %v2261, %v4086
        %v4575 = vsub.f32 %v2263, %v4091
        %v4576 = vsub.f32 %v2265, %v4091
        %v4577 = vsub.f32 %v2269, %v4096
        %v4578 = vsub.f32 %v2271, %v4096
        %v4579 = vsub.f32 %v2273, %v4101
        %v4580 = vsub.f32 %v2275, %v4101
        %v4581 = vsub.f32 %v2279, %v4106
        %v4582 = vsub.f32 %v2281, %v4106
        %v4583 = vsub.f32 %v2283, %v4111
        %v4584 = vsub.f32 %v2285, %v4111
        %v4585 = vsub.f32 %v2289, %v4116
        %v4586 = vsub.f32 %v2291, %v4116
        %v4587 = vsub.f32 %v2293, %v4121
        %v4588 = vsub.f32 %v2295, %v4121
        %v4589 = vsub.f32 %v2299, %v4126
        %v4590 = vsub.f32 %v2301, %v4126
        %v4591 = vsub.f32 %v2303, %v4131
        %v4592 = vsub.f32 %v2305, %v4131
        %v4593 = vsub.f32 %v2309, %v4136
        %v4594 = vsub.f32 %v2311, %v4136
        %v4595 = vsub.f32 %v2313, %v4141
        %v4596 = vsub.f32 %v2315, %v4141
        %v4597 = vsub.f32 %v2319, %v4146
        %v4598 = vsub.f32 %v2321, %v4146
        %v4599 = vsub.f32 %v2323, %v4151
        %v4600 = vsub.f32 %v2325, %v4151
        %v4601 = vsub.f32 %v2410, %v4156
        %v4602 = vsub.f32 %v2412, %v4156
        %v4603 = vsub.f32 %v2414, %v4161
        %v4604 = vsub.f32 %v2416, %v4161
        %v4605 = vsub.f32 %v2420, %v4166
        %v4606 = vsub.f32 %v2422, %v4166
        %v4607 = vsub.f32 %v2424, %v4171
        %v4608 = vsub.f32 %v2426, %v4171
        %v4609 = vsub.f32 %v2430, %v4176
        %v4610 = vsub.f32 %v2432, %v4176
        %v4611 = vsub.f32 %v2434, %v4181
        %v4612 = vsub.f32 %v2436, %v4181
        %v4613 = vsub.f32 %v2440, %v4186
        %v4614 = vsub.f32 %v2442, %v4186
        %v4615 = vsub.f32 %v2444, %v4191
        %v4616 = vsub.f32 %v2446, %v4191
        %v4617 = vsub.f32 %v2450, %v4196
        %v4618 = vsub.f32 %v2452, %v4196
        %v4619 = vsub.f32 %v2454, %v4201
        %v4620 = vsub.f32 %v2456, %v4201
        %v4621 = vsub.f32 %v2460, %v4206
        %v4622 = vsub.f32 %v2462, %v4206
        %v4623 = vsub.f32 %v2464, %v4211
        %v4624 = vsub.f32 %v2466, %v4211
        %v4625 = vsub.f32 %v2470, %v4216
        %v4626 = vsub.f32 %v2472, %v4216
        %v4627 = vsub.f32 %v2474, %v4221
        %v4628 = vsub.f32 %v2476, %v4221
        %v4629 = vsub.f32 %v2480, %v4226
        %v4630 = vsub.f32 %v2482, %v4226
        %v4631 = vsub.f32 %v2484, %v4231
        %v4632 = vsub.f32 %v2486, %v4231
        %v4633 = vsub.f32 %v2490, %v4236
        %v4634 = vsub.f32 %v2492, %v4236
        %v4635 = vsub.f32 %v2494, %v4241
        %v4636 = vsub.f32 %v2496, %v4241
        %v4637 = vsub.f32 %v2500, %v4246
        %v4638 = vsub.f32 %v2502, %v4246
        %v4639 = vsub.f32 %v2504, %v4251
        %v4640 = vsub.f32 %v2506, %v4251
        %v4641 = vsub.f32 %v2510, %v4256
        %v4642 = vsub.f32 %v2512, %v4256
        %v4643 = vsub.f32 %v2514, %v4261
        %v4644 = vsub.f32 %v2516, %v4261
        %v4645 = vsub.f32 %v2520, %v4266
        %v4646 = vsub.f32 %v2522, %v4266
        %v4647 = vsub.f32 %v2524, %v4271
        %v4648 = vsub.f32 %v2526, %v4271
        %v4649 = vsub.f32 %v2530, %v4276
        %v4650 = vsub.f32 %v2532, %v4276
        %v4651 = vsub.f32 %v2534, %v4281
        %v4652 = vsub.f32 %v2536, %v4281
        %v4653 = vsub.f32 %v2540, %v4286
        %v4654 = vsub.f32 %v2542, %v4286
        %v4655 = vsub.f32 %v2544, %v4291
        %v4656 = vsub.f32 %v2546, %v4291
        %v4657 = vsub.f32 %v2550, %v4296
        %v4658 = vsub.f32 %v2552, %v4296
        %v4659 = vsub.f32 %v2554, %v4301
        %v4660 = vsub.f32 %v2556, %v4301
        %v4661 = vsub.f32 %v2560, %v4306
        %v4662 = vsub.f32 %v2562, %v4306
        %v4663 = vsub.f32 %v2564, %v4311
        %v4664 = vsub.f32 %v2566, %v4311
        %v4665 = vsub.f32 %v2651, %v4316
        %v4666 = vsub.f32 %v2653, %v4316
        %v4667 = vsub.f32 %v2655, %v4321
        %v4668 = vsub.f32 %v2657, %v4321
        %v4669 = vsub.f32 %v2661, %v4326
        %v4670 = vsub.f32 %v2663, %v4326
        %v4671 = vsub.f32 %v2665, %v4331
        %v4672 = vsub.f32 %v2667, %v4331
        %v4673 = vsub.f32 %v2671, %v4336
        %v4674 = vsub.f32 %v2673, %v4336
        %v4675 = vsub.f32 %v2675, %v4341
        %v4676 = vsub.f32 %v2677, %v4341
        %v4677 = vsub.f32 %v2681, %v4346
        %v4678 = vsub.f32 %v2683, %v4346
        %v4679 = vsub.f32 %v2685, %v4351
        %v4680 = vsub.f32 %v2687, %v4351
        %v4681 = vsub.f32 %v2691, %v4356
        %v4682 = vsub.f32 %v2693, %v4356
        %v4683 = vsub.f32 %v2695, %v4361
        %v4684 = vsub.f32 %v2697, %v4361
        %v4685 = vsub.f32 %v2701, %v4366
        %v4686 = vsub.f32 %v2703, %v4366
        %v4687 = vsub.f32 %v2705, %v4371
        %v4688 = vsub.f32 %v2707, %v4371
        %v4689 = vsub.f32 %v2711, %v4376
        %v4690 = vsub.f32 %v2713, %v4376
        %v4691 = vsub.f32 %v2715, %v4381
        %v4692 = vsub.f32 %v2717, %v4381
        %v4693 = vsub.f32 %v2721, %v4386
        %v4694 = vsub.f32 %v2723, %v4386
        %v4695 = vsub.f32 %v2725, %v4391
        %v4696 = vsub.f32 %v2727, %v4391
        %v4697 = vsub.f32 %v2731, %v4396
        %v4698 = vsub.f32 %v2733, %v4396
        %v4699 = vsub.f32 %v2735, %v4401
        %v4700 = vsub.f32 %v2737, %v4401
        %v4701 = vsub.f32 %v2741, %v4406
        %v4702 = vsub.f32 %v2743, %v4406
        %v4703 = vsub.f32 %v2745, %v4411
        %v4704 = vsub.f32 %v2747, %v4411
        %v4705 = vsub.f32 %v2751, %v4416
        %v4706 = vsub.f32 %v2753, %v4416
        %v4707 = vsub.f32 %v2755, %v4421
        %v4708 = vsub.f32 %v2757, %v4421
        %v4709 = vsub.f32 %v2761, %v4426
        %v4710 = vsub.f32 %v2763, %v4426
        %v4711 = vsub.f32 %v2765, %v4431
        %v4712 = vsub.f32 %v2767, %v4431
        %v4713 = vsub.f32 %v2771, %v4436
        %v4714 = vsub.f32 %v2773, %v4436
        %v4715 = vsub.f32 %v2775, %v4441
        %v4716 = vsub.f32 %v2777, %v4441
        %v4717 = vsub.f32 %v2781, %v4446
        %v4718 = vsub.f32 %v2783, %v4446
        %v4719 = vsub.f32 %v2785, %v4451
        %v4720 = vsub.f32 %v2787, %v4451
        %v4721 = vsub.f32 %v2791, %v4456
        %v4722 = vsub.f32 %v2793, %v4456
        %v4723 = vsub.f32 %v2795, %v4461
        %v4724 = vsub.f32 %v2797, %v4461
        %v4725 = vsub.f32 %v2801, %v4466
        %v4726 = vsub.f32 %v2803, %v4466
        %v4727 = vsub.f32 %v2805, %v4471
        %v4728 = vsub.f32 %v2807, %v4471
        %v4729 = vmul.f32 %v4473, 1.442695
        %v4730 = vpow.pop %v4729
        %v4731 = vmul.f32 %v4474, 1.442695
        %v4732 = vpow.pop %v4731
        %v4733 = vmul.f32 %v4475, 1.442695
        %v4734 = vpow.pop %v4733
        %v4735 = vmul.f32 %v4476, 1.442695
        %v4736 = vpow.pop %v4735
        %v4737 = vmul.f32 %v4477, 1.442695
        %v4738 = vpow.pop %v4737
        %v4739 = vmul.f32 %v4478, 1.442695
        %v4740 = vpow.pop %v4739
        %v4741 = vmul.f32 %v4479, 1.442695
        %v4742 = vpow.pop %v4741
        %v4743 = vmul.f32 %v4480, 1.442695
        %v4744 = vpow.pop %v4743
        %v4745 = vmul.f32 %v4481, 1.442695
        %v4746 = vpow.pop %v4745
        %v4747 = vmul.f32 %v4482, 1.442695
        %v4748 = vpow.pop %v4747
        %v4749 = vmul.f32 %v4483, 1.442695
        %v4750 = vpow.pop %v4749
        %v4751 = vmul.f32 %v4484, 1.442695
        %v4752 = vpow.pop %v4751
        %v4753 = vmul.f32 %v4485, 1.442695
        %v4754 = vpow.pop %v4753
        %v4755 = vmul.f32 %v4486, 1.442695
        %v4756 = vpow.pop %v4755
        %v4757 = vmul.f32 %v4487, 1.442695
        %v4758 = vpow.pop %v4757
        %v4759 = vmul.f32 %v4488, 1.442695
        %v4760 = vpow.pop %v4759
        %v4761 = vmul.f32 %v4489, 1.442695
        %v4762 = vpow.pop %v4761
        %v4763 = vmul.f32 %v4490, 1.442695
        %v4764 = vpow.pop %v4763
        %v4765 = vmul.f32 %v4491, 1.442695
        %v4766 = vpow.pop %v4765
        %v4767 = vmul.f32 %v4492, 1.442695
        %v4768 = vpow.pop %v4767
        %v4769 = vmul.f32 %v4493, 1.442695
        %v4770 = vpow.pop %v4769
        %v4771 = vmul.f32 %v4494, 1.442695
        %v4772 = vpow.pop %v4771
        %v4773 = vmul.f32 %v4495, 1.442695
        %v4774 = vpow.pop %v4773
        %v4775 = vmul.f32 %v4496, 1.442695
        %v4776 = vpow.pop %v4775
        %v4777 = vmul.f32 %v4497, 1.442695
        %v4778 = vpow.pop %v4777
        %v4779 = vmul.f32 %v4498, 1.442695
        %v4780 = vpow.pop %v4779
        %v4781 = vmul.f32 %v4499, 1.442695
        %v4782 = vpow.pop %v4781
        %v4783 = vmul.f32 %v4500, 1.442695
        %v4784 = vpow.pop %v4783
        %v4785 = vmul.f32 %v4501, 1.442695
        %v4786 = vpow.pop %v4785
        %v4787 = vmul.f32 %v4502, 1.442695
        %v4788 = vpow.pop %v4787
        %v4789 = vmul.f32 %v4503, 1.442695
        %v4790 = vpow.pop %v4789
        %v4791 = vmul.f32 %v4504, 1.442695
        %v4792 = vpow.pop %v4791
        %v4793 = vmul.f32 %v4505, 1.442695
        %v4794 = vpow.pop %v4793
        %v4795 = vmul.f32 %v4506, 1.442695
        %v4796 = vpow.pop %v4795
        %v4797 = vmul.f32 %v4507, 1.442695
        %v4798 = vpow.pop %v4797
        %v4799 = vmul.f32 %v4508, 1.442695
        %v4800 = vpow.pop %v4799
        %v4801 = vmul.f32 %v4509, 1.442695
        %v4802 = vpow.pop %v4801
        %v4803 = vmul.f32 %v4510, 1.442695
        %v4804 = vpow.pop %v4803
        %v4805 = vmul.f32 %v4511, 1.442695
        %v4806 = vpow.pop %v4805
        %v4807 = vmul.f32 %v4512, 1.442695
        %v4808 = vpow.pop %v4807
        %v4809 = vmul.f32 %v4513, 1.442695
        %v4810 = vpow.pop %v4809
        %v4811 = vmul.f32 %v4514, 1.442695
        %v4812 = vpow.pop %v4811
        %v4813 = vmul.f32 %v4515, 1.442695
        %v4814 = vpow.pop %v4813
        %v4815 = vmul.f32 %v4516, 1.442695
        %v4816 = vpow.pop %v4815
        %v4817 = vmul.f32 %v4517, 1.442695
        %v4818 = vpow.pop %v4817
        %v4819 = vmul.f32 %v4518, 1.442695
        %v4820 = vpow.pop %v4819
        %v4821 = vmul.f32 %v4519, 1.442695
        %v4822 = vpow.pop %v4821
        %v4823 = vmul.f32 %v4520, 1.442695
        %v4824 = vpow.pop %v4823
        %v4825 = vmul.f32 %v4521, 1.442695
        %v4826 = vpow.pop %v4825
        %v4827 = vmul.f32 %v4522, 1.442695
        %v4828 = vpow.pop %v4827
        %v4829 = vmul.f32 %v4523, 1.442695
        %v4830 = vpow.pop %v4829
        %v4831 = vmul.f32 %v4524, 1.442695
        %v4832 = vpow.pop %v4831
        %v4833 = vmul.f32 %v4525, 1.442695
        %v4834 = vpow.pop %v4833
        %v4835 = vmul.f32 %v4526, 1.442695
        %v4836 = vpow.pop %v4835
        %v4837 = vmul.f32 %v4527, 1.442695
        %v4838 = vpow.pop %v4837
        %v4839 = vmul.f32 %v4528, 1.442695
        %v4840 = vpow.pop %v4839
        %v4841 = vmul.f32 %v4529, 1.442695
        %v4842 = vpow.pop %v4841
        %v4843 = vmul.f32 %v4530, 1.442695
        %v4844 = vpow.pop %v4843
        %v4845 = vmul.f32 %v4531, 1.442695
        %v4846 = vpow.pop %v4845
        %v4847 = vmul.f32 %v4532, 1.442695
        %v4848 = vpow.pop %v4847
        %v4849 = vmul.f32 %v4533, 1.442695
        %v4850 = vpow.pop %v4849
        %v4851 = vmul.f32 %v4534, 1.442695
        %v4852 = vpow.pop %v4851
        %v4853 = vmul.f32 %v4535, 1.442695
        %v4854 = vpow.pop %v4853
        %v4855 = vmul.f32 %v4536, 1.442695
        %v4856 = vpow.pop %v4855
        %v4857 = vmul.f32 %v4537, 1.442695
        %v4858 = vpow.pop %v4857
        %v4859 = vmul.f32 %v4538, 1.442695
        %v4860 = vpow.pop %v4859
        %v4861 = vmul.f32 %v4539, 1.442695
        %v4862 = vpow.pop %v4861
        %v4863 = vmul.f32 %v4540, 1.442695
        %v4864 = vpow.pop %v4863
        %v4865 = vmul.f32 %v4541, 1.442695
        %v4866 = vpow.pop %v4865
        %v4867 = vmul.f32 %v4542, 1.442695
        %v4868 = vpow.pop %v4867
        %v4869 = vmul.f32 %v4543, 1.442695
        %v4870 = vpow.pop %v4869
        %v4871 = vmul.f32 %v4544, 1.442695
        %v4872 = vpow.pop %v4871
        %v4873 = vmul.f32 %v4545, 1.442695
        %v4874 = vpow.pop %v4873
        %v4875 = vmul.f32 %v4546, 1.442695
        %v4876 = vpow.pop %v4875
        %v4877 = vmul.f32 %v4547, 1.442695
        %v4878 = vpow.pop %v4877
        %v4879 = vmul.f32 %v4548, 1.442695
        %v4880 = vpow.pop %v4879
        %v4881 = vmul.f32 %v4549, 1.442695
        %v4882 = vpow.pop %v4881
        %v4883 = vmul.f32 %v4550, 1.442695
        %v4884 = vpow.pop %v4883
        %v4885 = vmul.f32 %v4551, 1.442695
        %v4886 = vpow.pop %v4885
        %v4887 = vmul.f32 %v4552, 1.442695
        %v4888 = vpow.pop %v4887
        %v4889 = vmul.f32 %v4553, 1.442695
        %v4890 = vpow.pop %v4889
        %v4891 = vmul.f32 %v4554, 1.442695
        %v4892 = vpow.pop %v4891
        %v4893 = vmul.f32 %v4555, 1.442695
        %v4894 = vpow.pop %v4893
        %v4895 = vmul.f32 %v4556, 1.442695
        %v4896 = vpow.pop %v4895
        %v4897 = vmul.f32 %v4557, 1.442695
        %v4898 = vpow.pop %v4897
        %v4899 = vmul.f32 %v4558, 1.442695
        %v4900 = vpow.pop %v4899
        %v4901 = vmul.f32 %v4559, 1.442695
        %v4902 = vpow.pop %v4901
        %v4903 = vmul.f32 %v4560, 1.442695
        %v4904 = vpow.pop %v4903
        %v4905 = vmul.f32 %v4561, 1.442695
        %v4906 = vpow.pop %v4905
        %v4907 = vmul.f32 %v4562, 1.442695
        %v4908 = vpow.pop %v4907
        %v4909 = vmul.f32 %v4563, 1.442695
        %v4910 = vpow.pop %v4909
        %v4911 = vmul.f32 %v4564, 1.442695
        %v4912 = vpow.pop %v4911
        %v4913 = vmul.f32 %v4565, 1.442695
        %v4914 = vpow.pop %v4913
        %v4915 = vmul.f32 %v4566, 1.442695
        %v4916 = vpow.pop %v4915
        %v4917 = vmul.f32 %v4567, 1.442695
        %v4918 = vpow.pop %v4917
        %v4919 = vmul.f32 %v4568, 1.442695
        %v4920 = vpow.pop %v4919
        %v4921 = vmul.f32 %v4569, 1.442695
        %v4922 = vpow.pop %v4921
        %v4923 = vmul.f32 %v4570, 1.442695
        %v4924 = vpow.pop %v4923
        %v4925 = vmul.f32 %v4571, 1.442695
        %v4926 = vpow.pop %v4925
        %v4927 = vmul.f32 %v4572, 1.442695
        %v4928 = vpow.pop %v4927
        %v4929 = vmul.f32 %v4573, 1.442695
        %v4930 = vpow.pop %v4929
        %v4931 = vmul.f32 %v4574, 1.442695
        %v4932 = vpow.pop %v4931
        %v4933 = vmul.f32 %v4575, 1.442695
        %v4934 = vpow.pop %v4933
        %v4935 = vmul.f32 %v4576, 1.442695
        %v4936 = vpow.pop %v4935
        %v4937 = vmul.f32 %v4577, 1.442695
        %v4938 = vpow.pop %v4937
        %v4939 = vmul.f32 %v4578, 1.442695
        %v4940 = vpow.pop %v4939
        %v4941 = vmul.f32 %v4579, 1.442695
        %v4942 = vpow.pop %v4941
        %v4943 = vmul.f32 %v4580, 1.442695
        %v4944 = vpow.pop %v4943
        %v4945 = vmul.f32 %v4581, 1.442695
        %v4946 = vpow.pop %v4945
        %v4947 = vmul.f32 %v4582, 1.442695
        %v4948 = vpow.pop %v4947
        %v4949 = vmul.f32 %v4583, 1.442695
        %v4950 = vpow.pop %v4949
        %v4951 = vmul.f32 %v4584, 1.442695
        %v4952 = vpow.pop %v4951
        %v4953 = vmul.f32 %v4585, 1.442695
        %v4954 = vpow.pop %v4953
        %v4955 = vmul.f32 %v4586, 1.442695
        %v4956 = vpow.pop %v4955
        %v4957 = vmul.f32 %v4587, 1.442695
        %v4958 = vpow.pop %v4957
        %v4959 = vmul.f32 %v4588, 1.442695
        %v4960 = vpow.pop %v4959
        %v4961 = vmul.f32 %v4589, 1.442695
        %v4962 = vpow.pop %v4961
        %v4963 = vmul.f32 %v4590, 1.442695
        %v4964 = vpow.pop %v4963
        %v4965 = vmul.f32 %v4591, 1.442695
        %v4966 = vpow.pop %v4965
        %v4967 = vmul.f32 %v4592, 1.442695
        %v4968 = vpow.pop %v4967
        %v4969 = vmul.f32 %v4593, 1.442695
        %v4970 = vpow.pop %v4969
        %v4971 = vmul.f32 %v4594, 1.442695
        %v4972 = vpow.pop %v4971
        %v4973 = vmul.f32 %v4595, 1.442695
        %v4974 = vpow.pop %v4973
        %v4975 = vmul.f32 %v4596, 1.442695
        %v4976 = vpow.pop %v4975
        %v4977 = vmul.f32 %v4597, 1.442695
        %v4978 = vpow.pop %v4977
        %v4979 = vmul.f32 %v4598, 1.442695
        %v4980 = vpow.pop %v4979
        %v4981 = vmul.f32 %v4599, 1.442695
        %v4982 = vpow.pop %v4981
        %v4983 = vmul.f32 %v4600, 1.442695
        %v4984 = vpow.pop %v4983
        %v4985 = vmul.f32 %v4601, 1.442695
        %v4986 = vpow.pop %v4985
        %v4987 = vmul.f32 %v4602, 1.442695
        %v4988 = vpow.pop %v4987
        %v4989 = vmul.f32 %v4603, 1.442695
        %v4990 = vpow.pop %v4989
        %v4991 = vmul.f32 %v4604, 1.442695
        %v4992 = vpow.pop %v4991
        %v4993 = vmul.f32 %v4605, 1.442695
        %v4994 = vpow.pop %v4993
        %v4995 = vmul.f32 %v4606, 1.442695
        %v4996 = vpow.pop %v4995
        %v4997 = vmul.f32 %v4607, 1.442695
        %v4998 = vpow.pop %v4997
        %v4999 = vmul.f32 %v4608, 1.442695
        %v5000 = vpow.pop %v4999
        %v5001 = vmul.f32 %v4609, 1.442695
        %v5002 = vpow.pop %v5001
        %v5003 = vmul.f32 %v4610, 1.442695
        %v5004 = vpow.pop %v5003
        %v5005 = vmul.f32 %v4611, 1.442695
        %v5006 = vpow.pop %v5005
        %v5007 = vmul.f32 %v4612, 1.442695
        %v5008 = vpow.pop %v5007
        %v5009 = vmul.f32 %v4613, 1.442695
        %v5010 = vpow.pop %v5009
        %v5011 = vmul.f32 %v4614, 1.442695
        %v5012 = vpow.pop %v5011
        %v5013 = vmul.f32 %v4615, 1.442695
        %v5014 = vpow.pop %v5013
        %v5015 = vmul.f32 %v4616, 1.442695
        %v5016 = vpow.pop %v5015
        %v5017 = vmul.f32 %v4617, 1.442695
        %v5018 = vpow.pop %v5017
        %v5019 = vmul.f32 %v4618, 1.442695
        %v5020 = vpow.pop %v5019
        %v5021 = vmul.f32 %v4619, 1.442695
        %v5022 = vpow.pop %v5021
        %v5023 = vmul.f32 %v4620, 1.442695
        %v5024 = vpow.pop %v5023
        %v5025 = vmul.f32 %v4621, 1.442695
        %v5026 = vpow.pop %v5025
        %v5027 = vmul.f32 %v4622, 1.442695
        %v5028 = vpow.pop %v5027
        %v5029 = vmul.f32 %v4623, 1.442695
        %v5030 = vpow.pop %v5029
        %v5031 = vmul.f32 %v4624, 1.442695
        %v5032 = vpow.pop %v5031
        %v5033 = vmul.f32 %v4625, 1.442695
        %v5034 = vpow.pop %v5033
        %v5035 = vmul.f32 %v4626, 1.442695
        %v5036 = vpow.pop %v5035
        %v5037 = vmul.f32 %v4627, 1.442695
        %v5038 = vpow.pop %v5037
        %v5039 = vmul.f32 %v4628, 1.442695
        %v5040 = vpow.pop %v5039
        %v5041 = vmul.f32 %v4629, 1.442695
        %v5042 = vpow.pop %v5041
        %v5043 = vmul.f32 %v4630, 1.442695
        %v5044 = vpow.pop %v5043
        %v5045 = vmul.f32 %v4631, 1.442695
        %v5046 = vpow.pop %v5045
        %v5047 = vmul.f32 %v4632, 1.442695
        %v5048 = vpow.pop %v5047
        %v5049 = vmul.f32 %v4633, 1.442695
        %v5050 = vpow.pop %v5049
        %v5051 = vmul.f32 %v4634, 1.442695
        %v5052 = vpow.pop %v5051
        %v5053 = vmul.f32 %v4635, 1.442695
        %v5054 = vpow.pop %v5053
        %v5055 = vmul.f32 %v4636, 1.442695
        %v5056 = vpow.pop %v5055
        %v5057 = vmul.f32 %v4637, 1.442695
        %v5058 = vpow.pop %v5057
        %v5059 = vmul.f32 %v4638, 1.442695
        %v5060 = vpow.pop %v5059
        %v5061 = vmul.f32 %v4639, 1.442695
        %v5062 = vpow.pop %v5061
        %v5063 = vmul.f32 %v4640, 1.442695
        %v5064 = vpow.pop %v5063
        %v5065 = vmul.f32 %v4641, 1.442695
        %v5066 = vpow.pop %v5065
        %v5067 = vmul.f32 %v4642, 1.442695
        %v5068 = vpow.pop %v5067
        %v5069 = vmul.f32 %v4643, 1.442695
        %v5070 = vpow.pop %v5069
        %v5071 = vmul.f32 %v4644, 1.442695
        %v5072 = vpow.pop %v5071
        %v5073 = vmul.f32 %v4645, 1.442695
        %v5074 = vpow.pop %v5073
        %v5075 = vmul.f32 %v4646, 1.442695
        %v5076 = vpow.pop %v5075
        %v5077 = vmul.f32 %v4647, 1.442695
        %v5078 = vpow.pop %v5077
        %v5079 = vmul.f32 %v4648, 1.442695
        %v5080 = vpow.pop %v5079
        %v5081 = vmul.f32 %v4649, 1.442695
        %v5082 = vpow.pop %v5081
        %v5083 = vmul.f32 %v4650, 1.442695
        %v5084 = vpow.pop %v5083
        %v5085 = vmul.f32 %v4651, 1.442695
        %v5086 = vpow.pop %v5085
        %v5087 = vmul.f32 %v4652, 1.442695
        %v5088 = vpow.pop %v5087
        %v5089 = vmul.f32 %v4653, 1.442695
        %v5090 = vpow.pop %v5089
        %v5091 = vmul.f32 %v4654, 1.442695
        %v5092 = vpow.pop %v5091
        %v5093 = vmul.f32 %v4655, 1.442695
        %v5094 = vpow.pop %v5093
        %v5095 = vmul.f32 %v4656, 1.442695
        %v5096 = vpow.pop %v5095
        %v5097 = vmul.f32 %v4657, 1.442695
        %v5098 = vpow.pop %v5097
        %v5099 = vmul.f32 %v4658, 1.442695
        %v5100 = vpow.pop %v5099
        %v5101 = vmul.f32 %v4659, 1.442695
        %v5102 = vpow.pop %v5101
        %v5103 = vmul.f32 %v4660, 1.442695
        %v5104 = vpow.pop %v5103
        %v5105 = vmul.f32 %v4661, 1.442695
        %v5106 = vpow.pop %v5105
        %v5107 = vmul.f32 %v4662, 1.442695
        %v5108 = vpow.pop %v5107
        %v5109 = vmul.f32 %v4663, 1.442695
        %v5110 = vpow.pop %v5109
        %v5111 = vmul.f32 %v4664, 1.442695
        %v5112 = vpow.pop %v5111
        %v5113 = vmul.f32 %v4665, 1.442695
        %v5114 = vpow.pop %v5113
        %v5115 = vmul.f32 %v4666, 1.442695
        %v5116 = vpow.pop %v5115
        %v5117 = vmul.f32 %v4667, 1.442695
        %v5118 = vpow.pop %v5117
        %v5119 = vmul.f32 %v4668, 1.442695
        %v5120 = vpow.pop %v5119
        %v5121 = vmul.f32 %v4669, 1.442695
        %v5122 = vpow.pop %v5121
        %v5123 = vmul.f32 %v4670, 1.442695
        %v5124 = vpow.pop %v5123
        %v5125 = vmul.f32 %v4671, 1.442695
        %v5126 = vpow.pop %v5125
        %v5127 = vmul.f32 %v4672, 1.442695
        %v5128 = vpow.pop %v5127
        %v5129 = vmul.f32 %v4673, 1.442695
        %v5130 = vpow.pop %v5129
        %v5131 = vmul.f32 %v4674, 1.442695
        %v5132 = vpow.pop %v5131
        %v5133 = vmul.f32 %v4675, 1.442695
        %v5134 = vpow.pop %v5133
        %v5135 = vmul.f32 %v4676, 1.442695
        %v5136 = vpow.pop %v5135
        %v5137 = vmul.f32 %v4677, 1.442695
        %v5138 = vpow.pop %v5137
        %v5139 = vmul.f32 %v4678, 1.442695
        %v5140 = vpow.pop %v5139
        %v5141 = vmul.f32 %v4679, 1.442695
        %v5142 = vpow.pop %v5141
        %v5143 = vmul.f32 %v4680, 1.442695
        %v5144 = vpow.pop %v5143
        %v5145 = vmul.f32 %v4681, 1.442695
        %v5146 = vpow.pop %v5145
        %v5147 = vmul.f32 %v4682, 1.442695
        %v5148 = vpow.pop %v5147
        %v5149 = vmul.f32 %v4683, 1.442695
        %v5150 = vpow.pop %v5149
        %v5151 = vmul.f32 %v4684, 1.442695
        %v5152 = vpow.pop %v5151
        %v5153 = vmul.f32 %v4685, 1.442695
        %v5154 = vpow.pop %v5153
        %v5155 = vmul.f32 %v4686, 1.442695
        %v5156 = vpow.pop %v5155
        %v5157 = vmul.f32 %v4687, 1.442695
        %v5158 = vpow.pop %v5157
        %v5159 = vmul.f32 %v4688, 1.442695
        %v5160 = vpow.pop %v5159
        %v5161 = vmul.f32 %v4689, 1.442695
        %v5162 = vpow.pop %v5161
        %v5163 = vmul.f32 %v4690, 1.442695
        %v5164 = vpow.pop %v5163
        %v5165 = vmul.f32 %v4691, 1.442695
        %v5166 = vpow.pop %v5165
        %v5167 = vmul.f32 %v4692, 1.442695
        %v5168 = vpow.pop %v5167
        %v5169 = vmul.f32 %v4693, 1.442695
        %v5170 = vpow.pop %v5169
        %v5171 = vmul.f32 %v4694, 1.442695
        %v5172 = vpow.pop %v5171
        %v5173 = vmul.f32 %v4695, 1.442695
        %v5174 = vpow.pop %v5173
        %v5175 = vmul.f32 %v4696, 1.442695
        %v5176 = vpow.pop %v5175
        %v5177 = vmul.f32 %v4697, 1.442695
        %v5178 = vpow.pop %v5177
        %v5179 = vmul.f32 %v4698, 1.442695
        %v5180 = vpow.pop %v5179
        %v5181 = vmul.f32 %v4699, 1.442695
        %v5182 = vpow.pop %v5181
        %v5183 = vmul.f32 %v4700, 1.442695
        %v5184 = vpow.pop %v5183
        %v5185 = vmul.f32 %v4701, 1.442695
        %v5186 = vpow.pop %v5185
        %v5187 = vmul.f32 %v4702, 1.442695
        %v5188 = vpow.pop %v5187
        %v5189 = vmul.f32 %v4703, 1.442695
        %v5190 = vpow.pop %v5189
        %v5191 = vmul.f32 %v4704, 1.442695
        %v5192 = vpow.pop %v5191
        %v5193 = vmul.f32 %v4705, 1.442695
        %v5194 = vpow.pop %v5193
        %v5195 = vmul.f32 %v4706, 1.442695
        %v5196 = vpow.pop %v5195
        %v5197 = vmul.f32 %v4707, 1.442695
        %v5198 = vpow.pop %v5197
        %v5199 = vmul.f32 %v4708, 1.442695
        %v5200 = vpow.pop %v5199
        %v5201 = vmul.f32 %v4709, 1.442695
        %v5202 = vpow.pop %v5201
        %v5203 = vmul.f32 %v4710, 1.442695
        %v5204 = vpow.pop %v5203
        %v5205 = vmul.f32 %v4711, 1.442695
        %v5206 = vpow.pop %v5205
        %v5207 = vmul.f32 %v4712, 1.442695
        %v5208 = vpow.pop %v5207
        %v5209 = vmul.f32 %v4713, 1.442695
        %v5210 = vpow.pop %v5209
        %v5211 = vmul.f32 %v4714, 1.442695
        %v5212 = vpow.pop %v5211
        %v5213 = vmul.f32 %v4715, 1.442695
        %v5214 = vpow.pop %v5213
        %v5215 = vmul.f32 %v4716, 1.442695
        %v5216 = vpow.pop %v5215
        %v5217 = vmul.f32 %v4717, 1.442695
        %v5218 = vpow.pop %v5217
        %v5219 = vmul.f32 %v4718, 1.442695
        %v5220 = vpow.pop %v5219
        %v5221 = vmul.f32 %v4719, 1.442695
        %v5222 = vpow.pop %v5221
        %v5223 = vmul.f32 %v4720, 1.442695
        %v5224 = vpow.pop %v5223
        %v5225 = vmul.f32 %v4721, 1.442695
        %v5226 = vpow.pop %v5225
        %v5227 = vmul.f32 %v4722, 1.442695
        %v5228 = vpow.pop %v5227
        %v5229 = vmul.f32 %v4723, 1.442695
        %v5230 = vpow.pop %v5229
        %v5231 = vmul.f32 %v4724, 1.442695
        %v5232 = vpow.pop %v5231
        %v5233 = vmul.f32 %v4725, 1.442695
        %v5234 = vpow.pop %v5233
        %v5235 = vmul.f32 %v4726, 1.442695
        %v5236 = vpow.pop %v5235
        %v5237 = vmul.f32 %v4727, 1.442695
        %v5238 = vpow.pop %v5237
        %v5239 = vmul.f32 %v4728, 1.442695
        %v5240 = vpow.pop %v5239
        %v5241 = vld [vmem:[#allocation4] sm:$0xff]
        %v5242 = vld [vmem:[#allocation4 + $0x8] sm:$0xff]
        %v5243 = vld [vmem:[#allocation4 + $0x10] sm:$0xff]
        %v5244 = vld [vmem:[#allocation4 + $0x18] sm:$0xff]
        %v5245 = vld [vmem:[#allocation4 + $0x20] sm:$0xff]
        %v5246 = vld [vmem:[#allocation4 + $0x28] sm:$0xff]
        %v5247 = vld [vmem:[#allocation4 + $0x30] sm:$0xff]
        %v5248 = vld [vmem:[#allocation4 + $0x38] sm:$0xff]
        %v5249 = vld [vmem:[#allocation4 + $0x40] sm:$0xff]
        %v5250 = vld [vmem:[#allocation4 + $0x48] sm:$0xff]
        %v5251 = vld [vmem:[#allocation4 + $0x50] sm:$0xff]
        %v5252 = vld [vmem:[#allocation4 + $0x58] sm:$0xff]
        %v5253 = vld [vmem:[#allocation4 + $0x60] sm:$0xff]
        %v5254 = vld [vmem:[#allocation4 + $0x68] sm:$0xff]
        %v5255 = vld [vmem:[#allocation4 + $0x70] sm:$0xff]
        %v5256 = vld [vmem:[#allocation4 + $0x78] sm:$0xff]
        %v5257 = vld [vmem:[#allocation4 + $0x80] sm:$0xff]
        %v5258 = vld [vmem:[#allocation4 + $0x88] sm:$0xff]
        %v5259 = vld [vmem:[#allocation4 + $0x90] sm:$0xff]
        %v5260 = vld [vmem:[#allocation4 + $0x98] sm:$0xff]
        %v5261 = vld [vmem:[#allocation4 + $0xa0] sm:$0xff]
        %v5262 = vld [vmem:[#allocation4 + $0xa8] sm:$0xff]
        %v5263 = vld [vmem:[#allocation4 + $0xb0] sm:$0xff]
        %v5264 = vld [vmem:[#allocation4 + $0xb8] sm:$0xff]
        %v5265 = vld [vmem:[#allocation4 + $0xc0] sm:$0xff]
        %v5266 = vld [vmem:[#allocation4 + $0xc8] sm:$0xff]
        %v5267 = vld [vmem:[#allocation4 + $0xd0] sm:$0xff]
        %v5268 = vld [vmem:[#allocation4 + $0xd8] sm:$0xff]
        %v5269 = vld [vmem:[#allocation4 + $0xe0] sm:$0xff]
        %v5270 = vld [vmem:[#allocation4 + $0xe8] sm:$0xff]
        %v5271 = vld [vmem:[#allocation4 + $0xf0] sm:$0xff]
        %v5272 = vld [vmem:[#allocation4 + $0xf8] sm:$0xff]
        %v5273 = vld [vmem:[#allocation4 + $0x100] sm:$0xff]
        %v5274 = vld [vmem:[#allocation4 + $0x108] sm:$0xff]
        %v5275 = vld [vmem:[#allocation4 + $0x110] sm:$0xff]
        %v5276 = vld [vmem:[#allocation4 + $0x118] sm:$0xff]
        %v5277 = vld [vmem:[#allocation4 + $0x120] sm:$0xff]
        %v5278 = vld [vmem:[#allocation4 + $0x128] sm:$0xff]
        %v5279 = vld [vmem:[#allocation4 + $0x130] sm:$0xff]
        %v5280 = vld [vmem:[#allocation4 + $0x138] sm:$0xff]
        %v5281 = vld [vmem:[#allocation4 + $0x140] sm:$0xff]
        %v5282 = vld [vmem:[#allocation4 + $0x148] sm:$0xff]
        %v5283 = vld [vmem:[#allocation4 + $0x150] sm:$0xff]
        %v5284 = vld [vmem:[#allocation4 + $0x158] sm:$0xff]
        %v5285 = vld [vmem:[#allocation4 + $0x160] sm:$0xff]
        %v5286 = vld [vmem:[#allocation4 + $0x168] sm:$0xff]
        %v5287 = vld [vmem:[#allocation4 + $0x170] sm:$0xff]
        %v5288 = vld [vmem:[#allocation4 + $0x178] sm:$0xff]
        %v5289 = vld [vmem:[#allocation4 + $0x180] sm:$0xff]
        %v5290 = vld [vmem:[#allocation4 + $0x188] sm:$0xff]
        %v5291 = vld [vmem:[#allocation4 + $0x190] sm:$0xff]
        %v5292 = vld [vmem:[#allocation4 + $0x198] sm:$0xff]
        %v5293 = vld [vmem:[#allocation4 + $0x1a0] sm:$0xff]
        %v5294 = vld [vmem:[#allocation4 + $0x1a8] sm:$0xff]
        %v5295 = vld [vmem:[#allocation4 + $0x1b0] sm:$0xff]
        %v5296 = vld [vmem:[#allocation4 + $0x1b8] sm:$0xff]
        %v5297 = vld [vmem:[#allocation4 + $0x1c0] sm:$0xff]
        %v5298 = vld [vmem:[#allocation4 + $0x1c8] sm:$0xff]
        %v5299 = vld [vmem:[#allocation4 + $0x1d0] sm:$0xff]
        %v5300 = vld [vmem:[#allocation4 + $0x1d8] sm:$0xff]
        %v5301 = vld [vmem:[#allocation4 + $0x1e0] sm:$0xff]
        %v5302 = vld [vmem:[#allocation4 + $0x1e8] sm:$0xff]
        %v5303 = vld [vmem:[#allocation4 + $0x1f0] sm:$0xff]
        %v5304 = vld [vmem:[#allocation4 + $0x1f8] sm:$0xff]
        %v5305 = vld [vmem:[#allocation4 + $0x200] sm:$0xff]
        %v5306 = vld [vmem:[#allocation4 + $0x208] sm:$0xff]
        %v5307 = vld [vmem:[#allocation4 + $0x210] sm:$0xff]
        %v5308 = vld [vmem:[#allocation4 + $0x218] sm:$0xff]
        %v5309 = vld [vmem:[#allocation4 + $0x220] sm:$0xff]
        %v5310 = vld [vmem:[#allocation4 + $0x228] sm:$0xff]
        %v5311 = vld [vmem:[#allocation4 + $0x230] sm:$0xff]
        %v5312 = vld [vmem:[#allocation4 + $0x238] sm:$0xff]
        %v5313 = vld [vmem:[#allocation4 + $0x240] sm:$0xff]
        %v5314 = vld [vmem:[#allocation4 + $0x248] sm:$0xff]
        %v5315 = vld [vmem:[#allocation4 + $0x250] sm:$0xff]
        %v5316 = vld [vmem:[#allocation4 + $0x258] sm:$0xff]
        %v5317 = vld [vmem:[#allocation4 + $0x260] sm:$0xff]
        %v5318 = vld [vmem:[#allocation4 + $0x268] sm:$0xff]
        %v5319 = vld [vmem:[#allocation4 + $0x270] sm:$0xff]
        %v5320 = vld [vmem:[#allocation4 + $0x278] sm:$0xff]
        %v5321 = vld [vmem:[#allocation4 + $0x280] sm:$0xff]
        %v5322 = vld [vmem:[#allocation4 + $0x288] sm:$0xff]
        %v5323 = vld [vmem:[#allocation4 + $0x290] sm:$0xff]
        %v5324 = vld [vmem:[#allocation4 + $0x298] sm:$0xff]
        %v5325 = vld [vmem:[#allocation4 + $0x2a0] sm:$0xff]
        %v5326 = vld [vmem:[#allocation4 + $0x2a8] sm:$0xff]
        %v5327 = vld [vmem:[#allocation4 + $0x2b0] sm:$0xff]
        %v5328 = vld [vmem:[#allocation4 + $0x2b8] sm:$0xff]
        %v5329 = vld [vmem:[#allocation4 + $0x2c0] sm:$0xff]
        %v5330 = vld [vmem:[#allocation4 + $0x2c8] sm:$0xff]
        %v5331 = vld [vmem:[#allocation4 + $0x2d0] sm:$0xff]
        %v5332 = vld [vmem:[#allocation4 + $0x2d8] sm:$0xff]
        %v5333 = vld [vmem:[#allocation4 + $0x2e0] sm:$0xff]
        %v5334 = vld [vmem:[#allocation4 + $0x2e8] sm:$0xff]
        %v5335 = vld [vmem:[#allocation4 + $0x2f0] sm:$0xff]
        %v5336 = vld [vmem:[#allocation4 + $0x2f8] sm:$0xff]
        %v5337 = vld [vmem:[#allocation4 + $0x300] sm:$0xff]
        %v5338 = vld [vmem:[#allocation4 + $0x308] sm:$0xff]
        %v5339 = vld [vmem:[#allocation4 + $0x310] sm:$0xff]
        %v5340 = vld [vmem:[#allocation4 + $0x318] sm:$0xff]
        %v5341 = vld [vmem:[#allocation4 + $0x320] sm:$0xff]
        %v5342 = vld [vmem:[#allocation4 + $0x328] sm:$0xff]
        %v5343 = vld [vmem:[#allocation4 + $0x330] sm:$0xff]
        %v5344 = vld [vmem:[#allocation4 + $0x338] sm:$0xff]
        %v5345 = vld [vmem:[#allocation4 + $0x340] sm:$0xff]
        %v5346 = vld [vmem:[#allocation4 + $0x348] sm:$0xff]
        %v5347 = vld [vmem:[#allocation4 + $0x350] sm:$0xff]
        %v5348 = vld [vmem:[#allocation4 + $0x358] sm:$0xff]
        %v5349 = vld [vmem:[#allocation4 + $0x360] sm:$0xff]
        %v5350 = vld [vmem:[#allocation4 + $0x368] sm:$0xff]
        %v5351 = vld [vmem:[#allocation4 + $0x370] sm:$0xff]
        %v5352 = vld [vmem:[#allocation4 + $0x378] sm:$0xff]
        %v5353 = vld [vmem:[#allocation4 + $0x380] sm:$0xff]
        %v5354 = vld [vmem:[#allocation4 + $0x388] sm:$0xff]
        %v5355 = vld [vmem:[#allocation4 + $0x390] sm:$0xff]
        %v5356 = vld [vmem:[#allocation4 + $0x398] sm:$0xff]
        %v5357 = vld [vmem:[#allocation4 + $0x3a0] sm:$0xff]
        %v5358 = vld [vmem:[#allocation4 + $0x3a8] sm:$0xff]
        %v5359 = vld [vmem:[#allocation4 + $0x3b0] sm:$0xff]
        %v5360 = vld [vmem:[#allocation4 + $0x3b8] sm:$0xff]
        %v5361 = vld [vmem:[#allocation4 + $0x3c0] sm:$0xff]
        %v5362 = vld [vmem:[#allocation4 + $0x3c8] sm:$0xff]
        %v5363 = vld [vmem:[#allocation4 + $0x3d0] sm:$0xff]
        %v5364 = vld [vmem:[#allocation4 + $0x3d8] sm:$0xff]
        %v5365 = vld [vmem:[#allocation4 + $0x3e0] sm:$0xff]
        %v5366 = vld [vmem:[#allocation4 + $0x3e8] sm:$0xff]
        %v5367 = vld [vmem:[#allocation4 + $0x3f0] sm:$0xff]
        %v5368 = vld [vmem:[#allocation4 + $0x3f8] sm:$0xff]
        %v5369 = vmul.f32 %v3578, %v5241
        %v5370 = vmul.f32 %v3580, %v5242
        %v5371 = vmul.f32 %v3582, %v5243
        %v5372 = vmul.f32 %v3584, %v5244
        %v5373 = vmul.f32 %v3586, %v5245
        %v5374 = vmul.f32 %v3588, %v5246
        %v5375 = vmul.f32 %v3590, %v5247
        %v5376 = vmul.f32 %v3592, %v5248
        %v5377 = vmul.f32 %v3594, %v5249
        %v5378 = vmul.f32 %v3596, %v5250
        %v5379 = vmul.f32 %v3598, %v5251
        %v5380 = vmul.f32 %v3600, %v5252
        %v5381 = vmul.f32 %v3602, %v5253
        %v5382 = vmul.f32 %v3604, %v5254
        %v5383 = vmul.f32 %v3606, %v5255
        %v5384 = vmul.f32 %v3608, %v5256
        %v5385 = vmul.f32 %v3610, %v5257
        %v5386 = vmul.f32 %v3612, %v5258
        %v5387 = vmul.f32 %v3614, %v5259
        %v5388 = vmul.f32 %v3616, %v5260
        %v5389 = vmul.f32 %v3618, %v5261
        %v5390 = vmul.f32 %v3620, %v5262
        %v5391 = vmul.f32 %v3622, %v5263
        %v5392 = vmul.f32 %v3624, %v5264
        %v5393 = vmul.f32 %v3626, %v5265
        %v5394 = vmul.f32 %v3628, %v5266
        %v5395 = vmul.f32 %v3630, %v5267
        %v5396 = vmul.f32 %v3632, %v5268
        %v5397 = vmul.f32 %v3634, %v5269
        %v5398 = vmul.f32 %v3636, %v5270
        %v5399 = vmul.f32 %v3638, %v5271
        %v5400 = vmul.f32 %v3640, %v5272
        %v5401 = vmul.f32 %v3642, %v5273
        %v5402 = vmul.f32 %v3644, %v5274
        %v5403 = vmul.f32 %v3646, %v5275
        %v5404 = vmul.f32 %v3648, %v5276
        %v5405 = vmul.f32 %v3650, %v5277
        %v5406 = vmul.f32 %v3652, %v5278
        %v5407 = vmul.f32 %v3654, %v5279
        %v5408 = vmul.f32 %v3656, %v5280
        %v5409 = vmul.f32 %v3658, %v5281
        %v5410 = vmul.f32 %v3660, %v5282
        %v5411 = vmul.f32 %v3662, %v5283
        %v5412 = vmul.f32 %v3664, %v5284
        %v5413 = vmul.f32 %v3666, %v5285
        %v5414 = vmul.f32 %v3668, %v5286
        %v5415 = vmul.f32 %v3670, %v5287
        %v5416 = vmul.f32 %v3672, %v5288
        %v5417 = vmul.f32 %v3674, %v5289
        %v5418 = vmul.f32 %v3676, %v5290
        %v5419 = vmul.f32 %v3678, %v5291
        %v5420 = vmul.f32 %v3680, %v5292
        %v5421 = vmul.f32 %v3682, %v5293
        %v5422 = vmul.f32 %v3684, %v5294
        %v5423 = vmul.f32 %v3686, %v5295
        %v5424 = vmul.f32 %v3688, %v5296
        %v5425 = vmul.f32 %v3690, %v5297
        %v5426 = vmul.f32 %v3692, %v5298
        %v5427 = vmul.f32 %v3694, %v5299
        %v5428 = vmul.f32 %v3696, %v5300
        %v5429 = vmul.f32 %v3698, %v5301
        %v5430 = vmul.f32 %v3700, %v5302
        %v5431 = vmul.f32 %v3702, %v5303
        %v5432 = vmul.f32 %v3704, %v5304
        %v5433 = vmul.f32 %v3706, %v5305
        %v5434 = vmul.f32 %v3708, %v5306
        %v5435 = vmul.f32 %v3710, %v5307
        %v5436 = vmul.f32 %v3712, %v5308
        %v5437 = vmul.f32 %v3714, %v5309
        %v5438 = vmul.f32 %v3716, %v5310
        %v5439 = vmul.f32 %v3718, %v5311
        %v5440 = vmul.f32 %v3720, %v5312
        %v5441 = vmul.f32 %v3722, %v5313
        %v5442 = vmul.f32 %v3724, %v5314
        %v5443 = vmul.f32 %v3726, %v5315
        %v5444 = vmul.f32 %v3728, %v5316
        %v5445 = vmul.f32 %v3730, %v5317
        %v5446 = vmul.f32 %v3732, %v5318
        %v5447 = vmul.f32 %v3734, %v5319
        %v5448 = vmul.f32 %v3736, %v5320
        %v5449 = vmul.f32 %v3738, %v5321
        %v5450 = vmul.f32 %v3740, %v5322
        %v5451 = vmul.f32 %v3742, %v5323
        %v5452 = vmul.f32 %v3744, %v5324
        %v5453 = vmul.f32 %v3746, %v5325
        %v5454 = vmul.f32 %v3748, %v5326
        %v5455 = vmul.f32 %v3750, %v5327
        %v5456 = vmul.f32 %v3752, %v5328
        %v5457 = vmul.f32 %v3754, %v5329
        %v5458 = vmul.f32 %v3756, %v5330
        %v5459 = vmul.f32 %v3758, %v5331
        %v5460 = vmul.f32 %v3760, %v5332
        %v5461 = vmul.f32 %v3762, %v5333
        %v5462 = vmul.f32 %v3764, %v5334
        %v5463 = vmul.f32 %v3766, %v5335
        %v5464 = vmul.f32 %v3768, %v5336
        %v5465 = vmul.f32 %v3770, %v5337
        %v5466 = vmul.f32 %v3772, %v5338
        %v5467 = vmul.f32 %v3774, %v5339
        %v5468 = vmul.f32 %v3776, %v5340
        %v5469 = vmul.f32 %v3778, %v5341
        %v5470 = vmul.f32 %v3780, %v5342
        %v5471 = vmul.f32 %v3782, %v5343
        %v5472 = vmul.f32 %v3784, %v5344
        %v5473 = vmul.f32 %v3786, %v5345
        %v5474 = vmul.f32 %v3788, %v5346
        %v5475 = vmul.f32 %v3790, %v5347
        %v5476 = vmul.f32 %v3792, %v5348
        %v5477 = vmul.f32 %v3794, %v5349
        %v5478 = vmul.f32 %v3796, %v5350
        %v5479 = vmul.f32 %v3798, %v5351
        %v5480 = vmul.f32 %v3800, %v5352
        %v5481 = vmul.f32 %v3802, %v5353
        %v5482 = vmul.f32 %v3804, %v5354
        %v5483 = vmul.f32 %v3806, %v5355
        %v5484 = vmul.f32 %v3808, %v5356
        %v5485 = vmul.f32 %v3810, %v5357
        %v5486 = vmul.f32 %v3812, %v5358
        %v5487 = vmul.f32 %v3814, %v5359
        %v5488 = vmul.f32 %v3816, %v5360
        %v5489 = vmul.f32 %v3818, %v5361
        %v5490 = vmul.f32 %v3820, %v5362
        %v5491 = vmul.f32 %v3822, %v5363
        %v5492 = vmul.f32 %v3824, %v5364
        %v5493 = vmul.f32 %v3826, %v5365
        %v5494 = vmul.f32 %v3828, %v5366
        %v5495 = vmul.f32 %v3830, %v5367
        %v5496 = vmul.f32 %v3832, %v5368
        %v5497 = vadd.f32 %v4730, %v4732
        %5498 = vadd.xlane.f32.xlu0 %v5497
        %v5499 = vpop.xlane.xlu0 %5498
        %v5500 = vadd.f32 %v4734, %v4736
        %5501 = vadd.xlane.f32.xlu0 %v5500
        %v5502 = vpop.xlane.xlu0 %5501
        %v5503 = vadd.f32 %v4738, %v4740
        %5504 = vadd.xlane.f32.xlu0 %v5503
        %v5505 = vpop.xlane.xlu0 %5504
        %v5506 = vadd.f32 %v4742, %v4744
        %5507 = vadd.xlane.f32.xlu0 %v5506
        %v5508 = vpop.xlane.xlu0 %5507
        %v5509 = vadd.f32 %v4746, %v4748
        %5510 = vadd.xlane.f32.xlu0 %v5509
        %v5511 = vpop.xlane.xlu0 %5510
        %v5512 = vadd.f32 %v4750, %v4752
        %5513 = vadd.xlane.f32.xlu0 %v5512
        %v5514 = vpop.xlane.xlu0 %5513
        %v5515 = vadd.f32 %v4754, %v4756
        %5516 = vadd.xlane.f32.xlu0 %v5515
        %v5517 = vpop.xlane.xlu0 %5516
        %v5518 = vadd.f32 %v4758, %v4760
        %5519 = vadd.xlane.f32.xlu0 %v5518
        %v5520 = vpop.xlane.xlu0 %5519
        %v5521 = vadd.f32 %v4762, %v4764
        %5522 = vadd.xlane.f32.xlu0 %v5521
        %v5523 = vpop.xlane.xlu0 %5522
        %v5524 = vadd.f32 %v4766, %v4768
        %5525 = vadd.xlane.f32.xlu0 %v5524
        %v5526 = vpop.xlane.xlu0 %5525
        %v5527 = vadd.f32 %v4770, %v4772
        %5528 = vadd.xlane.f32.xlu0 %v5527
        %v5529 = vpop.xlane.xlu0 %5528
        %v5530 = vadd.f32 %v4774, %v4776
        %5531 = vadd.xlane.f32.xlu0 %v5530
        %v5532 = vpop.xlane.xlu0 %5531
        %v5533 = vadd.f32 %v4778, %v4780
        %5534 = vadd.xlane.f32.xlu0 %v5533
        %v5535 = vpop.xlane.xlu0 %5534
        %v5536 = vadd.f32 %v4782, %v4784
        %5537 = vadd.xlane.f32.xlu0 %v5536
        %v5538 = vpop.xlane.xlu0 %5537
        %v5539 = vadd.f32 %v4786, %v4788
        %5540 = vadd.xlane.f32.xlu0 %v5539
        %v5541 = vpop.xlane.xlu0 %5540
        %v5542 = vadd.f32 %v4790, %v4792
        %5543 = vadd.xlane.f32.xlu0 %v5542
        %v5544 = vpop.xlane.xlu0 %5543
        %v5545 = vadd.f32 %v4794, %v4796
        %5546 = vadd.xlane.f32.xlu0 %v5545
        %v5547 = vpop.xlane.xlu0 %5546
        %v5548 = vadd.f32 %v4798, %v4800
        %5549 = vadd.xlane.f32.xlu0 %v5548
        %v5550 = vpop.xlane.xlu0 %5549
        %v5551 = vadd.f32 %v4802, %v4804
        %5552 = vadd.xlane.f32.xlu0 %v5551
        %v5553 = vpop.xlane.xlu0 %5552
        %v5554 = vadd.f32 %v4806, %v4808
        %5555 = vadd.xlane.f32.xlu0 %v5554
        %v5556 = vpop.xlane.xlu0 %5555
        %v5557 = vadd.f32 %v4810, %v4812
        %5558 = vadd.xlane.f32.xlu0 %v5557
        %v5559 = vpop.xlane.xlu0 %5558
        %v5560 = vadd.f32 %v4814, %v4816
        %5561 = vadd.xlane.f32.xlu0 %v5560
        %v5562 = vpop.xlane.xlu0 %5561
        %v5563 = vadd.f32 %v4818, %v4820
        %5564 = vadd.xlane.f32.xlu0 %v5563
        %v5565 = vpop.xlane.xlu0 %5564
        %v5566 = vadd.f32 %v4822, %v4824
        %5567 = vadd.xlane.f32.xlu0 %v5566
        %v5568 = vpop.xlane.xlu0 %5567
        %v5569 = vadd.f32 %v4826, %v4828
        %5570 = vadd.xlane.f32.xlu0 %v5569
        %v5571 = vpop.xlane.xlu0 %5570
        %v5572 = vadd.f32 %v4830, %v4832
        %5573 = vadd.xlane.f32.xlu0 %v5572
        %v5574 = vpop.xlane.xlu0 %5573
        %v5575 = vadd.f32 %v4834, %v4836
        %5576 = vadd.xlane.f32.xlu0 %v5575
        %v5577 = vpop.xlane.xlu0 %5576
        %v5578 = vadd.f32 %v4838, %v4840
        %5579 = vadd.xlane.f32.xlu0 %v5578
        %v5580 = vpop.xlane.xlu0 %5579
        %v5581 = vadd.f32 %v4842, %v4844
        %5582 = vadd.xlane.f32.xlu0 %v5581
        %v5583 = vpop.xlane.xlu0 %5582
        %v5584 = vadd.f32 %v4846, %v4848
        %5585 = vadd.xlane.f32.xlu0 %v5584
        %v5586 = vpop.xlane.xlu0 %5585
        %v5587 = vadd.f32 %v4850, %v4852
        %5588 = vadd.xlane.f32.xlu0 %v5587
        %v5589 = vpop.xlane.xlu0 %5588
        %v5590 = vadd.f32 %v4854, %v4856
        %5591 = vadd.xlane.f32.xlu0 %v5590
        %v5592 = vpop.xlane.xlu0 %5591
        %v5593 = vadd.f32 %v4858, %v4860
        %5594 = vadd.xlane.f32.xlu0 %v5593
        %v5595 = vpop.xlane.xlu0 %5594
        %v5596 = vadd.f32 %v4862, %v4864
        %5597 = vadd.xlane.f32.xlu0 %v5596
        %v5598 = vpop.xlane.xlu0 %5597
        %v5599 = vadd.f32 %v4866, %v4868
        %5600 = vadd.xlane.f32.xlu0 %v5599
        %v5601 = vpop.xlane.xlu0 %5600
        %v5602 = vadd.f32 %v4870, %v4872
        %5603 = vadd.xlane.f32.xlu0 %v5602
        %v5604 = vpop.xlane.xlu0 %5603
        %v5605 = vadd.f32 %v4874, %v4876
        %5606 = vadd.xlane.f32.xlu0 %v5605
        %v5607 = vpop.xlane.xlu0 %5606
        %v5608 = vadd.f32 %v4878, %v4880
        %5609 = vadd.xlane.f32.xlu0 %v5608
        %v5610 = vpop.xlane.xlu0 %5609
        %v5611 = vadd.f32 %v4882, %v4884
        %5612 = vadd.xlane.f32.xlu0 %v5611
        %v5613 = vpop.xlane.xlu0 %5612
        %v5614 = vadd.f32 %v4886, %v4888
        %5615 = vadd.xlane.f32.xlu0 %v5614
        %v5616 = vpop.xlane.xlu0 %5615
        %v5617 = vadd.f32 %v4890, %v4892
        %5618 = vadd.xlane.f32.xlu0 %v5617
        %v5619 = vpop.xlane.xlu0 %5618
        %v5620 = vadd.f32 %v4894, %v4896
        %5621 = vadd.xlane.f32.xlu0 %v5620
        %v5622 = vpop.xlane.xlu0 %5621
        %v5623 = vadd.f32 %v4898, %v4900
        %5624 = vadd.xlane.f32.xlu0 %v5623
        %v5625 = vpop.xlane.xlu0 %5624
        %v5626 = vadd.f32 %v4902, %v4904
        %5627 = vadd.xlane.f32.xlu0 %v5626
        %v5628 = vpop.xlane.xlu0 %5627
        %v5629 = vadd.f32 %v4906, %v4908
        %5630 = vadd.xlane.f32.xlu0 %v5629
        %v5631 = vpop.xlane.xlu0 %5630
        %v5632 = vadd.f32 %v4910, %v4912
        %5633 = vadd.xlane.f32.xlu0 %v5632
        %v5634 = vpop.xlane.xlu0 %5633
        %v5635 = vadd.f32 %v4914, %v4916
        %5636 = vadd.xlane.f32.xlu0 %v5635
        %v5637 = vpop.xlane.xlu0 %5636
        %v5638 = vadd.f32 %v4918, %v4920
        %5639 = vadd.xlane.f32.xlu0 %v5638
        %v5640 = vpop.xlane.xlu0 %5639
        %v5641 = vadd.f32 %v4922, %v4924
        %5642 = vadd.xlane.f32.xlu0 %v5641
        %v5643 = vpop.xlane.xlu0 %5642
        %v5644 = vadd.f32 %v4926, %v4928
        %5645 = vadd.xlane.f32.xlu0 %v5644
        %v5646 = vpop.xlane.xlu0 %5645
        %v5647 = vadd.f32 %v4930, %v4932
        %5648 = vadd.xlane.f32.xlu0 %v5647
        %v5649 = vpop.xlane.xlu0 %5648
        %v5650 = vadd.f32 %v4934, %v4936
        %5651 = vadd.xlane.f32.xlu0 %v5650
        %v5652 = vpop.xlane.xlu0 %5651
        %v5653 = vadd.f32 %v4938, %v4940
        %5654 = vadd.xlane.f32.xlu0 %v5653
        %v5655 = vpop.xlane.xlu0 %5654
        %v5656 = vadd.f32 %v4942, %v4944
        %5657 = vadd.xlane.f32.xlu0 %v5656
        %v5658 = vpop.xlane.xlu0 %5657
        %v5659 = vadd.f32 %v4946, %v4948
        %5660 = vadd.xlane.f32.xlu0 %v5659
        %v5661 = vpop.xlane.xlu0 %5660
        %v5662 = vadd.f32 %v4950, %v4952
        %5663 = vadd.xlane.f32.xlu0 %v5662
        %v5664 = vpop.xlane.xlu0 %5663
        %v5665 = vadd.f32 %v4954, %v4956
        %5666 = vadd.xlane.f32.xlu0 %v5665
        %v5667 = vpop.xlane.xlu0 %5666
        %v5668 = vadd.f32 %v4958, %v4960
        %5669 = vadd.xlane.f32.xlu0 %v5668
        %v5670 = vpop.xlane.xlu0 %5669
        %v5671 = vadd.f32 %v4962, %v4964
        %5672 = vadd.xlane.f32.xlu0 %v5671
        %v5673 = vpop.xlane.xlu0 %5672
        %v5674 = vadd.f32 %v4966, %v4968
        %5675 = vadd.xlane.f32.xlu0 %v5674
        %v5676 = vpop.xlane.xlu0 %5675
        %v5677 = vadd.f32 %v4970, %v4972
        %5678 = vadd.xlane.f32.xlu0 %v5677
        %v5679 = vpop.xlane.xlu0 %5678
        %v5680 = vadd.f32 %v4974, %v4976
        %5681 = vadd.xlane.f32.xlu0 %v5680
        %v5682 = vpop.xlane.xlu0 %5681
        %v5683 = vadd.f32 %v4978, %v4980
        %5684 = vadd.xlane.f32.xlu0 %v5683
        %v5685 = vpop.xlane.xlu0 %5684
        %v5686 = vadd.f32 %v4982, %v4984
        %5687 = vadd.xlane.f32.xlu0 %v5686
        %v5688 = vpop.xlane.xlu0 %5687
        %v5689 = vadd.f32 %v4986, %v4988
        %5690 = vadd.xlane.f32.xlu0 %v5689
        %v5691 = vpop.xlane.xlu0 %5690
        %v5692 = vadd.f32 %v4990, %v4992
        %5693 = vadd.xlane.f32.xlu0 %v5692
        %v5694 = vpop.xlane.xlu0 %5693
        %v5695 = vadd.f32 %v4994, %v4996
        %5696 = vadd.xlane.f32.xlu0 %v5695
        %v5697 = vpop.xlane.xlu0 %5696
        %v5698 = vadd.f32 %v4998, %v5000
        %5699 = vadd.xlane.f32.xlu0 %v5698
        %v5700 = vpop.xlane.xlu0 %5699
        %v5701 = vadd.f32 %v5002, %v5004
        %5702 = vadd.xlane.f32.xlu0 %v5701
        %v5703 = vpop.xlane.xlu0 %5702
        %v5704 = vadd.f32 %v5006, %v5008
        %5705 = vadd.xlane.f32.xlu0 %v5704
        %v5706 = vpop.xlane.xlu0 %5705
        %v5707 = vadd.f32 %v5010, %v5012
        %5708 = vadd.xlane.f32.xlu0 %v5707
        %v5709 = vpop.xlane.xlu0 %5708
        %v5710 = vadd.f32 %v5014, %v5016
        %5711 = vadd.xlane.f32.xlu0 %v5710
        %v5712 = vpop.xlane.xlu0 %5711
        %v5713 = vadd.f32 %v5018, %v5020
        %5714 = vadd.xlane.f32.xlu0 %v5713
        %v5715 = vpop.xlane.xlu0 %5714
        %v5716 = vadd.f32 %v5022, %v5024
        %5717 = vadd.xlane.f32.xlu0 %v5716
        %v5718 = vpop.xlane.xlu0 %5717
        %v5719 = vadd.f32 %v5026, %v5028
        %5720 = vadd.xlane.f32.xlu0 %v5719
        %v5721 = vpop.xlane.xlu0 %5720
        %v5722 = vadd.f32 %v5030, %v5032
        %5723 = vadd.xlane.f32.xlu0 %v5722
        %v5724 = vpop.xlane.xlu0 %5723
        %v5725 = vadd.f32 %v5034, %v5036
        %5726 = vadd.xlane.f32.xlu0 %v5725
        %v5727 = vpop.xlane.xlu0 %5726
        %v5728 = vadd.f32 %v5038, %v5040
        %5729 = vadd.xlane.f32.xlu0 %v5728
        %v5730 = vpop.xlane.xlu0 %5729
        %v5731 = vadd.f32 %v5042, %v5044
        %5732 = vadd.xlane.f32.xlu0 %v5731
        %v5733 = vpop.xlane.xlu0 %5732
        %v5734 = vadd.f32 %v5046, %v5048
        %5735 = vadd.xlane.f32.xlu0 %v5734
        %v5736 = vpop.xlane.xlu0 %5735
        %v5737 = vadd.f32 %v5050, %v5052
        %5738 = vadd.xlane.f32.xlu0 %v5737
        %v5739 = vpop.xlane.xlu0 %5738
        %v5740 = vadd.f32 %v5054, %v5056
        %5741 = vadd.xlane.f32.xlu0 %v5740
        %v5742 = vpop.xlane.xlu0 %5741
        %v5743 = vadd.f32 %v5058, %v5060
        %5744 = vadd.xlane.f32.xlu0 %v5743
        %v5745 = vpop.xlane.xlu0 %5744
        %v5746 = vadd.f32 %v5062, %v5064
        %5747 = vadd.xlane.f32.xlu0 %v5746
        %v5748 = vpop.xlane.xlu0 %5747
        %v5749 = vadd.f32 %v5066, %v5068
        %5750 = vadd.xlane.f32.xlu0 %v5749
        %v5751 = vpop.xlane.xlu0 %5750
        %v5752 = vadd.f32 %v5070, %v5072
        %5753 = vadd.xlane.f32.xlu0 %v5752
        %v5754 = vpop.xlane.xlu0 %5753
        %v5755 = vadd.f32 %v5074, %v5076
        %5756 = vadd.xlane.f32.xlu0 %v5755
        %v5757 = vpop.xlane.xlu0 %5756
        %v5758 = vadd.f32 %v5078, %v5080
        %5759 = vadd.xlane.f32.xlu0 %v5758
        %v5760 = vpop.xlane.xlu0 %5759
        %v5761 = vadd.f32 %v5082, %v5084
        %5762 = vadd.xlane.f32.xlu0 %v5761
        %v5763 = vpop.xlane.xlu0 %5762
        %v5764 = vadd.f32 %v5086, %v5088
        %5765 = vadd.xlane.f32.xlu0 %v5764
        %v5766 = vpop.xlane.xlu0 %5765
        %v5767 = vadd.f32 %v5090, %v5092
        %5768 = vadd.xlane.f32.xlu0 %v5767
        %v5769 = vpop.xlane.xlu0 %5768
        %v5770 = vadd.f32 %v5094, %v5096
        %5771 = vadd.xlane.f32.xlu0 %v5770
        %v5772 = vpop.xlane.xlu0 %5771
        %v5773 = vadd.f32 %v5098, %v5100
        %5774 = vadd.xlane.f32.xlu0 %v5773
        %v5775 = vpop.xlane.xlu0 %5774
        %v5776 = vadd.f32 %v5102, %v5104
        %5777 = vadd.xlane.f32.xlu0 %v5776
        %v5778 = vpop.xlane.xlu0 %5777
        %v5779 = vadd.f32 %v5106, %v5108
        %5780 = vadd.xlane.f32.xlu0 %v5779
        %v5781 = vpop.xlane.xlu0 %5780
        %v5782 = vadd.f32 %v5110, %v5112
        %5783 = vadd.xlane.f32.xlu0 %v5782
        %v5784 = vpop.xlane.xlu0 %5783
        %v5785 = vadd.f32 %v5114, %v5116
        %5786 = vadd.xlane.f32.xlu0 %v5785
        %v5787 = vpop.xlane.xlu0 %5786
        %v5788 = vadd.f32 %v5118, %v5120
        %5789 = vadd.xlane.f32.xlu0 %v5788
        %v5790 = vpop.xlane.xlu0 %5789
        %v5791 = vadd.f32 %v5122, %v5124
        %5792 = vadd.xlane.f32.xlu0 %v5791
        %v5793 = vpop.xlane.xlu0 %5792
        %v5794 = vadd.f32 %v5126, %v5128
        %5795 = vadd.xlane.f32.xlu0 %v5794
        %v5796 = vpop.xlane.xlu0 %5795
        %v5797 = vadd.f32 %v5130, %v5132
        %5798 = vadd.xlane.f32.xlu0 %v5797
        %v5799 = vpop.xlane.xlu0 %5798
        %v5800 = vadd.f32 %v5134, %v5136
        %5801 = vadd.xlane.f32.xlu0 %v5800
        %v5802 = vpop.xlane.xlu0 %5801
        %v5803 = vadd.f32 %v5138, %v5140
        %5804 = vadd.xlane.f32.xlu0 %v5803
        %v5805 = vpop.xlane.xlu0 %5804
        %v5806 = vadd.f32 %v5142, %v5144
        %5807 = vadd.xlane.f32.xlu0 %v5806
        %v5808 = vpop.xlane.xlu0 %5807
        %v5809 = vadd.f32 %v5146, %v5148
        %5810 = vadd.xlane.f32.xlu0 %v5809
        %v5811 = vpop.xlane.xlu0 %5810
        %v5812 = vadd.f32 %v5150, %v5152
        %5813 = vadd.xlane.f32.xlu0 %v5812
        %v5814 = vpop.xlane.xlu0 %5813
        %v5815 = vadd.f32 %v5154, %v5156
        %5816 = vadd.xlane.f32.xlu0 %v5815
        %v5817 = vpop.xlane.xlu0 %5816
        %v5818 = vadd.f32 %v5158, %v5160
        %5819 = vadd.xlane.f32.xlu0 %v5818
        %v5820 = vpop.xlane.xlu0 %5819
        %v5821 = vadd.f32 %v5162, %v5164
        %5822 = vadd.xlane.f32.xlu0 %v5821
        %v5823 = vpop.xlane.xlu0 %5822
        %v5824 = vadd.f32 %v5166, %v5168
        %5825 = vadd.xlane.f32.xlu0 %v5824
        %v5826 = vpop.xlane.xlu0 %5825
        %v5827 = vadd.f32 %v5170, %v5172
        %5828 = vadd.xlane.f32.xlu0 %v5827
        %v5829 = vpop.xlane.xlu0 %5828
        %v5830 = vadd.f32 %v5174, %v5176
        %5831 = vadd.xlane.f32.xlu0 %v5830
        %v5832 = vpop.xlane.xlu0 %5831
        %v5833 = vadd.f32 %v5178, %v5180
        %5834 = vadd.xlane.f32.xlu0 %v5833
        %v5835 = vpop.xlane.xlu0 %5834
        %v5836 = vadd.f32 %v5182, %v5184
        %5837 = vadd.xlane.f32.xlu0 %v5836
        %v5838 = vpop.xlane.xlu0 %5837
        %v5839 = vadd.f32 %v5186, %v5188
        %5840 = vadd.xlane.f32.xlu0 %v5839
        %v5841 = vpop.xlane.xlu0 %5840
        %v5842 = vadd.f32 %v5190, %v5192
        %5843 = vadd.xlane.f32.xlu0 %v5842
        %v5844 = vpop.xlane.xlu0 %5843
        %v5845 = vadd.f32 %v5194, %v5196
        %5846 = vadd.xlane.f32.xlu0 %v5845
        %v5847 = vpop.xlane.xlu0 %5846
        %v5848 = vadd.f32 %v5198, %v5200
        %5849 = vadd.xlane.f32.xlu0 %v5848
        %v5850 = vpop.xlane.xlu0 %5849
        %v5851 = vadd.f32 %v5202, %v5204
        %5852 = vadd.xlane.f32.xlu0 %v5851
        %v5853 = vpop.xlane.xlu0 %5852
        %v5854 = vadd.f32 %v5206, %v5208
        %5855 = vadd.xlane.f32.xlu0 %v5854
        %v5856 = vpop.xlane.xlu0 %5855
        %v5857 = vadd.f32 %v5210, %v5212
        %5858 = vadd.xlane.f32.xlu0 %v5857
        %v5859 = vpop.xlane.xlu0 %5858
        %v5860 = vadd.f32 %v5214, %v5216
        %5861 = vadd.xlane.f32.xlu0 %v5860
        %v5862 = vpop.xlane.xlu0 %5861
        %v5863 = vadd.f32 %v5218, %v5220
        %5864 = vadd.xlane.f32.xlu0 %v5863
        %v5865 = vpop.xlane.xlu0 %5864
        %v5866 = vadd.f32 %v5222, %v5224
        %5867 = vadd.xlane.f32.xlu0 %v5866
        %v5868 = vpop.xlane.xlu0 %5867
        %v5869 = vadd.f32 %v5226, %v5228
        %5870 = vadd.xlane.f32.xlu0 %v5869
        %v5871 = vpop.xlane.xlu0 %5870
        %v5872 = vadd.f32 %v5230, %v5232
        %5873 = vadd.xlane.f32.xlu0 %v5872
        %v5874 = vpop.xlane.xlu0 %5873
        %v5875 = vadd.f32 %v5234, %v5236
        %5876 = vadd.xlane.f32.xlu0 %v5875
        %v5877 = vpop.xlane.xlu0 %5876
        %v5878 = vadd.f32 %v5238, %v5240
        %5879 = vadd.xlane.f32.xlu0 %v5878
        %v5880 = vpop.xlane.xlu0 %5879
        %v5881 = vadd.f32 %v5369, %v5499
        %v5882 = vadd.f32 %v5370, %v5502
        %v5883 = vadd.f32 %v5371, %v5505
        %v5884 = vadd.f32 %v5372, %v5508
        %v5885 = vadd.f32 %v5373, %v5511
        %v5886 = vadd.f32 %v5374, %v5514
        %v5887 = vadd.f32 %v5375, %v5517
        %v5888 = vadd.f32 %v5376, %v5520
        %v5889 = vadd.f32 %v5377, %v5523
        %v5890 = vadd.f32 %v5378, %v5526
        %v5891 = vadd.f32 %v5379, %v5529
        %v5892 = vadd.f32 %v5380, %v5532
        %v5893 = vadd.f32 %v5381, %v5535
        %v5894 = vadd.f32 %v5382, %v5538
        %v5895 = vadd.f32 %v5383, %v5541
        %v5896 = vadd.f32 %v5384, %v5544
        %v5897 = vadd.f32 %v5385, %v5547
        %v5898 = vadd.f32 %v5386, %v5550
        %v5899 = vadd.f32 %v5387, %v5553
        %v5900 = vadd.f32 %v5388, %v5556
        %v5901 = vadd.f32 %v5389, %v5559
        %v5902 = vadd.f32 %v5390, %v5562
        %v5903 = vadd.f32 %v5391, %v5565
        %v5904 = vadd.f32 %v5392, %v5568
        %v5905 = vadd.f32 %v5393, %v5571
        %v5906 = vadd.f32 %v5394, %v5574
        %v5907 = vadd.f32 %v5395, %v5577
        %v5908 = vadd.f32 %v5396, %v5580
        %v5909 = vadd.f32 %v5397, %v5583
        %v5910 = vadd.f32 %v5398, %v5586
        %v5911 = vadd.f32 %v5399, %v5589
        %v5912 = vadd.f32 %v5400, %v5592
        %v5913 = vadd.f32 %v5401, %v5595
        %v5914 = vadd.f32 %v5402, %v5598
        %v5915 = vadd.f32 %v5403, %v5601
        %v5916 = vadd.f32 %v5404, %v5604
        %v5917 = vadd.f32 %v5405, %v5607
        %v5918 = vadd.f32 %v5406, %v5610
        %v5919 = vadd.f32 %v5407, %v5613
        %v5920 = vadd.f32 %v5408, %v5616
        %v5921 = vadd.f32 %v5409, %v5619
        %v5922 = vadd.f32 %v5410, %v5622
        %v5923 = vadd.f32 %v5411, %v5625
        %v5924 = vadd.f32 %v5412, %v5628
        %v5925 = vadd.f32 %v5413, %v5631
        %v5926 = vadd.f32 %v5414, %v5634
        %v5927 = vadd.f32 %v5415, %v5637
        %v5928 = vadd.f32 %v5416, %v5640
        %v5929 = vadd.f32 %v5417, %v5643
        %v5930 = vadd.f32 %v5418, %v5646
        %v5931 = vadd.f32 %v5419, %v5649
        %v5932 = vadd.f32 %v5420, %v5652
        %v5933 = vadd.f32 %v5421, %v5655
        %v5934 = vadd.f32 %v5422, %v5658
        %v5935 = vadd.f32 %v5423, %v5661
        %v5936 = vadd.f32 %v5424, %v5664
        %v5937 = vadd.f32 %v5425, %v5667
        %v5938 = vadd.f32 %v5426, %v5670
        %v5939 = vadd.f32 %v5427, %v5673
        %v5940 = vadd.f32 %v5428, %v5676
        %v5941 = vadd.f32 %v5429, %v5679
        %v5942 = vadd.f32 %v5430, %v5682
        %v5943 = vadd.f32 %v5431, %v5685
        %v5944 = vadd.f32 %v5432, %v5688
        %v5945 = vadd.f32 %v5433, %v5691
        %v5946 = vadd.f32 %v5434, %v5694
        %v5947 = vadd.f32 %v5435, %v5697
        %v5948 = vadd.f32 %v5436, %v5700
        %v5949 = vadd.f32 %v5437, %v5703
        %v5950 = vadd.f32 %v5438, %v5706
        %v5951 = vadd.f32 %v5439, %v5709
        %v5952 = vadd.f32 %v5440, %v5712
        %v5953 = vadd.f32 %v5441, %v5715
        %v5954 = vadd.f32 %v5442, %v5718
        %v5955 = vadd.f32 %v5443, %v5721
        %v5956 = vadd.f32 %v5444, %v5724
        %v5957 = vadd.f32 %v5445, %v5727
        %v5958 = vadd.f32 %v5446, %v5730
        %v5959 = vadd.f32 %v5447, %v5733
        %v5960 = vadd.f32 %v5448, %v5736
        %v5961 = vadd.f32 %v5449, %v5739
        %v5962 = vadd.f32 %v5450, %v5742
        %v5963 = vadd.f32 %v5451, %v5745
        %v5964 = vadd.f32 %v5452, %v5748
        %v5965 = vadd.f32 %v5453, %v5751
        %v5966 = vadd.f32 %v5454, %v5754
        %v5967 = vadd.f32 %v5455, %v5757
        %v5968 = vadd.f32 %v5456, %v5760
        %v5969 = vadd.f32 %v5457, %v5763
        %v5970 = vadd.f32 %v5458, %v5766
        %v5971 = vadd.f32 %v5459, %v5769
        %v5972 = vadd.f32 %v5460, %v5772
        %v5973 = vadd.f32 %v5461, %v5775
        %v5974 = vadd.f32 %v5462, %v5778
        %v5975 = vadd.f32 %v5463, %v5781
        %v5976 = vadd.f32 %v5464, %v5784
        %v5977 = vadd.f32 %v5465, %v5787
        %v5978 = vadd.f32 %v5466, %v5790
        %v5979 = vadd.f32 %v5467, %v5793
        %v5980 = vadd.f32 %v5468, %v5796
        %v5981 = vadd.f32 %v5469, %v5799
        %v5982 = vadd.f32 %v5470, %v5802
        %v5983 = vadd.f32 %v5471, %v5805
        %v5984 = vadd.f32 %v5472, %v5808
        %v5985 = vadd.f32 %v5473, %v5811
        %v5986 = vadd.f32 %v5474, %v5814
        %v5987 = vadd.f32 %v5475, %v5817
        %v5988 = vadd.f32 %v5476, %v5820
        %v5989 = vadd.f32 %v5477, %v5823
        %v5990 = vadd.f32 %v5478, %v5826
        %v5991 = vadd.f32 %v5479, %v5829
        %v5992 = vadd.f32 %v5480, %v5832
        %v5993 = vadd.f32 %v5481, %v5835
        %v5994 = vadd.f32 %v5482, %v5838
        %v5995 = vadd.f32 %v5483, %v5841
        %v5996 = vadd.f32 %v5484, %v5844
        %v5997 = vadd.f32 %v5485, %v5847
        %v5998 = vadd.f32 %v5486, %v5850
        %v5999 = vadd.f32 %v5487, %v5853
        %v6000 = vadd.f32 %v5488, %v5856
        %v6001 = vadd.f32 %v5489, %v5859
        %v6002 = vadd.f32 %v5490, %v5862
        %v6003 = vadd.f32 %v5491, %v5865
        %v6004 = vadd.f32 %v5492, %v5868
        %v6005 = vadd.f32 %v5493, %v5871
        %v6006 = vadd.f32 %v5494, %v5874
        %v6007 = vadd.f32 %v5495, %v5877
        %v6008 = vadd.f32 %v5496, %v5880
        %vm6009 = vcmask 7168
        %6010 = vst.msk [vmem:[#allocation4] sm:$0xff] %vm6009, %v5881
        %6011 = vst.msk [vmem:[#allocation4 + $0x8] sm:$0xff] %vm6009, %v5882
        %6012 = vst.msk [vmem:[#allocation4 + $0x10] sm:$0xff] %vm6009, %v5883
        %6013 = vst.msk [vmem:[#allocation4 + $0x18] sm:$0xff] %vm6009, %v5884
        %6014 = vst.msk [vmem:[#allocation4 + $0x20] sm:$0xff] %vm6009, %v5885
        %6015 = vst.msk [vmem:[#allocation4 + $0x28] sm:$0xff] %vm6009, %v5886
        %6016 = vst.msk [vmem:[#allocation4 + $0x30] sm:$0xff] %vm6009, %v5887
        %6017 = vst.msk [vmem:[#allocation4 + $0x38] sm:$0xff] %vm6009, %v5888
        %6018 = vst.msk [vmem:[#allocation4 + $0x40] sm:$0xff] %vm6009, %v5889
        %6019 = vst.msk [vmem:[#allocation4 + $0x48] sm:$0xff] %vm6009, %v5890
        %6020 = vst.msk [vmem:[#allocation4 + $0x50] sm:$0xff] %vm6009, %v5891
        %6021 = vst.msk [vmem:[#allocation4 + $0x58] sm:$0xff] %vm6009, %v5892
        %6022 = vst.msk [vmem:[#allocation4 + $0x60] sm:$0xff] %vm6009, %v5893
        %6023 = vst.msk [vmem:[#allocation4 + $0x68] sm:$0xff] %vm6009, %v5894
        %6024 = vst.msk [vmem:[#allocation4 + $0x70] sm:$0xff] %vm6009, %v5895
        %6025 = vst.msk [vmem:[#allocation4 + $0x78] sm:$0xff] %vm6009, %v5896
        %6026 = vst.msk [vmem:[#allocation4 + $0x80] sm:$0xff] %vm6009, %v5897
        %6027 = vst.msk [vmem:[#allocation4 + $0x88] sm:$0xff] %vm6009, %v5898
        %6028 = vst.msk [vmem:[#allocation4 + $0x90] sm:$0xff] %vm6009, %v5899
        %6029 = vst.msk [vmem:[#allocation4 + $0x98] sm:$0xff] %vm6009, %v5900
        %6030 = vst.msk [vmem:[#allocation4 + $0xa0] sm:$0xff] %vm6009, %v5901
        %6031 = vst.msk [vmem:[#allocation4 + $0xa8] sm:$0xff] %vm6009, %v5902
        %6032 = vst.msk [vmem:[#allocation4 + $0xb0] sm:$0xff] %vm6009, %v5903
        %6033 = vst.msk [vmem:[#allocation4 + $0xb8] sm:$0xff] %vm6009, %v5904
        %6034 = vst.msk [vmem:[#allocation4 + $0xc0] sm:$0xff] %vm6009, %v5905
        %6035 = vst.msk [vmem:[#allocation4 + $0xc8] sm:$0xff] %vm6009, %v5906
        %6036 = vst.msk [vmem:[#allocation4 + $0xd0] sm:$0xff] %vm6009, %v5907
        %6037 = vst.msk [vmem:[#allocation4 + $0xd8] sm:$0xff] %vm6009, %v5908
        %6038 = vst.msk [vmem:[#allocation4 + $0xe0] sm:$0xff] %vm6009, %v5909
        %6039 = vst.msk [vmem:[#allocation4 + $0xe8] sm:$0xff] %vm6009, %v5910
        %6040 = vst.msk [vmem:[#allocation4 + $0xf0] sm:$0xff] %vm6009, %v5911
        %6041 = vst.msk [vmem:[#allocation4 + $0xf8] sm:$0xff] %vm6009, %v5912
        %6042 = vst.msk [vmem:[#allocation4 + $0x100] sm:$0xff] %vm6009, %v5913
        %6043 = vst.msk [vmem:[#allocation4 + $0x108] sm:$0xff] %vm6009, %v5914
        %6044 = vst.msk [vmem:[#allocation4 + $0x110] sm:$0xff] %vm6009, %v5915
        %6045 = vst.msk [vmem:[#allocation4 + $0x118] sm:$0xff] %vm6009, %v5916
        %6046 = vst.msk [vmem:[#allocation4 + $0x120] sm:$0xff] %vm6009, %v5917
        %6047 = vst.msk [vmem:[#allocation4 + $0x128] sm:$0xff] %vm6009, %v5918
        %6048 = vst.msk [vmem:[#allocation4 + $0x130] sm:$0xff] %vm6009, %v5919
        %6049 = vst.msk [vmem:[#allocation4 + $0x138] sm:$0xff] %vm6009, %v5920
        %6050 = vst.msk [vmem:[#allocation4 + $0x140] sm:$0xff] %vm6009, %v5921
        %6051 = vst.msk [vmem:[#allocation4 + $0x148] sm:$0xff] %vm6009, %v5922
        %6052 = vst.msk [vmem:[#allocation4 + $0x150] sm:$0xff] %vm6009, %v5923
        %6053 = vst.msk [vmem:[#allocation4 + $0x158] sm:$0xff] %vm6009, %v5924
        %6054 = vst.msk [vmem:[#allocation4 + $0x160] sm:$0xff] %vm6009, %v5925
        %6055 = vst.msk [vmem:[#allocation4 + $0x168] sm:$0xff] %vm6009, %v5926
        %6056 = vst.msk [vmem:[#allocation4 + $0x170] sm:$0xff] %vm6009, %v5927
        %6057 = vst.msk [vmem:[#allocation4 + $0x178] sm:$0xff] %vm6009, %v5928
        %6058 = vst.msk [vmem:[#allocation4 + $0x180] sm:$0xff] %vm6009, %v5929
        %6059 = vst.msk [vmem:[#allocation4 + $0x188] sm:$0xff] %vm6009, %v5930
        %6060 = vst.msk [vmem:[#allocation4 + $0x190] sm:$0xff] %vm6009, %v5931
        %6061 = vst.msk [vmem:[#allocation4 + $0x198] sm:$0xff] %vm6009, %v5932
        %6062 = vst.msk [vmem:[#allocation4 + $0x1a0] sm:$0xff] %vm6009, %v5933
        %6063 = vst.msk [vmem:[#allocation4 + $0x1a8] sm:$0xff] %vm6009, %v5934
        %6064 = vst.msk [vmem:[#allocation4 + $0x1b0] sm:$0xff] %vm6009, %v5935
        %6065 = vst.msk [vmem:[#allocation4 + $0x1b8] sm:$0xff] %vm6009, %v5936
        %6066 = vst.msk [vmem:[#allocation4 + $0x1c0] sm:$0xff] %vm6009, %v5937
        %6067 = vst.msk [vmem:[#allocation4 + $0x1c8] sm:$0xff] %vm6009, %v5938
        %6068 = vst.msk [vmem:[#allocation4 + $0x1d0] sm:$0xff] %vm6009, %v5939
        %6069 = vst.msk [vmem:[#allocation4 + $0x1d8] sm:$0xff] %vm6009, %v5940
        %6070 = vst.msk [vmem:[#allocation4 + $0x1e0] sm:$0xff] %vm6009, %v5941
        %6071 = vst.msk [vmem:[#allocation4 + $0x1e8] sm:$0xff] %vm6009, %v5942
        %6072 = vst.msk [vmem:[#allocation4 + $0x1f0] sm:$0xff] %vm6009, %v5943
        %6073 = vst.msk [vmem:[#allocation4 + $0x1f8] sm:$0xff] %vm6009, %v5944
        %6074 = vst.msk [vmem:[#allocation4 + $0x200] sm:$0xff] %vm6009, %v5945
        %6075 = vst.msk [vmem:[#allocation4 + $0x208] sm:$0xff] %vm6009, %v5946
        %6076 = vst.msk [vmem:[#allocation4 + $0x210] sm:$0xff] %vm6009, %v5947
        %6077 = vst.msk [vmem:[#allocation4 + $0x218] sm:$0xff] %vm6009, %v5948
        %6078 = vst.msk [vmem:[#allocation4 + $0x220] sm:$0xff] %vm6009, %v5949
        %6079 = vst.msk [vmem:[#allocation4 + $0x228] sm:$0xff] %vm6009, %v5950
        %6080 = vst.msk [vmem:[#allocation4 + $0x230] sm:$0xff] %vm6009, %v5951
        %6081 = vst.msk [vmem:[#allocation4 + $0x238] sm:$0xff] %vm6009, %v5952
        %6082 = vst.msk [vmem:[#allocation4 + $0x240] sm:$0xff] %vm6009, %v5953
        %6083 = vst.msk [vmem:[#allocation4 + $0x248] sm:$0xff] %vm6009, %v5954
        %6084 = vst.msk [vmem:[#allocation4 + $0x250] sm:$0xff] %vm6009, %v5955
        %6085 = vst.msk [vmem:[#allocation4 + $0x258] sm:$0xff] %vm6009, %v5956
        %6086 = vst.msk [vmem:[#allocation4 + $0x260] sm:$0xff] %vm6009, %v5957
        %6087 = vst.msk [vmem:[#allocation4 + $0x268] sm:$0xff] %vm6009, %v5958
        %6088 = vst.msk [vmem:[#allocation4 + $0x270] sm:$0xff] %vm6009, %v5959
        %6089 = vst.msk [vmem:[#allocation4 + $0x278] sm:$0xff] %vm6009, %v5960
        %6090 = vst.msk [vmem:[#allocation4 + $0x280] sm:$0xff] %vm6009, %v5961
        %6091 = vst.msk [vmem:[#allocation4 + $0x288] sm:$0xff] %vm6009, %v5962
        %6092 = vst.msk [vmem:[#allocation4 + $0x290] sm:$0xff] %vm6009, %v5963
        %6093 = vst.msk [vmem:[#allocation4 + $0x298] sm:$0xff] %vm6009, %v5964
        %6094 = vst.msk [vmem:[#allocation4 + $0x2a0] sm:$0xff] %vm6009, %v5965
        %6095 = vst.msk [vmem:[#allocation4 + $0x2a8] sm:$0xff] %vm6009, %v5966
        %6096 = vst.msk [vmem:[#allocation4 + $0x2b0] sm:$0xff] %vm6009, %v5967
        %6097 = vst.msk [vmem:[#allocation4 + $0x2b8] sm:$0xff] %vm6009, %v5968
        %6098 = vst.msk [vmem:[#allocation4 + $0x2c0] sm:$0xff] %vm6009, %v5969
        %6099 = vst.msk [vmem:[#allocation4 + $0x2c8] sm:$0xff] %vm6009, %v5970
        %6100 = vst.msk [vmem:[#allocation4 + $0x2d0] sm:$0xff] %vm6009, %v5971
        %6101 = vst.msk [vmem:[#allocation4 + $0x2d8] sm:$0xff] %vm6009, %v5972
        %6102 = vst.msk [vmem:[#allocation4 + $0x2e0] sm:$0xff] %vm6009, %v5973
        %6103 = vst.msk [vmem:[#allocation4 + $0x2e8] sm:$0xff] %vm6009, %v5974
        %6104 = vst.msk [vmem:[#allocation4 + $0x2f0] sm:$0xff] %vm6009, %v5975
        %6105 = vst.msk [vmem:[#allocation4 + $0x2f8] sm:$0xff] %vm6009, %v5976
        %6106 = vst.msk [vmem:[#allocation4 + $0x300] sm:$0xff] %vm6009, %v5977
        %6107 = vst.msk [vmem:[#allocation4 + $0x308] sm:$0xff] %vm6009, %v5978
        %6108 = vst.msk [vmem:[#allocation4 + $0x310] sm:$0xff] %vm6009, %v5979
        %6109 = vst.msk [vmem:[#allocation4 + $0x318] sm:$0xff] %vm6009, %v5980
        %6110 = vst.msk [vmem:[#allocation4 + $0x320] sm:$0xff] %vm6009, %v5981
        %6111 = vst.msk [vmem:[#allocation4 + $0x328] sm:$0xff] %vm6009, %v5982
        %6112 = vst.msk [vmem:[#allocation4 + $0x330] sm:$0xff] %vm6009, %v5983
        %6113 = vst.msk [vmem:[#allocation4 + $0x338] sm:$0xff] %vm6009, %v5984
        %6114 = vst.msk [vmem:[#allocation4 + $0x340] sm:$0xff] %vm6009, %v5985
        %6115 = vst.msk [vmem:[#allocation4 + $0x348] sm:$0xff] %vm6009, %v5986
        %6116 = vst.msk [vmem:[#allocation4 + $0x350] sm:$0xff] %vm6009, %v5987
        %6117 = vst.msk [vmem:[#allocation4 + $0x358] sm:$0xff] %vm6009, %v5988
        %6118 = vst.msk [vmem:[#allocation4 + $0x360] sm:$0xff] %vm6009, %v5989
        %6119 = vst.msk [vmem:[#allocation4 + $0x368] sm:$0xff] %vm6009, %v5990
        %6120 = vst.msk [vmem:[#allocation4 + $0x370] sm:$0xff] %vm6009, %v5991
        %6121 = vst.msk [vmem:[#allocation4 + $0x378] sm:$0xff] %vm6009, %v5992
        %6122 = vst.msk [vmem:[#allocation4 + $0x380] sm:$0xff] %vm6009, %v5993
        %6123 = vst.msk [vmem:[#allocation4 + $0x388] sm:$0xff] %vm6009, %v5994
        %6124 = vst.msk [vmem:[#allocation4 + $0x390] sm:$0xff] %vm6009, %v5995
        %6125 = vst.msk [vmem:[#allocation4 + $0x398] sm:$0xff] %vm6009, %v5996
        %6126 = vst.msk [vmem:[#allocation4 + $0x3a0] sm:$0xff] %vm6009, %v5997
        %6127 = vst.msk [vmem:[#allocation4 + $0x3a8] sm:$0xff] %vm6009, %v5998
        %6128 = vst.msk [vmem:[#allocation4 + $0x3b0] sm:$0xff] %vm6009, %v5999
        %6129 = vst.msk [vmem:[#allocation4 + $0x3b8] sm:$0xff] %vm6009, %v6000
        %6130 = vst.msk [vmem:[#allocation4 + $0x3c0] sm:$0xff] %vm6009, %v6001
        %6131 = vst.msk [vmem:[#allocation4 + $0x3c8] sm:$0xff] %vm6009, %v6002
        %6132 = vst.msk [vmem:[#allocation4 + $0x3d0] sm:$0xff] %vm6009, %v6003
        %6133 = vst.msk [vmem:[#allocation4 + $0x3d8] sm:$0xff] %vm6009, %v6004
        %6134 = vst.msk [vmem:[#allocation4 + $0x3e0] sm:$0xff] %vm6009, %v6005
        %6135 = vst.msk [vmem:[#allocation4 + $0x3e8] sm:$0xff] %vm6009, %v6006
        %6136 = vst.msk [vmem:[#allocation4 + $0x3f0] sm:$0xff] %vm6009, %v6007
        %6137 = vst.msk [vmem:[#allocation4 + $0x3f8] sm:$0xff] %vm6009, %v6008
        %v6138 = vld [vmem:[#allocation5] sm:$0xff]
        %v6139 = vld [vmem:[#allocation5 + $0x8] sm:$0xff]
        %v6140 = vld [vmem:[#allocation5 + $0x10] sm:$0xff]
        %v6141 = vld [vmem:[#allocation5 + $0x18] sm:$0xff]
        %v6142 = vld [vmem:[#allocation5 + $0x20] sm:$0xff]
        %v6143 = vld [vmem:[#allocation5 + $0x28] sm:$0xff]
        %v6144 = vld [vmem:[#allocation5 + $0x30] sm:$0xff]
        %v6145 = vld [vmem:[#allocation5 + $0x38] sm:$0xff]
        %v6146 = vld [vmem:[#allocation5 + $0x40] sm:$0xff]
        %v6147 = vld [vmem:[#allocation5 + $0x48] sm:$0xff]
        %v6148 = vld [vmem:[#allocation5 + $0x50] sm:$0xff]
        %v6149 = vld [vmem:[#allocation5 + $0x58] sm:$0xff]
        %v6150 = vld [vmem:[#allocation5 + $0x60] sm:$0xff]
        %v6151 = vld [vmem:[#allocation5 + $0x68] sm:$0xff]
        %v6152 = vld [vmem:[#allocation5 + $0x70] sm:$0xff]
        %v6153 = vld [vmem:[#allocation5 + $0x78] sm:$0xff]
        %v6154 = vld [vmem:[#allocation5 + $0x80] sm:$0xff]
        %v6155 = vld [vmem:[#allocation5 + $0x88] sm:$0xff]
        %v6156 = vld [vmem:[#allocation5 + $0x90] sm:$0xff]
        %v6157 = vld [vmem:[#allocation5 + $0x98] sm:$0xff]
        %v6158 = vld [vmem:[#allocation5 + $0xa0] sm:$0xff]
        %v6159 = vld [vmem:[#allocation5 + $0xa8] sm:$0xff]
        %v6160 = vld [vmem:[#allocation5 + $0xb0] sm:$0xff]
        %v6161 = vld [vmem:[#allocation5 + $0xb8] sm:$0xff]
        %v6162 = vld [vmem:[#allocation5 + $0xc0] sm:$0xff]
        %v6163 = vld [vmem:[#allocation5 + $0xc8] sm:$0xff]
        %v6164 = vld [vmem:[#allocation5 + $0xd0] sm:$0xff]
        %v6165 = vld [vmem:[#allocation5 + $0xd8] sm:$0xff]
        %v6166 = vld [vmem:[#allocation5 + $0xe0] sm:$0xff]
        %v6167 = vld [vmem:[#allocation5 + $0xe8] sm:$0xff]
        %v6168 = vld [vmem:[#allocation5 + $0xf0] sm:$0xff]
        %v6169 = vld [vmem:[#allocation5 + $0xf8] sm:$0xff]
        %v6170 = vld [vmem:[#allocation5 + $0x100] sm:$0xff]
        %v6171 = vld [vmem:[#allocation5 + $0x108] sm:$0xff]
        %v6172 = vld [vmem:[#allocation5 + $0x110] sm:$0xff]
        %v6173 = vld [vmem:[#allocation5 + $0x118] sm:$0xff]
        %v6174 = vld [vmem:[#allocation5 + $0x120] sm:$0xff]
        %v6175 = vld [vmem:[#allocation5 + $0x128] sm:$0xff]
        %v6176 = vld [vmem:[#allocation5 + $0x130] sm:$0xff]
        %v6177 = vld [vmem:[#allocation5 + $0x138] sm:$0xff]
        %v6178 = vld [vmem:[#allocation5 + $0x140] sm:$0xff]
        %v6179 = vld [vmem:[#allocation5 + $0x148] sm:$0xff]
        %v6180 = vld [vmem:[#allocation5 + $0x150] sm:$0xff]
        %v6181 = vld [vmem:[#allocation5 + $0x158] sm:$0xff]
        %v6182 = vld [vmem:[#allocation5 + $0x160] sm:$0xff]
        %v6183 = vld [vmem:[#allocation5 + $0x168] sm:$0xff]
        %v6184 = vld [vmem:[#allocation5 + $0x170] sm:$0xff]
        %v6185 = vld [vmem:[#allocation5 + $0x178] sm:$0xff]
        %v6186 = vld [vmem:[#allocation5 + $0x180] sm:$0xff]
        %v6187 = vld [vmem:[#allocation5 + $0x188] sm:$0xff]
        %v6188 = vld [vmem:[#allocation5 + $0x190] sm:$0xff]
        %v6189 = vld [vmem:[#allocation5 + $0x198] sm:$0xff]
        %v6190 = vld [vmem:[#allocation5 + $0x1a0] sm:$0xff]
        %v6191 = vld [vmem:[#allocation5 + $0x1a8] sm:$0xff]
        %v6192 = vld [vmem:[#allocation5 + $0x1b0] sm:$0xff]
        %v6193 = vld [vmem:[#allocation5 + $0x1b8] sm:$0xff]
        %v6194 = vld [vmem:[#allocation5 + $0x1c0] sm:$0xff]
        %v6195 = vld [vmem:[#allocation5 + $0x1c8] sm:$0xff]
        %v6196 = vld [vmem:[#allocation5 + $0x1d0] sm:$0xff]
        %v6197 = vld [vmem:[#allocation5 + $0x1d8] sm:$0xff]
        %v6198 = vld [vmem:[#allocation5 + $0x1e0] sm:$0xff]
        %v6199 = vld [vmem:[#allocation5 + $0x1e8] sm:$0xff]
        %v6200 = vld [vmem:[#allocation5 + $0x1f0] sm:$0xff]
        %v6201 = vld [vmem:[#allocation5 + $0x1f8] sm:$0xff]
        %v6202 = vld [vmem:[#allocation5 + $0x200] sm:$0xff]
        %v6203 = vld [vmem:[#allocation5 + $0x208] sm:$0xff]
        %v6204 = vld [vmem:[#allocation5 + $0x210] sm:$0xff]
        %v6205 = vld [vmem:[#allocation5 + $0x218] sm:$0xff]
        %v6206 = vld [vmem:[#allocation5 + $0x220] sm:$0xff]
        %v6207 = vld [vmem:[#allocation5 + $0x228] sm:$0xff]
        %v6208 = vld [vmem:[#allocation5 + $0x230] sm:$0xff]
        %v6209 = vld [vmem:[#allocation5 + $0x238] sm:$0xff]
        %v6210 = vld [vmem:[#allocation5 + $0x240] sm:$0xff]
        %v6211 = vld [vmem:[#allocation5 + $0x248] sm:$0xff]
        %v6212 = vld [vmem:[#allocation5 + $0x250] sm:$0xff]
        %v6213 = vld [vmem:[#allocation5 + $0x258] sm:$0xff]
        %v6214 = vld [vmem:[#allocation5 + $0x260] sm:$0xff]
        %v6215 = vld [vmem:[#allocation5 + $0x268] sm:$0xff]
        %v6216 = vld [vmem:[#allocation5 + $0x270] sm:$0xff]
        %v6217 = vld [vmem:[#allocation5 + $0x278] sm:$0xff]
        %v6218 = vld [vmem:[#allocation5 + $0x280] sm:$0xff]
        %v6219 = vld [vmem:[#allocation5 + $0x288] sm:$0xff]
        %v6220 = vld [vmem:[#allocation5 + $0x290] sm:$0xff]
        %v6221 = vld [vmem:[#allocation5 + $0x298] sm:$0xff]
        %v6222 = vld [vmem:[#allocation5 + $0x2a0] sm:$0xff]
        %v6223 = vld [vmem:[#allocation5 + $0x2a8] sm:$0xff]
        %v6224 = vld [vmem:[#allocation5 + $0x2b0] sm:$0xff]
        %v6225 = vld [vmem:[#allocation5 + $0x2b8] sm:$0xff]
        %v6226 = vld [vmem:[#allocation5 + $0x2c0] sm:$0xff]
        %v6227 = vld [vmem:[#allocation5 + $0x2c8] sm:$0xff]
        %v6228 = vld [vmem:[#allocation5 + $0x2d0] sm:$0xff]
        %v6229 = vld [vmem:[#allocation5 + $0x2d8] sm:$0xff]
        %v6230 = vld [vmem:[#allocation5 + $0x2e0] sm:$0xff]
        %v6231 = vld [vmem:[#allocation5 + $0x2e8] sm:$0xff]
        %v6232 = vld [vmem:[#allocation5 + $0x2f0] sm:$0xff]
        %v6233 = vld [vmem:[#allocation5 + $0x2f8] sm:$0xff]
        %v6234 = vld [vmem:[#allocation5 + $0x300] sm:$0xff]
        %v6235 = vld [vmem:[#allocation5 + $0x308] sm:$0xff]
        %v6236 = vld [vmem:[#allocation5 + $0x310] sm:$0xff]
        %v6237 = vld [vmem:[#allocation5 + $0x318] sm:$0xff]
        %v6238 = vld [vmem:[#allocation5 + $0x320] sm:$0xff]
        %v6239 = vld [vmem:[#allocation5 + $0x328] sm:$0xff]
        %v6240 = vld [vmem:[#allocation5 + $0x330] sm:$0xff]
        %v6241 = vld [vmem:[#allocation5 + $0x338] sm:$0xff]
        %v6242 = vld [vmem:[#allocation5 + $0x340] sm:$0xff]
        %v6243 = vld [vmem:[#allocation5 + $0x348] sm:$0xff]
        %v6244 = vld [vmem:[#allocation5 + $0x350] sm:$0xff]
        %v6245 = vld [vmem:[#allocation5 + $0x358] sm:$0xff]
        %v6246 = vld [vmem:[#allocation5 + $0x360] sm:$0xff]
        %v6247 = vld [vmem:[#allocation5 + $0x368] sm:$0xff]
        %v6248 = vld [vmem:[#allocation5 + $0x370] sm:$0xff]
        %v6249 = vld [vmem:[#allocation5 + $0x378] sm:$0xff]
        %v6250 = vld [vmem:[#allocation5 + $0x380] sm:$0xff]
        %v6251 = vld [vmem:[#allocation5 + $0x388] sm:$0xff]
        %v6252 = vld [vmem:[#allocation5 + $0x390] sm:$0xff]
        %v6253 = vld [vmem:[#allocation5 + $0x398] sm:$0xff]
        %v6254 = vld [vmem:[#allocation5 + $0x3a0] sm:$0xff]
        %v6255 = vld [vmem:[#allocation5 + $0x3a8] sm:$0xff]
        %v6256 = vld [vmem:[#allocation5 + $0x3b0] sm:$0xff]
        %v6257 = vld [vmem:[#allocation5 + $0x3b8] sm:$0xff]
        %v6258 = vld [vmem:[#allocation5 + $0x3c0] sm:$0xff]
        %v6259 = vld [vmem:[#allocation5 + $0x3c8] sm:$0xff]
        %v6260 = vld [vmem:[#allocation5 + $0x3d0] sm:$0xff]
        %v6261 = vld [vmem:[#allocation5 + $0x3d8] sm:$0xff]
        %v6262 = vld [vmem:[#allocation5 + $0x3e0] sm:$0xff]
        %v6263 = vld [vmem:[#allocation5 + $0x3e8] sm:$0xff]
        %v6264 = vld [vmem:[#allocation5 + $0x3f0] sm:$0xff]
        %v6265 = vld [vmem:[#allocation5 + $0x3f8] sm:$0xff]
        %6267 = vset.pattern.permute.xlu0 0
        %6268 = vperm.xlu0 %6267, %v3578
        %v6269 = vpop.permute.xlu0 %6268
        %6272 = vset.pattern.permute.xlu0 0
        %6273 = vperm.xlu0 %6272, %v3580
        %v6274 = vpop.permute.xlu0 %6273
        %6277 = vset.pattern.permute.xlu0 0
        %6278 = vperm.xlu0 %6277, %v3582
        %v6279 = vpop.permute.xlu0 %6278
        %6282 = vset.pattern.permute.xlu0 0
        %6283 = vperm.xlu0 %6282, %v3584
        %v6284 = vpop.permute.xlu0 %6283
        %6287 = vset.pattern.permute.xlu0 0
        %6288 = vperm.xlu0 %6287, %v3586
        %v6289 = vpop.permute.xlu0 %6288
        %6292 = vset.pattern.permute.xlu0 0
        %6293 = vperm.xlu0 %6292, %v3588
        %v6294 = vpop.permute.xlu0 %6293
        %6297 = vset.pattern.permute.xlu0 0
        %6298 = vperm.xlu0 %6297, %v3590
        %v6299 = vpop.permute.xlu0 %6298
        %6302 = vset.pattern.permute.xlu0 0
        %6303 = vperm.xlu0 %6302, %v3592
        %v6304 = vpop.permute.xlu0 %6303
        %6307 = vset.pattern.permute.xlu0 0
        %6308 = vperm.xlu0 %6307, %v3594
        %v6309 = vpop.permute.xlu0 %6308
        %6312 = vset.pattern.permute.xlu0 0
        %6313 = vperm.xlu0 %6312, %v3596
        %v6314 = vpop.permute.xlu0 %6313
        %6317 = vset.pattern.permute.xlu0 0
        %6318 = vperm.xlu0 %6317, %v3598
        %v6319 = vpop.permute.xlu0 %6318
        %6322 = vset.pattern.permute.xlu0 0
        %6323 = vperm.xlu0 %6322, %v3600
        %v6324 = vpop.permute.xlu0 %6323
        %6327 = vset.pattern.permute.xlu0 0
        %6328 = vperm.xlu0 %6327, %v3602
        %v6329 = vpop.permute.xlu0 %6328
        %6332 = vset.pattern.permute.xlu0 0
        %6333 = vperm.xlu0 %6332, %v3604
        %v6334 = vpop.permute.xlu0 %6333
        %6337 = vset.pattern.permute.xlu0 0
        %6338 = vperm.xlu0 %6337, %v3606
        %v6339 = vpop.permute.xlu0 %6338
        %6342 = vset.pattern.permute.xlu0 0
        %6343 = vperm.xlu0 %6342, %v3608
        %v6344 = vpop.permute.xlu0 %6343
        %6347 = vset.pattern.permute.xlu0 0
        %6348 = vperm.xlu0 %6347, %v3610
        %v6349 = vpop.permute.xlu0 %6348
        %6352 = vset.pattern.permute.xlu0 0
        %6353 = vperm.xlu0 %6352, %v3612
        %v6354 = vpop.permute.xlu0 %6353
        %6357 = vset.pattern.permute.xlu0 0
        %6358 = vperm.xlu0 %6357, %v3614
        %v6359 = vpop.permute.xlu0 %6358
        %6362 = vset.pattern.permute.xlu0 0
        %6363 = vperm.xlu0 %6362, %v3616
        %v6364 = vpop.permute.xlu0 %6363
        %6367 = vset.pattern.permute.xlu0 0
        %6368 = vperm.xlu0 %6367, %v3618
        %v6369 = vpop.permute.xlu0 %6368
        %6372 = vset.pattern.permute.xlu0 0
        %6373 = vperm.xlu0 %6372, %v3620
        %v6374 = vpop.permute.xlu0 %6373
        %6377 = vset.pattern.permute.xlu0 0
        %6378 = vperm.xlu0 %6377, %v3622
        %v6379 = vpop.permute.xlu0 %6378
        %6382 = vset.pattern.permute.xlu0 0
        %6383 = vperm.xlu0 %6382, %v3624
        %v6384 = vpop.permute.xlu0 %6383
        %6387 = vset.pattern.permute.xlu0 0
        %6388 = vperm.xlu0 %6387, %v3626
        %v6389 = vpop.permute.xlu0 %6388
        %6392 = vset.pattern.permute.xlu0 0
        %6393 = vperm.xlu0 %6392, %v3628
        %v6394 = vpop.permute.xlu0 %6393
        %6397 = vset.pattern.permute.xlu0 0
        %6398 = vperm.xlu0 %6397, %v3630
        %v6399 = vpop.permute.xlu0 %6398
        %6402 = vset.pattern.permute.xlu0 0
        %6403 = vperm.xlu0 %6402, %v3632
        %v6404 = vpop.permute.xlu0 %6403
        %6407 = vset.pattern.permute.xlu0 0
        %6408 = vperm.xlu0 %6407, %v3634
        %v6409 = vpop.permute.xlu0 %6408
        %6412 = vset.pattern.permute.xlu0 0
        %6413 = vperm.xlu0 %6412, %v3636
        %v6414 = vpop.permute.xlu0 %6413
        %6417 = vset.pattern.permute.xlu0 0
        %6418 = vperm.xlu0 %6417, %v3638
        %v6419 = vpop.permute.xlu0 %6418
        %6422 = vset.pattern.permute.xlu0 0
        %6423 = vperm.xlu0 %6422, %v3640
        %v6424 = vpop.permute.xlu0 %6423
        %6427 = vset.pattern.permute.xlu0 0
        %6428 = vperm.xlu0 %6427, %v3642
        %v6429 = vpop.permute.xlu0 %6428
        %6432 = vset.pattern.permute.xlu0 0
        %6433 = vperm.xlu0 %6432, %v3644
        %v6434 = vpop.permute.xlu0 %6433
        %6437 = vset.pattern.permute.xlu0 0
        %6438 = vperm.xlu0 %6437, %v3646
        %v6439 = vpop.permute.xlu0 %6438
        %6442 = vset.pattern.permute.xlu0 0
        %6443 = vperm.xlu0 %6442, %v3648
        %v6444 = vpop.permute.xlu0 %6443
        %6447 = vset.pattern.permute.xlu0 0
        %6448 = vperm.xlu0 %6447, %v3650
        %v6449 = vpop.permute.xlu0 %6448
        %6452 = vset.pattern.permute.xlu0 0
        %6453 = vperm.xlu0 %6452, %v3652
        %v6454 = vpop.permute.xlu0 %6453
        %6457 = vset.pattern.permute.xlu0 0
        %6458 = vperm.xlu0 %6457, %v3654
        %v6459 = vpop.permute.xlu0 %6458
        %6462 = vset.pattern.permute.xlu0 0
        %6463 = vperm.xlu0 %6462, %v3656
        %v6464 = vpop.permute.xlu0 %6463
        %6467 = vset.pattern.permute.xlu0 0
        %6468 = vperm.xlu0 %6467, %v3658
        %v6469 = vpop.permute.xlu0 %6468
        %6472 = vset.pattern.permute.xlu0 0
        %6473 = vperm.xlu0 %6472, %v3660
        %v6474 = vpop.permute.xlu0 %6473
        %6477 = vset.pattern.permute.xlu0 0
        %6478 = vperm.xlu0 %6477, %v3662
        %v6479 = vpop.permute.xlu0 %6478
        %6482 = vset.pattern.permute.xlu0 0
        %6483 = vperm.xlu0 %6482, %v3664
        %v6484 = vpop.permute.xlu0 %6483
        %6487 = vset.pattern.permute.xlu0 0
        %6488 = vperm.xlu0 %6487, %v3666
        %v6489 = vpop.permute.xlu0 %6488
        %6492 = vset.pattern.permute.xlu0 0
        %6493 = vperm.xlu0 %6492, %v3668
        %v6494 = vpop.permute.xlu0 %6493
        %6497 = vset.pattern.permute.xlu0 0
        %6498 = vperm.xlu0 %6497, %v3670
        %v6499 = vpop.permute.xlu0 %6498
        %6502 = vset.pattern.permute.xlu0 0
        %6503 = vperm.xlu0 %6502, %v3672
        %v6504 = vpop.permute.xlu0 %6503
        %6507 = vset.pattern.permute.xlu0 0
        %6508 = vperm.xlu0 %6507, %v3674
        %v6509 = vpop.permute.xlu0 %6508
        %6512 = vset.pattern.permute.xlu0 0
        %6513 = vperm.xlu0 %6512, %v3676
        %v6514 = vpop.permute.xlu0 %6513
        %6517 = vset.pattern.permute.xlu0 0
        %6518 = vperm.xlu0 %6517, %v3678
        %v6519 = vpop.permute.xlu0 %6518
        %6522 = vset.pattern.permute.xlu0 0
        %6523 = vperm.xlu0 %6522, %v3680
        %v6524 = vpop.permute.xlu0 %6523
        %6527 = vset.pattern.permute.xlu0 0
        %6528 = vperm.xlu0 %6527, %v3682
        %v6529 = vpop.permute.xlu0 %6528
        %6532 = vset.pattern.permute.xlu0 0
        %6533 = vperm.xlu0 %6532, %v3684
        %v6534 = vpop.permute.xlu0 %6533
        %6537 = vset.pattern.permute.xlu0 0
        %6538 = vperm.xlu0 %6537, %v3686
        %v6539 = vpop.permute.xlu0 %6538
        %6542 = vset.pattern.permute.xlu0 0
        %6543 = vperm.xlu0 %6542, %v3688
        %v6544 = vpop.permute.xlu0 %6543
        %6547 = vset.pattern.permute.xlu0 0
        %6548 = vperm.xlu0 %6547, %v3690
        %v6549 = vpop.permute.xlu0 %6548
        %6552 = vset.pattern.permute.xlu0 0
        %6553 = vperm.xlu0 %6552, %v3692
        %v6554 = vpop.permute.xlu0 %6553
        %6557 = vset.pattern.permute.xlu0 0
        %6558 = vperm.xlu0 %6557, %v3694
        %v6559 = vpop.permute.xlu0 %6558
        %6562 = vset.pattern.permute.xlu0 0
        %6563 = vperm.xlu0 %6562, %v3696
        %v6564 = vpop.permute.xlu0 %6563
        %6567 = vset.pattern.permute.xlu0 0
        %6568 = vperm.xlu0 %6567, %v3698
        %v6569 = vpop.permute.xlu0 %6568
        %6572 = vset.pattern.permute.xlu0 0
        %6573 = vperm.xlu0 %6572, %v3700
        %v6574 = vpop.permute.xlu0 %6573
        %6577 = vset.pattern.permute.xlu0 0
        %6578 = vperm.xlu0 %6577, %v3702
        %v6579 = vpop.permute.xlu0 %6578
        %6582 = vset.pattern.permute.xlu0 0
        %6583 = vperm.xlu0 %6582, %v3704
        %v6584 = vpop.permute.xlu0 %6583
        %6587 = vset.pattern.permute.xlu0 0
        %6588 = vperm.xlu0 %6587, %v3706
        %v6589 = vpop.permute.xlu0 %6588
        %6592 = vset.pattern.permute.xlu0 0
        %6593 = vperm.xlu0 %6592, %v3708
        %v6594 = vpop.permute.xlu0 %6593
        %6597 = vset.pattern.permute.xlu0 0
        %6598 = vperm.xlu0 %6597, %v3710
        %v6599 = vpop.permute.xlu0 %6598
        %6602 = vset.pattern.permute.xlu0 0
        %6603 = vperm.xlu0 %6602, %v3712
        %v6604 = vpop.permute.xlu0 %6603
        %6607 = vset.pattern.permute.xlu0 0
        %6608 = vperm.xlu0 %6607, %v3714
        %v6609 = vpop.permute.xlu0 %6608
        %6612 = vset.pattern.permute.xlu0 0
        %6613 = vperm.xlu0 %6612, %v3716
        %v6614 = vpop.permute.xlu0 %6613
        %6617 = vset.pattern.permute.xlu0 0
        %6618 = vperm.xlu0 %6617, %v3718
        %v6619 = vpop.permute.xlu0 %6618
        %6622 = vset.pattern.permute.xlu0 0
        %6623 = vperm.xlu0 %6622, %v3720
        %v6624 = vpop.permute.xlu0 %6623
        %6627 = vset.pattern.permute.xlu0 0
        %6628 = vperm.xlu0 %6627, %v3722
        %v6629 = vpop.permute.xlu0 %6628
        %6632 = vset.pattern.permute.xlu0 0
        %6633 = vperm.xlu0 %6632, %v3724
        %v6634 = vpop.permute.xlu0 %6633
        %6637 = vset.pattern.permute.xlu0 0
        %6638 = vperm.xlu0 %6637, %v3726
        %v6639 = vpop.permute.xlu0 %6638
        %6642 = vset.pattern.permute.xlu0 0
        %6643 = vperm.xlu0 %6642, %v3728
        %v6644 = vpop.permute.xlu0 %6643
        %6647 = vset.pattern.permute.xlu0 0
        %6648 = vperm.xlu0 %6647, %v3730
        %v6649 = vpop.permute.xlu0 %6648
        %6652 = vset.pattern.permute.xlu0 0
        %6653 = vperm.xlu0 %6652, %v3732
        %v6654 = vpop.permute.xlu0 %6653
        %6657 = vset.pattern.permute.xlu0 0
        %6658 = vperm.xlu0 %6657, %v3734
        %v6659 = vpop.permute.xlu0 %6658
        %6662 = vset.pattern.permute.xlu0 0
        %6663 = vperm.xlu0 %6662, %v3736
        %v6664 = vpop.permute.xlu0 %6663
        %6667 = vset.pattern.permute.xlu0 0
        %6668 = vperm.xlu0 %6667, %v3738
        %v6669 = vpop.permute.xlu0 %6668
        %6672 = vset.pattern.permute.xlu0 0
        %6673 = vperm.xlu0 %6672, %v3740
        %v6674 = vpop.permute.xlu0 %6673
        %6677 = vset.pattern.permute.xlu0 0
        %6678 = vperm.xlu0 %6677, %v3742
        %v6679 = vpop.permute.xlu0 %6678
        %6682 = vset.pattern.permute.xlu0 0
        %6683 = vperm.xlu0 %6682, %v3744
        %v6684 = vpop.permute.xlu0 %6683
        %6687 = vset.pattern.permute.xlu0 0
        %6688 = vperm.xlu0 %6687, %v3746
        %v6689 = vpop.permute.xlu0 %6688
        %6692 = vset.pattern.permute.xlu0 0
        %6693 = vperm.xlu0 %6692, %v3748
        %v6694 = vpop.permute.xlu0 %6693
        %6697 = vset.pattern.permute.xlu0 0
        %6698 = vperm.xlu0 %6697, %v3750
        %v6699 = vpop.permute.xlu0 %6698
        %6702 = vset.pattern.permute.xlu0 0
        %6703 = vperm.xlu0 %6702, %v3752
        %v6704 = vpop.permute.xlu0 %6703
        %6707 = vset.pattern.permute.xlu0 0
        %6708 = vperm.xlu0 %6707, %v3754
        %v6709 = vpop.permute.xlu0 %6708
        %6712 = vset.pattern.permute.xlu0 0
        %6713 = vperm.xlu0 %6712, %v3756
        %v6714 = vpop.permute.xlu0 %6713
        %6717 = vset.pattern.permute.xlu0 0
        %6718 = vperm.xlu0 %6717, %v3758
        %v6719 = vpop.permute.xlu0 %6718
        %6722 = vset.pattern.permute.xlu0 0
        %6723 = vperm.xlu0 %6722, %v3760
        %v6724 = vpop.permute.xlu0 %6723
        %6727 = vset.pattern.permute.xlu0 0
        %6728 = vperm.xlu0 %6727, %v3762
        %v6729 = vpop.permute.xlu0 %6728
        %6732 = vset.pattern.permute.xlu0 0
        %6733 = vperm.xlu0 %6732, %v3764
        %v6734 = vpop.permute.xlu0 %6733
        %6737 = vset.pattern.permute.xlu0 0
        %6738 = vperm.xlu0 %6737, %v3766
        %v6739 = vpop.permute.xlu0 %6738
        %6742 = vset.pattern.permute.xlu0 0
        %6743 = vperm.xlu0 %6742, %v3768
        %v6744 = vpop.permute.xlu0 %6743
        %6747 = vset.pattern.permute.xlu0 0
        %6748 = vperm.xlu0 %6747, %v3770
        %v6749 = vpop.permute.xlu0 %6748
        %6752 = vset.pattern.permute.xlu0 0
        %6753 = vperm.xlu0 %6752, %v3772
        %v6754 = vpop.permute.xlu0 %6753
        %6757 = vset.pattern.permute.xlu0 0
        %6758 = vperm.xlu0 %6757, %v3774
        %v6759 = vpop.permute.xlu0 %6758
        %6762 = vset.pattern.permute.xlu0 0
        %6763 = vperm.xlu0 %6762, %v3776
        %v6764 = vpop.permute.xlu0 %6763
        %6767 = vset.pattern.permute.xlu0 0
        %6768 = vperm.xlu0 %6767, %v3778
        %v6769 = vpop.permute.xlu0 %6768
        %6772 = vset.pattern.permute.xlu0 0
        %6773 = vperm.xlu0 %6772, %v3780
        %v6774 = vpop.permute.xlu0 %6773
        %6777 = vset.pattern.permute.xlu0 0
        %6778 = vperm.xlu0 %6777, %v3782
        %v6779 = vpop.permute.xlu0 %6778
        %6782 = vset.pattern.permute.xlu0 0
        %6783 = vperm.xlu0 %6782, %v3784
        %v6784 = vpop.permute.xlu0 %6783
        %6787 = vset.pattern.permute.xlu0 0
        %6788 = vperm.xlu0 %6787, %v3786
        %v6789 = vpop.permute.xlu0 %6788
        %6792 = vset.pattern.permute.xlu0 0
        %6793 = vperm.xlu0 %6792, %v3788
        %v6794 = vpop.permute.xlu0 %6793
        %6797 = vset.pattern.permute.xlu0 0
        %6798 = vperm.xlu0 %6797, %v3790
        %v6799 = vpop.permute.xlu0 %6798
        %6802 = vset.pattern.permute.xlu0 0
        %6803 = vperm.xlu0 %6802, %v3792
        %v6804 = vpop.permute.xlu0 %6803
        %6807 = vset.pattern.permute.xlu0 0
        %6808 = vperm.xlu0 %6807, %v3794
        %v6809 = vpop.permute.xlu0 %6808
        %6812 = vset.pattern.permute.xlu0 0
        %6813 = vperm.xlu0 %6812, %v3796
        %v6814 = vpop.permute.xlu0 %6813
        %6817 = vset.pattern.permute.xlu0 0
        %6818 = vperm.xlu0 %6817, %v3798
        %v6819 = vpop.permute.xlu0 %6818
        %6822 = vset.pattern.permute.xlu0 0
        %6823 = vperm.xlu0 %6822, %v3800
        %v6824 = vpop.permute.xlu0 %6823
        %6827 = vset.pattern.permute.xlu0 0
        %6828 = vperm.xlu0 %6827, %v3802
        %v6829 = vpop.permute.xlu0 %6828
        %6832 = vset.pattern.permute.xlu0 0
        %6833 = vperm.xlu0 %6832, %v3804
        %v6834 = vpop.permute.xlu0 %6833
        %6837 = vset.pattern.permute.xlu0 0
        %6838 = vperm.xlu0 %6837, %v3806
        %v6839 = vpop.permute.xlu0 %6838
        %6842 = vset.pattern.permute.xlu0 0
        %6843 = vperm.xlu0 %6842, %v3808
        %v6844 = vpop.permute.xlu0 %6843
        %6847 = vset.pattern.permute.xlu0 0
        %6848 = vperm.xlu0 %6847, %v3810
        %v6849 = vpop.permute.xlu0 %6848
        %6852 = vset.pattern.permute.xlu0 0
        %6853 = vperm.xlu0 %6852, %v3812
        %v6854 = vpop.permute.xlu0 %6853
        %6857 = vset.pattern.permute.xlu0 0
        %6858 = vperm.xlu0 %6857, %v3814
        %v6859 = vpop.permute.xlu0 %6858
        %6862 = vset.pattern.permute.xlu0 0
        %6863 = vperm.xlu0 %6862, %v3816
        %v6864 = vpop.permute.xlu0 %6863
        %6867 = vset.pattern.permute.xlu0 0
        %6868 = vperm.xlu0 %6867, %v3818
        %v6869 = vpop.permute.xlu0 %6868
        %6872 = vset.pattern.permute.xlu0 0
        %6873 = vperm.xlu0 %6872, %v3820
        %v6874 = vpop.permute.xlu0 %6873
        %6877 = vset.pattern.permute.xlu0 0
        %6878 = vperm.xlu0 %6877, %v3822
        %v6879 = vpop.permute.xlu0 %6878
        %6882 = vset.pattern.permute.xlu0 0
        %6883 = vperm.xlu0 %6882, %v3824
        %v6884 = vpop.permute.xlu0 %6883
        %6887 = vset.pattern.permute.xlu0 0
        %6888 = vperm.xlu0 %6887, %v3826
        %v6889 = vpop.permute.xlu0 %6888
        %6892 = vset.pattern.permute.xlu0 0
        %6893 = vperm.xlu0 %6892, %v3828
        %v6894 = vpop.permute.xlu0 %6893
        %6897 = vset.pattern.permute.xlu0 0
        %6898 = vperm.xlu0 %6897, %v3830
        %v6899 = vpop.permute.xlu0 %6898
        %6902 = vset.pattern.permute.xlu0 0
        %6903 = vperm.xlu0 %6902, %v3832
        %v6904 = vpop.permute.xlu0 %6903
        %v6906 = vmul.f32 %v6269, %v6138
        %v6907 = vmul.f32 %v6274, %v6139
        %v6908 = vmul.f32 %v6279, %v6140
        %v6909 = vmul.f32 %v6284, %v6141
        %v6910 = vmul.f32 %v6289, %v6142
        %v6911 = vmul.f32 %v6294, %v6143
        %v6912 = vmul.f32 %v6299, %v6144
        %v6913 = vmul.f32 %v6304, %v6145
        %v6914 = vmul.f32 %v6309, %v6146
        %v6915 = vmul.f32 %v6314, %v6147
        %v6916 = vmul.f32 %v6319, %v6148
        %v6917 = vmul.f32 %v6324, %v6149
        %v6918 = vmul.f32 %v6329, %v6150
        %v6919 = vmul.f32 %v6334, %v6151
        %v6920 = vmul.f32 %v6339, %v6152
        %v6921 = vmul.f32 %v6344, %v6153
        %v6922 = vmul.f32 %v6349, %v6154
        %v6923 = vmul.f32 %v6354, %v6155
        %v6924 = vmul.f32 %v6359, %v6156
        %v6925 = vmul.f32 %v6364, %v6157
        %v6926 = vmul.f32 %v6369, %v6158
        %v6927 = vmul.f32 %v6374, %v6159
        %v6928 = vmul.f32 %v6379, %v6160
        %v6929 = vmul.f32 %v6384, %v6161
        %v6930 = vmul.f32 %v6389, %v6162
        %v6931 = vmul.f32 %v6394, %v6163
        %v6932 = vmul.f32 %v6399, %v6164
        %v6933 = vmul.f32 %v6404, %v6165
        %v6934 = vmul.f32 %v6409, %v6166
        %v6935 = vmul.f32 %v6414, %v6167
        %v6936 = vmul.f32 %v6419, %v6168
        %v6937 = vmul.f32 %v6424, %v6169
        %v6938 = vmul.f32 %v6429, %v6170
        %v6939 = vmul.f32 %v6434, %v6171
        %v6940 = vmul.f32 %v6439, %v6172
        %v6941 = vmul.f32 %v6444, %v6173
        %v6942 = vmul.f32 %v6449, %v6174
        %v6943 = vmul.f32 %v6454, %v6175
        %v6944 = vmul.f32 %v6459, %v6176
        %v6945 = vmul.f32 %v6464, %v6177
        %v6946 = vmul.f32 %v6469, %v6178
        %v6947 = vmul.f32 %v6474, %v6179
        %v6948 = vmul.f32 %v6479, %v6180
        %v6949 = vmul.f32 %v6484, %v6181
        %v6950 = vmul.f32 %v6489, %v6182
        %v6951 = vmul.f32 %v6494, %v6183
        %v6952 = vmul.f32 %v6499, %v6184
        %v6953 = vmul.f32 %v6504, %v6185
        %v6954 = vmul.f32 %v6509, %v6186
        %v6955 = vmul.f32 %v6514, %v6187
        %v6956 = vmul.f32 %v6519, %v6188
        %v6957 = vmul.f32 %v6524, %v6189
        %v6958 = vmul.f32 %v6529, %v6190
        %v6959 = vmul.f32 %v6534, %v6191
        %v6960 = vmul.f32 %v6539, %v6192
        %v6961 = vmul.f32 %v6544, %v6193
        %v6962 = vmul.f32 %v6549, %v6194
        %v6963 = vmul.f32 %v6554, %v6195
        %v6964 = vmul.f32 %v6559, %v6196
        %v6965 = vmul.f32 %v6564, %v6197
        %v6966 = vmul.f32 %v6569, %v6198
        %v6967 = vmul.f32 %v6574, %v6199
        %v6968 = vmul.f32 %v6579, %v6200
        %v6969 = vmul.f32 %v6584, %v6201
        %v6970 = vmul.f32 %v6589, %v6202
        %v6971 = vmul.f32 %v6594, %v6203
        %v6972 = vmul.f32 %v6599, %v6204
        %v6973 = vmul.f32 %v6604, %v6205
        %v6974 = vmul.f32 %v6609, %v6206
        %v6975 = vmul.f32 %v6614, %v6207
        %v6976 = vmul.f32 %v6619, %v6208
        %v6977 = vmul.f32 %v6624, %v6209
        %v6978 = vmul.f32 %v6629, %v6210
        %v6979 = vmul.f32 %v6634, %v6211
        %v6980 = vmul.f32 %v6639, %v6212
        %v6981 = vmul.f32 %v6644, %v6213
        %v6982 = vmul.f32 %v6649, %v6214
        %v6983 = vmul.f32 %v6654, %v6215
        %v6984 = vmul.f32 %v6659, %v6216
        %v6985 = vmul.f32 %v6664, %v6217
        %v6986 = vmul.f32 %v6669, %v6218
        %v6987 = vmul.f32 %v6674, %v6219
        %v6988 = vmul.f32 %v6679, %v6220
        %v6989 = vmul.f32 %v6684, %v6221
        %v6990 = vmul.f32 %v6689, %v6222
        %v6991 = vmul.f32 %v6694, %v6223
        %v6992 = vmul.f32 %v6699, %v6224
        %v6993 = vmul.f32 %v6704, %v6225
        %v6994 = vmul.f32 %v6709, %v6226
        %v6995 = vmul.f32 %v6714, %v6227
        %v6996 = vmul.f32 %v6719, %v6228
        %v6997 = vmul.f32 %v6724, %v6229
        %v6998 = vmul.f32 %v6729, %v6230
        %v6999 = vmul.f32 %v6734, %v6231
        %v7000 = vmul.f32 %v6739, %v6232
        %v7001 = vmul.f32 %v6744, %v6233
        %v7002 = vmul.f32 %v6749, %v6234
        %v7003 = vmul.f32 %v6754, %v6235
        %v7004 = vmul.f32 %v6759, %v6236
        %v7005 = vmul.f32 %v6764, %v6237
        %v7006 = vmul.f32 %v6769, %v6238
        %v7007 = vmul.f32 %v6774, %v6239
        %v7008 = vmul.f32 %v6779, %v6240
        %v7009 = vmul.f32 %v6784, %v6241
        %v7010 = vmul.f32 %v6789, %v6242
        %v7011 = vmul.f32 %v6794, %v6243
        %v7012 = vmul.f32 %v6799, %v6244
        %v7013 = vmul.f32 %v6804, %v6245
        %v7014 = vmul.f32 %v6809, %v6246
        %v7015 = vmul.f32 %v6814, %v6247
        %v7016 = vmul.f32 %v6819, %v6248
        %v7017 = vmul.f32 %v6824, %v6249
        %v7018 = vmul.f32 %v6829, %v6250
        %v7019 = vmul.f32 %v6834, %v6251
        %v7020 = vmul.f32 %v6839, %v6252
        %v7021 = vmul.f32 %v6844, %v6253
        %v7022 = vmul.f32 %v6849, %v6254
        %v7023 = vmul.f32 %v6854, %v6255
        %v7024 = vmul.f32 %v6859, %v6256
        %v7025 = vmul.f32 %v6864, %v6257
        %v7026 = vmul.f32 %v6869, %v6258
        %v7027 = vmul.f32 %v6874, %v6259
        %v7028 = vmul.f32 %v6879, %v6260
        %v7029 = vmul.f32 %v6884, %v6261
        %v7030 = vmul.f32 %v6889, %v6262
        %v7031 = vmul.f32 %v6894, %v6263
        %v7032 = vmul.f32 %v6899, %v6264
        %v7033 = vmul.f32 %v6904, %v6265
        %v7034 = vpack.c.bf16 %v4734, %v4730
        %v7035 = vpack.c.bf16 %v4736, %v4732
        %v7036 = vpack.c.bf16 %v4742, %v4738
        %v7037 = vpack.c.bf16 %v4744, %v4740
        %v7038 = vpack.c.bf16 %v4750, %v4746
        %v7039 = vpack.c.bf16 %v4752, %v4748
        %v7040 = vpack.c.bf16 %v4758, %v4754
        %v7041 = vpack.c.bf16 %v4760, %v4756
        %v7042 = vpack.c.bf16 %v4766, %v4762
        %v7043 = vpack.c.bf16 %v4768, %v4764
        %v7044 = vpack.c.bf16 %v4774, %v4770
        %v7045 = vpack.c.bf16 %v4776, %v4772
        %v7046 = vpack.c.bf16 %v4782, %v4778
        %v7047 = vpack.c.bf16 %v4784, %v4780
        %v7048 = vpack.c.bf16 %v4790, %v4786
        %v7049 = vpack.c.bf16 %v4792, %v4788
        %v7050 = vpack.c.bf16 %v4798, %v4794
        %v7051 = vpack.c.bf16 %v4800, %v4796
        %v7052 = vpack.c.bf16 %v4806, %v4802
        %v7053 = vpack.c.bf16 %v4808, %v4804
        %v7054 = vpack.c.bf16 %v4814, %v4810
        %v7055 = vpack.c.bf16 %v4816, %v4812
        %v7056 = vpack.c.bf16 %v4822, %v4818
        %v7057 = vpack.c.bf16 %v4824, %v4820
        %v7058 = vpack.c.bf16 %v4830, %v4826
        %v7059 = vpack.c.bf16 %v4832, %v4828
        %v7060 = vpack.c.bf16 %v4838, %v4834
        %v7061 = vpack.c.bf16 %v4840, %v4836
        %v7062 = vpack.c.bf16 %v4846, %v4842
        %v7063 = vpack.c.bf16 %v4848, %v4844
        %v7064 = vpack.c.bf16 %v4854, %v4850
        %v7065 = vpack.c.bf16 %v4856, %v4852
        %v7066 = vpack.c.bf16 %v4862, %v4858
        %v7067 = vpack.c.bf16 %v4864, %v4860
        %v7068 = vpack.c.bf16 %v4870, %v4866
        %v7069 = vpack.c.bf16 %v4872, %v4868
        %v7070 = vpack.c.bf16 %v4878, %v4874
        %v7071 = vpack.c.bf16 %v4880, %v4876
        %v7072 = vpack.c.bf16 %v4886, %v4882
        %v7073 = vpack.c.bf16 %v4888, %v4884
        %v7074 = vpack.c.bf16 %v4894, %v4890
        %v7075 = vpack.c.bf16 %v4896, %v4892
        %v7076 = vpack.c.bf16 %v4902, %v4898
        %v7077 = vpack.c.bf16 %v4904, %v4900
        %v7078 = vpack.c.bf16 %v4910, %v4906
        %v7079 = vpack.c.bf16 %v4912, %v4908
        %v7080 = vpack.c.bf16 %v4918, %v4914
        %v7081 = vpack.c.bf16 %v4920, %v4916
        %v7082 = vpack.c.bf16 %v4926, %v4922
        %v7083 = vpack.c.bf16 %v4928, %v4924
        %v7084 = vpack.c.bf16 %v4934, %v4930
        %v7085 = vpack.c.bf16 %v4936, %v4932
        %v7086 = vpack.c.bf16 %v4942, %v4938
        %v7087 = vpack.c.bf16 %v4944, %v4940
        %v7088 = vpack.c.bf16 %v4950, %v4946
        %v7089 = vpack.c.bf16 %v4952, %v4948
        %v7090 = vpack.c.bf16 %v4958, %v4954
        %v7091 = vpack.c.bf16 %v4960, %v4956
        %v7092 = vpack.c.bf16 %v4966, %v4962
        %v7093 = vpack.c.bf16 %v4968, %v4964
        %v7094 = vpack.c.bf16 %v4974, %v4970
        %v7095 = vpack.c.bf16 %v4976, %v4972
        %v7096 = vpack.c.bf16 %v4982, %v4978
        %v7097 = vpack.c.bf16 %v4984, %v4980
        %v7098 = vpack.c.bf16 %v4990, %v4986
        %v7099 = vpack.c.bf16 %v4992, %v4988
        %v7100 = vpack.c.bf16 %v4998, %v4994
        %v7101 = vpack.c.bf16 %v5000, %v4996
        %v7102 = vpack.c.bf16 %v5006, %v5002
        %v7103 = vpack.c.bf16 %v5008, %v5004
        %v7104 = vpack.c.bf16 %v5014, %v5010
        %v7105 = vpack.c.bf16 %v5016, %v5012
        %v7106 = vpack.c.bf16 %v5022, %v5018
        %v7107 = vpack.c.bf16 %v5024, %v5020
        %v7108 = vpack.c.bf16 %v5030, %v5026
        %v7109 = vpack.c.bf16 %v5032, %v5028
        %v7110 = vpack.c.bf16 %v5038, %v5034
        %v7111 = vpack.c.bf16 %v5040, %v5036
        %v7112 = vpack.c.bf16 %v5046, %v5042
        %v7113 = vpack.c.bf16 %v5048, %v5044
        %v7114 = vpack.c.bf16 %v5054, %v5050
        %v7115 = vpack.c.bf16 %v5056, %v5052
        %v7116 = vpack.c.bf16 %v5062, %v5058
        %v7117 = vpack.c.bf16 %v5064, %v5060
        %v7118 = vpack.c.bf16 %v5070, %v5066
        %v7119 = vpack.c.bf16 %v5072, %v5068
        %v7120 = vpack.c.bf16 %v5078, %v5074
        %v7121 = vpack.c.bf16 %v5080, %v5076
        %v7122 = vpack.c.bf16 %v5086, %v5082
        %v7123 = vpack.c.bf16 %v5088, %v5084
        %v7124 = vpack.c.bf16 %v5094, %v5090
        %v7125 = vpack.c.bf16 %v5096, %v5092
        %v7126 = vpack.c.bf16 %v5102, %v5098
        %v7127 = vpack.c.bf16 %v5104, %v5100
        %v7128 = vpack.c.bf16 %v5110, %v5106
        %v7129 = vpack.c.bf16 %v5112, %v5108
        %v7130 = vpack.c.bf16 %v5118, %v5114
        %v7131 = vpack.c.bf16 %v5120, %v5116
        %v7132 = vpack.c.bf16 %v5126, %v5122
        %v7133 = vpack.c.bf16 %v5128, %v5124
        %v7134 = vpack.c.bf16 %v5134, %v5130
        %v7135 = vpack.c.bf16 %v5136, %v5132
        %v7136 = vpack.c.bf16 %v5142, %v5138
        %v7137 = vpack.c.bf16 %v5144, %v5140
        %v7138 = vpack.c.bf16 %v5150, %v5146
        %v7139 = vpack.c.bf16 %v5152, %v5148
        %v7140 = vpack.c.bf16 %v5158, %v5154
        %v7141 = vpack.c.bf16 %v5160, %v5156
        %v7142 = vpack.c.bf16 %v5166, %v5162
        %v7143 = vpack.c.bf16 %v5168, %v5164
        %v7144 = vpack.c.bf16 %v5174, %v5170
        %v7145 = vpack.c.bf16 %v5176, %v5172
        %v7146 = vpack.c.bf16 %v5182, %v5178
        %v7147 = vpack.c.bf16 %v5184, %v5180
        %v7148 = vpack.c.bf16 %v5190, %v5186
        %v7149 = vpack.c.bf16 %v5192, %v5188
        %v7150 = vpack.c.bf16 %v5198, %v5194
        %v7151 = vpack.c.bf16 %v5200, %v5196
        %v7152 = vpack.c.bf16 %v5206, %v5202
        %v7153 = vpack.c.bf16 %v5208, %v5204
        %v7154 = vpack.c.bf16 %v5214, %v5210
        %v7155 = vpack.c.bf16 %v5216, %v5212
        %v7156 = vpack.c.bf16 %v5222, %v5218
        %v7157 = vpack.c.bf16 %v5224, %v5220
        %v7158 = vpack.c.bf16 %v5230, %v5226
        %v7159 = vpack.c.bf16 %v5232, %v5228
        %v7160 = vpack.c.bf16 %v5238, %v5234
        %v7161 = vpack.c.bf16 %v5240, %v5236
        %7162 = vmatprep.subr.bf16.mxu0 %v1765
        %7163 = vmatpush1.bf16.xpose.msra.mxu0 %v1764
        %7164 = vmatprep.subr.bf16.mxu0 %v1767
        %7165 = vmatpush1.bf16.xpose.msra.mxu0 %v1766
        %7166 = vmatprep.subr.bf16.mxu0 0
        %7167 = vmatpush1.bf16.xpose.msra.mxu0 0
        %7168 = vmatprep.subr.bf16.mxu0 0
        %7169 = vmatpush1.bf16.xpose.msra.mxu0 0
        %7170 = vmatprep.subr.bf16.mxu0 0
        %7171 = vmatpush1.bf16.xpose.msra.mxu0 0
        %7172 = vmatprep.subr.bf16.mxu0 0
        %7173 = vmatpush1.bf16.xpose.msra.mxu0 0
        %7174 = vmatprep.subr.bf16.mxu0 0
        %7175 = vmatpush1.bf16.xpose.msra.mxu0 0
        %7176 = vmatprep.subr.bf16.mxu0 0
        %7177 = vmatpush1.bf16.xpose.msra.mxu0 0
        %7178 = vmatprep.subr.bf16.mxu0 0
        %7179 = vmatpush1.bf16.xpose.msra.mxu0 0
        %7180 = vmatprep.subr.bf16.mxu0 0
        %7181 = vmatpush1.bf16.xpose.msra.mxu0 0
        %7182 = vmatprep.subr.bf16.mxu0 0
        %7183 = vmatpush1.bf16.xpose.msra.mxu0 0
        %7184 = vmatprep.subr.bf16.mxu0 0
        %7185 = vmatpush1.bf16.xpose.msra.mxu0 0
        %7186 = vmatprep.subr.bf16.mxu0 0
        %7187 = vmatpush1.bf16.xpose.msra.mxu0 0
        %7188 = vmatprep.subr.bf16.mxu0 0
        %7189 = vmatpush1.bf16.xpose.msra.mxu0 0
        %7190 = vmatprep.subr.bf16.mxu0 0
        %7191 = vmatpush1.bf16.xpose.msra.mxu0 0
        %7192 = vmatprep.subr.bf16.mxu0 0
        %7193 = vmatpush1.bf16.xpose.msra.mxu0 0
        %7194 = vmatprep.mubr.bf16.mxu0 %v7035
        %7195 = vmatmul.mubr.bf16.gmra.mrb[0].mxu0 %v7034
        %v7196 = vpop.f32.mrb[0].mxu0
        %v7197 = vadd.f32 0.0, %v7196
        %v7198 = vpop.f32.mrb[0].mxu0
        %v7199 = vpop.f32.mrb[0].mxu0
        %v7200 = vadd.f32 0.0, %v7199
        %v7201 = vpop.f32.mrb[0].mxu0
        %7202 = vmatprep.mubr.bf16.mxu0 %v7037
        %7203 = vmatmul.mubr.bf16.gmra.mrb[0].mxu0 %v7036
        %v7204 = vpop.f32.mrb[0].mxu0
        %v7205 = vadd.f32 0.0, %v7204
        %v7206 = vpop.f32.mrb[0].mxu0
        %v7207 = vpop.f32.mrb[0].mxu0
        %v7208 = vadd.f32 0.0, %v7207
        %v7209 = vpop.f32.mrb[0].mxu0
        %7210 = vmatprep.mubr.bf16.mxu0 %v7039
        %7211 = vmatmul.mubr.bf16.gmra.mrb[0].mxu0 %v7038
        %v7212 = vpop.f32.mrb[0].mxu0
        %v7213 = vadd.f32 0.0, %v7212
        %v7214 = vpop.f32.mrb[0].mxu0
        %v7215 = vpop.f32.mrb[0].mxu0
        %v7216 = vadd.f32 0.0, %v7215
        %v7217 = vpop.f32.mrb[0].mxu0
        %7218 = vmatprep.mubr.bf16.mxu0 %v7041
        %7219 = vmatmul.mubr.bf16.gmra.mrb[0].mxu0 %v7040
        %v7220 = vpop.f32.mrb[0].mxu0
        %v7221 = vadd.f32 0.0, %v7220
        %v7222 = vpop.f32.mrb[0].mxu0
        %v7223 = vpop.f32.mrb[0].mxu0
        %v7224 = vadd.f32 0.0, %v7223
        %v7225 = vpop.f32.mrb[0].mxu0
        %7226 = vmatprep.mubr.bf16.mxu0 %v7043
        %7227 = vmatmul.mubr.bf16.gmra.mrb[0].mxu0 %v7042
        %v7228 = vpop.f32.mrb[0].mxu0
        %v7229 = vadd.f32 0.0, %v7228
        %v7230 = vpop.f32.mrb[0].mxu0
        %v7231 = vpop.f32.mrb[0].mxu0
        %v7232 = vadd.f32 0.0, %v7231
        %v7233 = vpop.f32.mrb[0].mxu0
        %7234 = vmatprep.mubr.bf16.mxu0 %v7045
        %7235 = vmatmul.mubr.bf16.gmra.mrb[0].mxu0 %v7044
        %v7236 = vpop.f32.mrb[0].mxu0
        %v7237 = vadd.f32 0.0, %v7236
        %v7238 = vpop.f32.mrb[0].mxu0
        %v7239 = vpop.f32.mrb[0].mxu0
        %v7240 = vadd.f32 0.0, %v7239
        %v7241 = vpop.f32.mrb[0].mxu0
        %7242 = vmatprep.mubr.bf16.mxu0 %v7047
        %7243 = vmatmul.mubr.bf16.gmra.mrb[0].mxu0 %v7046
        %v7244 = vpop.f32.mrb[0].mxu0
        %v7245 = vadd.f32 0.0, %v7244
        %v7246 = vpop.f32.mrb[0].mxu0
        %v7247 = vpop.f32.mrb[0].mxu0
        %v7248 = vadd.f32 0.0, %v7247
        %v7249 = vpop.f32.mrb[0].mxu0
        %7250 = vmatprep.mubr.bf16.mxu0 %v7049
        %7251 = vmatmul.mubr.bf16.gmra.mrb[0].mxu0 %v7048
        %v7252 = vpop.f32.mrb[0].mxu0
        %v7253 = vadd.f32 0.0, %v7252
        %v7254 = vpop.f32.mrb[0].mxu0
        %v7255 = vpop.f32.mrb[0].mxu0
        %v7256 = vadd.f32 0.0, %v7255
        %v7257 = vpop.f32.mrb[0].mxu0
        %7258 = vmatprep.mubr.bf16.mxu0 %v7051
        %7259 = vmatmul.mubr.bf16.gmra.mrb[0].mxu0 %v7050
        %v7260 = vpop.f32.mrb[0].mxu0
        %v7261 = vadd.f32 0.0, %v7260
        %v7262 = vpop.f32.mrb[0].mxu0
        %v7263 = vpop.f32.mrb[0].mxu0
        %v7264 = vadd.f32 0.0, %v7263
        %v7265 = vpop.f32.mrb[0].mxu0
        %7266 = vmatprep.mubr.bf16.mxu0 %v7053
        %7267 = vmatmul.mubr.bf16.gmra.mrb[0].mxu0 %v7052
        %v7268 = vpop.f32.mrb[0].mxu0
        %v7269 = vadd.f32 0.0, %v7268
        %v7270 = vpop.f32.mrb[0].mxu0
        %v7271 = vpop.f32.mrb[0].mxu0
        %v7272 = vadd.f32 0.0, %v7271
        %v7273 = vpop.f32.mrb[0].mxu0
        %7274 = vmatprep.mubr.bf16.mxu0 %v7055
        %7275 = vmatmul.mubr.bf16.gmra.mrb[0].mxu0 %v7054
        %v7276 = vpop.f32.mrb[0].mxu0
        %v7277 = vadd.f32 0.0, %v7276
        %v7278 = vpop.f32.mrb[0].mxu0
        %v7279 = vpop.f32.mrb[0].mxu0
        %v7280 = vadd.f32 0.0, %v7279
        %v7281 = vpop.f32.mrb[0].mxu0
        %7282 = vmatprep.mubr.bf16.mxu0 %v7057
        %7283 = vmatmul.mubr.bf16.gmra.mrb[0].mxu0 %v7056
        %v7284 = vpop.f32.mrb[0].mxu0
        %v7285 = vadd.f32 0.0, %v7284
        %v7286 = vpop.f32.mrb[0].mxu0
        %v7287 = vpop.f32.mrb[0].mxu0
        %v7288 = vadd.f32 0.0, %v7287
        %v7289 = vpop.f32.mrb[0].mxu0
        %7290 = vmatprep.mubr.bf16.mxu0 %v7059
        %7291 = vmatmul.mubr.bf16.gmra.mrb[0].mxu0 %v7058
        %v7292 = vpop.f32.mrb[0].mxu0
        %v7293 = vadd.f32 0.0, %v7292
        %v7294 = vpop.f32.mrb[0].mxu0
        %v7295 = vpop.f32.mrb[0].mxu0
        %v7296 = vadd.f32 0.0, %v7295
        %v7297 = vpop.f32.mrb[0].mxu0
        %7298 = vmatprep.mubr.bf16.mxu0 %v7061
        %7299 = vmatmul.mubr.bf16.gmra.mrb[0].mxu0 %v7060
        %v7300 = vpop.f32.mrb[0].mxu0
        %v7301 = vadd.f32 0.0, %v7300
        %v7302 = vpop.f32.mrb[0].mxu0
        %v7303 = vpop.f32.mrb[0].mxu0
        %v7304 = vadd.f32 0.0, %v7303
        %v7305 = vpop.f32.mrb[0].mxu0
        %7306 = vmatprep.mubr.bf16.mxu0 %v7063
        %7307 = vmatmul.mubr.bf16.gmra.mrb[0].mxu0 %v7062
        %v7308 = vpop.f32.mrb[0].mxu0
        %v7309 = vadd.f32 0.0, %v7308
        %v7310 = vpop.f32.mrb[0].mxu0
        %v7311 = vpop.f32.mrb[0].mxu0
        %v7312 = vadd.f32 0.0, %v7311
        %v7313 = vpop.f32.mrb[0].mxu0
        %7314 = vmatprep.mubr.bf16.mxu0 %v7065
        %7315 = vmatmul.mubr.bf16.gmra.mrb[0].mxu0 %v7064
        %v7316 = vpop.f32.mrb[0].mxu0
        %v7317 = vadd.f32 0.0, %v7316
        %v7318 = vpop.f32.mrb[0].mxu0
        %v7319 = vpop.f32.mrb[0].mxu0
        %v7320 = vadd.f32 0.0, %v7319
        %v7321 = vpop.f32.mrb[0].mxu0
        %7322 = vdwg.mxu0
        %7323 = vmatprep.subr.bf16.mxu0 %v1769
        %7324 = vmatpush1.bf16.xpose.msra.mxu0 %v1768
        %7325 = vmatprep.subr.bf16.mxu0 %v1771
        %7326 = vmatpush1.bf16.xpose.msra.mxu0 %v1770
        %7327 = vmatprep.subr.bf16.mxu0 0
        %7328 = vmatpush1.bf16.xpose.msra.mxu0 0
        %7329 = vmatprep.subr.bf16.mxu0 0
        %7330 = vmatpush1.bf16.xpose.msra.mxu0 0
        %7331 = vmatprep.subr.bf16.mxu0 0
        %7332 = vmatpush1.bf16.xpose.msra.mxu0 0
        %7333 = vmatprep.subr.bf16.mxu0 0
        %7334 = vmatpush1.bf16.xpose.msra.mxu0 0
        %7335 = vmatprep.subr.bf16.mxu0 0
        %7336 = vmatpush1.bf16.xpose.msra.mxu0 0
        %7337 = vmatprep.subr.bf16.mxu0 0
        %7338 = vmatpush1.bf16.xpose.msra.mxu0 0
        %7339 = vmatprep.subr.bf16.mxu0 0
        %7340 = vmatpush1.bf16.xpose.msra.mxu0 0
        %7341 = vmatprep.subr.bf16.mxu0 0
        %7342 = vmatpush1.bf16.xpose.msra.mxu0 0
        %7343 = vmatprep.subr.bf16.mxu0 0
        %7344 = vmatpush1.bf16.xpose.msra.mxu0 0
        %7345 = vmatprep.subr.bf16.mxu0 0
        %7346 = vmatpush1.bf16.xpose.msra.mxu0 0
        %7347 = vmatprep.subr.bf16.mxu0 0
        %7348 = vmatpush1.bf16.xpose.msra.mxu0 0
        %7349 = vmatprep.subr.bf16.mxu0 0
        %7350 = vmatpush1.bf16.xpose.msra.mxu0 0
        %7351 = vmatprep.subr.bf16.mxu0 0
        %7352 = vmatpush1.bf16.xpose.msra.mxu0 0
        %7353 = vmatprep.subr.bf16.mxu0 0
        %7354 = vmatpush1.bf16.xpose.msra.mxu0 0
        %7355 = vmatprep.mubr.bf16.mxu0 %v7067
        %7356 = vmatmul.mubr.bf16.gmra.mrb[0].mxu0 %v7066
        %v7357 = vpop.f32.mrb[0].mxu0
        %v7358 = vadd.f32 0.0, %v7357
        %v7359 = vpop.f32.mrb[0].mxu0
        %v7360 = vpop.f32.mrb[0].mxu0
        %v7361 = vadd.f32 0.0, %v7360
        %v7362 = vpop.f32.mrb[0].mxu0
        %7363 = vmatprep.mubr.bf16.mxu0 %v7069
        %7364 = vmatmul.mubr.bf16.gmra.mrb[0].mxu0 %v7068
        %v7365 = vpop.f32.mrb[0].mxu0
        %v7366 = vadd.f32 0.0, %v7365
        %v7367 = vpop.f32.mrb[0].mxu0
        %v7368 = vpop.f32.mrb[0].mxu0
        %v7369 = vadd.f32 0.0, %v7368
        %v7370 = vpop.f32.mrb[0].mxu0
        %7371 = vmatprep.mubr.bf16.mxu0 %v7071
        %7372 = vmatmul.mubr.bf16.gmra.mrb[0].mxu0 %v7070
        %v7373 = vpop.f32.mrb[0].mxu0
        %v7374 = vadd.f32 0.0, %v7373
        %v7375 = vpop.f32.mrb[0].mxu0
        %v7376 = vpop.f32.mrb[0].mxu0
        %v7377 = vadd.f32 0.0, %v7376
        %v7378 = vpop.f32.mrb[0].mxu0
        %7379 = vmatprep.mubr.bf16.mxu0 %v7073
        %7380 = vmatmul.mubr.bf16.gmra.mrb[0].mxu0 %v7072
        %v7381 = vpop.f32.mrb[0].mxu0
        %v7382 = vadd.f32 0.0, %v7381
        %v7383 = vpop.f32.mrb[0].mxu0
        %v7384 = vpop.f32.mrb[0].mxu0
        %v7385 = vadd.f32 0.0, %v7384
        %v7386 = vpop.f32.mrb[0].mxu0
        %7387 = vmatprep.mubr.bf16.mxu0 %v7075
        %7388 = vmatmul.mubr.bf16.gmra.mrb[0].mxu0 %v7074
        %v7389 = vpop.f32.mrb[0].mxu0
        %v7390 = vadd.f32 0.0, %v7389
        %v7391 = vpop.f32.mrb[0].mxu0
        %v7392 = vpop.f32.mrb[0].mxu0
        %v7393 = vadd.f32 0.0, %v7392
        %v7394 = vpop.f32.mrb[0].mxu0
        %7395 = vmatprep.mubr.bf16.mxu0 %v7077
        %7396 = vmatmul.mubr.bf16.gmra.mrb[0].mxu0 %v7076
        %v7397 = vpop.f32.mrb[0].mxu0
        %v7398 = vadd.f32 0.0, %v7397
        %v7399 = vpop.f32.mrb[0].mxu0
        %v7400 = vpop.f32.mrb[0].mxu0
        %v7401 = vadd.f32 0.0, %v7400
        %v7402 = vpop.f32.mrb[0].mxu0
        %7403 = vmatprep.mubr.bf16.mxu0 %v7079
        %7404 = vmatmul.mubr.bf16.gmra.mrb[0].mxu0 %v7078
        %v7405 = vpop.f32.mrb[0].mxu0
        %v7406 = vadd.f32 0.0, %v7405
        %v7407 = vpop.f32.mrb[0].mxu0
        %v7408 = vpop.f32.mrb[0].mxu0
        %v7409 = vadd.f32 0.0, %v7408
        %v7410 = vpop.f32.mrb[0].mxu0
        %7411 = vmatprep.mubr.bf16.mxu0 %v7081
        %7412 = vmatmul.mubr.bf16.gmra.mrb[0].mxu0 %v7080
        %v7413 = vpop.f32.mrb[0].mxu0
        %v7414 = vadd.f32 0.0, %v7413
        %v7415 = vpop.f32.mrb[0].mxu0
        %v7416 = vpop.f32.mrb[0].mxu0
        %v7417 = vadd.f32 0.0, %v7416
        %v7418 = vpop.f32.mrb[0].mxu0
        %7419 = vmatprep.mubr.bf16.mxu0 %v7083
        %7420 = vmatmul.mubr.bf16.gmra.mrb[0].mxu0 %v7082
        %v7421 = vpop.f32.mrb[0].mxu0
        %v7422 = vadd.f32 0.0, %v7421
        %v7423 = vpop.f32.mrb[0].mxu0
        %v7424 = vpop.f32.mrb[0].mxu0
        %v7425 = vadd.f32 0.0, %v7424
        %v7426 = vpop.f32.mrb[0].mxu0
        %7427 = vmatprep.mubr.bf16.mxu0 %v7085
        %7428 = vmatmul.mubr.bf16.gmra.mrb[0].mxu0 %v7084
        %v7429 = vpop.f32.mrb[0].mxu0
        %v7430 = vadd.f32 0.0, %v7429
        %v7431 = vpop.f32.mrb[0].mxu0
        %v7432 = vpop.f32.mrb[0].mxu0
        %v7433 = vadd.f32 0.0, %v7432
        %v7434 = vpop.f32.mrb[0].mxu0
        %7435 = vmatprep.mubr.bf16.mxu0 %v7087
        %7436 = vmatmul.mubr.bf16.gmra.mrb[0].mxu0 %v7086
        %v7437 = vpop.f32.mrb[0].mxu0
        %v7438 = vadd.f32 0.0, %v7437
        %v7439 = vpop.f32.mrb[0].mxu0
        %v7440 = vpop.f32.mrb[0].mxu0
        %v7441 = vadd.f32 0.0, %v7440
        %v7442 = vpop.f32.mrb[0].mxu0
        %7443 = vmatprep.mubr.bf16.mxu0 %v7089
        %7444 = vmatmul.mubr.bf16.gmra.mrb[0].mxu0 %v7088
        %v7445 = vpop.f32.mrb[0].mxu0
        %v7446 = vadd.f32 0.0, %v7445
        %v7447 = vpop.f32.mrb[0].mxu0
        %v7448 = vpop.f32.mrb[0].mxu0
        %v7449 = vadd.f32 0.0, %v7448
        %v7450 = vpop.f32.mrb[0].mxu0
        %7451 = vmatprep.mubr.bf16.mxu0 %v7091
        %7452 = vmatmul.mubr.bf16.gmra.mrb[0].mxu0 %v7090
        %v7453 = vpop.f32.mrb[0].mxu0
        %v7454 = vadd.f32 0.0, %v7453
        %v7455 = vpop.f32.mrb[0].mxu0
        %v7456 = vpop.f32.mrb[0].mxu0
        %v7457 = vadd.f32 0.0, %v7456
        %v7458 = vpop.f32.mrb[0].mxu0
        %7459 = vmatprep.mubr.bf16.mxu0 %v7093
        %7460 = vmatmul.mubr.bf16.gmra.mrb[0].mxu0 %v7092
        %v7461 = vpop.f32.mrb[0].mxu0
        %v7462 = vadd.f32 0.0, %v7461
        %v7463 = vpop.f32.mrb[0].mxu0
        %v7464 = vpop.f32.mrb[0].mxu0
        %v7465 = vadd.f32 0.0, %v7464
        %v7466 = vpop.f32.mrb[0].mxu0
        %7467 = vmatprep.mubr.bf16.mxu0 %v7095
        %7468 = vmatmul.mubr.bf16.gmra.mrb[0].mxu0 %v7094
        %v7469 = vpop.f32.mrb[0].mxu0
        %v7470 = vadd.f32 0.0, %v7469
        %v7471 = vpop.f32.mrb[0].mxu0
        %v7472 = vpop.f32.mrb[0].mxu0
        %v7473 = vadd.f32 0.0, %v7472
        %v7474 = vpop.f32.mrb[0].mxu0
        %7475 = vmatprep.mubr.bf16.mxu0 %v7097
        %7476 = vmatmul.mubr.bf16.gmra.mrb[0].mxu0 %v7096
        %v7477 = vpop.f32.mrb[0].mxu0
        %v7478 = vadd.f32 0.0, %v7477
        %v7479 = vpop.f32.mrb[0].mxu0
        %v7480 = vpop.f32.mrb[0].mxu0
        %v7481 = vadd.f32 0.0, %v7480
        %v7482 = vpop.f32.mrb[0].mxu0
        %7483 = vdwg.mxu0
        %7484 = vmatprep.subr.bf16.mxu0 %v1773
        %7485 = vmatpush1.bf16.xpose.msra.mxu0 %v1772
        %7486 = vmatprep.subr.bf16.mxu0 %v1775
        %7487 = vmatpush1.bf16.xpose.msra.mxu0 %v1774
        %7488 = vmatprep.subr.bf16.mxu0 0
        %7489 = vmatpush1.bf16.xpose.msra.mxu0 0
        %7490 = vmatprep.subr.bf16.mxu0 0
        %7491 = vmatpush1.bf16.xpose.msra.mxu0 0
        %7492 = vmatprep.subr.bf16.mxu0 0
        %7493 = vmatpush1.bf16.xpose.msra.mxu0 0
        %7494 = vmatprep.subr.bf16.mxu0 0
        %7495 = vmatpush1.bf16.xpose.msra.mxu0 0
        %7496 = vmatprep.subr.bf16.mxu0 0
        %7497 = vmatpush1.bf16.xpose.msra.mxu0 0
        %7498 = vmatprep.subr.bf16.mxu0 0
        %7499 = vmatpush1.bf16.xpose.msra.mxu0 0
        %7500 = vmatprep.subr.bf16.mxu0 0
        %7501 = vmatpush1.bf16.xpose.msra.mxu0 0
        %7502 = vmatprep.subr.bf16.mxu0 0
        %7503 = vmatpush1.bf16.xpose.msra.mxu0 0
        %7504 = vmatprep.subr.bf16.mxu0 0
        %7505 = vmatpush1.bf16.xpose.msra.mxu0 0
        %7506 = vmatprep.subr.bf16.mxu0 0
        %7507 = vmatpush1.bf16.xpose.msra.mxu0 0
        %7508 = vmatprep.subr.bf16.mxu0 0
        %7509 = vmatpush1.bf16.xpose.msra.mxu0 0
        %7510 = vmatprep.subr.bf16.mxu0 0
        %7511 = vmatpush1.bf16.xpose.msra.mxu0 0
        %7512 = vmatprep.subr.bf16.mxu0 0
        %7513 = vmatpush1.bf16.xpose.msra.mxu0 0
        %7514 = vmatprep.subr.bf16.mxu0 0
        %7515 = vmatpush1.bf16.xpose.msra.mxu0 0
        %7516 = vmatprep.mubr.bf16.mxu0 %v7099
        %7517 = vmatmul.mubr.bf16.gmra.mrb[0].mxu0 %v7098
        %v7518 = vpop.f32.mrb[0].mxu0
        %v7519 = vadd.f32 0.0, %v7518
        %v7520 = vpop.f32.mrb[0].mxu0
        %v7521 = vpop.f32.mrb[0].mxu0
        %v7522 = vadd.f32 0.0, %v7521
        %v7523 = vpop.f32.mrb[0].mxu0
        %7524 = vmatprep.mubr.bf16.mxu0 %v7101
        %7525 = vmatmul.mubr.bf16.gmra.mrb[0].mxu0 %v7100
        %v7526 = vpop.f32.mrb[0].mxu0
        %v7527 = vadd.f32 0.0, %v7526
        %v7528 = vpop.f32.mrb[0].mxu0
        %v7529 = vpop.f32.mrb[0].mxu0
        %v7530 = vadd.f32 0.0, %v7529
        %v7531 = vpop.f32.mrb[0].mxu0
        %7532 = vmatprep.mubr.bf16.mxu0 %v7103
        %7533 = vmatmul.mubr.bf16.gmra.mrb[0].mxu0 %v7102
        %v7534 = vpop.f32.mrb[0].mxu0
        %v7535 = vadd.f32 0.0, %v7534
        %v7536 = vpop.f32.mrb[0].mxu0
        %v7537 = vpop.f32.mrb[0].mxu0
        %v7538 = vadd.f32 0.0, %v7537
        %v7539 = vpop.f32.mrb[0].mxu0
        %7540 = vmatprep.mubr.bf16.mxu0 %v7105
        %7541 = vmatmul.mubr.bf16.gmra.mrb[0].mxu0 %v7104
        %v7542 = vpop.f32.mrb[0].mxu0
        %v7543 = vadd.f32 0.0, %v7542
        %v7544 = vpop.f32.mrb[0].mxu0
        %v7545 = vpop.f32.mrb[0].mxu0
        %v7546 = vadd.f32 0.0, %v7545
        %v7547 = vpop.f32.mrb[0].mxu0
        %7548 = vmatprep.mubr.bf16.mxu0 %v7107
        %7549 = vmatmul.mubr.bf16.gmra.mrb[0].mxu0 %v7106
        %v7550 = vpop.f32.mrb[0].mxu0
        %v7551 = vadd.f32 0.0, %v7550
        %v7552 = vpop.f32.mrb[0].mxu0
        %v7553 = vpop.f32.mrb[0].mxu0
        %v7554 = vadd.f32 0.0, %v7553
        %v7555 = vpop.f32.mrb[0].mxu0
        %7556 = vmatprep.mubr.bf16.mxu0 %v7109
        %7557 = vmatmul.mubr.bf16.gmra.mrb[0].mxu0 %v7108
        %v7558 = vpop.f32.mrb[0].mxu0
        %v7559 = vadd.f32 0.0, %v7558
        %v7560 = vpop.f32.mrb[0].mxu0
        %v7561 = vpop.f32.mrb[0].mxu0
        %v7562 = vadd.f32 0.0, %v7561
        %v7563 = vpop.f32.mrb[0].mxu0
        %7564 = vmatprep.mubr.bf16.mxu0 %v7111
        %7565 = vmatmul.mubr.bf16.gmra.mrb[0].mxu0 %v7110
        %v7566 = vpop.f32.mrb[0].mxu0
        %v7567 = vadd.f32 0.0, %v7566
        %v7568 = vpop.f32.mrb[0].mxu0
        %v7569 = vpop.f32.mrb[0].mxu0
        %v7570 = vadd.f32 0.0, %v7569
        %v7571 = vpop.f32.mrb[0].mxu0
        %7572 = vmatprep.mubr.bf16.mxu0 %v7113
        %7573 = vmatmul.mubr.bf16.gmra.mrb[0].mxu0 %v7112
        %v7574 = vpop.f32.mrb[0].mxu0
        %v7575 = vadd.f32 0.0, %v7574
        %v7576 = vpop.f32.mrb[0].mxu0
        %v7577 = vpop.f32.mrb[0].mxu0
        %v7578 = vadd.f32 0.0, %v7577
        %v7579 = vpop.f32.mrb[0].mxu0
        %7580 = vmatprep.mubr.bf16.mxu0 %v7115
        %7581 = vmatmul.mubr.bf16.gmra.mrb[0].mxu0 %v7114
        %v7582 = vpop.f32.mrb[0].mxu0
        %v7583 = vadd.f32 0.0, %v7582
        %v7584 = vpop.f32.mrb[0].mxu0
        %v7585 = vpop.f32.mrb[0].mxu0
        %v7586 = vadd.f32 0.0, %v7585
        %v7587 = vpop.f32.mrb[0].mxu0
        %7588 = vmatprep.mubr.bf16.mxu0 %v7117
        %7589 = vmatmul.mubr.bf16.gmra.mrb[0].mxu0 %v7116
        %v7590 = vpop.f32.mrb[0].mxu0
        %v7591 = vadd.f32 0.0, %v7590
        %v7592 = vpop.f32.mrb[0].mxu0
        %v7593 = vpop.f32.mrb[0].mxu0
        %v7594 = vadd.f32 0.0, %v7593
        %v7595 = vpop.f32.mrb[0].mxu0
        %7596 = vmatprep.mubr.bf16.mxu0 %v7119
        %7597 = vmatmul.mubr.bf16.gmra.mrb[0].mxu0 %v7118
        %v7598 = vpop.f32.mrb[0].mxu0
        %v7599 = vadd.f32 0.0, %v7598
        %v7600 = vpop.f32.mrb[0].mxu0
        %v7601 = vpop.f32.mrb[0].mxu0
        %v7602 = vadd.f32 0.0, %v7601
        %v7603 = vpop.f32.mrb[0].mxu0
        %7604 = vmatprep.mubr.bf16.mxu0 %v7121
        %7605 = vmatmul.mubr.bf16.gmra.mrb[0].mxu0 %v7120
        %v7606 = vpop.f32.mrb[0].mxu0
        %v7607 = vadd.f32 0.0, %v7606
        %v7608 = vpop.f32.mrb[0].mxu0
        %v7609 = vpop.f32.mrb[0].mxu0
        %v7610 = vadd.f32 0.0, %v7609
        %v7611 = vpop.f32.mrb[0].mxu0
        %7612 = vmatprep.mubr.bf16.mxu0 %v7123
        %7613 = vmatmul.mubr.bf16.gmra.mrb[0].mxu0 %v7122
        %v7614 = vpop.f32.mrb[0].mxu0
        %v7615 = vadd.f32 0.0, %v7614
        %v7616 = vpop.f32.mrb[0].mxu0
        %v7617 = vpop.f32.mrb[0].mxu0
        %v7618 = vadd.f32 0.0, %v7617
        %v7619 = vpop.f32.mrb[0].mxu0
        %7620 = vmatprep.mubr.bf16.mxu0 %v7125
        %7621 = vmatmul.mubr.bf16.gmra.mrb[0].mxu0 %v7124
        %v7622 = vpop.f32.mrb[0].mxu0
        %v7623 = vadd.f32 0.0, %v7622
        %v7624 = vpop.f32.mrb[0].mxu0
        %v7625 = vpop.f32.mrb[0].mxu0
        %v7626 = vadd.f32 0.0, %v7625
        %v7627 = vpop.f32.mrb[0].mxu0
        %7628 = vmatprep.mubr.bf16.mxu0 %v7127
        %7629 = vmatmul.mubr.bf16.gmra.mrb[0].mxu0 %v7126
        %v7630 = vpop.f32.mrb[0].mxu0
        %v7631 = vadd.f32 0.0, %v7630
        %v7632 = vpop.f32.mrb[0].mxu0
        %v7633 = vpop.f32.mrb[0].mxu0
        %v7634 = vadd.f32 0.0, %v7633
        %v7635 = vpop.f32.mrb[0].mxu0
        %7636 = vmatprep.mubr.bf16.mxu0 %v7129
        %7637 = vmatmul.mubr.bf16.gmra.mrb[0].mxu0 %v7128
        %v7638 = vpop.f32.mrb[0].mxu0
        %v7639 = vadd.f32 0.0, %v7638
        %v7640 = vpop.f32.mrb[0].mxu0
        %v7641 = vpop.f32.mrb[0].mxu0
        %v7642 = vadd.f32 0.0, %v7641
        %v7643 = vpop.f32.mrb[0].mxu0
        %7644 = vdwg.mxu0
        %7645 = vmatprep.subr.bf16.mxu0 %v1777
        %7646 = vmatpush1.bf16.xpose.msra.mxu0 %v1776
        %7647 = vmatprep.subr.bf16.mxu0 %v1779
        %7648 = vmatpush1.bf16.xpose.msra.mxu0 %v1778
        %7649 = vmatprep.subr.bf16.mxu0 0
        %7650 = vmatpush1.bf16.xpose.msra.mxu0 0
        %7651 = vmatprep.subr.bf16.mxu0 0
        %7652 = vmatpush1.bf16.xpose.msra.mxu0 0
        %7653 = vmatprep.subr.bf16.mxu0 0
        %7654 = vmatpush1.bf16.xpose.msra.mxu0 0
        %7655 = vmatprep.subr.bf16.mxu0 0
        %7656 = vmatpush1.bf16.xpose.msra.mxu0 0
        %7657 = vmatprep.subr.bf16.mxu0 0
        %7658 = vmatpush1.bf16.xpose.msra.mxu0 0
        %7659 = vmatprep.subr.bf16.mxu0 0
        %7660 = vmatpush1.bf16.xpose.msra.mxu0 0
        %7661 = vmatprep.subr.bf16.mxu0 0
        %7662 = vmatpush1.bf16.xpose.msra.mxu0 0
        %7663 = vmatprep.subr.bf16.mxu0 0
        %7664 = vmatpush1.bf16.xpose.msra.mxu0 0
        %7665 = vmatprep.subr.bf16.mxu0 0
        %7666 = vmatpush1.bf16.xpose.msra.mxu0 0
        %7667 = vmatprep.subr.bf16.mxu0 0
        %7668 = vmatpush1.bf16.xpose.msra.mxu0 0
        %7669 = vmatprep.subr.bf16.mxu0 0
        %7670 = vmatpush1.bf16.xpose.msra.mxu0 0
        %7671 = vmatprep.subr.bf16.mxu0 0
        %7672 = vmatpush1.bf16.xpose.msra.mxu0 0
        %7673 = vmatprep.subr.bf16.mxu0 0
        %7674 = vmatpush1.bf16.xpose.msra.mxu0 0
        %7675 = vmatprep.subr.bf16.mxu0 0
        %7676 = vmatpush1.bf16.xpose.msra.mxu0 0
        %7677 = vmatprep.mubr.bf16.mxu0 %v7131
        %7678 = vmatmul.mubr.bf16.gmra.mrb[0].mxu0 %v7130
        %v7679 = vpop.f32.mrb[0].mxu0
        %v7680 = vadd.f32 0.0, %v7679
        %v7681 = vpop.f32.mrb[0].mxu0
        %v7682 = vpop.f32.mrb[0].mxu0
        %v7683 = vadd.f32 0.0, %v7682
        %v7684 = vpop.f32.mrb[0].mxu0
        %7685 = vmatprep.mubr.bf16.mxu0 %v7133
        %7686 = vmatmul.mubr.bf16.gmra.mrb[0].mxu0 %v7132
        %v7687 = vpop.f32.mrb[0].mxu0
        %v7688 = vadd.f32 0.0, %v7687
        %v7689 = vpop.f32.mrb[0].mxu0
        %v7690 = vpop.f32.mrb[0].mxu0
        %v7691 = vadd.f32 0.0, %v7690
        %v7692 = vpop.f32.mrb[0].mxu0
        %7693 = vmatprep.mubr.bf16.mxu0 %v7135
        %7694 = vmatmul.mubr.bf16.gmra.mrb[0].mxu0 %v7134
        %v7695 = vpop.f32.mrb[0].mxu0
        %v7696 = vadd.f32 0.0, %v7695
        %v7697 = vpop.f32.mrb[0].mxu0
        %v7698 = vpop.f32.mrb[0].mxu0
        %v7699 = vadd.f32 0.0, %v7698
        %v7700 = vpop.f32.mrb[0].mxu0
        %7701 = vmatprep.mubr.bf16.mxu0 %v7137
        %7702 = vmatmul.mubr.bf16.gmra.mrb[0].mxu0 %v7136
        %v7703 = vpop.f32.mrb[0].mxu0
        %v7704 = vadd.f32 0.0, %v7703
        %v7705 = vpop.f32.mrb[0].mxu0
        %v7706 = vpop.f32.mrb[0].mxu0
        %v7707 = vadd.f32 0.0, %v7706
        %v7708 = vpop.f32.mrb[0].mxu0
        %7709 = vmatprep.mubr.bf16.mxu0 %v7139
        %7710 = vmatmul.mubr.bf16.gmra.mrb[0].mxu0 %v7138
        %v7711 = vpop.f32.mrb[0].mxu0
        %v7712 = vadd.f32 0.0, %v7711
        %v7713 = vpop.f32.mrb[0].mxu0
        %v7714 = vpop.f32.mrb[0].mxu0
        %v7715 = vadd.f32 0.0, %v7714
        %v7716 = vpop.f32.mrb[0].mxu0
        %7717 = vmatprep.mubr.bf16.mxu0 %v7141
        %7718 = vmatmul.mubr.bf16.gmra.mrb[0].mxu0 %v7140
        %v7719 = vpop.f32.mrb[0].mxu0
        %v7720 = vadd.f32 0.0, %v7719
        %v7721 = vpop.f32.mrb[0].mxu0
        %v7722 = vpop.f32.mrb[0].mxu0
        %v7723 = vadd.f32 0.0, %v7722
        %v7724 = vpop.f32.mrb[0].mxu0
        %7725 = vmatprep.mubr.bf16.mxu0 %v7143
        %7726 = vmatmul.mubr.bf16.gmra.mrb[0].mxu0 %v7142
        %v7727 = vpop.f32.mrb[0].mxu0
        %v7728 = vadd.f32 0.0, %v7727
        %v7729 = vpop.f32.mrb[0].mxu0
        %v7730 = vpop.f32.mrb[0].mxu0
        %v7731 = vadd.f32 0.0, %v7730
        %v7732 = vpop.f32.mrb[0].mxu0
        %7733 = vmatprep.mubr.bf16.mxu0 %v7145
        %7734 = vmatmul.mubr.bf16.gmra.mrb[0].mxu0 %v7144
        %v7735 = vpop.f32.mrb[0].mxu0
        %v7736 = vadd.f32 0.0, %v7735
        %v7737 = vpop.f32.mrb[0].mxu0
        %v7738 = vpop.f32.mrb[0].mxu0
        %v7739 = vadd.f32 0.0, %v7738
        %v7740 = vpop.f32.mrb[0].mxu0
        %7741 = vmatprep.mubr.bf16.mxu0 %v7147
        %7742 = vmatmul.mubr.bf16.gmra.mrb[0].mxu0 %v7146
        %v7743 = vpop.f32.mrb[0].mxu0
        %v7744 = vadd.f32 0.0, %v7743
        %v7745 = vpop.f32.mrb[0].mxu0
        %v7746 = vpop.f32.mrb[0].mxu0
        %v7747 = vadd.f32 0.0, %v7746
        %v7748 = vpop.f32.mrb[0].mxu0
        %7749 = vmatprep.mubr.bf16.mxu0 %v7149
        %7750 = vmatmul.mubr.bf16.gmra.mrb[0].mxu0 %v7148
        %v7751 = vpop.f32.mrb[0].mxu0
        %v7752 = vadd.f32 0.0, %v7751
        %v7753 = vpop.f32.mrb[0].mxu0
        %v7754 = vpop.f32.mrb[0].mxu0
        %v7755 = vadd.f32 0.0, %v7754
        %v7756 = vpop.f32.mrb[0].mxu0
        %7757 = vmatprep.mubr.bf16.mxu0 %v7151
        %7758 = vmatmul.mubr.bf16.gmra.mrb[0].mxu0 %v7150
        %v7759 = vpop.f32.mrb[0].mxu0
        %v7760 = vadd.f32 0.0, %v7759
        %v7761 = vpop.f32.mrb[0].mxu0
        %v7762 = vpop.f32.mrb[0].mxu0
        %v7763 = vadd.f32 0.0, %v7762
        %v7764 = vpop.f32.mrb[0].mxu0
        %7765 = vmatprep.mubr.bf16.mxu0 %v7153
        %7766 = vmatmul.mubr.bf16.gmra.mrb[0].mxu0 %v7152
        %v7767 = vpop.f32.mrb[0].mxu0
        %v7768 = vadd.f32 0.0, %v7767
        %v7769 = vpop.f32.mrb[0].mxu0
        %v7770 = vpop.f32.mrb[0].mxu0
        %v7771 = vadd.f32 0.0, %v7770
        %v7772 = vpop.f32.mrb[0].mxu0
        %7773 = vmatprep.mubr.bf16.mxu0 %v7155
        %7774 = vmatmul.mubr.bf16.gmra.mrb[0].mxu0 %v7154
        %v7775 = vpop.f32.mrb[0].mxu0
        %v7776 = vadd.f32 0.0, %v7775
        %v7777 = vpop.f32.mrb[0].mxu0
        %v7778 = vpop.f32.mrb[0].mxu0
        %v7779 = vadd.f32 0.0, %v7778
        %v7780 = vpop.f32.mrb[0].mxu0
        %7781 = vmatprep.mubr.bf16.mxu0 %v7157
        %7782 = vmatmul.mubr.bf16.gmra.mrb[0].mxu0 %v7156
        %v7783 = vpop.f32.mrb[0].mxu0
        %v7784 = vadd.f32 0.0, %v7783
        %v7785 = vpop.f32.mrb[0].mxu0
        %v7786 = vpop.f32.mrb[0].mxu0
        %v7787 = vadd.f32 0.0, %v7786
        %v7788 = vpop.f32.mrb[0].mxu0
        %7789 = vmatprep.mubr.bf16.mxu0 %v7159
        %7790 = vmatmul.mubr.bf16.gmra.mrb[0].mxu0 %v7158
        %v7791 = vpop.f32.mrb[0].mxu0
        %v7792 = vadd.f32 0.0, %v7791
        %v7793 = vpop.f32.mrb[0].mxu0
        %v7794 = vpop.f32.mrb[0].mxu0
        %v7795 = vadd.f32 0.0, %v7794
        %v7796 = vpop.f32.mrb[0].mxu0
        %7797 = vmatprep.mubr.bf16.mxu0 %v7161
        %7798 = vmatmul.mubr.bf16.gmra.mrb[0].mxu0 %v7160
        %v7799 = vpop.f32.mrb[0].mxu0
        %v7800 = vadd.f32 0.0, %v7799
        %v7801 = vpop.f32.mrb[0].mxu0
        %v7802 = vpop.f32.mrb[0].mxu0
        %v7803 = vadd.f32 0.0, %v7802
        %v7804 = vpop.f32.mrb[0].mxu0
        %7805 = vdwg.mxu0
        %v7806 = vadd.f32 %v6906, %v7197
        %v7807 = vadd.f32 %v6907, %v7200
        %v7808 = vadd.f32 %v6908, %v7205
        %v7809 = vadd.f32 %v6909, %v7208
        %v7810 = vadd.f32 %v6910, %v7213
        %v7811 = vadd.f32 %v6911, %v7216
        %v7812 = vadd.f32 %v6912, %v7221
        %v7813 = vadd.f32 %v6913, %v7224
        %v7814 = vadd.f32 %v6914, %v7229
        %v7815 = vadd.f32 %v6915, %v7232
        %v7816 = vadd.f32 %v6916, %v7237
        %v7817 = vadd.f32 %v6917, %v7240
        %v7818 = vadd.f32 %v6918, %v7245
        %v7819 = vadd.f32 %v6919, %v7248
        %v7820 = vadd.f32 %v6920, %v7253
        %v7821 = vadd.f32 %v6921, %v7256
        %v7822 = vadd.f32 %v6922, %v7261
        %v7823 = vadd.f32 %v6923, %v7264
        %v7824 = vadd.f32 %v6924, %v7269
        %v7825 = vadd.f32 %v6925, %v7272
        %v7826 = vadd.f32 %v6926, %v7277
        %v7827 = vadd.f32 %v6927, %v7280
        %v7828 = vadd.f32 %v6928, %v7285
        %v7829 = vadd.f32 %v6929, %v7288
        %v7830 = vadd.f32 %v6930, %v7293
        %v7831 = vadd.f32 %v6931, %v7296
        %v7832 = vadd.f32 %v6932, %v7301
        %v7833 = vadd.f32 %v6933, %v7304
        %v7834 = vadd.f32 %v6934, %v7309
        %v7835 = vadd.f32 %v6935, %v7312
        %v7836 = vadd.f32 %v6936, %v7317
        %v7837 = vadd.f32 %v6937, %v7320
        %v7838 = vadd.f32 %v6938, %v7358
        %v7839 = vadd.f32 %v6939, %v7361
        %v7840 = vadd.f32 %v6940, %v7366
        %v7841 = vadd.f32 %v6941, %v7369
        %v7842 = vadd.f32 %v6942, %v7374
        %v7843 = vadd.f32 %v6943, %v7377
        %v7844 = vadd.f32 %v6944, %v7382
        %v7845 = vadd.f32 %v6945, %v7385
        %v7846 = vadd.f32 %v6946, %v7390
        %v7847 = vadd.f32 %v6947, %v7393
        %v7848 = vadd.f32 %v6948, %v7398
        %v7849 = vadd.f32 %v6949, %v7401
        %v7850 = vadd.f32 %v6950, %v7406
        %v7851 = vadd.f32 %v6951, %v7409
        %v7852 = vadd.f32 %v6952, %v7414
        %v7853 = vadd.f32 %v6953, %v7417
        %v7854 = vadd.f32 %v6954, %v7422
        %v7855 = vadd.f32 %v6955, %v7425
        %v7856 = vadd.f32 %v6956, %v7430
        %v7857 = vadd.f32 %v6957, %v7433
        %v7858 = vadd.f32 %v6958, %v7438
        %v7859 = vadd.f32 %v6959, %v7441
        %v7860 = vadd.f32 %v6960, %v7446
        %v7861 = vadd.f32 %v6961, %v7449
        %v7862 = vadd.f32 %v6962, %v7454
        %v7863 = vadd.f32 %v6963, %v7457
        %v7864 = vadd.f32 %v6964, %v7462
        %v7865 = vadd.f32 %v6965, %v7465
        %v7866 = vadd.f32 %v6966, %v7470
        %v7867 = vadd.f32 %v6967, %v7473
        %v7868 = vadd.f32 %v6968, %v7478
        %v7869 = vadd.f32 %v6969, %v7481
        %v7870 = vadd.f32 %v6970, %v7519
        %v7871 = vadd.f32 %v6971, %v7522
        %v7872 = vadd.f32 %v6972, %v7527
        %v7873 = vadd.f32 %v6973, %v7530
        %v7874 = vadd.f32 %v6974, %v7535
        %v7875 = vadd.f32 %v6975, %v7538
        %v7876 = vadd.f32 %v6976, %v7543
        %v7877 = vadd.f32 %v6977, %v7546
        %v7878 = vadd.f32 %v6978, %v7551
        %v7879 = vadd.f32 %v6979, %v7554
        %v7880 = vadd.f32 %v6980, %v7559
        %v7881 = vadd.f32 %v6981, %v7562
        %v7882 = vadd.f32 %v6982, %v7567
        %v7883 = vadd.f32 %v6983, %v7570
        %v7884 = vadd.f32 %v6984, %v7575
        %v7885 = vadd.f32 %v6985, %v7578
        %v7886 = vadd.f32 %v6986, %v7583
        %v7887 = vadd.f32 %v6987, %v7586
        %v7888 = vadd.f32 %v6988, %v7591
        %v7889 = vadd.f32 %v6989, %v7594
        %v7890 = vadd.f32 %v6990, %v7599
        %v7891 = vadd.f32 %v6991, %v7602
        %v7892 = vadd.f32 %v6992, %v7607
        %v7893 = vadd.f32 %v6993, %v7610
        %v7894 = vadd.f32 %v6994, %v7615
        %v7895 = vadd.f32 %v6995, %v7618
        %v7896 = vadd.f32 %v6996, %v7623
        %v7897 = vadd.f32 %v6997, %v7626
        %v7898 = vadd.f32 %v6998, %v7631
        %v7899 = vadd.f32 %v6999, %v7634
        %v7900 = vadd.f32 %v7000, %v7639
        %v7901 = vadd.f32 %v7001, %v7642
        %v7902 = vadd.f32 %v7002, %v7680
        %v7903 = vadd.f32 %v7003, %v7683
        %v7904 = vadd.f32 %v7004, %v7688
        %v7905 = vadd.f32 %v7005, %v7691
        %v7906 = vadd.f32 %v7006, %v7696
        %v7907 = vadd.f32 %v7007, %v7699
        %v7908 = vadd.f32 %v7008, %v7704
        %v7909 = vadd.f32 %v7009, %v7707
        %v7910 = vadd.f32 %v7010, %v7712
        %v7911 = vadd.f32 %v7011, %v7715
        %v7912 = vadd.f32 %v7012, %v7720
        %v7913 = vadd.f32 %v7013, %v7723
        %v7914 = vadd.f32 %v7014, %v7728
        %v7915 = vadd.f32 %v7015, %v7731
        %v7916 = vadd.f32 %v7016, %v7736
        %v7917 = vadd.f32 %v7017, %v7739
        %v7918 = vadd.f32 %v7018, %v7744
        %v7919 = vadd.f32 %v7019, %v7747
        %v7920 = vadd.f32 %v7020, %v7752
        %v7921 = vadd.f32 %v7021, %v7755
        %v7922 = vadd.f32 %v7022, %v7760
        %v7923 = vadd.f32 %v7023, %v7763
        %v7924 = vadd.f32 %v7024, %v7768
        %v7925 = vadd.f32 %v7025, %v7771
        %v7926 = vadd.f32 %v7026, %v7776
        %v7927 = vadd.f32 %v7027, %v7779
        %v7928 = vadd.f32 %v7028, %v7784
        %v7929 = vadd.f32 %v7029, %v7787
        %v7930 = vadd.f32 %v7030, %v7792
        %v7931 = vadd.f32 %v7031, %v7795
        %v7932 = vadd.f32 %v7032, %v7800
        %v7933 = vadd.f32 %v7033, %v7803
        %7934 = vst.msk [vmem:[#allocation5] sm:$0xff] %vm1844, %v7806
        %7935 = vst.msk [vmem:[#allocation5 + $0x8] sm:$0xff] %vm1844, %v7807
        %7936 = vst.msk [vmem:[#allocation5 + $0x10] sm:$0xff] %vm1844, %v7808
        %7937 = vst.msk [vmem:[#allocation5 + $0x18] sm:$0xff] %vm1844, %v7809
        %7938 = vst.msk [vmem:[#allocation5 + $0x20] sm:$0xff] %vm1844, %v7810
        %7939 = vst.msk [vmem:[#allocation5 + $0x28] sm:$0xff] %vm1844, %v7811
        %7940 = vst.msk [vmem:[#allocation5 + $0x30] sm:$0xff] %vm1844, %v7812
        %7941 = vst.msk [vmem:[#allocation5 + $0x38] sm:$0xff] %vm1844, %v7813
        %7942 = vst.msk [vmem:[#allocation5 + $0x40] sm:$0xff] %vm1844, %v7814
        %7943 = vst.msk [vmem:[#allocation5 + $0x48] sm:$0xff] %vm1844, %v7815
        %7944 = vst.msk [vmem:[#allocation5 + $0x50] sm:$0xff] %vm1844, %v7816
        %7945 = vst.msk [vmem:[#allocation5 + $0x58] sm:$0xff] %vm1844, %v7817
        %7946 = vst.msk [vmem:[#allocation5 + $0x60] sm:$0xff] %vm1844, %v7818
        %7947 = vst.msk [vmem:[#allocation5 + $0x68] sm:$0xff] %vm1844, %v7819
        %7948 = vst.msk [vmem:[#allocation5 + $0x70] sm:$0xff] %vm1844, %v7820
        %7949 = vst.msk [vmem:[#allocation5 + $0x78] sm:$0xff] %vm1844, %v7821
        %7950 = vst.msk [vmem:[#allocation5 + $0x80] sm:$0xff] %vm1844, %v7822
        %7951 = vst.msk [vmem:[#allocation5 + $0x88] sm:$0xff] %vm1844, %v7823
        %7952 = vst.msk [vmem:[#allocation5 + $0x90] sm:$0xff] %vm1844, %v7824
        %7953 = vst.msk [vmem:[#allocation5 + $0x98] sm:$0xff] %vm1844, %v7825
        %7954 = vst.msk [vmem:[#allocation5 + $0xa0] sm:$0xff] %vm1844, %v7826
        %7955 = vst.msk [vmem:[#allocation5 + $0xa8] sm:$0xff] %vm1844, %v7827
        %7956 = vst.msk [vmem:[#allocation5 + $0xb0] sm:$0xff] %vm1844, %v7828
        %7957 = vst.msk [vmem:[#allocation5 + $0xb8] sm:$0xff] %vm1844, %v7829
        %7958 = vst.msk [vmem:[#allocation5 + $0xc0] sm:$0xff] %vm1844, %v7830
        %7959 = vst.msk [vmem:[#allocation5 + $0xc8] sm:$0xff] %vm1844, %v7831
        %7960 = vst.msk [vmem:[#allocation5 + $0xd0] sm:$0xff] %vm1844, %v7832
        %7961 = vst.msk [vmem:[#allocation5 + $0xd8] sm:$0xff] %vm1844, %v7833
        %7962 = vst.msk [vmem:[#allocation5 + $0xe0] sm:$0xff] %vm1844, %v7834
        %7963 = vst.msk [vmem:[#allocation5 + $0xe8] sm:$0xff] %vm1844, %v7835
        %7964 = vst.msk [vmem:[#allocation5 + $0xf0] sm:$0xff] %vm1844, %v7836
        %7965 = vst.msk [vmem:[#allocation5 + $0xf8] sm:$0xff] %vm1844, %v7837
        %7966 = vst.msk [vmem:[#allocation5 + $0x100] sm:$0xff] %vm1844, %v7838
        %7967 = vst.msk [vmem:[#allocation5 + $0x108] sm:$0xff] %vm1844, %v7839
        %7968 = vst.msk [vmem:[#allocation5 + $0x110] sm:$0xff] %vm1844, %v7840
        %7969 = vst.msk [vmem:[#allocation5 + $0x118] sm:$0xff] %vm1844, %v7841
        %7970 = vst.msk [vmem:[#allocation5 + $0x120] sm:$0xff] %vm1844, %v7842
        %7971 = vst.msk [vmem:[#allocation5 + $0x128] sm:$0xff] %vm1844, %v7843
        %7972 = vst.msk [vmem:[#allocation5 + $0x130] sm:$0xff] %vm1844, %v7844
        %7973 = vst.msk [vmem:[#allocation5 + $0x138] sm:$0xff] %vm1844, %v7845
        %7974 = vst.msk [vmem:[#allocation5 + $0x140] sm:$0xff] %vm1844, %v7846
        %7975 = vst.msk [vmem:[#allocation5 + $0x148] sm:$0xff] %vm1844, %v7847
        %7976 = vst.msk [vmem:[#allocation5 + $0x150] sm:$0xff] %vm1844, %v7848
        %7977 = vst.msk [vmem:[#allocation5 + $0x158] sm:$0xff] %vm1844, %v7849
        %7978 = vst.msk [vmem:[#allocation5 + $0x160] sm:$0xff] %vm1844, %v7850
        %7979 = vst.msk [vmem:[#allocation5 + $0x168] sm:$0xff] %vm1844, %v7851
        %7980 = vst.msk [vmem:[#allocation5 + $0x170] sm:$0xff] %vm1844, %v7852
        %7981 = vst.msk [vmem:[#allocation5 + $0x178] sm:$0xff] %vm1844, %v7853
        %7982 = vst.msk [vmem:[#allocation5 + $0x180] sm:$0xff] %vm1844, %v7854
        %7983 = vst.msk [vmem:[#allocation5 + $0x188] sm:$0xff] %vm1844, %v7855
        %7984 = vst.msk [vmem:[#allocation5 + $0x190] sm:$0xff] %vm1844, %v7856
        %7985 = vst.msk [vmem:[#allocation5 + $0x198] sm:$0xff] %vm1844, %v7857
        %7986 = vst.msk [vmem:[#allocation5 + $0x1a0] sm:$0xff] %vm1844, %v7858
        %7987 = vst.msk [vmem:[#allocation5 + $0x1a8] sm:$0xff] %vm1844, %v7859
        %7988 = vst.msk [vmem:[#allocation5 + $0x1b0] sm:$0xff] %vm1844, %v7860
        %7989 = vst.msk [vmem:[#allocation5 + $0x1b8] sm:$0xff] %vm1844, %v7861
        %7990 = vst.msk [vmem:[#allocation5 + $0x1c0] sm:$0xff] %vm1844, %v7862
        %7991 = vst.msk [vmem:[#allocation5 + $0x1c8] sm:$0xff] %vm1844, %v7863
        %7992 = vst.msk [vmem:[#allocation5 + $0x1d0] sm:$0xff] %vm1844, %v7864
        %7993 = vst.msk [vmem:[#allocation5 + $0x1d8] sm:$0xff] %vm1844, %v7865
        %7994 = vst.msk [vmem:[#allocation5 + $0x1e0] sm:$0xff] %vm1844, %v7866
        %7995 = vst.msk [vmem:[#allocation5 + $0x1e8] sm:$0xff] %vm1844, %v7867
        %7996 = vst.msk [vmem:[#allocation5 + $0x1f0] sm:$0xff] %vm1844, %v7868
        %7997 = vst.msk [vmem:[#allocation5 + $0x1f8] sm:$0xff] %vm1844, %v7869
        %7998 = vst.msk [vmem:[#allocation5 + $0x200] sm:$0xff] %vm1844, %v7870
        %7999 = vst.msk [vmem:[#allocation5 + $0x208] sm:$0xff] %vm1844, %v7871
        %8000 = vst.msk [vmem:[#allocation5 + $0x210] sm:$0xff] %vm1844, %v7872
        %8001 = vst.msk [vmem:[#allocation5 + $0x218] sm:$0xff] %vm1844, %v7873
        %8002 = vst.msk [vmem:[#allocation5 + $0x220] sm:$0xff] %vm1844, %v7874
        %8003 = vst.msk [vmem:[#allocation5 + $0x228] sm:$0xff] %vm1844, %v7875
        %8004 = vst.msk [vmem:[#allocation5 + $0x230] sm:$0xff] %vm1844, %v7876
        %8005 = vst.msk [vmem:[#allocation5 + $0x238] sm:$0xff] %vm1844, %v7877
        %8006 = vst.msk [vmem:[#allocation5 + $0x240] sm:$0xff] %vm1844, %v7878
        %8007 = vst.msk [vmem:[#allocation5 + $0x248] sm:$0xff] %vm1844, %v7879
        %8008 = vst.msk [vmem:[#allocation5 + $0x250] sm:$0xff] %vm1844, %v7880
        %8009 = vst.msk [vmem:[#allocation5 + $0x258] sm:$0xff] %vm1844, %v7881
        %8010 = vst.msk [vmem:[#allocation5 + $0x260] sm:$0xff] %vm1844, %v7882
        %8011 = vst.msk [vmem:[#allocation5 + $0x268] sm:$0xff] %vm1844, %v7883
        %8012 = vst.msk [vmem:[#allocation5 + $0x270] sm:$0xff] %vm1844, %v7884
        %8013 = vst.msk [vmem:[#allocation5 + $0x278] sm:$0xff] %vm1844, %v7885
        %8014 = vst.msk [vmem:[#allocation5 + $0x280] sm:$0xff] %vm1844, %v7886
        %8015 = vst.msk [vmem:[#allocation5 + $0x288] sm:$0xff] %vm1844, %v7887
        %8016 = vst.msk [vmem:[#allocation5 + $0x290] sm:$0xff] %vm1844, %v7888
        %8017 = vst.msk [vmem:[#allocation5 + $0x298] sm:$0xff] %vm1844, %v7889
        %8018 = vst.msk [vmem:[#allocation5 + $0x2a0] sm:$0xff] %vm1844, %v7890
        %8019 = vst.msk [vmem:[#allocation5 + $0x2a8] sm:$0xff] %vm1844, %v7891
        %8020 = vst.msk [vmem:[#allocation5 + $0x2b0] sm:$0xff] %vm1844, %v7892
        %8021 = vst.msk [vmem:[#allocation5 + $0x2b8] sm:$0xff] %vm1844, %v7893
        %8022 = vst.msk [vmem:[#allocation5 + $0x2c0] sm:$0xff] %vm1844, %v7894
        %8023 = vst.msk [vmem:[#allocation5 + $0x2c8] sm:$0xff] %vm1844, %v7895
        %8024 = vst.msk [vmem:[#allocation5 + $0x2d0] sm:$0xff] %vm1844, %v7896
        %8025 = vst.msk [vmem:[#allocation5 + $0x2d8] sm:$0xff] %vm1844, %v7897
        %8026 = vst.msk [vmem:[#allocation5 + $0x2e0] sm:$0xff] %vm1844, %v7898
        %8027 = vst.msk [vmem:[#allocation5 + $0x2e8] sm:$0xff] %vm1844, %v7899
        %8028 = vst.msk [vmem:[#allocation5 + $0x2f0] sm:$0xff] %vm1844, %v7900
        %8029 = vst.msk [vmem:[#allocation5 + $0x2f8] sm:$0xff] %vm1844, %v7901
        %8030 = vst.msk [vmem:[#allocation5 + $0x300] sm:$0xff] %vm1844, %v7902
        %8031 = vst.msk [vmem:[#allocation5 + $0x308] sm:$0xff] %vm1844, %v7903
        %8032 = vst.msk [vmem:[#allocation5 + $0x310] sm:$0xff] %vm1844, %v7904
        %8033 = vst.msk [vmem:[#allocation5 + $0x318] sm:$0xff] %vm1844, %v7905
        %8034 = vst.msk [vmem:[#allocation5 + $0x320] sm:$0xff] %vm1844, %v7906
        %8035 = vst.msk [vmem:[#allocation5 + $0x328] sm:$0xff] %vm1844, %v7907
        %8036 = vst.msk [vmem:[#allocation5 + $0x330] sm:$0xff] %vm1844, %v7908
        %8037 = vst.msk [vmem:[#allocation5 + $0x338] sm:$0xff] %vm1844, %v7909
        %8038 = vst.msk [vmem:[#allocation5 + $0x340] sm:$0xff] %vm1844, %v7910
        %8039 = vst.msk [vmem:[#allocation5 + $0x348] sm:$0xff] %vm1844, %v7911
        %8040 = vst.msk [vmem:[#allocation5 + $0x350] sm:$0xff] %vm1844, %v7912
        %8041 = vst.msk [vmem:[#allocation5 + $0x358] sm:$0xff] %vm1844, %v7913
        %8042 = vst.msk [vmem:[#allocation5 + $0x360] sm:$0xff] %vm1844, %v7914
        %8043 = vst.msk [vmem:[#allocation5 + $0x368] sm:$0xff] %vm1844, %v7915
        %8044 = vst.msk [vmem:[#allocation5 + $0x370] sm:$0xff] %vm1844, %v7916
        %8045 = vst.msk [vmem:[#allocation5 + $0x378] sm:$0xff] %vm1844, %v7917
        %8046 = vst.msk [vmem:[#allocation5 + $0x380] sm:$0xff] %vm1844, %v7918
        %8047 = vst.msk [vmem:[#allocation5 + $0x388] sm:$0xff] %vm1844, %v7919
        %8048 = vst.msk [vmem:[#allocation5 + $0x390] sm:$0xff] %vm1844, %v7920
        %8049 = vst.msk [vmem:[#allocation5 + $0x398] sm:$0xff] %vm1844, %v7921
        %8050 = vst.msk [vmem:[#allocation5 + $0x3a0] sm:$0xff] %vm1844, %v7922
        %8051 = vst.msk [vmem:[#allocation5 + $0x3a8] sm:$0xff] %vm1844, %v7923
        %8052 = vst.msk [vmem:[#allocation5 + $0x3b0] sm:$0xff] %vm1844, %v7924
        %8053 = vst.msk [vmem:[#allocation5 + $0x3b8] sm:$0xff] %vm1844, %v7925
        %8054 = vst.msk [vmem:[#allocation5 + $0x3c0] sm:$0xff] %vm1844, %v7926
        %8055 = vst.msk [vmem:[#allocation5 + $0x3c8] sm:$0xff] %vm1844, %v7927
        %8056 = vst.msk [vmem:[#allocation5 + $0x3d0] sm:$0xff] %vm1844, %v7928
        %8057 = vst.msk [vmem:[#allocation5 + $0x3d8] sm:$0xff] %vm1844, %v7929
        %8058 = vst.msk [vmem:[#allocation5 + $0x3e0] sm:$0xff] %vm1844, %v7930
        %8059 = vst.msk [vmem:[#allocation5 + $0x3e8] sm:$0xff] %vm1844, %v7931
        %8060 = vst.msk [vmem:[#allocation5 + $0x3f0] sm:$0xff] %vm1844, %v7932
        %8061 = vst.msk [vmem:[#allocation5 + $0x3f8] sm:$0xff] %vm1844, %v7933
        %8062 = vst.msk [vmem:[#allocation3] sm:$0xff] %vm6009, %v3321
        %8063 = vst.msk [vmem:[#allocation3 + $0x8] sm:$0xff] %vm6009, %v3322
        %8064 = vst.msk [vmem:[#allocation3 + $0x10] sm:$0xff] %vm6009, %v3323
        %8065 = vst.msk [vmem:[#allocation3 + $0x18] sm:$0xff] %vm6009, %v3324
        %8066 = vst.msk [vmem:[#allocation3 + $0x20] sm:$0xff] %vm6009, %v3325
        %8067 = vst.msk [vmem:[#allocation3 + $0x28] sm:$0xff] %vm6009, %v3326
        %8068 = vst.msk [vmem:[#allocation3 + $0x30] sm:$0xff] %vm6009, %v3327
        %8069 = vst.msk [vmem:[#allocation3 + $0x38] sm:$0xff] %vm6009, %v3328
        %8070 = vst.msk [vmem:[#allocation3 + $0x40] sm:$0xff] %vm6009, %v3329
        %8071 = vst.msk [vmem:[#allocation3 + $0x48] sm:$0xff] %vm6009, %v3330
        %8072 = vst.msk [vmem:[#allocation3 + $0x50] sm:$0xff] %vm6009, %v3331
        %8073 = vst.msk [vmem:[#allocation3 + $0x58] sm:$0xff] %vm6009, %v3332
        %8074 = vst.msk [vmem:[#allocation3 + $0x60] sm:$0xff] %vm6009, %v3333
        %8075 = vst.msk [vmem:[#allocation3 + $0x68] sm:$0xff] %vm6009, %v3334
        %8076 = vst.msk [vmem:[#allocation3 + $0x70] sm:$0xff] %vm6009, %v3335
        %8077 = vst.msk [vmem:[#allocation3 + $0x78] sm:$0xff] %vm6009, %v3336
        %8078 = vst.msk [vmem:[#allocation3 + $0x80] sm:$0xff] %vm6009, %v3337
        %8079 = vst.msk [vmem:[#allocation3 + $0x88] sm:$0xff] %vm6009, %v3338
        %8080 = vst.msk [vmem:[#allocation3 + $0x90] sm:$0xff] %vm6009, %v3339
        %8081 = vst.msk [vmem:[#allocation3 + $0x98] sm:$0xff] %vm6009, %v3340
        %8082 = vst.msk [vmem:[#allocation3 + $0xa0] sm:$0xff] %vm6009, %v3341
        %8083 = vst.msk [vmem:[#allocation3 + $0xa8] sm:$0xff] %vm6009, %v3342
        %8084 = vst.msk [vmem:[#allocation3 + $0xb0] sm:$0xff] %vm6009, %v3343
        %8085 = vst.msk [vmem:[#allocation3 + $0xb8] sm:$0xff] %vm6009, %v3344
        %8086 = vst.msk [vmem:[#allocation3 + $0xc0] sm:$0xff] %vm6009, %v3345
        %8087 = vst.msk [vmem:[#allocation3 + $0xc8] sm:$0xff] %vm6009, %v3346
        %8088 = vst.msk [vmem:[#allocation3 + $0xd0] sm:$0xff] %vm6009, %v3347
        %8089 = vst.msk [vmem:[#allocation3 + $0xd8] sm:$0xff] %vm6009, %v3348
        %8090 = vst.msk [vmem:[#allocation3 + $0xe0] sm:$0xff] %vm6009, %v3349
        %8091 = vst.msk [vmem:[#allocation3 + $0xe8] sm:$0xff] %vm6009, %v3350
        %8092 = vst.msk [vmem:[#allocation3 + $0xf0] sm:$0xff] %vm6009, %v3351
        %8093 = vst.msk [vmem:[#allocation3 + $0xf8] sm:$0xff] %vm6009, %v3352
        %8094 = vst.msk [vmem:[#allocation3 + $0x100] sm:$0xff] %vm6009, %v3353
        %8095 = vst.msk [vmem:[#allocation3 + $0x108] sm:$0xff] %vm6009, %v3354
        %8096 = vst.msk [vmem:[#allocation3 + $0x110] sm:$0xff] %vm6009, %v3355
        %8097 = vst.msk [vmem:[#allocation3 + $0x118] sm:$0xff] %vm6009, %v3356
        %8098 = vst.msk [vmem:[#allocation3 + $0x120] sm:$0xff] %vm6009, %v3357
        %8099 = vst.msk [vmem:[#allocation3 + $0x128] sm:$0xff] %vm6009, %v3358
        %8100 = vst.msk [vmem:[#allocation3 + $0x130] sm:$0xff] %vm6009, %v3359
        %8101 = vst.msk [vmem:[#allocation3 + $0x138] sm:$0xff] %vm6009, %v3360
        %8102 = vst.msk [vmem:[#allocation3 + $0x140] sm:$0xff] %vm6009, %v3361
        %8103 = vst.msk [vmem:[#allocation3 + $0x148] sm:$0xff] %vm6009, %v3362
        %8104 = vst.msk [vmem:[#allocation3 + $0x150] sm:$0xff] %vm6009, %v3363
        %8105 = vst.msk [vmem:[#allocation3 + $0x158] sm:$0xff] %vm6009, %v3364
        %8106 = vst.msk [vmem:[#allocation3 + $0x160] sm:$0xff] %vm6009, %v3365
        %8107 = vst.msk [vmem:[#allocation3 + $0x168] sm:$0xff] %vm6009, %v3366
        %8108 = vst.msk [vmem:[#allocation3 + $0x170] sm:$0xff] %vm6009, %v3367
        %8109 = vst.msk [vmem:[#allocation3 + $0x178] sm:$0xff] %vm6009, %v3368
        %8110 = vst.msk [vmem:[#allocation3 + $0x180] sm:$0xff] %vm6009, %v3369
        %8111 = vst.msk [vmem:[#allocation3 + $0x188] sm:$0xff] %vm6009, %v3370
        %8112 = vst.msk [vmem:[#allocation3 + $0x190] sm:$0xff] %vm6009, %v3371
        %8113 = vst.msk [vmem:[#allocation3 + $0x198] sm:$0xff] %vm6009, %v3372
        %8114 = vst.msk [vmem:[#allocation3 + $0x1a0] sm:$0xff] %vm6009, %v3373
        %8115 = vst.msk [vmem:[#allocation3 + $0x1a8] sm:$0xff] %vm6009, %v3374
        %8116 = vst.msk [vmem:[#allocation3 + $0x1b0] sm:$0xff] %vm6009, %v3375
        %8117 = vst.msk [vmem:[#allocation3 + $0x1b8] sm:$0xff] %vm6009, %v3376
        %8118 = vst.msk [vmem:[#allocation3 + $0x1c0] sm:$0xff] %vm6009, %v3377
        %8119 = vst.msk [vmem:[#allocation3 + $0x1c8] sm:$0xff] %vm6009, %v3378
        %8120 = vst.msk [vmem:[#allocation3 + $0x1d0] sm:$0xff] %vm6009, %v3379
        %8121 = vst.msk [vmem:[#allocation3 + $0x1d8] sm:$0xff] %vm6009, %v3380
        %8122 = vst.msk [vmem:[#allocation3 + $0x1e0] sm:$0xff] %vm6009, %v3381
        %8123 = vst.msk [vmem:[#allocation3 + $0x1e8] sm:$0xff] %vm6009, %v3382
        %8124 = vst.msk [vmem:[#allocation3 + $0x1f0] sm:$0xff] %vm6009, %v3383
        %8125 = vst.msk [vmem:[#allocation3 + $0x1f8] sm:$0xff] %vm6009, %v3384
        %8126 = vst.msk [vmem:[#allocation3 + $0x200] sm:$0xff] %vm6009, %v3385
        %8127 = vst.msk [vmem:[#allocation3 + $0x208] sm:$0xff] %vm6009, %v3386
        %8128 = vst.msk [vmem:[#allocation3 + $0x210] sm:$0xff] %vm6009, %v3387
        %8129 = vst.msk [vmem:[#allocation3 + $0x218] sm:$0xff] %vm6009, %v3388
        %8130 = vst.msk [vmem:[#allocation3 + $0x220] sm:$0xff] %vm6009, %v3389
        %8131 = vst.msk [vmem:[#allocation3 + $0x228] sm:$0xff] %vm6009, %v3390
        %8132 = vst.msk [vmem:[#allocation3 + $0x230] sm:$0xff] %vm6009, %v3391
        %8133 = vst.msk [vmem:[#allocation3 + $0x238] sm:$0xff] %vm6009, %v3392
        %8134 = vst.msk [vmem:[#allocation3 + $0x240] sm:$0xff] %vm6009, %v3393
        %8135 = vst.msk [vmem:[#allocation3 + $0x248] sm:$0xff] %vm6009, %v3394
        %8136 = vst.msk [vmem:[#allocation3 + $0x250] sm:$0xff] %vm6009, %v3395
        %8137 = vst.msk [vmem:[#allocation3 + $0x258] sm:$0xff] %vm6009, %v3396
        %8138 = vst.msk [vmem:[#allocation3 + $0x260] sm:$0xff] %vm6009, %v3397
        %8139 = vst.msk [vmem:[#allocation3 + $0x268] sm:$0xff] %vm6009, %v3398
        %8140 = vst.msk [vmem:[#allocation3 + $0x270] sm:$0xff] %vm6009, %v3399
        %8141 = vst.msk [vmem:[#allocation3 + $0x278] sm:$0xff] %vm6009, %v3400
        %8142 = vst.msk [vmem:[#allocation3 + $0x280] sm:$0xff] %vm6009, %v3401
        %8143 = vst.msk [vmem:[#allocation3 + $0x288] sm:$0xff] %vm6009, %v3402
        %8144 = vst.msk [vmem:[#allocation3 + $0x290] sm:$0xff] %vm6009, %v3403
        %8145 = vst.msk [vmem:[#allocation3 + $0x298] sm:$0xff] %vm6009, %v3404
        %8146 = vst.msk [vmem:[#allocation3 + $0x2a0] sm:$0xff] %vm6009, %v3405
        %8147 = vst.msk [vmem:[#allocation3 + $0x2a8] sm:$0xff] %vm6009, %v3406
        %8148 = vst.msk [vmem:[#allocation3 + $0x2b0] sm:$0xff] %vm6009, %v3407
        %8149 = vst.msk [vmem:[#allocation3 + $0x2b8] sm:$0xff] %vm6009, %v3408
        %8150 = vst.msk [vmem:[#allocation3 + $0x2c0] sm:$0xff] %vm6009, %v3409
        %8151 = vst.msk [vmem:[#allocation3 + $0x2c8] sm:$0xff] %vm6009, %v3410
        %8152 = vst.msk [vmem:[#allocation3 + $0x2d0] sm:$0xff] %vm6009, %v3411
        %8153 = vst.msk [vmem:[#allocation3 + $0x2d8] sm:$0xff] %vm6009, %v3412
        %8154 = vst.msk [vmem:[#allocation3 + $0x2e0] sm:$0xff] %vm6009, %v3413
        %8155 = vst.msk [vmem:[#allocation3 + $0x2e8] sm:$0xff] %vm6009, %v3414
        %8156 = vst.msk [vmem:[#allocation3 + $0x2f0] sm:$0xff] %vm6009, %v3415
        %8157 = vst.msk [vmem:[#allocation3 + $0x2f8] sm:$0xff] %vm6009, %v3416
        %8158 = vst.msk [vmem:[#allocation3 + $0x300] sm:$0xff] %vm6009, %v3417
        %8159 = vst.msk [vmem:[#allocation3 + $0x308] sm:$0xff] %vm6009, %v3418
        %8160 = vst.msk [vmem:[#allocation3 + $0x310] sm:$0xff] %vm6009, %v3419
        %8161 = vst.msk [vmem:[#allocation3 + $0x318] sm:$0xff] %vm6009, %v3420
        %8162 = vst.msk [vmem:[#allocation3 + $0x320] sm:$0xff] %vm6009, %v3421
        %8163 = vst.msk [vmem:[#allocation3 + $0x328] sm:$0xff] %vm6009, %v3422
        %8164 = vst.msk [vmem:[#allocation3 + $0x330] sm:$0xff] %vm6009, %v3423
        %8165 = vst.msk [vmem:[#allocation3 + $0x338] sm:$0xff] %vm6009, %v3424
        %8166 = vst.msk [vmem:[#allocation3 + $0x340] sm:$0xff] %vm6009, %v3425
        %8167 = vst.msk [vmem:[#allocation3 + $0x348] sm:$0xff] %vm6009, %v3426
        %8168 = vst.msk [vmem:[#allocation3 + $0x350] sm:$0xff] %vm6009, %v3427
        %8169 = vst.msk [vmem:[#allocation3 + $0x358] sm:$0xff] %vm6009, %v3428
        %8170 = vst.msk [vmem:[#allocation3 + $0x360] sm:$0xff] %vm6009, %v3429
        %8171 = vst.msk [vmem:[#allocation3 + $0x368] sm:$0xff] %vm6009, %v3430
        %8172 = vst.msk [vmem:[#allocation3 + $0x370] sm:$0xff] %vm6009, %v3431
        %8173 = vst.msk [vmem:[#allocation3 + $0x378] sm:$0xff] %vm6009, %v3432
        %8174 = vst.msk [vmem:[#allocation3 + $0x380] sm:$0xff] %vm6009, %v3433
        %8175 = vst.msk [vmem:[#allocation3 + $0x388] sm:$0xff] %vm6009, %v3434
        %8176 = vst.msk [vmem:[#allocation3 + $0x390] sm:$0xff] %vm6009, %v3435
        %8177 = vst.msk [vmem:[#allocation3 + $0x398] sm:$0xff] %vm6009, %v3436
        %8178 = vst.msk [vmem:[#allocation3 + $0x3a0] sm:$0xff] %vm6009, %v3437
        %8179 = vst.msk [vmem:[#allocation3 + $0x3a8] sm:$0xff] %vm6009, %v3438
        %8180 = vst.msk [vmem:[#allocation3 + $0x3b0] sm:$0xff] %vm6009, %v3439
        %8181 = vst.msk [vmem:[#allocation3 + $0x3b8] sm:$0xff] %vm6009, %v3440
        %8182 = vst.msk [vmem:[#allocation3 + $0x3c0] sm:$0xff] %vm6009, %v3441
        %8183 = vst.msk [vmem:[#allocation3 + $0x3c8] sm:$0xff] %vm6009, %v3442
        %8184 = vst.msk [vmem:[#allocation3 + $0x3d0] sm:$0xff] %vm6009, %v3443
        %8185 = vst.msk [vmem:[#allocation3 + $0x3d8] sm:$0xff] %vm6009, %v3444
        %8186 = vst.msk [vmem:[#allocation3 + $0x3e0] sm:$0xff] %vm6009, %v3445
        %8187 = vst.msk [vmem:[#allocation3 + $0x3e8] sm:$0xff] %vm6009, %v3446
        %8188 = vst.msk [vmem:[#allocation3 + $0x3f0] sm:$0xff] %vm6009, %v3447
        %8189 = vst.msk [vmem:[#allocation3 + $0x3f8] sm:$0xff] %vm6009, %v3448
        // Predicated region
        $region53: #{tpu_custom_call.1} parent=47 // pred_check
          %p8190 = pneg %p352
        $region54: #{tpu_custom_call.1} parent=47 // pred_check_branch
          %8192 = sbr.rel (%p8190) target = $region56
        $region55: #{tpu_custom_call.1} parent=47 // pred_region
          %v8193 = vld [vmem:[#allocation4] sm:$0xff]
          %v8194 = vld [vmem:[#allocation4 + $0x8] sm:$0xff]
          %v8195 = vld [vmem:[#allocation4 + $0x10] sm:$0xff]
          %v8196 = vld [vmem:[#allocation4 + $0x18] sm:$0xff]
          %v8197 = vld [vmem:[#allocation4 + $0x20] sm:$0xff]
          %v8198 = vld [vmem:[#allocation4 + $0x28] sm:$0xff]
          %v8199 = vld [vmem:[#allocation4 + $0x30] sm:$0xff]
          %v8200 = vld [vmem:[#allocation4 + $0x38] sm:$0xff]
          %v8201 = vld [vmem:[#allocation4 + $0x40] sm:$0xff]
          %v8202 = vld [vmem:[#allocation4 + $0x48] sm:$0xff]
          %v8203 = vld [vmem:[#allocation4 + $0x50] sm:$0xff]
          %v8204 = vld [vmem:[#allocation4 + $0x58] sm:$0xff]
          %v8205 = vld [vmem:[#allocation4 + $0x60] sm:$0xff]
          %v8206 = vld [vmem:[#allocation4 + $0x68] sm:$0xff]
          %v8207 = vld [vmem:[#allocation4 + $0x70] sm:$0xff]
          %v8208 = vld [vmem:[#allocation4 + $0x78] sm:$0xff]
          %v8209 = vld [vmem:[#allocation4 + $0x80] sm:$0xff]
          %v8210 = vld [vmem:[#allocation4 + $0x88] sm:$0xff]
          %v8211 = vld [vmem:[#allocation4 + $0x90] sm:$0xff]
          %v8212 = vld [vmem:[#allocation4 + $0x98] sm:$0xff]
          %v8213 = vld [vmem:[#allocation4 + $0xa0] sm:$0xff]
          %v8214 = vld [vmem:[#allocation4 + $0xa8] sm:$0xff]
          %v8215 = vld [vmem:[#allocation4 + $0xb0] sm:$0xff]
          %v8216 = vld [vmem:[#allocation4 + $0xb8] sm:$0xff]
          %v8217 = vld [vmem:[#allocation4 + $0xc0] sm:$0xff]
          %v8218 = vld [vmem:[#allocation4 + $0xc8] sm:$0xff]
          %v8219 = vld [vmem:[#allocation4 + $0xd0] sm:$0xff]
          %v8220 = vld [vmem:[#allocation4 + $0xd8] sm:$0xff]
          %v8221 = vld [vmem:[#allocation4 + $0xe0] sm:$0xff]
          %v8222 = vld [vmem:[#allocation4 + $0xe8] sm:$0xff]
          %v8223 = vld [vmem:[#allocation4 + $0xf0] sm:$0xff]
          %v8224 = vld [vmem:[#allocation4 + $0xf8] sm:$0xff]
          %v8225 = vld [vmem:[#allocation4 + $0x100] sm:$0xff]
          %v8226 = vld [vmem:[#allocation4 + $0x108] sm:$0xff]
          %v8227 = vld [vmem:[#allocation4 + $0x110] sm:$0xff]
          %v8228 = vld [vmem:[#allocation4 + $0x118] sm:$0xff]
          %v8229 = vld [vmem:[#allocation4 + $0x120] sm:$0xff]
          %v8230 = vld [vmem:[#allocation4 + $0x128] sm:$0xff]
          %v8231 = vld [vmem:[#allocation4 + $0x130] sm:$0xff]
          %v8232 = vld [vmem:[#allocation4 + $0x138] sm:$0xff]
          %v8233 = vld [vmem:[#allocation4 + $0x140] sm:$0xff]
          %v8234 = vld [vmem:[#allocation4 + $0x148] sm:$0xff]
          %v8235 = vld [vmem:[#allocation4 + $0x150] sm:$0xff]
          %v8236 = vld [vmem:[#allocation4 + $0x158] sm:$0xff]
          %v8237 = vld [vmem:[#allocation4 + $0x160] sm:$0xff]
          %v8238 = vld [vmem:[#allocation4 + $0x168] sm:$0xff]
          %v8239 = vld [vmem:[#allocation4 + $0x170] sm:$0xff]
          %v8240 = vld [vmem:[#allocation4 + $0x178] sm:$0xff]
          %v8241 = vld [vmem:[#allocation4 + $0x180] sm:$0xff]
          %v8242 = vld [vmem:[#allocation4 + $0x188] sm:$0xff]
          %v8243 = vld [vmem:[#allocation4 + $0x190] sm:$0xff]
          %v8244 = vld [vmem:[#allocation4 + $0x198] sm:$0xff]
          %v8245 = vld [vmem:[#allocation4 + $0x1a0] sm:$0xff]
          %v8246 = vld [vmem:[#allocation4 + $0x1a8] sm:$0xff]
          %v8247 = vld [vmem:[#allocation4 + $0x1b0] sm:$0xff]
          %v8248 = vld [vmem:[#allocation4 + $0x1b8] sm:$0xff]
          %v8249 = vld [vmem:[#allocation4 + $0x1c0] sm:$0xff]
          %v8250 = vld [vmem:[#allocation4 + $0x1c8] sm:$0xff]
          %v8251 = vld [vmem:[#allocation4 + $0x1d0] sm:$0xff]
          %v8252 = vld [vmem:[#allocation4 + $0x1d8] sm:$0xff]
          %v8253 = vld [vmem:[#allocation4 + $0x1e0] sm:$0xff]
          %v8254 = vld [vmem:[#allocation4 + $0x1e8] sm:$0xff]
          %v8255 = vld [vmem:[#allocation4 + $0x1f0] sm:$0xff]
          %v8256 = vld [vmem:[#allocation4 + $0x1f8] sm:$0xff]
          %v8257 = vld [vmem:[#allocation4 + $0x200] sm:$0xff]
          %v8258 = vld [vmem:[#allocation4 + $0x208] sm:$0xff]
          %v8259 = vld [vmem:[#allocation4 + $0x210] sm:$0xff]
          %v8260 = vld [vmem:[#allocation4 + $0x218] sm:$0xff]
          %v8261 = vld [vmem:[#allocation4 + $0x220] sm:$0xff]
          %v8262 = vld [vmem:[#allocation4 + $0x228] sm:$0xff]
          %v8263 = vld [vmem:[#allocation4 + $0x230] sm:$0xff]
          %v8264 = vld [vmem:[#allocation4 + $0x238] sm:$0xff]
          %v8265 = vld [vmem:[#allocation4 + $0x240] sm:$0xff]
          %v8266 = vld [vmem:[#allocation4 + $0x248] sm:$0xff]
          %v8267 = vld [vmem:[#allocation4 + $0x250] sm:$0xff]
          %v8268 = vld [vmem:[#allocation4 + $0x258] sm:$0xff]
          %v8269 = vld [vmem:[#allocation4 + $0x260] sm:$0xff]
          %v8270 = vld [vmem:[#allocation4 + $0x268] sm:$0xff]
          %v8271 = vld [vmem:[#allocation4 + $0x270] sm:$0xff]
          %v8272 = vld [vmem:[#allocation4 + $0x278] sm:$0xff]
          %v8273 = vld [vmem:[#allocation4 + $0x280] sm:$0xff]
          %v8274 = vld [vmem:[#allocation4 + $0x288] sm:$0xff]
          %v8275 = vld [vmem:[#allocation4 + $0x290] sm:$0xff]
          %v8276 = vld [vmem:[#allocation4 + $0x298] sm:$0xff]
          %v8277 = vld [vmem:[#allocation4 + $0x2a0] sm:$0xff]
          %v8278 = vld [vmem:[#allocation4 + $0x2a8] sm:$0xff]
          %v8279 = vld [vmem:[#allocation4 + $0x2b0] sm:$0xff]
          %v8280 = vld [vmem:[#allocation4 + $0x2b8] sm:$0xff]
          %v8281 = vld [vmem:[#allocation4 + $0x2c0] sm:$0xff]
          %v8282 = vld [vmem:[#allocation4 + $0x2c8] sm:$0xff]
          %v8283 = vld [vmem:[#allocation4 + $0x2d0] sm:$0xff]
          %v8284 = vld [vmem:[#allocation4 + $0x2d8] sm:$0xff]
          %v8285 = vld [vmem:[#allocation4 + $0x2e0] sm:$0xff]
          %v8286 = vld [vmem:[#allocation4 + $0x2e8] sm:$0xff]
          %v8287 = vld [vmem:[#allocation4 + $0x2f0] sm:$0xff]
          %v8288 = vld [vmem:[#allocation4 + $0x2f8] sm:$0xff]
          %v8289 = vld [vmem:[#allocation4 + $0x300] sm:$0xff]
          %v8290 = vld [vmem:[#allocation4 + $0x308] sm:$0xff]
          %v8291 = vld [vmem:[#allocation4 + $0x310] sm:$0xff]
          %v8292 = vld [vmem:[#allocation4 + $0x318] sm:$0xff]
          %v8293 = vld [vmem:[#allocation4 + $0x320] sm:$0xff]
          %v8294 = vld [vmem:[#allocation4 + $0x328] sm:$0xff]
          %v8295 = vld [vmem:[#allocation4 + $0x330] sm:$0xff]
          %v8296 = vld [vmem:[#allocation4 + $0x338] sm:$0xff]
          %v8297 = vld [vmem:[#allocation4 + $0x340] sm:$0xff]
          %v8298 = vld [vmem:[#allocation4 + $0x348] sm:$0xff]
          %v8299 = vld [vmem:[#allocation4 + $0x350] sm:$0xff]
          %v8300 = vld [vmem:[#allocation4 + $0x358] sm:$0xff]
          %v8301 = vld [vmem:[#allocation4 + $0x360] sm:$0xff]
          %v8302 = vld [vmem:[#allocation4 + $0x368] sm:$0xff]
          %v8303 = vld [vmem:[#allocation4 + $0x370] sm:$0xff]
          %v8304 = vld [vmem:[#allocation4 + $0x378] sm:$0xff]
          %v8305 = vld [vmem:[#allocation4 + $0x380] sm:$0xff]
          %v8306 = vld [vmem:[#allocation4 + $0x388] sm:$0xff]
          %v8307 = vld [vmem:[#allocation4 + $0x390] sm:$0xff]
          %v8308 = vld [vmem:[#allocation4 + $0x398] sm:$0xff]
          %v8309 = vld [vmem:[#allocation4 + $0x3a0] sm:$0xff]
          %v8310 = vld [vmem:[#allocation4 + $0x3a8] sm:$0xff]
          %v8311 = vld [vmem:[#allocation4 + $0x3b0] sm:$0xff]
          %v8312 = vld [vmem:[#allocation4 + $0x3b8] sm:$0xff]
          %v8313 = vld [vmem:[#allocation4 + $0x3c0] sm:$0xff]
          %v8314 = vld [vmem:[#allocation4 + $0x3c8] sm:$0xff]
          %v8315 = vld [vmem:[#allocation4 + $0x3d0] sm:$0xff]
          %v8316 = vld [vmem:[#allocation4 + $0x3d8] sm:$0xff]
          %v8317 = vld [vmem:[#allocation4 + $0x3e0] sm:$0xff]
          %v8318 = vld [vmem:[#allocation4 + $0x3e8] sm:$0xff]
          %v8319 = vld [vmem:[#allocation4 + $0x3f0] sm:$0xff]
          %v8320 = vld [vmem:[#allocation4 + $0x3f8] sm:$0xff]
          %v8321 = vrcp.pop %v8193
          %v8322 = vrcp.pop %v8194
          %v8323 = vrcp.pop %v8195
          %v8324 = vrcp.pop %v8196
          %v8325 = vrcp.pop %v8197
          %v8326 = vrcp.pop %v8198
          %v8327 = vrcp.pop %v8199
          %v8328 = vrcp.pop %v8200
          %v8329 = vrcp.pop %v8201
          %v8330 = vrcp.pop %v8202
          %v8331 = vrcp.pop %v8203
          %v8332 = vrcp.pop %v8204
          %v8333 = vrcp.pop %v8205
          %v8334 = vrcp.pop %v8206
          %v8335 = vrcp.pop %v8207
          %v8336 = vrcp.pop %v8208
          %v8337 = vrcp.pop %v8209
          %v8338 = vrcp.pop %v8210
          %v8339 = vrcp.pop %v8211
          %v8340 = vrcp.pop %v8212
          %v8341 = vrcp.pop %v8213
          %v8342 = vrcp.pop %v8214
          %v8343 = vrcp.pop %v8215
          %v8344 = vrcp.pop %v8216
          %v8345 = vrcp.pop %v8217
          %v8346 = vrcp.pop %v8218
          %v8347 = vrcp.pop %v8219
          %v8348 = vrcp.pop %v8220
          %v8349 = vrcp.pop %v8221
          %v8350 = vrcp.pop %v8222
          %v8351 = vrcp.pop %v8223
          %v8352 = vrcp.pop %v8224
          %v8353 = vrcp.pop %v8225
          %v8354 = vrcp.pop %v8226
          %v8355 = vrcp.pop %v8227
          %v8356 = vrcp.pop %v8228
          %v8357 = vrcp.pop %v8229
          %v8358 = vrcp.pop %v8230
          %v8359 = vrcp.pop %v8231
          %v8360 = vrcp.pop %v8232
          %v8361 = vrcp.pop %v8233
          %v8362 = vrcp.pop %v8234
          %v8363 = vrcp.pop %v8235
          %v8364 = vrcp.pop %v8236
          %v8365 = vrcp.pop %v8237
          %v8366 = vrcp.pop %v8238
          %v8367 = vrcp.pop %v8239
          %v8368 = vrcp.pop %v8240
          %v8369 = vrcp.pop %v8241
          %v8370 = vrcp.pop %v8242
          %v8371 = vrcp.pop %v8243
          %v8372 = vrcp.pop %v8244
          %v8373 = vrcp.pop %v8245
          %v8374 = vrcp.pop %v8246
          %v8375 = vrcp.pop %v8247
          %v8376 = vrcp.pop %v8248
          %v8377 = vrcp.pop %v8249
          %v8378 = vrcp.pop %v8250
          %v8379 = vrcp.pop %v8251
          %v8380 = vrcp.pop %v8252
          %v8381 = vrcp.pop %v8253
          %v8382 = vrcp.pop %v8254
          %v8383 = vrcp.pop %v8255
          %v8384 = vrcp.pop %v8256
          %v8385 = vrcp.pop %v8257
          %v8386 = vrcp.pop %v8258
          %v8387 = vrcp.pop %v8259
          %v8388 = vrcp.pop %v8260
          %v8389 = vrcp.pop %v8261
          %v8390 = vrcp.pop %v8262
          %v8391 = vrcp.pop %v8263
          %v8392 = vrcp.pop %v8264
          %v8393 = vrcp.pop %v8265
          %v8394 = vrcp.pop %v8266
          %v8395 = vrcp.pop %v8267
          %v8396 = vrcp.pop %v8268
          %v8397 = vrcp.pop %v8269
          %v8398 = vrcp.pop %v8270
          %v8399 = vrcp.pop %v8271
          %v8400 = vrcp.pop %v8272
          %v8401 = vrcp.pop %v8273
          %v8402 = vrcp.pop %v8274
          %v8403 = vrcp.pop %v8275
          %v8404 = vrcp.pop %v8276
          %v8405 = vrcp.pop %v8277
          %v8406 = vrcp.pop %v8278
          %v8407 = vrcp.pop %v8279
          %v8408 = vrcp.pop %v8280
          %v8409 = vrcp.pop %v8281
          %v8410 = vrcp.pop %v8282
          %v8411 = vrcp.pop %v8283
          %v8412 = vrcp.pop %v8284
          %v8413 = vrcp.pop %v8285
          %v8414 = vrcp.pop %v8286
          %v8415 = vrcp.pop %v8287
          %v8416 = vrcp.pop %v8288
          %v8417 = vrcp.pop %v8289
          %v8418 = vrcp.pop %v8290
          %v8419 = vrcp.pop %v8291
          %v8420 = vrcp.pop %v8292
          %v8421 = vrcp.pop %v8293
          %v8422 = vrcp.pop %v8294
          %v8423 = vrcp.pop %v8295
          %v8424 = vrcp.pop %v8296
          %v8425 = vrcp.pop %v8297
          %v8426 = vrcp.pop %v8298
          %v8427 = vrcp.pop %v8299
          %v8428 = vrcp.pop %v8300
          %v8429 = vrcp.pop %v8301
          %v8430 = vrcp.pop %v8302
          %v8431 = vrcp.pop %v8303
          %v8432 = vrcp.pop %v8304
          %v8433 = vrcp.pop %v8305
          %v8434 = vrcp.pop %v8306
          %v8435 = vrcp.pop %v8307
          %v8436 = vrcp.pop %v8308
          %v8437 = vrcp.pop %v8309
          %v8438 = vrcp.pop %v8310
          %v8439 = vrcp.pop %v8311
          %v8440 = vrcp.pop %v8312
          %v8441 = vrcp.pop %v8313
          %v8442 = vrcp.pop %v8314
          %v8443 = vrcp.pop %v8315
          %v8444 = vrcp.pop %v8316
          %v8445 = vrcp.pop %v8317
          %v8446 = vrcp.pop %v8318
          %v8447 = vrcp.pop %v8319
          %v8448 = vrcp.pop %v8320
          %v8449 = vld [vmem:[#allocation5] sm:$0xff]
          %v8450 = vld [vmem:[#allocation5 + $0x8] sm:$0xff]
          %v8451 = vld [vmem:[#allocation5 + $0x10] sm:$0xff]
          %v8452 = vld [vmem:[#allocation5 + $0x18] sm:$0xff]
          %v8453 = vld [vmem:[#allocation5 + $0x20] sm:$0xff]
          %v8454 = vld [vmem:[#allocation5 + $0x28] sm:$0xff]
          %v8455 = vld [vmem:[#allocation5 + $0x30] sm:$0xff]
          %v8456 = vld [vmem:[#allocation5 + $0x38] sm:$0xff]
          %v8457 = vld [vmem:[#allocation5 + $0x40] sm:$0xff]
          %v8458 = vld [vmem:[#allocation5 + $0x48] sm:$0xff]
          %v8459 = vld [vmem:[#allocation5 + $0x50] sm:$0xff]
          %v8460 = vld [vmem:[#allocation5 + $0x58] sm:$0xff]
          %v8461 = vld [vmem:[#allocation5 + $0x60] sm:$0xff]
          %v8462 = vld [vmem:[#allocation5 + $0x68] sm:$0xff]
          %v8463 = vld [vmem:[#allocation5 + $0x70] sm:$0xff]
          %v8464 = vld [vmem:[#allocation5 + $0x78] sm:$0xff]
          %v8465 = vld [vmem:[#allocation5 + $0x80] sm:$0xff]
          %v8466 = vld [vmem:[#allocation5 + $0x88] sm:$0xff]
          %v8467 = vld [vmem:[#allocation5 + $0x90] sm:$0xff]
          %v8468 = vld [vmem:[#allocation5 + $0x98] sm:$0xff]
          %v8469 = vld [vmem:[#allocation5 + $0xa0] sm:$0xff]
          %v8470 = vld [vmem:[#allocation5 + $0xa8] sm:$0xff]
          %v8471 = vld [vmem:[#allocation5 + $0xb0] sm:$0xff]
          %v8472 = vld [vmem:[#allocation5 + $0xb8] sm:$0xff]
          %v8473 = vld [vmem:[#allocation5 + $0xc0] sm:$0xff]
          %v8474 = vld [vmem:[#allocation5 + $0xc8] sm:$0xff]
          %v8475 = vld [vmem:[#allocation5 + $0xd0] sm:$0xff]
          %v8476 = vld [vmem:[#allocation5 + $0xd8] sm:$0xff]
          %v8477 = vld [vmem:[#allocation5 + $0xe0] sm:$0xff]
          %v8478 = vld [vmem:[#allocation5 + $0xe8] sm:$0xff]
          %v8479 = vld [vmem:[#allocation5 + $0xf0] sm:$0xff]
          %v8480 = vld [vmem:[#allocation5 + $0xf8] sm:$0xff]
          %v8481 = vld [vmem:[#allocation5 + $0x100] sm:$0xff]
          %v8482 = vld [vmem:[#allocation5 + $0x108] sm:$0xff]
          %v8483 = vld [vmem:[#allocation5 + $0x110] sm:$0xff]
          %v8484 = vld [vmem:[#allocation5 + $0x118] sm:$0xff]
          %v8485 = vld [vmem:[#allocation5 + $0x120] sm:$0xff]
          %v8486 = vld [vmem:[#allocation5 + $0x128] sm:$0xff]
          %v8487 = vld [vmem:[#allocation5 + $0x130] sm:$0xff]
          %v8488 = vld [vmem:[#allocation5 + $0x138] sm:$0xff]
          %v8489 = vld [vmem:[#allocation5 + $0x140] sm:$0xff]
          %v8490 = vld [vmem:[#allocation5 + $0x148] sm:$0xff]
          %v8491 = vld [vmem:[#allocation5 + $0x150] sm:$0xff]
          %v8492 = vld [vmem:[#allocation5 + $0x158] sm:$0xff]
          %v8493 = vld [vmem:[#allocation5 + $0x160] sm:$0xff]
          %v8494 = vld [vmem:[#allocation5 + $0x168] sm:$0xff]
          %v8495 = vld [vmem:[#allocation5 + $0x170] sm:$0xff]
          %v8496 = vld [vmem:[#allocation5 + $0x178] sm:$0xff]
          %v8497 = vld [vmem:[#allocation5 + $0x180] sm:$0xff]
          %v8498 = vld [vmem:[#allocation5 + $0x188] sm:$0xff]
          %v8499 = vld [vmem:[#allocation5 + $0x190] sm:$0xff]
          %v8500 = vld [vmem:[#allocation5 + $0x198] sm:$0xff]
          %v8501 = vld [vmem:[#allocation5 + $0x1a0] sm:$0xff]
          %v8502 = vld [vmem:[#allocation5 + $0x1a8] sm:$0xff]
          %v8503 = vld [vmem:[#allocation5 + $0x1b0] sm:$0xff]
          %v8504 = vld [vmem:[#allocation5 + $0x1b8] sm:$0xff]
          %v8505 = vld [vmem:[#allocation5 + $0x1c0] sm:$0xff]
          %v8506 = vld [vmem:[#allocation5 + $0x1c8] sm:$0xff]
          %v8507 = vld [vmem:[#allocation5 + $0x1d0] sm:$0xff]
          %v8508 = vld [vmem:[#allocation5 + $0x1d8] sm:$0xff]
          %v8509 = vld [vmem:[#allocation5 + $0x1e0] sm:$0xff]
          %v8510 = vld [vmem:[#allocation5 + $0x1e8] sm:$0xff]
          %v8511 = vld [vmem:[#allocation5 + $0x1f0] sm:$0xff]
          %v8512 = vld [vmem:[#allocation5 + $0x1f8] sm:$0xff]
          %v8513 = vld [vmem:[#allocation5 + $0x200] sm:$0xff]
          %v8514 = vld [vmem:[#allocation5 + $0x208] sm:$0xff]
          %v8515 = vld [vmem:[#allocation5 + $0x210] sm:$0xff]
          %v8516 = vld [vmem:[#allocation5 + $0x218] sm:$0xff]
          %v8517 = vld [vmem:[#allocation5 + $0x220] sm:$0xff]
          %v8518 = vld [vmem:[#allocation5 + $0x228] sm:$0xff]
          %v8519 = vld [vmem:[#allocation5 + $0x230] sm:$0xff]
          %v8520 = vld [vmem:[#allocation5 + $0x238] sm:$0xff]
          %v8521 = vld [vmem:[#allocation5 + $0x240] sm:$0xff]
          %v8522 = vld [vmem:[#allocation5 + $0x248] sm:$0xff]
          %v8523 = vld [vmem:[#allocation5 + $0x250] sm:$0xff]
          %v8524 = vld [vmem:[#allocation5 + $0x258] sm:$0xff]
          %v8525 = vld [vmem:[#allocation5 + $0x260] sm:$0xff]
          %v8526 = vld [vmem:[#allocation5 + $0x268] sm:$0xff]
          %v8527 = vld [vmem:[#allocation5 + $0x270] sm:$0xff]
          %v8528 = vld [vmem:[#allocation5 + $0x278] sm:$0xff]
          %v8529 = vld [vmem:[#allocation5 + $0x280] sm:$0xff]
          %v8530 = vld [vmem:[#allocation5 + $0x288] sm:$0xff]
          %v8531 = vld [vmem:[#allocation5 + $0x290] sm:$0xff]
          %v8532 = vld [vmem:[#allocation5 + $0x298] sm:$0xff]
          %v8533 = vld [vmem:[#allocation5 + $0x2a0] sm:$0xff]
          %v8534 = vld [vmem:[#allocation5 + $0x2a8] sm:$0xff]
          %v8535 = vld [vmem:[#allocation5 + $0x2b0] sm:$0xff]
          %v8536 = vld [vmem:[#allocation5 + $0x2b8] sm:$0xff]
          %v8537 = vld [vmem:[#allocation5 + $0x2c0] sm:$0xff]
          %v8538 = vld [vmem:[#allocation5 + $0x2c8] sm:$0xff]
          %v8539 = vld [vmem:[#allocation5 + $0x2d0] sm:$0xff]
          %v8540 = vld [vmem:[#allocation5 + $0x2d8] sm:$0xff]
          %v8541 = vld [vmem:[#allocation5 + $0x2e0] sm:$0xff]
          %v8542 = vld [vmem:[#allocation5 + $0x2e8] sm:$0xff]
          %v8543 = vld [vmem:[#allocation5 + $0x2f0] sm:$0xff]
          %v8544 = vld [vmem:[#allocation5 + $0x2f8] sm:$0xff]
          %v8545 = vld [vmem:[#allocation5 + $0x300] sm:$0xff]
          %v8546 = vld [vmem:[#allocation5 + $0x308] sm:$0xff]
          %v8547 = vld [vmem:[#allocation5 + $0x310] sm:$0xff]
          %v8548 = vld [vmem:[#allocation5 + $0x318] sm:$0xff]
          %v8549 = vld [vmem:[#allocation5 + $0x320] sm:$0xff]
          %v8550 = vld [vmem:[#allocation5 + $0x328] sm:$0xff]
          %v8551 = vld [vmem:[#allocation5 + $0x330] sm:$0xff]
          %v8552 = vld [vmem:[#allocation5 + $0x338] sm:$0xff]
          %v8553 = vld [vmem:[#allocation5 + $0x340] sm:$0xff]
          %v8554 = vld [vmem:[#allocation5 + $0x348] sm:$0xff]
          %v8555 = vld [vmem:[#allocation5 + $0x350] sm:$0xff]
          %v8556 = vld [vmem:[#allocation5 + $0x358] sm:$0xff]
          %v8557 = vld [vmem:[#allocation5 + $0x360] sm:$0xff]
          %v8558 = vld [vmem:[#allocation5 + $0x368] sm:$0xff]
          %v8559 = vld [vmem:[#allocation5 + $0x370] sm:$0xff]
          %v8560 = vld [vmem:[#allocation5 + $0x378] sm:$0xff]
          %v8561 = vld [vmem:[#allocation5 + $0x380] sm:$0xff]
          %v8562 = vld [vmem:[#allocation5 + $0x388] sm:$0xff]
          %v8563 = vld [vmem:[#allocation5 + $0x390] sm:$0xff]
          %v8564 = vld [vmem:[#allocation5 + $0x398] sm:$0xff]
          %v8565 = vld [vmem:[#allocation5 + $0x3a0] sm:$0xff]
          %v8566 = vld [vmem:[#allocation5 + $0x3a8] sm:$0xff]
          %v8567 = vld [vmem:[#allocation5 + $0x3b0] sm:$0xff]
          %v8568 = vld [vmem:[#allocation5 + $0x3b8] sm:$0xff]
          %v8569 = vld [vmem:[#allocation5 + $0x3c0] sm:$0xff]
          %v8570 = vld [vmem:[#allocation5 + $0x3c8] sm:$0xff]
          %v8571 = vld [vmem:[#allocation5 + $0x3d0] sm:$0xff]
          %v8572 = vld [vmem:[#allocation5 + $0x3d8] sm:$0xff]
          %v8573 = vld [vmem:[#allocation5 + $0x3e0] sm:$0xff]
          %v8574 = vld [vmem:[#allocation5 + $0x3e8] sm:$0xff]
          %v8575 = vld [vmem:[#allocation5 + $0x3f0] sm:$0xff]
          %v8576 = vld [vmem:[#allocation5 + $0x3f8] sm:$0xff]
          %8578 = vset.pattern.permute.xlu0 0
          %8579 = vperm.xlu0 %8578, %v8321
          %v8580 = vpop.permute.xlu0 %8579
          %8583 = vset.pattern.permute.xlu0 0
          %8584 = vperm.xlu0 %8583, %v8322
          %v8585 = vpop.permute.xlu0 %8584
          %8588 = vset.pattern.permute.xlu0 0
          %8589 = vperm.xlu0 %8588, %v8323
          %v8590 = vpop.permute.xlu0 %8589
          %8593 = vset.pattern.permute.xlu0 0
          %8594 = vperm.xlu0 %8593, %v8324
          %v8595 = vpop.permute.xlu0 %8594
          %8598 = vset.pattern.permute.xlu0 0
          %8599 = vperm.xlu0 %8598, %v8325
          %v8600 = vpop.permute.xlu0 %8599
          %8603 = vset.pattern.permute.xlu0 0
          %8604 = vperm.xlu0 %8603, %v8326
          %v8605 = vpop.permute.xlu0 %8604
          %8608 = vset.pattern.permute.xlu0 0
          %8609 = vperm.xlu0 %8608, %v8327
          %v8610 = vpop.permute.xlu0 %8609
          %8613 = vset.pattern.permute.xlu0 0
          %8614 = vperm.xlu0 %8613, %v8328
          %v8615 = vpop.permute.xlu0 %8614
          %8618 = vset.pattern.permute.xlu0 0
          %8619 = vperm.xlu0 %8618, %v8329
          %v8620 = vpop.permute.xlu0 %8619
          %8623 = vset.pattern.permute.xlu0 0
          %8624 = vperm.xlu0 %8623, %v8330
          %v8625 = vpop.permute.xlu0 %8624
          %8628 = vset.pattern.permute.xlu0 0
          %8629 = vperm.xlu0 %8628, %v8331
          %v8630 = vpop.permute.xlu0 %8629
          %8633 = vset.pattern.permute.xlu0 0
          %8634 = vperm.xlu0 %8633, %v8332
          %v8635 = vpop.permute.xlu0 %8634
          %8638 = vset.pattern.permute.xlu0 0
          %8639 = vperm.xlu0 %8638, %v8333
          %v8640 = vpop.permute.xlu0 %8639
          %8643 = vset.pattern.permute.xlu0 0
          %8644 = vperm.xlu0 %8643, %v8334
          %v8645 = vpop.permute.xlu0 %8644
          %8648 = vset.pattern.permute.xlu0 0
          %8649 = vperm.xlu0 %8648, %v8335
          %v8650 = vpop.permute.xlu0 %8649
          %8653 = vset.pattern.permute.xlu0 0
          %8654 = vperm.xlu0 %8653, %v8336
          %v8655 = vpop.permute.xlu0 %8654
          %8658 = vset.pattern.permute.xlu0 0
          %8659 = vperm.xlu0 %8658, %v8337
          %v8660 = vpop.permute.xlu0 %8659
          %8663 = vset.pattern.permute.xlu0 0
          %8664 = vperm.xlu0 %8663, %v8338
          %v8665 = vpop.permute.xlu0 %8664
          %8668 = vset.pattern.permute.xlu0 0
          %8669 = vperm.xlu0 %8668, %v8339
          %v8670 = vpop.permute.xlu0 %8669
          %8673 = vset.pattern.permute.xlu0 0
          %8674 = vperm.xlu0 %8673, %v8340
          %v8675 = vpop.permute.xlu0 %8674
          %8678 = vset.pattern.permute.xlu0 0
          %8679 = vperm.xlu0 %8678, %v8341
          %v8680 = vpop.permute.xlu0 %8679
          %8683 = vset.pattern.permute.xlu0 0
          %8684 = vperm.xlu0 %8683, %v8342
          %v8685 = vpop.permute.xlu0 %8684
          %8688 = vset.pattern.permute.xlu0 0
          %8689 = vperm.xlu0 %8688, %v8343
          %v8690 = vpop.permute.xlu0 %8689
          %8693 = vset.pattern.permute.xlu0 0
          %8694 = vperm.xlu0 %8693, %v8344
          %v8695 = vpop.permute.xlu0 %8694
          %8698 = vset.pattern.permute.xlu0 0
          %8699 = vperm.xlu0 %8698, %v8345
          %v8700 = vpop.permute.xlu0 %8699
          %8703 = vset.pattern.permute.xlu0 0
          %8704 = vperm.xlu0 %8703, %v8346
          %v8705 = vpop.permute.xlu0 %8704
          %8708 = vset.pattern.permute.xlu0 0
          %8709 = vperm.xlu0 %8708, %v8347
          %v8710 = vpop.permute.xlu0 %8709
          %8713 = vset.pattern.permute.xlu0 0
          %8714 = vperm.xlu0 %8713, %v8348
          %v8715 = vpop.permute.xlu0 %8714
          %8718 = vset.pattern.permute.xlu0 0
          %8719 = vperm.xlu0 %8718, %v8349
          %v8720 = vpop.permute.xlu0 %8719
          %8723 = vset.pattern.permute.xlu0 0
          %8724 = vperm.xlu0 %8723, %v8350
          %v8725 = vpop.permute.xlu0 %8724
          %8728 = vset.pattern.permute.xlu0 0
          %8729 = vperm.xlu0 %8728, %v8351
          %v8730 = vpop.permute.xlu0 %8729
          %8733 = vset.pattern.permute.xlu0 0
          %8734 = vperm.xlu0 %8733, %v8352
          %v8735 = vpop.permute.xlu0 %8734
          %8738 = vset.pattern.permute.xlu0 0
          %8739 = vperm.xlu0 %8738, %v8353
          %v8740 = vpop.permute.xlu0 %8739
          %8743 = vset.pattern.permute.xlu0 0
          %8744 = vperm.xlu0 %8743, %v8354
          %v8745 = vpop.permute.xlu0 %8744
          %8748 = vset.pattern.permute.xlu0 0
          %8749 = vperm.xlu0 %8748, %v8355
          %v8750 = vpop.permute.xlu0 %8749
          %8753 = vset.pattern.permute.xlu0 0
          %8754 = vperm.xlu0 %8753, %v8356
          %v8755 = vpop.permute.xlu0 %8754
          %8758 = vset.pattern.permute.xlu0 0
          %8759 = vperm.xlu0 %8758, %v8357
          %v8760 = vpop.permute.xlu0 %8759
          %8763 = vset.pattern.permute.xlu0 0
          %8764 = vperm.xlu0 %8763, %v8358
          %v8765 = vpop.permute.xlu0 %8764
          %8768 = vset.pattern.permute.xlu0 0
          %8769 = vperm.xlu0 %8768, %v8359
          %v8770 = vpop.permute.xlu0 %8769
          %8773 = vset.pattern.permute.xlu0 0
          %8774 = vperm.xlu0 %8773, %v8360
          %v8775 = vpop.permute.xlu0 %8774
          %8778 = vset.pattern.permute.xlu0 0
          %8779 = vperm.xlu0 %8778, %v8361
          %v8780 = vpop.permute.xlu0 %8779
          %8783 = vset.pattern.permute.xlu0 0
          %8784 = vperm.xlu0 %8783, %v8362
          %v8785 = vpop.permute.xlu0 %8784
          %8788 = vset.pattern.permute.xlu0 0
          %8789 = vperm.xlu0 %8788, %v8363
          %v8790 = vpop.permute.xlu0 %8789
          %8793 = vset.pattern.permute.xlu0 0
          %8794 = vperm.xlu0 %8793, %v8364
          %v8795 = vpop.permute.xlu0 %8794
          %8798 = vset.pattern.permute.xlu0 0
          %8799 = vperm.xlu0 %8798, %v8365
          %v8800 = vpop.permute.xlu0 %8799
          %8803 = vset.pattern.permute.xlu0 0
          %8804 = vperm.xlu0 %8803, %v8366
          %v8805 = vpop.permute.xlu0 %8804
          %8808 = vset.pattern.permute.xlu0 0
          %8809 = vperm.xlu0 %8808, %v8367
          %v8810 = vpop.permute.xlu0 %8809
          %8813 = vset.pattern.permute.xlu0 0
          %8814 = vperm.xlu0 %8813, %v8368
          %v8815 = vpop.permute.xlu0 %8814
          %8818 = vset.pattern.permute.xlu0 0
          %8819 = vperm.xlu0 %8818, %v8369
          %v8820 = vpop.permute.xlu0 %8819
          %8823 = vset.pattern.permute.xlu0 0
          %8824 = vperm.xlu0 %8823, %v8370
          %v8825 = vpop.permute.xlu0 %8824
          %8828 = vset.pattern.permute.xlu0 0
          %8829 = vperm.xlu0 %8828, %v8371
          %v8830 = vpop.permute.xlu0 %8829
          %8833 = vset.pattern.permute.xlu0 0
          %8834 = vperm.xlu0 %8833, %v8372
          %v8835 = vpop.permute.xlu0 %8834
          %8838 = vset.pattern.permute.xlu0 0
          %8839 = vperm.xlu0 %8838, %v8373
          %v8840 = vpop.permute.xlu0 %8839
          %8843 = vset.pattern.permute.xlu0 0
          %8844 = vperm.xlu0 %8843, %v8374
          %v8845 = vpop.permute.xlu0 %8844
          %8848 = vset.pattern.permute.xlu0 0
          %8849 = vperm.xlu0 %8848, %v8375
          %v8850 = vpop.permute.xlu0 %8849
          %8853 = vset.pattern.permute.xlu0 0
          %8854 = vperm.xlu0 %8853, %v8376
          %v8855 = vpop.permute.xlu0 %8854
          %8858 = vset.pattern.permute.xlu0 0
          %8859 = vperm.xlu0 %8858, %v8377
          %v8860 = vpop.permute.xlu0 %8859
          %8863 = vset.pattern.permute.xlu0 0
          %8864 = vperm.xlu0 %8863, %v8378
          %v8865 = vpop.permute.xlu0 %8864
          %8868 = vset.pattern.permute.xlu0 0
          %8869 = vperm.xlu0 %8868, %v8379
          %v8870 = vpop.permute.xlu0 %8869
          %8873 = vset.pattern.permute.xlu0 0
          %8874 = vperm.xlu0 %8873, %v8380
          %v8875 = vpop.permute.xlu0 %8874
          %8878 = vset.pattern.permute.xlu0 0
          %8879 = vperm.xlu0 %8878, %v8381
          %v8880 = vpop.permute.xlu0 %8879
          %8883 = vset.pattern.permute.xlu0 0
          %8884 = vperm.xlu0 %8883, %v8382
          %v8885 = vpop.permute.xlu0 %8884
          %8888 = vset.pattern.permute.xlu0 0
          %8889 = vperm.xlu0 %8888, %v8383
          %v8890 = vpop.permute.xlu0 %8889
          %8893 = vset.pattern.permute.xlu0 0
          %8894 = vperm.xlu0 %8893, %v8384
          %v8895 = vpop.permute.xlu0 %8894
          %8898 = vset.pattern.permute.xlu0 0
          %8899 = vperm.xlu0 %8898, %v8385
          %v8900 = vpop.permute.xlu0 %8899
          %8903 = vset.pattern.permute.xlu0 0
          %8904 = vperm.xlu0 %8903, %v8386
          %v8905 = vpop.permute.xlu0 %8904
          %8908 = vset.pattern.permute.xlu0 0
          %8909 = vperm.xlu0 %8908, %v8387
          %v8910 = vpop.permute.xlu0 %8909
          %8913 = vset.pattern.permute.xlu0 0
          %8914 = vperm.xlu0 %8913, %v8388
          %v8915 = vpop.permute.xlu0 %8914
          %8918 = vset.pattern.permute.xlu0 0
          %8919 = vperm.xlu0 %8918, %v8389
          %v8920 = vpop.permute.xlu0 %8919
          %8923 = vset.pattern.permute.xlu0 0
          %8924 = vperm.xlu0 %8923, %v8390
          %v8925 = vpop.permute.xlu0 %8924
          %8928 = vset.pattern.permute.xlu0 0
          %8929 = vperm.xlu0 %8928, %v8391
          %v8930 = vpop.permute.xlu0 %8929
          %8933 = vset.pattern.permute.xlu0 0
          %8934 = vperm.xlu0 %8933, %v8392
          %v8935 = vpop.permute.xlu0 %8934
          %8938 = vset.pattern.permute.xlu0 0
          %8939 = vperm.xlu0 %8938, %v8393
          %v8940 = vpop.permute.xlu0 %8939
          %8943 = vset.pattern.permute.xlu0 0
          %8944 = vperm.xlu0 %8943, %v8394
          %v8945 = vpop.permute.xlu0 %8944
          %8948 = vset.pattern.permute.xlu0 0
          %8949 = vperm.xlu0 %8948, %v8395
          %v8950 = vpop.permute.xlu0 %8949
          %8953 = vset.pattern.permute.xlu0 0
          %8954 = vperm.xlu0 %8953, %v8396
          %v8955 = vpop.permute.xlu0 %8954
          %8958 = vset.pattern.permute.xlu0 0
          %8959 = vperm.xlu0 %8958, %v8397
          %v8960 = vpop.permute.xlu0 %8959
          %8963 = vset.pattern.permute.xlu0 0
          %8964 = vperm.xlu0 %8963, %v8398
          %v8965 = vpop.permute.xlu0 %8964
          %8968 = vset.pattern.permute.xlu0 0
          %8969 = vperm.xlu0 %8968, %v8399
          %v8970 = vpop.permute.xlu0 %8969
          %8973 = vset.pattern.permute.xlu0 0
          %8974 = vperm.xlu0 %8973, %v8400
          %v8975 = vpop.permute.xlu0 %8974
          %8978 = vset.pattern.permute.xlu0 0
          %8979 = vperm.xlu0 %8978, %v8401
          %v8980 = vpop.permute.xlu0 %8979
          %8983 = vset.pattern.permute.xlu0 0
          %8984 = vperm.xlu0 %8983, %v8402
          %v8985 = vpop.permute.xlu0 %8984
          %8988 = vset.pattern.permute.xlu0 0
          %8989 = vperm.xlu0 %8988, %v8403
          %v8990 = vpop.permute.xlu0 %8989
          %8993 = vset.pattern.permute.xlu0 0
          %8994 = vperm.xlu0 %8993, %v8404
          %v8995 = vpop.permute.xlu0 %8994
          %8998 = vset.pattern.permute.xlu0 0
          %8999 = vperm.xlu0 %8998, %v8405
          %v9000 = vpop.permute.xlu0 %8999
          %9003 = vset.pattern.permute.xlu0 0
          %9004 = vperm.xlu0 %9003, %v8406
          %v9005 = vpop.permute.xlu0 %9004
          %9008 = vset.pattern.permute.xlu0 0
          %9009 = vperm.xlu0 %9008, %v8407
          %v9010 = vpop.permute.xlu0 %9009
          %9013 = vset.pattern.permute.xlu0 0
          %9014 = vperm.xlu0 %9013, %v8408
          %v9015 = vpop.permute.xlu0 %9014
          %9018 = vset.pattern.permute.xlu0 0
          %9019 = vperm.xlu0 %9018, %v8409
          %v9020 = vpop.permute.xlu0 %9019
          %9023 = vset.pattern.permute.xlu0 0
          %9024 = vperm.xlu0 %9023, %v8410
          %v9025 = vpop.permute.xlu0 %9024
          %9028 = vset.pattern.permute.xlu0 0
          %9029 = vperm.xlu0 %9028, %v8411
          %v9030 = vpop.permute.xlu0 %9029
          %9033 = vset.pattern.permute.xlu0 0
          %9034 = vperm.xlu0 %9033, %v8412
          %v9035 = vpop.permute.xlu0 %9034
          %9038 = vset.pattern.permute.xlu0 0
          %9039 = vperm.xlu0 %9038, %v8413
          %v9040 = vpop.permute.xlu0 %9039
          %9043 = vset.pattern.permute.xlu0 0
          %9044 = vperm.xlu0 %9043, %v8414
          %v9045 = vpop.permute.xlu0 %9044
          %9048 = vset.pattern.permute.xlu0 0
          %9049 = vperm.xlu0 %9048, %v8415
          %v9050 = vpop.permute.xlu0 %9049
          %9053 = vset.pattern.permute.xlu0 0
          %9054 = vperm.xlu0 %9053, %v8416
          %v9055 = vpop.permute.xlu0 %9054
          %9058 = vset.pattern.permute.xlu0 0
          %9059 = vperm.xlu0 %9058, %v8417
          %v9060 = vpop.permute.xlu0 %9059
          %9063 = vset.pattern.permute.xlu0 0
          %9064 = vperm.xlu0 %9063, %v8418
          %v9065 = vpop.permute.xlu0 %9064
          %9068 = vset.pattern.permute.xlu0 0
          %9069 = vperm.xlu0 %9068, %v8419
          %v9070 = vpop.permute.xlu0 %9069
          %9073 = vset.pattern.permute.xlu0 0
          %9074 = vperm.xlu0 %9073, %v8420
          %v9075 = vpop.permute.xlu0 %9074
          %9078 = vset.pattern.permute.xlu0 0
          %9079 = vperm.xlu0 %9078, %v8421
          %v9080 = vpop.permute.xlu0 %9079
          %9083 = vset.pattern.permute.xlu0 0
          %9084 = vperm.xlu0 %9083, %v8422
          %v9085 = vpop.permute.xlu0 %9084
          %9088 = vset.pattern.permute.xlu0 0
          %9089 = vperm.xlu0 %9088, %v8423
          %v9090 = vpop.permute.xlu0 %9089
          %9093 = vset.pattern.permute.xlu0 0
          %9094 = vperm.xlu0 %9093, %v8424
          %v9095 = vpop.permute.xlu0 %9094
          %9098 = vset.pattern.permute.xlu0 0
          %9099 = vperm.xlu0 %9098, %v8425
          %v9100 = vpop.permute.xlu0 %9099
          %9103 = vset.pattern.permute.xlu0 0
          %9104 = vperm.xlu0 %9103, %v8426
          %v9105 = vpop.permute.xlu0 %9104
          %9108 = vset.pattern.permute.xlu0 0
          %9109 = vperm.xlu0 %9108, %v8427
          %v9110 = vpop.permute.xlu0 %9109
          %9113 = vset.pattern.permute.xlu0 0
          %9114 = vperm.xlu0 %9113, %v8428
          %v9115 = vpop.permute.xlu0 %9114
          %9118 = vset.pattern.permute.xlu0 0
          %9119 = vperm.xlu0 %9118, %v8429
          %v9120 = vpop.permute.xlu0 %9119
          %9123 = vset.pattern.permute.xlu0 0
          %9124 = vperm.xlu0 %9123, %v8430
          %v9125 = vpop.permute.xlu0 %9124
          %9128 = vset.pattern.permute.xlu0 0
          %9129 = vperm.xlu0 %9128, %v8431
          %v9130 = vpop.permute.xlu0 %9129
          %9133 = vset.pattern.permute.xlu0 0
          %9134 = vperm.xlu0 %9133, %v8432
          %v9135 = vpop.permute.xlu0 %9134
          %9138 = vset.pattern.permute.xlu0 0
          %9139 = vperm.xlu0 %9138, %v8433
          %v9140 = vpop.permute.xlu0 %9139
          %9143 = vset.pattern.permute.xlu0 0
          %9144 = vperm.xlu0 %9143, %v8434
          %v9145 = vpop.permute.xlu0 %9144
          %9148 = vset.pattern.permute.xlu0 0
          %9149 = vperm.xlu0 %9148, %v8435
          %v9150 = vpop.permute.xlu0 %9149
          %9153 = vset.pattern.permute.xlu0 0
          %9154 = vperm.xlu0 %9153, %v8436
          %v9155 = vpop.permute.xlu0 %9154
          %9158 = vset.pattern.permute.xlu0 0
          %9159 = vperm.xlu0 %9158, %v8437
          %v9160 = vpop.permute.xlu0 %9159
          %9163 = vset.pattern.permute.xlu0 0
          %9164 = vperm.xlu0 %9163, %v8438
          %v9165 = vpop.permute.xlu0 %9164
          %9168 = vset.pattern.permute.xlu0 0
          %9169 = vperm.xlu0 %9168, %v8439
          %v9170 = vpop.permute.xlu0 %9169
          %9173 = vset.pattern.permute.xlu0 0
          %9174 = vperm.xlu0 %9173, %v8440
          %v9175 = vpop.permute.xlu0 %9174
          %9178 = vset.pattern.permute.xlu0 0
          %9179 = vperm.xlu0 %9178, %v8441
          %v9180 = vpop.permute.xlu0 %9179
          %9183 = vset.pattern.permute.xlu0 0
          %9184 = vperm.xlu0 %9183, %v8442
          %v9185 = vpop.permute.xlu0 %9184
          %9188 = vset.pattern.permute.xlu0 0
          %9189 = vperm.xlu0 %9188, %v8443
          %v9190 = vpop.permute.xlu0 %9189
          %9193 = vset.pattern.permute.xlu0 0
          %9194 = vperm.xlu0 %9193, %v8444
          %v9195 = vpop.permute.xlu0 %9194
          %9198 = vset.pattern.permute.xlu0 0
          %9199 = vperm.xlu0 %9198, %v8445
          %v9200 = vpop.permute.xlu0 %9199
          %9203 = vset.pattern.permute.xlu0 0
          %9204 = vperm.xlu0 %9203, %v8446
          %v9205 = vpop.permute.xlu0 %9204
          %9208 = vset.pattern.permute.xlu0 0
          %9209 = vperm.xlu0 %9208, %v8447
          %v9210 = vpop.permute.xlu0 %9209
          %9213 = vset.pattern.permute.xlu0 0
          %9214 = vperm.xlu0 %9213, %v8448
          %v9215 = vpop.permute.xlu0 %9214
          %v9217 = vmul.f32 %v8449, %v8580
          %v9218 = vmul.f32 %v8450, %v8585
          %v9219 = vmul.f32 %v8451, %v8590
          %v9220 = vmul.f32 %v8452, %v8595
          %v9221 = vmul.f32 %v8453, %v8600
          %v9222 = vmul.f32 %v8454, %v8605
          %v9223 = vmul.f32 %v8455, %v8610
          %v9224 = vmul.f32 %v8456, %v8615
          %v9225 = vmul.f32 %v8457, %v8620
          %v9226 = vmul.f32 %v8458, %v8625
          %v9227 = vmul.f32 %v8459, %v8630
          %v9228 = vmul.f32 %v8460, %v8635
          %v9229 = vmul.f32 %v8461, %v8640
          %v9230 = vmul.f32 %v8462, %v8645
          %v9231 = vmul.f32 %v8463, %v8650
          %v9232 = vmul.f32 %v8464, %v8655
          %v9233 = vmul.f32 %v8465, %v8660
          %v9234 = vmul.f32 %v8466, %v8665
          %v9235 = vmul.f32 %v8467, %v8670
          %v9236 = vmul.f32 %v8468, %v8675
          %v9237 = vmul.f32 %v8469, %v8680
          %v9238 = vmul.f32 %v8470, %v8685
          %v9239 = vmul.f32 %v8471, %v8690
          %v9240 = vmul.f32 %v8472, %v8695
          %v9241 = vmul.f32 %v8473, %v8700
          %v9242 = vmul.f32 %v8474, %v8705
          %v9243 = vmul.f32 %v8475, %v8710
          %v9244 = vmul.f32 %v8476, %v8715
          %v9245 = vmul.f32 %v8477, %v8720
          %v9246 = vmul.f32 %v8478, %v8725
          %v9247 = vmul.f32 %v8479, %v8730
          %v9248 = vmul.f32 %v8480, %v8735
          %v9249 = vmul.f32 %v8481, %v8740
          %v9250 = vmul.f32 %v8482, %v8745
          %v9251 = vmul.f32 %v8483, %v8750
          %v9252 = vmul.f32 %v8484, %v8755
          %v9253 = vmul.f32 %v8485, %v8760
          %v9254 = vmul.f32 %v8486, %v8765
          %v9255 = vmul.f32 %v8487, %v8770
          %v9256 = vmul.f32 %v8488, %v8775
          %v9257 = vmul.f32 %v8489, %v8780
          %v9258 = vmul.f32 %v8490, %v8785
          %v9259 = vmul.f32 %v8491, %v8790
          %v9260 = vmul.f32 %v8492, %v8795
          %v9261 = vmul.f32 %v8493, %v8800
          %v9262 = vmul.f32 %v8494, %v8805
          %v9263 = vmul.f32 %v8495, %v8810
          %v9264 = vmul.f32 %v8496, %v8815
          %v9265 = vmul.f32 %v8497, %v8820
          %v9266 = vmul.f32 %v8498, %v8825
          %v9267 = vmul.f32 %v8499, %v8830
          %v9268 = vmul.f32 %v8500, %v8835
          %v9269 = vmul.f32 %v8501, %v8840
          %v9270 = vmul.f32 %v8502, %v8845
          %v9271 = vmul.f32 %v8503, %v8850
          %v9272 = vmul.f32 %v8504, %v8855
          %v9273 = vmul.f32 %v8505, %v8860
          %v9274 = vmul.f32 %v8506, %v8865
          %v9275 = vmul.f32 %v8507, %v8870
          %v9276 = vmul.f32 %v8508, %v8875
          %v9277 = vmul.f32 %v8509, %v8880
          %v9278 = vmul.f32 %v8510, %v8885
          %v9279 = vmul.f32 %v8511, %v8890
          %v9280 = vmul.f32 %v8512, %v8895
          %v9281 = vmul.f32 %v8513, %v8900
          %v9282 = vmul.f32 %v8514, %v8905
          %v9283 = vmul.f32 %v8515, %v8910
          %v9284 = vmul.f32 %v8516, %v8915
          %v9285 = vmul.f32 %v8517, %v8920
          %v9286 = vmul.f32 %v8518, %v8925
          %v9287 = vmul.f32 %v8519, %v8930
          %v9288 = vmul.f32 %v8520, %v8935
          %v9289 = vmul.f32 %v8521, %v8940
          %v9290 = vmul.f32 %v8522, %v8945
          %v9291 = vmul.f32 %v8523, %v8950
          %v9292 = vmul.f32 %v8524, %v8955
          %v9293 = vmul.f32 %v8525, %v8960
          %v9294 = vmul.f32 %v8526, %v8965
          %v9295 = vmul.f32 %v8527, %v8970
          %v9296 = vmul.f32 %v8528, %v8975
          %v9297 = vmul.f32 %v8529, %v8980
          %v9298 = vmul.f32 %v8530, %v8985
          %v9299 = vmul.f32 %v8531, %v8990
          %v9300 = vmul.f32 %v8532, %v8995
          %v9301 = vmul.f32 %v8533, %v9000
          %v9302 = vmul.f32 %v8534, %v9005
          %v9303 = vmul.f32 %v8535, %v9010
          %v9304 = vmul.f32 %v8536, %v9015
          %v9305 = vmul.f32 %v8537, %v9020
          %v9306 = vmul.f32 %v8538, %v9025
          %v9307 = vmul.f32 %v8539, %v9030
          %v9308 = vmul.f32 %v8540, %v9035
          %v9309 = vmul.f32 %v8541, %v9040
          %v9310 = vmul.f32 %v8542, %v9045
          %v9311 = vmul.f32 %v8543, %v9050
          %v9312 = vmul.f32 %v8544, %v9055
          %v9313 = vmul.f32 %v8545, %v9060
          %v9314 = vmul.f32 %v8546, %v9065
          %v9315 = vmul.f32 %v8547, %v9070
          %v9316 = vmul.f32 %v8548, %v9075
          %v9317 = vmul.f32 %v8549, %v9080
          %v9318 = vmul.f32 %v8550, %v9085
          %v9319 = vmul.f32 %v8551, %v9090
          %v9320 = vmul.f32 %v8552, %v9095
          %v9321 = vmul.f32 %v8553, %v9100
          %v9322 = vmul.f32 %v8554, %v9105
          %v9323 = vmul.f32 %v8555, %v9110
          %v9324 = vmul.f32 %v8556, %v9115
          %v9325 = vmul.f32 %v8557, %v9120
          %v9326 = vmul.f32 %v8558, %v9125
          %v9327 = vmul.f32 %v8559, %v9130
          %v9328 = vmul.f32 %v8560, %v9135
          %v9329 = vmul.f32 %v8561, %v9140
          %v9330 = vmul.f32 %v8562, %v9145
          %v9331 = vmul.f32 %v8563, %v9150
          %v9332 = vmul.f32 %v8564, %v9155
          %v9333 = vmul.f32 %v8565, %v9160
          %v9334 = vmul.f32 %v8566, %v9165
          %v9335 = vmul.f32 %v8567, %v9170
          %v9336 = vmul.f32 %v8568, %v9175
          %v9337 = vmul.f32 %v8569, %v9180
          %v9338 = vmul.f32 %v8570, %v9185
          %v9339 = vmul.f32 %v8571, %v9190
          %v9340 = vmul.f32 %v8572, %v9195
          %v9341 = vmul.f32 %v8573, %v9200
          %v9342 = vmul.f32 %v8574, %v9205
          %v9343 = vmul.f32 %v8575, %v9210
          %v9344 = vmul.f32 %v8576, %v9215
          %v9345 = vpack.c.bf16 %v9218, %v9217
          %v9346 = vpack.c.bf16 %v9220, %v9219
          %v9347 = vpack.c.bf16 %v9222, %v9221
          %v9348 = vpack.c.bf16 %v9224, %v9223
          %v9349 = vpack.c.bf16 %v9226, %v9225
          %v9350 = vpack.c.bf16 %v9228, %v9227
          %v9351 = vpack.c.bf16 %v9230, %v9229
          %v9352 = vpack.c.bf16 %v9232, %v9231
          %v9353 = vpack.c.bf16 %v9234, %v9233
          %v9354 = vpack.c.bf16 %v9236, %v9235
          %v9355 = vpack.c.bf16 %v9238, %v9237
          %v9356 = vpack.c.bf16 %v9240, %v9239
          %v9357 = vpack.c.bf16 %v9242, %v9241
          %v9358 = vpack.c.bf16 %v9244, %v9243
          %v9359 = vpack.c.bf16 %v9246, %v9245
          %v9360 = vpack.c.bf16 %v9248, %v9247
          %v9361 = vpack.c.bf16 %v9250, %v9249
          %v9362 = vpack.c.bf16 %v9252, %v9251
          %v9363 = vpack.c.bf16 %v9254, %v9253
          %v9364 = vpack.c.bf16 %v9256, %v9255
          %v9365 = vpack.c.bf16 %v9258, %v9257
          %v9366 = vpack.c.bf16 %v9260, %v9259
          %v9367 = vpack.c.bf16 %v9262, %v9261
          %v9368 = vpack.c.bf16 %v9264, %v9263
          %v9369 = vpack.c.bf16 %v9266, %v9265
          %v9370 = vpack.c.bf16 %v9268, %v9267
          %v9371 = vpack.c.bf16 %v9270, %v9269
          %v9372 = vpack.c.bf16 %v9272, %v9271
          %v9373 = vpack.c.bf16 %v9274, %v9273
          %v9374 = vpack.c.bf16 %v9276, %v9275
          %v9375 = vpack.c.bf16 %v9278, %v9277
          %v9376 = vpack.c.bf16 %v9280, %v9279
          %v9377 = vpack.c.bf16 %v9282, %v9281
          %v9378 = vpack.c.bf16 %v9284, %v9283
          %v9379 = vpack.c.bf16 %v9286, %v9285
          %v9380 = vpack.c.bf16 %v9288, %v9287
          %v9381 = vpack.c.bf16 %v9290, %v9289
          %v9382 = vpack.c.bf16 %v9292, %v9291
          %v9383 = vpack.c.bf16 %v9294, %v9293
          %v9384 = vpack.c.bf16 %v9296, %v9295
          %v9385 = vpack.c.bf16 %v9298, %v9297
          %v9386 = vpack.c.bf16 %v9300, %v9299
          %v9387 = vpack.c.bf16 %v9302, %v9301
          %v9388 = vpack.c.bf16 %v9304, %v9303
          %v9389 = vpack.c.bf16 %v9306, %v9305
          %v9390 = vpack.c.bf16 %v9308, %v9307
          %v9391 = vpack.c.bf16 %v9310, %v9309
          %v9392 = vpack.c.bf16 %v9312, %v9311
          %v9393 = vpack.c.bf16 %v9314, %v9313
          %v9394 = vpack.c.bf16 %v9316, %v9315
          %v9395 = vpack.c.bf16 %v9318, %v9317
          %v9396 = vpack.c.bf16 %v9320, %v9319
          %v9397 = vpack.c.bf16 %v9322, %v9321
          %v9398 = vpack.c.bf16 %v9324, %v9323
          %v9399 = vpack.c.bf16 %v9326, %v9325
          %v9400 = vpack.c.bf16 %v9328, %v9327
          %v9401 = vpack.c.bf16 %v9330, %v9329
          %v9402 = vpack.c.bf16 %v9332, %v9331
          %v9403 = vpack.c.bf16 %v9334, %v9333
          %v9404 = vpack.c.bf16 %v9336, %v9335
          %v9405 = vpack.c.bf16 %v9338, %v9337
          %v9406 = vpack.c.bf16 %v9340, %v9339
          %v9407 = vpack.c.bf16 %v9342, %v9341
          %v9408 = vpack.c.bf16 %v9344, %v9343
          %v9409 = vld [vmem:[%s5] sm:$0x3]
          %v9410 = vld [vmem:[%s5 + $0x2] sm:$0x3]
          %v9411 = vld [vmem:[%s5 + $0x4] sm:$0x3]
          %v9412 = vld [vmem:[%s5 + $0x6] sm:$0x3]
          %v9414 = vsel %vm1844, %v9409, 0
          %v9417 = vsel %vm1844, %v9345, 0
          %v9420 = vsel %vm1844, %v9346, 0
          %v9423 = vsel %vm1844, %v9347, 0
          %v9426 = vsel %vm1844, %v9348, 0
          %v9429 = vsel %vm1844, %v9349, 0
          %v9432 = vsel %vm1844, %v9350, 0
          %v9435 = vsel %vm1844, %v9351, 0
          %v9438 = vsel %vm1844, %v9352, 0
          %v9441 = vsel %vm1844, %v9353, 0
          %v9444 = vsel %vm1844, %v9354, 0
          %v9447 = vsel %vm1844, %v9355, 0
          %v9450 = vsel %vm1844, %v9356, 0
          %v9453 = vsel %vm1844, %v9357, 0
          %v9456 = vsel %vm1844, %v9358, 0
          %v9459 = vsel %vm1844, %v9359, 0
          %v9462 = vsel %vm1844, %v9360, 0
          %9464 = vmatprep.subr.bf16.mxu0 0
          %9465 = vmatpush1.bf16.xpose.msra.mxu0 %v9417
          %9466 = vmatprep.subr.bf16.mxu0 0
          %9467 = vmatpush1.bf16.xpose.msra.mxu0 %v9420
          %9468 = vmatprep.subr.bf16.mxu0 0
          %9469 = vmatpush1.bf16.xpose.msra.mxu0 %v9423
          %9470 = vmatprep.subr.bf16.mxu0 0
          %9471 = vmatpush1.bf16.xpose.msra.mxu0 %v9426
          %9472 = vmatprep.subr.bf16.mxu0 0
          %9473 = vmatpush1.bf16.xpose.msra.mxu0 %v9429
          %9474 = vmatprep.subr.bf16.mxu0 0
          %9475 = vmatpush1.bf16.xpose.msra.mxu0 %v9432
          %9476 = vmatprep.subr.bf16.mxu0 0
          %9477 = vmatpush1.bf16.xpose.msra.mxu0 %v9435
          %9478 = vmatprep.subr.bf16.mxu0 0
          %9479 = vmatpush1.bf16.xpose.msra.mxu0 %v9438
          %9480 = vmatprep.subr.bf16.mxu0 0
          %9481 = vmatpush1.bf16.xpose.msra.mxu0 %v9441
          %9482 = vmatprep.subr.bf16.mxu0 0
          %9483 = vmatpush1.bf16.xpose.msra.mxu0 %v9444
          %9484 = vmatprep.subr.bf16.mxu0 0
          %9485 = vmatpush1.bf16.xpose.msra.mxu0 %v9447
          %9486 = vmatprep.subr.bf16.mxu0 0
          %9487 = vmatpush1.bf16.xpose.msra.mxu0 %v9450
          %9488 = vmatprep.subr.bf16.mxu0 0
          %9489 = vmatpush1.bf16.xpose.msra.mxu0 %v9453
          %9490 = vmatprep.subr.bf16.mxu0 0
          %9491 = vmatpush1.bf16.xpose.msra.mxu0 %v9456
          %9492 = vmatprep.subr.bf16.mxu0 0
          %9493 = vmatpush1.bf16.xpose.msra.mxu0 %v9459
          %9494 = vmatprep.subr.bf16.mxu0 0
          %9495 = vmatpush1.bf16.xpose.msra.mxu0 %v9462
          %9496 = vmatprep.mubr.bf16.mxu0 0
          %9497 = vmatmul.mubr.bf16.gmra.mrb[0].mxu0 %v9414
          %v9498 = vpop.f32.mrb[0].mxu0
          %v9499 = vadd.f32 0.0, %v9498
          %v9500 = vpop.f32.mrb[0].mxu0
          %v9501 = vadd.f32 0.0, %v9500
          %v9502 = vpop.f32.mrb[0].mxu0
          %v9503 = vpop.f32.mrb[0].mxu0
          %9504 = vdwg.mxu0
          %v9506 = vsel %vm1844, %v9410, 0
          %v9509 = vsel %vm1844, %v9361, 0
          %v9512 = vsel %vm1844, %v9362, 0
          %v9515 = vsel %vm1844, %v9363, 0
          %v9518 = vsel %vm1844, %v9364, 0
          %v9521 = vsel %vm1844, %v9365, 0
          %v9524 = vsel %vm1844, %v9366, 0
          %v9527 = vsel %vm1844, %v9367, 0
          %v9530 = vsel %vm1844, %v9368, 0
          %v9533 = vsel %vm1844, %v9369, 0
          %v9536 = vsel %vm1844, %v9370, 0
          %v9539 = vsel %vm1844, %v9371, 0
          %v9542 = vsel %vm1844, %v9372, 0
          %v9545 = vsel %vm1844, %v9373, 0
          %v9548 = vsel %vm1844, %v9374, 0
          %v9551 = vsel %vm1844, %v9375, 0
          %v9554 = vsel %vm1844, %v9376, 0
          %9556 = vmatprep.subr.bf16.mxu0 0
          %9557 = vmatpush1.bf16.xpose.msra.mxu0 %v9509
          %9558 = vmatprep.subr.bf16.mxu0 0
          %9559 = vmatpush1.bf16.xpose.msra.mxu0 %v9512
          %9560 = vmatprep.subr.bf16.mxu0 0
          %9561 = vmatpush1.bf16.xpose.msra.mxu0 %v9515
          %9562 = vmatprep.subr.bf16.mxu0 0
          %9563 = vmatpush1.bf16.xpose.msra.mxu0 %v9518
          %9564 = vmatprep.subr.bf16.mxu0 0
          %9565 = vmatpush1.bf16.xpose.msra.mxu0 %v9521
          %9566 = vmatprep.subr.bf16.mxu0 0
          %9567 = vmatpush1.bf16.xpose.msra.mxu0 %v9524
          %9568 = vmatprep.subr.bf16.mxu0 0
          %9569 = vmatpush1.bf16.xpose.msra.mxu0 %v9527
          %9570 = vmatprep.subr.bf16.mxu0 0
          %9571 = vmatpush1.bf16.xpose.msra.mxu0 %v9530
          %9572 = vmatprep.subr.bf16.mxu0 0
          %9573 = vmatpush1.bf16.xpose.msra.mxu0 %v9533
          %9574 = vmatprep.subr.bf16.mxu0 0
          %9575 = vmatpush1.bf16.xpose.msra.mxu0 %v9536
          %9576 = vmatprep.subr.bf16.mxu0 0
          %9577 = vmatpush1.bf16.xpose.msra.mxu0 %v9539
          %9578 = vmatprep.subr.bf16.mxu0 0
          %9579 = vmatpush1.bf16.xpose.msra.mxu0 %v9542
          %9580 = vmatprep.subr.bf16.mxu0 0
          %9581 = vmatpush1.bf16.xpose.msra.mxu0 %v9545
          %9582 = vmatprep.subr.bf16.mxu0 0
          %9583 = vmatpush1.bf16.xpose.msra.mxu0 %v9548
          %9584 = vmatprep.subr.bf16.mxu0 0
          %9585 = vmatpush1.bf16.xpose.msra.mxu0 %v9551
          %9586 = vmatprep.subr.bf16.mxu0 0
          %9587 = vmatpush1.bf16.xpose.msra.mxu0 %v9554
          %9588 = vmatprep.mubr.bf16.mxu0 0
          %9589 = vmatmul.mubr.bf16.gmra.mrb[0].mxu0 %v9506
          %v9590 = vpop.f32.mrb[0].mxu0
          %v9591 = vadd.f32 0.0, %v9590
          %v9592 = vpop.f32.mrb[0].mxu0
          %v9593 = vadd.f32 0.0, %v9592
          %v9594 = vpop.f32.mrb[0].mxu0
          %v9595 = vpop.f32.mrb[0].mxu0
          %9596 = vdwg.mxu0
          %v9598 = vsel %vm1844, %v9411, 0
          %v9601 = vsel %vm1844, %v9377, 0
          %v9604 = vsel %vm1844, %v9378, 0
          %v9607 = vsel %vm1844, %v9379, 0
          %v9610 = vsel %vm1844, %v9380, 0
          %v9613 = vsel %vm1844, %v9381, 0
          %v9616 = vsel %vm1844, %v9382, 0
          %v9619 = vsel %vm1844, %v9383, 0
          %v9622 = vsel %vm1844, %v9384, 0
          %v9625 = vsel %vm1844, %v9385, 0
          %v9628 = vsel %vm1844, %v9386, 0
          %v9631 = vsel %vm1844, %v9387, 0
          %v9634 = vsel %vm1844, %v9388, 0
          %v9637 = vsel %vm1844, %v9389, 0
          %v9640 = vsel %vm1844, %v9390, 0
          %v9643 = vsel %vm1844, %v9391, 0
          %v9646 = vsel %vm1844, %v9392, 0
          %9648 = vmatprep.subr.bf16.mxu0 0
          %9649 = vmatpush1.bf16.xpose.msra.mxu0 %v9601
          %9650 = vmatprep.subr.bf16.mxu0 0
          %9651 = vmatpush1.bf16.xpose.msra.mxu0 %v9604
          %9652 = vmatprep.subr.bf16.mxu0 0
          %9653 = vmatpush1.bf16.xpose.msra.mxu0 %v9607
          %9654 = vmatprep.subr.bf16.mxu0 0
          %9655 = vmatpush1.bf16.xpose.msra.mxu0 %v9610
          %9656 = vmatprep.subr.bf16.mxu0 0
          %9657 = vmatpush1.bf16.xpose.msra.mxu0 %v9613
          %9658 = vmatprep.subr.bf16.mxu0 0
          %9659 = vmatpush1.bf16.xpose.msra.mxu0 %v9616
          %9660 = vmatprep.subr.bf16.mxu0 0
          %9661 = vmatpush1.bf16.xpose.msra.mxu0 %v9619
          %9662 = vmatprep.subr.bf16.mxu0 0
          %9663 = vmatpush1.bf16.xpose.msra.mxu0 %v9622
          %9664 = vmatprep.subr.bf16.mxu0 0
          %9665 = vmatpush1.bf16.xpose.msra.mxu0 %v9625
          %9666 = vmatprep.subr.bf16.mxu0 0
          %9667 = vmatpush1.bf16.xpose.msra.mxu0 %v9628
          %9668 = vmatprep.subr.bf16.mxu0 0
          %9669 = vmatpush1.bf16.xpose.msra.mxu0 %v9631
          %9670 = vmatprep.subr.bf16.mxu0 0
          %9671 = vmatpush1.bf16.xpose.msra.mxu0 %v9634
          %9672 = vmatprep.subr.bf16.mxu0 0
          %9673 = vmatpush1.bf16.xpose.msra.mxu0 %v9637
          %9674 = vmatprep.subr.bf16.mxu0 0
          %9675 = vmatpush1.bf16.xpose.msra.mxu0 %v9640
          %9676 = vmatprep.subr.bf16.mxu0 0
          %9677 = vmatpush1.bf16.xpose.msra.mxu0 %v9643
          %9678 = vmatprep.subr.bf16.mxu0 0
          %9679 = vmatpush1.bf16.xpose.msra.mxu0 %v9646
          %9680 = vmatprep.mubr.bf16.mxu0 0
          %9681 = vmatmul.mubr.bf16.gmra.mrb[0].mxu0 %v9598
          %v9682 = vpop.f32.mrb[0].mxu0
          %v9683 = vadd.f32 0.0, %v9682
          %v9684 = vpop.f32.mrb[0].mxu0
          %v9685 = vadd.f32 0.0, %v9684
          %v9686 = vpop.f32.mrb[0].mxu0
          %v9687 = vpop.f32.mrb[0].mxu0
          %9688 = vdwg.mxu0
          %v9690 = vsel %vm1844, %v9412, 0
          %v9693 = vsel %vm1844, %v9393, 0
          %v9696 = vsel %vm1844, %v9394, 0
          %v9699 = vsel %vm1844, %v9395, 0
          %v9702 = vsel %vm1844, %v9396, 0
          %v9705 = vsel %vm1844, %v9397, 0
          %v9708 = vsel %vm1844, %v9398, 0
          %v9711 = vsel %vm1844, %v9399, 0
          %v9714 = vsel %vm1844, %v9400, 0
          %v9717 = vsel %vm1844, %v9401, 0
          %v9720 = vsel %vm1844, %v9402, 0
          %v9723 = vsel %vm1844, %v9403, 0
          %v9726 = vsel %vm1844, %v9404, 0
          %v9729 = vsel %vm1844, %v9405, 0
          %v9732 = vsel %vm1844, %v9406, 0
          %v9735 = vsel %vm1844, %v9407, 0
          %v9738 = vsel %vm1844, %v9408, 0
          %9740 = vmatprep.subr.bf16.mxu0 0
          %9741 = vmatpush1.bf16.xpose.msra.mxu0 %v9693
          %9742 = vmatprep.subr.bf16.mxu0 0
          %9743 = vmatpush1.bf16.xpose.msra.mxu0 %v9696
          %9744 = vmatprep.subr.bf16.mxu0 0
          %9745 = vmatpush1.bf16.xpose.msra.mxu0 %v9699
          %9746 = vmatprep.subr.bf16.mxu0 0
          %9747 = vmatpush1.bf16.xpose.msra.mxu0 %v9702
          %9748 = vmatprep.subr.bf16.mxu0 0
          %9749 = vmatpush1.bf16.xpose.msra.mxu0 %v9705
          %9750 = vmatprep.subr.bf16.mxu0 0
          %9751 = vmatpush1.bf16.xpose.msra.mxu0 %v9708
          %9752 = vmatprep.subr.bf16.mxu0 0
          %9753 = vmatpush1.bf16.xpose.msra.mxu0 %v9711
          %9754 = vmatprep.subr.bf16.mxu0 0
          %9755 = vmatpush1.bf16.xpose.msra.mxu0 %v9714
          %9756 = vmatprep.subr.bf16.mxu0 0
          %9757 = vmatpush1.bf16.xpose.msra.mxu0 %v9717
          %9758 = vmatprep.subr.bf16.mxu0 0
          %9759 = vmatpush1.bf16.xpose.msra.mxu0 %v9720
          %9760 = vmatprep.subr.bf16.mxu0 0
          %9761 = vmatpush1.bf16.xpose.msra.mxu0 %v9723
          %9762 = vmatprep.subr.bf16.mxu0 0
          %9763 = vmatpush1.bf16.xpose.msra.mxu0 %v9726
          %9764 = vmatprep.subr.bf16.mxu0 0
          %9765 = vmatpush1.bf16.xpose.msra.mxu0 %v9729
          %9766 = vmatprep.subr.bf16.mxu0 0
          %9767 = vmatpush1.bf16.xpose.msra.mxu0 %v9732
          %9768 = vmatprep.subr.bf16.mxu0 0
          %9769 = vmatpush1.bf16.xpose.msra.mxu0 %v9735
          %9770 = vmatprep.subr.bf16.mxu0 0
          %9771 = vmatpush1.bf16.xpose.msra.mxu0 %v9738
          %9772 = vmatprep.mubr.bf16.mxu0 0
          %9773 = vmatmul.mubr.bf16.gmra.mrb[0].mxu0 %v9690
          %v9774 = vpop.f32.mrb[0].mxu0
          %v9775 = vadd.f32 0.0, %v9774
          %v9776 = vpop.f32.mrb[0].mxu0
          %v9777 = vadd.f32 0.0, %v9776
          %v9778 = vpop.f32.mrb[0].mxu0
          %v9779 = vpop.f32.mrb[0].mxu0
          %9780 = vdwg.mxu0
          %vm9781 = vcmask 1043456
          %v9782 = vsel %vm9781, %v9499, 0.0
          %v9783 = vsel %vm9781, %v9591, 0.0
          %v9784 = vadd.f32 %v9782, %v9783
          %v9785 = vsel %vm9781, %v9683, 0.0
          %v9786 = vadd.f32 %v9784, %v9785
          %v9787 = vsel %vm9781, %v9775, 0.0
          %v9788 = vadd.f32 %v9786, %v9787
          %v9789 = vsel %vm9781, %v9501, 0.0
          %v9790 = vsel %vm9781, %v9593, 0.0
          %v9791 = vadd.f32 %v9789, %v9790
          %v9792 = vsel %vm9781, %v9685, 0.0
          %v9793 = vadd.f32 %v9791, %v9792
          %v9794 = vsel %vm9781, %v9777, 0.0
          %v9795 = vadd.f32 %v9793, %v9794
          %v9796 = vld [vmem:[%s6] sm:$0xf]
          %9798 = vset.pattern.permute.xlu0 0
          %9799 = vperm.xlu0 %9798, %v9796
          %v9800 = vpop.permute.xlu0 %9799
          %v9802 = vadd.f32 %v9788, %v9800
          %v9803 = vadd.f32 %v9795, %v9800
          %v9806 = vcombine.low %v9802, %v9803
          %9808 = vst [vmem:[%s329] sm:$0xff] %v9806
        $region56: #{tpu_custom_call.1} parent=47 // pred_fallthru
          _
        %s9809 = sand.u32 %s211, 1
        %s9810 = scalar_lea.sflag [#allocation7], %s9809
        %s9811 = sand.u32 %s211, 1
        %s9812 = smul.addr %s9811, 8
        %s9813 = scalar_lea.vmem [#allocation6], %s9812
        // Predicated region
        $region57: #{tpu_custom_call.1} parent=47 // pred_check
          %p9814 = pneg %p221
        $region58: #{tpu_custom_call.1} parent=47 // pred_check_branch
          %9816 = sbr.rel (%p9814) target = $region60
        $region59: #{tpu_custom_call.1} parent=47 // pred_region
          %s9817 = smul.u32 2, %s27
          %s9819 = ssub.s32 128, 128
          %9820 = vsyncadd %s9810, %s9819
          %s9821 = smul.addr %s26, 2
          %s9822 = sadd.s32 %s9817, %s9821
          %s9823 = smul.addr %s9822, 64
          %s9824 = scalar_lea.hbm %s7, %s9823
          %s9826 = sshll.u32 %s9813, 4
          %s9827 = int_to_ptr.vmem [resolvable:$true] %s9826
          %9829 = dma.vmem_to_hbm [thread:$0]  %s9827, 128, %s9824, %s9810
        $region60: #{tpu_custom_call.1} parent=47 // pred_fallthru
          _
      $region48: #{tpu_custom_call.1} parent=5 // pred_fallthru
        _
      %p9830 = scmp.le.s32.totalorder 2, %s16
      // Predicated region
      $region61: #{tpu_custom_call.1} parent=5 // pred_check
        %p9831 = pneg %p9830
      $region62: #{tpu_custom_call.1} parent=5 // pred_check_branch
        %9833 = sbr.rel (%p9831) target = $region64
      $region63: #{tpu_custom_call.1} parent=5 // pred_region
        %s9834 = ssub.s32 %s16, 2
        // Predicated region
        $region65: #{tpu_custom_call.1} parent=63 // pred_check
          %p9835 = pneg %p227
        $region66: #{tpu_custom_call.1} parent=63 // pred_check_branch
          %9837 = sbr.rel (%p9835) target = $region68
        $region67: #{tpu_custom_call.1} parent=63 // pred_region
          %s9838 = sand.u32 %s212, 1
          %s9839 = scalar_lea.sflag [#allocation7], %s9838
          %s9840 = sand.u32 %s212, 1
          %s9841 = smul.addr %s9840, 8
          %s9842 = scalar_lea.vmem [#allocation6], %s9841
          %9843 = dma.done %s9839, 128
        $region68: #{tpu_custom_call.1} parent=63 // pred_fallthru
          _
      $region64: #{tpu_custom_call.1} parent=5 // pred_fallthru
        _
    $region6: #{tpu_custom_call.1} parent=1 // loop_footer
      %s20 = sadd.s32 1, %s16
    $region7: #{tpu_custom_call.1} parent=1 // loop_footer_branch
      %15 = sbr.rel target = $region3
    $region8: #{tpu_custom_call.1} parent=1 // loop_exit
      _
    %9844 = vsyncpa [#allocation7], 1
    %s9845 = scalar_lea.sflag [#allocation7], 1
    %9846 = vsyncpa %s9845, 1

</llo_original>
